<compile_context>
chip_gen: v6e
topology: v6e:2x2x1
jax: 0.10.0
libtpu: 0.0.40
codegen_flags: <defaults>
</compile_context>

<pallas_src>
import functools
import math
from collections import namedtuple

import jax
import jax.numpy as jnp
from jax.experimental import pallas as pl
from jax.experimental.pallas import tpu as pltpu

BN_EPS = 1e-3
LANE = 128      # channel padding (TPU lane width)
SUB = 8         # row padding (TPU sublane width)

BlockArgs = namedtuple(
    "BlockArgs",
    ["num_repeat", "kernel_size", "stride", "expand_ratio",
     "input_filters", "output_filters", "se_ratio", "id_skip"],
)


def _ceil_to(x, m):
    return ((x + m - 1) // m) * m


def _pick_tile(dim, target, base):
    """Largest multiple of `base` that divides `dim` (dim % base == 0) and is <= target."""
    t = min(target, dim)
    t = (t // base) * base
    while dim % t != 0:
        t -= base
    return t


# ----------------------------- Pallas kernels -------------------------------

def _mm_kernel(*refs, act, has_gate, has_res):
    # fused: (gate*X) @ W  -> f32 acc over K tiles -> BN scale/bias -> swish -> +residual
    x_ref, w_ref, s_ref, b_ref = refs[:4]
    i = 4
    g_ref = r_ref = None
    if has_gate:
        g_ref = refs[i]; i += 1
    if has_res:
        r_ref = refs[i]; i += 1
    o_ref, acc_ref = refs[i], refs[i + 1]

    k = pl.program_id(3)
    nk = pl.num_programs(3)

    @pl.when(k == 0)
    def _():
        acc_ref[...] = jnp.zeros_like(acc_ref)

    x = x_ref[...]
    if has_gate:
        x = (x.astype(jnp.float32) * g_ref[...]).astype(x_ref.dtype)
    acc_ref[...] += jnp.dot(x, w_ref[...], preferred_element_type=jnp.float32)

    @pl.when(k == nk - 1)
    def _():
        y = acc_ref[...] * s_ref[...] + b_ref[...]
        if act == "swish":
            y = y * jax.nn.sigmoid(y)
        if has_res:
            y = y + r_ref[...].astype(jnp.float32)
        o_ref[...] = y.astype(o_ref.dtype)


def matmul_bn_act(x, w, scale, bias, act="none", gate=None, residual=None,
                  tm_target=512, tn_target=512, tk_target=512):
    """x:(B,Mp,Kp) -> (B,Mp,Np) bf16 with fused folded-BN (+swish) (+SE gate) (+residual)."""
    B, Mp, Kp = x.shape
    Np = w.shape[1]
    tm = _pick_tile(Mp, tm_target, SUB)
    tn = _pick_tile(Np, tn_target, LANE)
    tk = _pick_tile(Kp, tk_target, LANE)
    grid = (B, Mp // tm, Np // tn, Kp // tk)

    in_specs = [
        pl.BlockSpec((None, tm, tk), lambda b, m, n, k: (b, m, k)),
        pl.BlockSpec((tk, tn), lambda b, m, n, k: (k, n)),
        pl.BlockSpec((1, tn), lambda b, m, n, k: (0, n)),
        pl.BlockSpec((1, tn), lambda b, m, n, k: (0, n)),
    ]
    inputs = [x.astype(jnp.bfloat16), w.astype(jnp.bfloat16),
              scale.reshape(1, Np).astype(jnp.float32),
              bias.reshape(1, Np).astype(jnp.float32)]
    if gate is not None:
        in_specs.append(pl.BlockSpec((None, 1, tk), lambda b, m, n, k: (b, 0, k)))
        inputs.append(gate.reshape(B, 1, Kp).astype(jnp.float32))
    if residual is not None:
        in_specs.append(pl.BlockSpec((None, tm, tn), lambda b, m, n, k: (b, m, n)))
        inputs.append(residual.astype(jnp.bfloat16))

    kernel = functools.partial(_mm_kernel, act=act,
                               has_gate=gate is not None, has_res=residual is not None)
    return pl.pallas_call(
        kernel,
        out_shape=jax.ShapeDtypeStruct((B, Mp, Np), jnp.bfloat16),
        grid=grid,
        in_specs=in_specs,
        out_specs=pl.BlockSpec((None, tm, tn), lambda b, m, n, k: (b, m, n)),
        scratch_shapes=[pltpu.VMEM((tm, tn), jnp.float32)],
        compiler_params=pltpu.CompilerParams(
            dimension_semantics=("parallel", "parallel", "parallel", "arbitrary")),
    )(*inputs)


def _mm_gap_kernel(x_ref, w_ref, s_ref, b_ref, o_ref, acc_ref, gap_ref, *, valid_rows):
    # head 1x1 conv + BN + swish fused with masked global average pooling
    m = pl.program_id(2)
    k = pl.program_id(3)
    nm = pl.num_programs(2)
    nk = pl.num_programs(3)

    @pl.when((m == 0) & (k == 0))
    def _():
        gap_ref[...] = jnp.zeros_like(gap_ref)

    @pl.when(k == 0)
    def _():
        acc_ref[...] = jnp.zeros_like(acc_ref)

    acc_ref[...] += jnp.dot(x_ref[...], w_ref[...], preferred_element_type=jnp.float32)

    @pl.when(k == nk - 1)
    def _():
        y = acc_ref[...] * s_ref[...] + b_ref[...]
        y = y * jax.nn.sigmoid(y)                                  # swish
        tm = y.shape[0]
        row = m * tm + jax.lax.broadcasted_iota(jnp.int32, y.shape, 0)
        y = jnp.where(row < valid_rows, y, 0.0)                    # mask padded rows
        gap_ref[...] += jnp.sum(y, axis=0, keepdims=True)

    @pl.when((m == nm - 1) & (k == nk - 1))
    def _():
        o_ref[...] = gap_ref[...] * (1.0 / float(valid_rows))


def matmul_bn_swish_gap(x, w, scale, bias, valid_rows,
                        tm_target=512, tn_target=512, tk_target=512):
    B, Mp, Kp = x.shape
    Np = w.shape[1]
    tm = _pick_tile(Mp, tm_target, SUB)
    tn = _pick_tile(Np, tn_target, LANE)
    tk = _pick_tile(Kp, tk_target, LANE)
    grid = (B, Np // tn, Mp // tm, Kp // tk)

    kernel = functools.partial(_mm_gap_kernel, valid_rows=valid_rows)
    return pl.pallas_call(
        kernel,
        out_shape=jax.ShapeDtypeStruct((B, 1, Np), jnp.float32),
        grid=grid,
        in_specs=[
            pl.BlockSpec((None, tm, tk), lambda b, n, m, k: (b, m, k)),
            pl.BlockSpec((tk, tn), lambda b, n, m, k: (k, n)),
            pl.BlockSpec((1, tn), lambda b, n, m, k: (0, n)),
            pl.BlockSpec((1, tn), lambda b, n, m, k: (0, n)),
        ],
        out_specs=pl.BlockSpec((None, 1, tn), lambda b, n, m, k: (b, 0, n)),
        scratch_shapes=[pltpu.VMEM((tm, tn), jnp.float32),
                        pltpu.VMEM((1, tn), jnp.float32)],
        compiler_params=pltpu.CompilerParams(
            dimension_semantics=("parallel", "parallel", "arbitrary", "arbitrary")),
    )(x.astype(jnp.bfloat16), w.astype(jnp.bfloat16),
      scale.reshape(1, Np).astype(jnp.float32),
      bias.reshape(1, Np).astype(jnp.float32))


def _dw_kernel(p_ref, w_ref, s_ref, b_ref, *out_refs, valid_rows, has_se):
    # depthwise conv (k*k tap accumulate) + folded BN + swish, optional per-sample SE sums
    o_ref = out_refs[0]
    m = pl.program_id(1)
    kk = p_ref.shape[0]

    acc = jnp.zeros(o_ref.shape, jnp.float32)
    for t in range(kk):                                            # unrolled over taps
        acc = acc + p_ref[t].astype(jnp.float32) * w_ref[t].astype(jnp.float32)
    y = acc * s_ref[...] + b_ref[...]
    y = y * jax.nn.sigmoid(y)                                      # swish
    o_ref[...] = y.astype(o_ref.dtype)

    if has_se:
        sesum_ref = out_refs[1]

        @pl.when(m == 0)
        def _():
            sesum_ref[...] = jnp.zeros_like(sesum_ref)

        tm = y.shape[0]
        row = m * tm + jax.lax.broadcasted_iota(jnp.int32, y.shape, 0)
        ym = jnp.where(row < valid_rows, y, 0.0)
        sesum_ref[...] += jnp.sum(ym, axis=0, keepdims=True)


def dwconv_bn_swish(patches, w_kk_c, scale, bias, valid_rows, with_se, tm_target=256):
    """patches:(B,KK,Mp,Cp) -> (y:(B,Mp,Cp) bf16, SE channel sums:(B,1,Cp) f32 or None)."""
    B, KK, Mp, Cp = patches.shape
    tm = _pick_tile(Mp, tm_target, SUB)
    grid = (B, Mp // tm)

    out_shape = [jax.ShapeDtypeStruct((B, Mp, Cp), jnp.bfloat16)]
    out_specs = [pl.BlockSpec((None, tm, Cp), lambda b, m: (b, m, 0))]
    if with_se:
        out_shape.append(jax.ShapeDtypeStruct((B, 1, Cp), jnp.float32))
        out_specs.append(pl.BlockSpec((None, 1, Cp), lambda b, m: (b, 0, 0)))

    kernel = functools.partial(_dw_kernel, valid_rows=valid_rows, has_se=with_se)
    outs = pl.pallas_call(
        kernel,
        out_shape=tuple(out_shape),
        grid=grid,
        in_specs=[
            pl.BlockSpec((None, KK, tm, Cp), lambda b, m: (b, 0, m, 0)),
            pl.BlockSpec((KK, 1, Cp), lambda b, m: (0, 0, 0)),
            pl.BlockSpec((1, Cp), lambda b, m: (0, 0)),
            pl.BlockSpec((1, Cp), lambda b, m: (0, 0)),
        ],
        out_specs=tuple(out_specs),
        compiler_params=pltpu.CompilerParams(
            dimension_semantics=("parallel", "arbitrary" if with_se else "parallel")),
    )(patches.astype(jnp.bfloat16),
      w_kk_c.reshape(KK, 1, Cp).astype(jnp.float32),
      scale.reshape(1, Cp).astype(jnp.float32),
      bias.reshape(1, Cp).astype(jnp.float32))
    if with_se:
        return outs[0], outs[1]
    return outs[0], None


def _se_gate_kernel(m_ref, wr_ref, br_ref, we_ref, be_ref, g_ref):
    # squeeze-excite gate: 1x1 reduce (swish) -> 1x1 expand -> sigmoid; tiny, whole-VMEM
    s = jnp.dot(m_ref[...], wr_ref[...], preferred_element_type=jnp.float32) + br_ref[...]
    s = s * jax.nn.sigmoid(s)
    s = jnp.dot(s, we_ref[...], preferred_element_type=jnp.float32) + be_ref[...]
    g_ref[...] = jax.nn.sigmoid(s)


def se_gate(pooled, wr, br, we, be):
    B, C = pooled.shape
    Cs = wr.shape[1]
    vmem = pl.BlockSpec(memory_space=pltpu.MemorySpace.VMEM)
    return pl.pallas_call(
        _se_gate_kernel,
        out_shape=jax.ShapeDtypeStruct((B, C), jnp.float32),
        in_specs=[vmem] * 5,
        out_specs=vmem,
    )(pooled.astype(jnp.float32), wr.astype(jnp.float32),
      br.reshape(1, Cs).astype(jnp.float32),
      we.astype(jnp.float32), be.reshape(1, C).astype(jnp.float32))


# ------------------------------- JAX glue ------------------------------------

def bn_fold_padded(bn, np_):
    c = bn["gamma"].shape[0]
    scale = bn["gamma"] / jnp.sqrt(bn["var"] + BN_EPS)
    bias = bn["beta"] - bn["mean"] * scale
    return (jnp.pad(scale, (0, np_ - c), constant_values=1.0),
            jnp.pad(bias, (0, np_ - c)))


def tf_same_pad(x, k, s):
    _, H, W, _ = x.shape
    oh = -(-H // s)
    ow = -(-W // s)
    ph = max((oh - 1) * s + k - H, 0)
    pw = max((ow - 1) * s + k - W, 0)
    xp = jnp.pad(x, ((0, 0), (ph // 2, ph - ph // 2), (pw // 2, pw - pw // 2), (0, 0)))
    return xp, oh, ow


def _im2col(x, k, s):
    xp, oh, ow = tf_same_pad(x, k, s)
    cols = []
    for ky in range(k):
        for kx in range(k):
            cols.append(xp[:, ky: ky + oh * s: s, kx: kx + ow * s: s, :])
    return cols, oh, ow


def _to_spatial(x, h, w):
    B, _, Cp = x.shape
    return x[:, :h * w, :].reshape(B, h, w, Cp)


def conv2d_same_bn_swish(xs, w_hwio, bn, stride):
    """Stem conv as im2col + fused matmul. xs: (B,H,W,Cin) with raw channels."""
    B = xs.shape[0]
    k, _, cin, cout = w_hwio.shape
    cols, oh, ow = _im2col(xs, k, stride)
    kdim = k * k * cin
    kp = _ceil_to(kdim, LANE)
    m = oh * ow
    mp = _ceil_to(m, SUB)
    patches = jnp.concatenate(cols, axis=-1).reshape(B, m, kdim)
    patches = jnp.pad(patches, ((0, 0), (0, mp - m), (0, kp - kdim)))
    np_ = _ceil_to(cout, LANE)
    w2 = jnp.pad(w_hwio.reshape(kdim, cout), ((0, kp - kdim), (0, np_ - cout)))
    scale, bias = bn_fold_padded(bn, np_)
    y = matmul_bn_act(patches, w2, scale, bias, act="swish")
    return y, oh, ow


def pointwise_bn_act(x, w, bn, act="none", gate=None, residual=None):
    B, Mp, Kp = x.shape
    cin, cout = w.shape
    np_ = _ceil_to(cout, LANE)
    w2 = jnp.pad(w, ((0, Kp - cin), (0, np_ - cout)))
    scale, bias = bn_fold_padded(bn, np_)
    return matmul_bn_act(x, w2, scale, bias, act=act, gate=gate, residual=residual)


def depthwise_same_bn_swish(x, h, w, w_kkc, bn, stride, with_se):
    B, Mp, Cp = x.shape
    k, _, c = w_kkc.shape
    xs = _to_spatial(x, h, w)
    cols, oh, ow = _im2col(xs, k, stride)
    m = oh * ow
    mp = _ceil_to(m, SUB)
    patches = jnp.stack(cols, axis=1).reshape(B, k * k, m, Cp)
    if mp != m:
        patches = jnp.pad(patches, ((0, 0), (0, 0), (0, mp - m), (0, 0)))
    w_p = jnp.pad(w_kkc.reshape(k * k, c), ((0, 0), (0, Cp - c)))
    scale, bias = bn_fold_padded(bn, Cp)
    y, sesum = dwconv_bn_swish(patches, w_p, scale, bias, valid_rows=m, with_se=with_se)
    return y, sesum, oh, ow


def mbconv(x, h, w, p, ba):
    inputs = x
    has_se = ba.se_ratio is not None and 0 < ba.se_ratio <= 1

    if ba.expand_ratio != 1:
        x = pointwise_bn_act(x, p["expand_w"], p["bn0"], act="swish")

    x, sesum, oh, ow = depthwise_same_bn_swish(x, h, w, p["dw_w"], p["bn1"], ba.stride, has_se)

    gate = None
    if has_se:
        oup = ba.input_filters * ba.expand_ratio
        cp_oup = x.shape[2]
        cse = p["se_rw"].shape[1]
        csp = _ceil_to(cse, LANE)
        pooled = sesum[:, 0, :] * (1.0 / float(oh * ow))           # (B, Cp_oup)
        wr = jnp.pad(p["se_rw"], ((0, cp_oup - oup), (0, csp - cse)))
        br = jnp.pad(p["se_rb"].reshape(-1), (0, csp - cse))
        we = jnp.pad(p["se_ew"], ((0, csp - cse), (0, cp_oup - oup)))
        be = jnp.pad(p["se_eb"].reshape(-1), (0, cp_oup - oup))
        gate = se_gate(pooled, wr, br, we, be)[:, None, :]         # (B, 1, Cp_oup)

    use_res = ba.id_skip and ba.stride == 1 and ba.input_filters == ba.output_filters
    residual = inputs if use_res else None
    x = pointwise_bn_act(x, p["project_w"], p["bn2"], act="none", gate=gate, residual=residual)
    return x, oh, ow


def head_bn_swish_gap(x, h, w, head_w, bn):
    B, Mp, Kp = x.shape
    cin, cout = head_w.shape
    np_ = _ceil_to(cout, LANE)
    w2 = jnp.pad(head_w, ((0, Kp - cin), (0, np_ - cout)))
    scale, bias = bn_fold_padded(bn, np_)
    pooled = matmul_bn_swish_gap(x, w2, scale, bias, valid_rows=h * w)
    return pooled[:, 0, :cout]                                     # (B, cout) f32


def efficientnet_forward(x_nchw, params, block_instances):
    n = x_nchw.shape[0]
    x = jnp.transpose(x_nchw, (0, 2, 3, 1)).astype(jnp.bfloat16)   # NCHW -> NHWC
    x_cont = x[..., 0:47]
    x_48 = jnp.concatenate([x[..., 47:95], x[..., 95:143]], axis=0)   # location+rotation batched

    y_c, oh, ow = conv2d_same_bn_swish(x_cont, params["stem47_w"], params["bn0"], stride=2)
    y_48, _, _ = conv2d_same_bn_swish(x_48, params["stem48_w"], params["bn0"], stride=2)
    y = jnp.concatenate([y_c, y_48], axis=0)                       # (3N, Mp, 128)

    h, w = oh, ow
    for p, ba in zip(params["blocks"], block_instances):
        y, h, w = mbconv(y, h, w, p, ba)

    pooled = head_bn_swish_gap(y, h, w, params["head_w"], params["bn_head"])   # (3N, 1280)
    return pooled[:n], pooled[n:2 * n], pooled[2 * n:]


# ------------------------ deterministic parameter init -----------------------

def bn_init(key, c):
    k1, k2, k3, k4 = jax.random.split(key, 4)
    return {
        "gamma": 1.0 + 0.1 * jax.random.normal(k1, (c,)),
        "beta": 0.1 * jax.random.normal(k2, (c,)),
        "mean": 0.1 * jax.random.normal(k3, (c,)),
        "var": 1.0 + 0.1 * jax.random.uniform(k4, (c,)),
    }


def build_block_instances(blocks_args):
    instances = []
    for ba in blocks_args:
        instances.append(ba)
        if ba.num_repeat > 1:
            ba = ba._replace(input_filters=ba.output_filters, stride=1)
        for _ in range(ba.num_repeat - 1):
            instances.append(ba)
    return instances


def init_block(key, ba):
    ks = jax.random.split(key, 10)
    inp = ba.input_filters
    oup = inp * ba.expand_ratio
    p = {}
    if ba.expand_ratio != 1:
        p["expand_w"] = jax.random.normal(ks[0], (inp, oup)) / math.sqrt(inp)
        p["bn0"] = bn_init(ks[1], oup)
    k = ba.kernel_size
    p["dw_w"] = jax.random.normal(ks[2], (k, k, oup)) / float(k)
    p["bn1"] = bn_init(ks[3], oup)
    if ba.se_ratio is not None and 0 < ba.se_ratio <= 1:
        cse = max(1, int(inp * ba.se_ratio))
        p["se_rw"] = jax.random.normal(ks[4], (oup, cse)) / math.sqrt(oup)
        p["se_rb"] = 0.1 * jax.random.normal(ks[5], (1, cse))
        p["se_ew"] = jax.random.normal(ks[6], (cse, oup)) / math.sqrt(cse)
        p["se_eb"] = 0.1 * jax.random.normal(ks[7], (1, oup))
    p["project_w"] = jax.random.normal(ks[8], (oup, ba.output_filters)) / math.sqrt(oup)
    p["bn2"] = bn_init(ks[9], ba.output_filters)
    return p


def init_params(key, block_instances, stem_out=32, head_out=1280):
    keys = jax.random.split(key, 5 + len(block_instances))
    params = {}
    params["stem47_w"] = jax.random.normal(keys[0], (3, 3, 47, stem_out)) / math.sqrt(9 * 47)
    params["stem48_w"] = jax.random.normal(keys[1], (3, 3, 48, stem_out)) / math.sqrt(9 * 48)
    params["bn0"] = bn_init(keys[2], stem_out)
    params["blocks"] = [init_block(keys[3 + i], ba) for i, ba in enumerate(block_instances)]
    in_head = block_instances[-1].output_filters
    params["head_w"] = jax.random.normal(keys[-2], (in_head, head_out)) / math.sqrt(in_head)
    params["bn_head"] = bn_init(keys[-1], head_out)
    return params


# ----------------------------------- main -------------------------------------

if __name__ == "__main__":
    # Small EfficientNet config (stem=32, two MBConv stages, head=1280).
    blocks_args = [
        BlockArgs(num_repeat=1, kernel_size=3, stride=1, expand_ratio=1,
                  input_filters=32, output_filters=16, se_ratio=0.25, id_skip=True),
        BlockArgs(num_repeat=2, kernel_size=3, stride=2, expand_ratio=6,
                  input_filters=16, output_filters=24, se_ratio=0.25, id_skip=True),
    ]
    block_instances = build_block_instances(blocks_args)

    key = jax.random.PRNGKey(0)
    kp, kx = jax.random.split(key)
    params = init_params(kp, block_instances)

    # NCHW input like the PyTorch module: 143 channels split 47/48/48.
    x = jax.random.normal(kx, (2, 143, 16, 16), dtype=jnp.float32)

    def fwd(inp):
        return efficientnet_forward(inp, params, block_instances)

    out = jax.block_until_ready(jax.jit(fwd)(x))
    xc, xl, xr = out
    assert xc.shape == (2, 1280) and xl.shape == (2, 1280) and xr.shape == (2, 1280)
    assert bool(jnp.all(jnp.isfinite(xc)) & jnp.all(jnp.isfinite(xl)) & jnp.all(jnp.isfinite(xr)))
    print("KERNEL_OK")
</pallas_src>

<mosaic_0001>
module attributes {stable_mosaic.version = 11 : i64} {
  func.func @_mm_kernel(%arg0: i32, %arg1: i32, %arg2: i32, %arg3: i32, %arg4: memref<1x64x512xbf16, #tpu.memory_space<vmem>>, %arg5: memref<512x128xbf16, #tpu.memory_space<vmem>>, %arg6: memref<1x128xf32, #tpu.memory_space<vmem>>, %arg7: memref<1x128xf32, #tpu.memory_space<vmem>>, %arg8: memref<1x64x128xbf16, #tpu.memory_space<vmem>>, %arg9: memref<64x128xf32, #tpu.memory_space<vmem>>) attributes {dimension_semantics = [#tpu.dimension_semantics<parallel>, #tpu.dimension_semantics<parallel>, #tpu.dimension_semantics<parallel>, #tpu.dimension_semantics<arbitrary>], iteration_bounds = array<i64: 2, 1, 1, 1>, scalar_prefetch = 0 : i64, scratch_operands = 1 : i64, tpu.core_type = #tpu.core_type<tc>, window_params = [{transform_indices = @transform_0, window_bounds = array<i64: 1, 64, 512>}, {transform_indices = @transform_1, window_bounds = array<i64: 512, 128>}, {transform_indices = @transform_2, window_bounds = array<i64: 1, 128>}, {transform_indices = @transform_3, window_bounds = array<i64: 1, 128>}, {transform_indices = @transform_4, window_bounds = array<i64: 1, 64, 128>}]} {
    %c0_i32 = arith.constant 0 : i32
    %0 = arith.cmpi eq, %arg3, %c0_i32 : i32
    %1 = arith.extui %0 : i1 to i32
    %c0_i32_0 = arith.constant 0 : i32
    %2 = arith.cmpi ne, %1, %c0_i32_0 : i32
    scf.if %2 {
      %cst_11 = arith.constant 0.000000e+00 : f32
      %13 = vector.broadcast %cst_11 : f32 to vector<64x128xf32>
      %c0_12 = arith.constant 0 : index
      %c0_13 = arith.constant 0 : index
      %14 = vector.load %arg9[%c0_12, %c0_13] : memref<64x128xf32, #tpu.memory_space<vmem>>, vector<64x128xf32>
      tpu.vector_store %arg9[%c0_12, %c0_13], %13 {strides = array<i32>} : memref<64x128xf32, #tpu.memory_space<vmem>>, vector<64x128xf32>,
    } else {
    }
    %c0 = arith.constant 0 : index
    %c0_1 = arith.constant 0 : index
    %c0_2 = arith.constant 0 : index
    %3 = vector.load %arg4[%c0, %c0_1, %c0_2] : memref<1x64x512xbf16, #tpu.memory_space<vmem>>, vector<1x64x512xbf16>
    %4 = vector.shape_cast %3 : vector<1x64x512xbf16> to vector<64x512xbf16>
    %c0_3 = arith.constant 0 : index
    %c0_4 = arith.constant 0 : index
    %5 = vector.load %arg9[%c0_3, %c0_4] : memref<64x128xf32, #tpu.memory_space<vmem>>, vector<64x128xf32>
    %c0_5 = arith.constant 0 : index
    %c0_6 = arith.constant 0 : index
    %6 = vector.load %arg5[%c0_5, %c0_6] : memref<512x128xbf16, #tpu.memory_space<vmem>>, vector<512x128xbf16>
    %cst = arith.constant dense<0.000000e+00> : vector<64x128xf32>
    %7 = tpu.matmul %4, %6, %cst {dimension_numbers = #tpu.dot_dimension_numbers<[1], [0], [0], [1], [0, 0, 1, 1], [], []>} : vector<64x512xbf16>, vector<512x128xbf16>, vector<64x128xf32> -> vector<64x128xf32>
    %8 = arith.addf %5, %7 : vector<64x128xf32>
    %c0_7 = arith.constant 0 : index
    %c0_8 = arith.constant 0 : index
    %9 = vector.load %arg9[%c0_7, %c0_8] : memref<64x128xf32, #tpu.memory_space<vmem>>, vector<64x128xf32>
    tpu.vector_store %arg9[%c0_7, %c0_8], %8 {strides = array<i32>} : memref<64x128xf32, #tpu.memory_space<vmem>>, vector<64x128xf32>,
    %c0_i32_9 = arith.constant 0 : i32
    %10 = arith.cmpi eq, %arg3, %c0_i32_9 : i32
    %11 = arith.extui %10 : i1 to i32
    %c0_i32_10 = arith.constant 0 : i32
    %12 = arith.cmpi ne, %11, %c0_i32_10 : i32
    scf.if %12 {
      %c0_11 = arith.constant 0 : index
      %c0_12 = arith.constant 0 : index
      %13 = vector.load %arg9[%c0_11, %c0_12] : memref<64x128xf32, #tpu.memory_space<vmem>>, vector<64x128xf32>
      %c0_13 = arith.constant 0 : index
      %c0_14 = arith.constant 0 : index
      %14 = vector.load %arg6[%c0_13, %c0_14] : memref<1x128xf32, #tpu.memory_space<vmem>>, vector<1x128xf32>
      %15 = vector.broadcast %14 : vector<1x128xf32> to vector<64x128xf32>
      %16 = arith.mulf %13, %15 : vector<64x128xf32>
      %c0_15 = arith.constant 0 : index
      %c0_16 = arith.constant 0 : index
      %17 = vector.load %arg7[%c0_15, %c0_16] : memref<1x128xf32, #tpu.memory_space<vmem>>, vector<1x128xf32>
      %18 = vector.broadcast %17 : vector<1x128xf32> to vector<64x128xf32>
      %19 = arith.addf %16, %18 : vector<64x128xf32>
      %20 = arith.negf %19 : vector<64x128xf32>
      %21 = math.exp %20 : vector<64x128xf32>
      %cst_17 = arith.constant 1.000000e+00 : f32
      %22 = vector.broadcast %cst_17 : f32 to vector<64x128xf32>
      %23 = arith.addf %22, %21 : vector<64x128xf32>
      %24 = arith.divf %22, %23 : vector<64x128xf32>
      %25 = arith.mulf %19, %24 : vector<64x128xf32>
      %26 = arith.truncf %25 : vector<64x128xf32> to vector<64x128xbf16>
      %c0_18 = arith.constant 0 : index
      %c0_19 = arith.constant 0 : index
      %c0_20 = arith.constant 0 : index
      %27 = vector.load %arg8[%c0_18, %c0_19, %c0_20] : memref<1x64x128xbf16, #tpu.memory_space<vmem>>, vector<1x64x128xbf16>
      %28 = vector.shape_cast %27 : vector<1x64x128xbf16> to vector<64x128xbf16>
      %29 = vector.shape_cast %26 : vector<64x128xbf16> to vector<1x64x128xbf16>
      tpu.vector_store %arg8[%c0_18, %c0_19, %c0_20], %29 {strides = array<i32>} : memref<1x64x128xbf16, #tpu.memory_space<vmem>>, vector<1x64x128xbf16>,
    } else {
    }
    return
  }
  func.func @transform_0(%arg0: i32, %arg1: i32, %arg2: i32, %arg3: i32) -> (i32, i32, i32) {
    %c0_i32 = arith.constant 0 : i32
    return %arg0, %arg1, %arg3 : i32, i32, i32
  }
  func.func @transform_1(%arg0: i32, %arg1: i32, %arg2: i32, %arg3: i32) -> (i32, i32) {
    %c0_i32 = arith.constant 0 : i32
    return %arg3, %arg2 : i32, i32
  }
  func.func @transform_2(%arg0: i32, %arg1: i32, %arg2: i32, %arg3: i32) -> (i32, i32) {
    %c0_i32 = arith.constant 0 : i32
    %c0_i32_0 = arith.constant 0 : i32
    return %c0_i32, %arg2 : i32, i32
  }
  func.func @transform_3(%arg0: i32, %arg1: i32, %arg2: i32, %arg3: i32) -> (i32, i32) {
    %c0_i32 = arith.constant 0 : i32
    %c0_i32_0 = arith.constant 0 : i32
    return %c0_i32, %arg2 : i32, i32
  }
  func.func @transform_4(%arg0: i32, %arg1: i32, %arg2: i32, %arg3: i32) -> (i32, i32, i32) {
    %c0_i32 = arith.constant 0 : i32
    return %arg0, %arg1, %arg2 : i32, i32, i32
  }
}

module attributes {stable_mosaic.version = 11 : i64} {
  func.func @_mm_kernel(%arg0: i32, %arg1: i32, %arg2: i32, %arg3: i32, %arg4: memref<1x64x512xbf16, #tpu.memory_space<vmem>>, %arg5: memref<512x128xbf16, #tpu.memory_space<vmem>>, %arg6: memref<1x128xf32, #tpu.memory_space<vmem>>, %arg7: memref<1x128xf32, #tpu.memory_space<vmem>>, %arg8: memref<1x64x128xbf16, #tpu.memory_space<vmem>>, %arg9: memref<64x128xf32, #tpu.memory_space<vmem>>) attributes {dimension_semantics = [#tpu.dimension_semantics<parallel>, #tpu.dimension_semantics<parallel>, #tpu.dimension_semantics<parallel>, #tpu.dimension_semantics<arbitrary>], iteration_bounds = array<i64: 4, 1, 1, 1>, scalar_prefetch = 0 : i64, scratch_operands = 1 : i64, tpu.core_type = #tpu.core_type<tc>, window_params = [{transform_indices = @transform_0, window_bounds = array<i64: 1, 64, 512>}, {transform_indices = @transform_1, window_bounds = array<i64: 512, 128>}, {transform_indices = @transform_2, window_bounds = array<i64: 1, 128>}, {transform_indices = @transform_3, window_bounds = array<i64: 1, 128>}, {transform_indices = @transform_4, window_bounds = array<i64: 1, 64, 128>}]} {
    %c0_i32 = arith.constant 0 : i32
    %0 = arith.cmpi eq, %arg3, %c0_i32 : i32
    %1 = arith.extui %0 : i1 to i32
    %c0_i32_0 = arith.constant 0 : i32
    %2 = arith.cmpi ne, %1, %c0_i32_0 : i32
    scf.if %2 {
      %cst_11 = arith.constant 0.000000e+00 : f32
      %13 = vector.broadcast %cst_11 : f32 to vector<64x128xf32>
      %c0_12 = arith.constant 0 : index
      %c0_13 = arith.constant 0 : index
      %14 = vector.load %arg9[%c0_12, %c0_13] : memref<64x128xf32, #tpu.memory_space<vmem>>, vector<64x128xf32>
      tpu.vector_store %arg9[%c0_12, %c0_13], %13 {strides = array<i32>} : memref<64x128xf32, #tpu.memory_space<vmem>>, vector<64x128xf32>,
    } else {
    }
    %c0 = arith.constant 0 : index
    %c0_1 = arith.constant 0 : index
    %c0_2 = arith.constant 0 : index
    %3 = vector.load %arg4[%c0, %c0_1, %c0_2] : memref<1x64x512xbf16, #tpu.memory_space<vmem>>, vector<1x64x512xbf16>
    %4 = vector.shape_cast %3 : vector<1x64x512xbf16> to vector<64x512xbf16>
    %c0_3 = arith.constant 0 : index
    %c0_4 = arith.constant 0 : index
    %5 = vector.load %arg9[%c0_3, %c0_4] : memref<64x128xf32, #tpu.memory_space<vmem>>, vector<64x128xf32>
    %c0_5 = arith.constant 0 : index
    %c0_6 = arith.constant 0 : index
    %6 = vector.load %arg5[%c0_5, %c0_6] : memref<512x128xbf16, #tpu.memory_space<vmem>>, vector<512x128xbf16>
    %cst = arith.constant dense<0.000000e+00> : vector<64x128xf32>
    %7 = tpu.matmul %4, %6, %cst {dimension_numbers = #tpu.dot_dimension_numbers<[1], [0], [0], [1], [0, 0, 1, 1], [], []>} : vector<64x512xbf16>, vector<512x128xbf16>, vector<64x128xf32> -> vector<64x128xf32>
    %8 = arith.addf %5, %7 : vector<64x128xf32>
    %c0_7 = arith.constant 0 : index
    %c0_8 = arith.constant 0 : index
    %9 = vector.load %arg9[%c0_7, %c0_8] : memref<64x128xf32, #tpu.memory_space<vmem>>, vector<64x128xf32>
    tpu.vector_store %arg9[%c0_7, %c0_8], %8 {strides = array<i32>} : memref<64x128xf32, #tpu.memory_space<vmem>>, vector<64x128xf32>,
    %c0_i32_9 = arith.constant 0 : i32
    %10 = arith.cmpi eq, %arg3, %c0_i32_9 : i32
    %11 = arith.extui %10 : i1 to i32
    %c0_i32_10 = arith.constant 0 : i32
    %12 = arith.cmpi ne, %11, %c0_i32_10 : i32
    scf.if %12 {
      %c0_11 = arith.constant 0 : index
      %c0_12 = arith.constant 0 : index
      %13 = vector.load %arg9[%c0_11, %c0_12] : memref<64x128xf32, #tpu.memory_space<vmem>>, vector<64x128xf32>
      %c0_13 = arith.constant 0 : index
      %c0_14 = arith.constant 0 : index
      %14 = vector.load %arg6[%c0_13, %c0_14] : memref<1x128xf32, #tpu.memory_space<vmem>>, vector<1x128xf32>
      %15 = vector.broadcast %14 : vector<1x128xf32> to vector<64x128xf32>
      %16 = arith.mulf %13, %15 : vector<64x128xf32>
      %c0_15 = arith.constant 0 : index
      %c0_16 = arith.constant 0 : index
      %17 = vector.load %arg7[%c0_15, %c0_16] : memref<1x128xf32, #tpu.memory_space<vmem>>, vector<1x128xf32>
      %18 = vector.broadcast %17 : vector<1x128xf32> to vector<64x128xf32>
      %19 = arith.addf %16, %18 : vector<64x128xf32>
      %20 = arith.negf %19 : vector<64x128xf32>
      %21 = math.exp %20 : vector<64x128xf32>
      %cst_17 = arith.constant 1.000000e+00 : f32
      %22 = vector.broadcast %cst_17 : f32 to vector<64x128xf32>
      %23 = arith.addf %22, %21 : vector<64x128xf32>
      %24 = arith.divf %22, %23 : vector<64x128xf32>
      %25 = arith.mulf %19, %24 : vector<64x128xf32>
      %26 = arith.truncf %25 : vector<64x128xf32> to vector<64x128xbf16>
      %c0_18 = arith.constant 0 : index
      %c0_19 = arith.constant 0 : index
      %c0_20 = arith.constant 0 : index
      %27 = vector.load %arg8[%c0_18, %c0_19, %c0_20] : memref<1x64x128xbf16, #tpu.memory_space<vmem>>, vector<1x64x128xbf16>
      %28 = vector.shape_cast %27 : vector<1x64x128xbf16> to vector<64x128xbf16>
      %29 = vector.shape_cast %26 : vector<64x128xbf16> to vector<1x64x128xbf16>
      tpu.vector_store %arg8[%c0_18, %c0_19, %c0_20], %29 {strides = array<i32>} : memref<1x64x128xbf16, #tpu.memory_space<vmem>>, vector<1x64x128xbf16>,
    } else {
    }
    return
  }
  func.func @transform_0(%arg0: i32, %arg1: i32, %arg2: i32, %arg3: i32) -> (i32, i32, i32) {
    %c0_i32 = arith.constant 0 : i32
    return %arg0, %arg1, %arg3 : i32, i32, i32
  }
  func.func @transform_1(%arg0: i32, %arg1: i32, %arg2: i32, %arg3: i32) -> (i32, i32) {
    %c0_i32 = arith.constant 0 : i32
    return %arg3, %arg2 : i32, i32
  }
  func.func @transform_2(%arg0: i32, %arg1: i32, %arg2: i32, %arg3: i32) -> (i32, i32) {
    %c0_i32 = arith.constant 0 : i32
    %c0_i32_0 = arith.constant 0 : i32
    return %c0_i32, %arg2 : i32, i32
  }
  func.func @transform_3(%arg0: i32, %arg1: i32, %arg2: i32, %arg3: i32) -> (i32, i32) {
    %c0_i32 = arith.constant 0 : i32
    %c0_i32_0 = arith.constant 0 : i32
    return %c0_i32, %arg2 : i32, i32
  }
  func.func @transform_4(%arg0: i32, %arg1: i32, %arg2: i32, %arg3: i32) -> (i32, i32, i32) {
    %c0_i32 = arith.constant 0 : i32
    return %arg0, %arg1, %arg2 : i32, i32, i32
  }
}

module attributes {stable_mosaic.version = 11 : i64} {
  func.func @_se_gate_kernel(%arg0: memref<6x128xf32, #tpu.memory_space<vmem>>, %arg1: memref<128x128xf32, #tpu.memory_space<vmem>>, %arg2: memref<1x128xf32, #tpu.memory_space<vmem>>, %arg3: memref<128x128xf32, #tpu.memory_space<vmem>>, %arg4: memref<1x128xf32, #tpu.memory_space<vmem>>, %arg5: memref<6x128xf32, #tpu.memory_space<vmem>>) attributes {dimension_semantics = [], scalar_prefetch = 0 : i64, scratch_operands = 0 : i64, tpu.core_type = #tpu.core_type<tc>} {
    %c0 = arith.constant 0 : index
    %c0_0 = arith.constant 0 : index
    %0 = vector.load %arg0[%c0, %c0_0] : memref<6x128xf32, #tpu.memory_space<vmem>>, vector<6x128xf32>
    %c0_1 = arith.constant 0 : index
    %c0_2 = arith.constant 0 : index
    %1 = vector.load %arg1[%c0_1, %c0_2] : memref<128x128xf32, #tpu.memory_space<vmem>>, vector<128x128xf32>
    %cst = arith.constant dense<0.000000e+00> : vector<6x128xf32>
    %2 = tpu.matmul %0, %1, %cst {dimension_numbers = #tpu.dot_dimension_numbers<[1], [0], [0], [1], [0, 0, 1, 1], [], []>} : vector<6x128xf32>, vector<128x128xf32>, vector<6x128xf32> -> vector<6x128xf32>
    %c0_3 = arith.constant 0 : index
    %c0_4 = arith.constant 0 : index
    %3 = vector.load %arg2[%c0_3, %c0_4] : memref<1x128xf32, #tpu.memory_space<vmem>>, vector<1x128xf32>
    %4 = vector.broadcast %3 : vector<1x128xf32> to vector<6x128xf32>
    %5 = arith.addf %2, %4 : vector<6x128xf32>
    %6 = arith.negf %5 : vector<6x128xf32>
    %7 = math.exp %6 : vector<6x128xf32>
    %cst_5 = arith.constant 1.000000e+00 : f32
    %8 = vector.broadcast %cst_5 : f32 to vector<6x128xf32>
    %9 = arith.addf %8, %7 : vector<6x128xf32>
    %10 = arith.divf %8, %9 : vector<6x128xf32>
    %11 = arith.mulf %5, %10 : vector<6x128xf32>
    %c0_6 = arith.constant 0 : index
    %c0_7 = arith.constant 0 : index
    %12 = vector.load %arg3[%c0_6, %c0_7] : memref<128x128xf32, #tpu.memory_space<vmem>>, vector<128x128xf32>
    %cst_8 = arith.constant dense<0.000000e+00> : vector<6x128xf32>
    %13 = tpu.matmul %11, %12, %cst_8 {dimension_numbers = #tpu.dot_dimension_numbers<[1], [0], [0], [1], [0, 0, 1, 1], [], []>} : vector<6x128xf32>, vector<128x128xf32>, vector<6x128xf32> -> vector<6x128xf32>
    %c0_9 = arith.constant 0 : index
    %c0_10 = arith.constant 0 : index
    %14 = vector.load %arg4[%c0_9, %c0_10] : memref<1x128xf32, #tpu.memory_space<vmem>>, vector<1x128xf32>
    %15 = vector.broadcast %14 : vector<1x128xf32> to vector<6x128xf32>
    %16 = arith.addf %13, %15 : vector<6x128xf32>
    %17 = arith.negf %16 : vector<6x128xf32>
    %18 = math.exp %17 : vector<6x128xf32>
    %cst_11 = arith.constant 1.000000e+00 : f32
    %19 = vector.broadcast %cst_11 : f32 to vector<6x128xf32>
    %20 = arith.addf %19, %18 : vector<6x128xf32>
    %21 = arith.divf %19, %20 : vector<6x128xf32>
    %c0_12 = arith.constant 0 : index
    %c0_13 = arith.constant 0 : index
    %22 = vector.load %arg5[%c0_12, %c0_13] : memref<6x128xf32, #tpu.memory_space<vmem>>, vector<6x128xf32>
    tpu.vector_store %arg5[%c0_12, %c0_13], %21 {strides = array<i32>} : memref<6x128xf32, #tpu.memory_space<vmem>>, vector<6x128xf32>,
    return
  }
}

module attributes {stable_mosaic.version = 11 : i64} {
  func.func @_dw_kernel(%arg0: i32, %arg1: i32, %arg2: memref<1x9x64x128xbf16, #tpu.memory_space<vmem>>, %arg3: memref<9x1x128xf32, #tpu.memory_space<vmem>>, %arg4: memref<1x128xf32, #tpu.memory_space<vmem>>, %arg5: memref<1x128xf32, #tpu.memory_space<vmem>>, %arg6: memref<1x64x128xbf16, #tpu.memory_space<vmem>>, %arg7: memref<1x1x128xf32, #tpu.memory_space<vmem>>) attributes {dimension_semantics = [#tpu.dimension_semantics<parallel>, #tpu.dimension_semantics<arbitrary>], iteration_bounds = array<i64: 6, 1>, scalar_prefetch = 0 : i64, scratch_operands = 0 : i64, tpu.core_type = #tpu.core_type<tc>, window_params = [{transform_indices = @transform_0, window_bounds = array<i64: 1, 9, 64, 128>}, {pipeline_mode = #tpu.pipeline_mode<synchronous>, transform_indices = @transform_1, window_bounds = array<i64: 9, 1, 128>}, {pipeline_mode = #tpu.pipeline_mode<synchronous>, transform_indices = @transform_2, window_bounds = array<i64: 1, 128>}, {pipeline_mode = #tpu.pipeline_mode<synchronous>, transform_indices = @transform_3, window_bounds = array<i64: 1, 128>}, {transform_indices = @transform_4, window_bounds = array<i64: 1, 64, 128>}, {transform_indices = @transform_5, window_bounds = array<i64: 1, 1, 128>}]} {
    %cst = arith.constant 0.000000e+00 : f32
    %0 = vector.broadcast %cst : f32 to vector<64x128xf32>
    %c0 = arith.constant 0 : index
    %c0_0 = arith.constant 0 : index
    %c0_1 = arith.constant 0 : index
    %c0_2 = arith.constant 0 : index
    %1 = vector.load %arg2[%c0, %c0_0, %c0_1, %c0_2] : memref<1x9x64x128xbf16, #tpu.memory_space<vmem>>, vector<1x1x64x128xbf16>
    %2 = vector.shape_cast %1 : vector<1x1x64x128xbf16> to vector<64x128xbf16>
    %3 = arith.extf %2 : vector<64x128xbf16> to vector<64x128xf32>
    %c0_3 = arith.constant 0 : index
    %c0_4 = arith.constant 0 : index
    %c0_5 = arith.constant 0 : index
    %4 = vector.load %arg3[%c0_3, %c0_4, %c0_5] : memref<9x1x128xf32, #tpu.memory_space<vmem>>, vector<1x1x128xf32>
    %5 = vector.shape_cast %4 : vector<1x1x128xf32> to vector<1x128xf32>
    %6 = vector.broadcast %5 : vector<1x128xf32> to vector<64x128xf32>
    %7 = arith.mulf %3, %6 : vector<64x128xf32>
    %8 = arith.addf %0, %7 : vector<64x128xf32>
    %c0_6 = arith.constant 0 : index
    %c1 = arith.constant 1 : index
    %c0_7 = arith.constant 0 : index
    %c0_8 = arith.constant 0 : index
    %9 = vector.load %arg2[%c0_6, %c1, %c0_7, %c0_8] : memref<1x9x64x128xbf16, #tpu.memory_space<vmem>>, vector<1x1x64x128xbf16>
    %10 = vector.shape_cast %9 : vector<1x1x64x128xbf16> to vector<64x128xbf16>
    %11 = arith.extf %10 : vector<64x128xbf16> to vector<64x128xf32>
    %c1_9 = arith.constant 1 : index
    %c0_10 = arith.constant 0 : index
    %c0_11 = arith.constant 0 : index
    %12 = vector.load %arg3[%c1_9, %c0_10, %c0_11] : memref<9x1x128xf32, #tpu.memory_space<vmem>>, vector<1x1x128xf32>
    %13 = vector.shape_cast %12 : vector<1x1x128xf32> to vector<1x128xf32>
    %14 = vector.broadcast %13 : vector<1x128xf32> to vector<64x128xf32>
    %15 = arith.mulf %11, %14 : vector<64x128xf32>
    %16 = arith.addf %8, %15 : vector<64x128xf32>
    %c0_12 = arith.constant 0 : index
    %c2 = arith.constant 2 : index
    %c0_13 = arith.constant 0 : index
    %c0_14 = arith.constant 0 : index
    %17 = vector.load %arg2[%c0_12, %c2, %c0_13, %c0_14] : memref<1x9x64x128xbf16, #tpu.memory_space<vmem>>, vector<1x1x64x128xbf16>
    %18 = vector.shape_cast %17 : vector<1x1x64x128xbf16> to vector<64x128xbf16>
    %19 = arith.extf %18 : vector<64x128xbf16> to vector<64x128xf32>
    %c2_15 = arith.constant 2 : index
    %c0_16 = arith.constant 0 : index
    %c0_17 = arith.constant 0 : index
    %20 = vector.load %arg3[%c2_15, %c0_16, %c0_17] : memref<9x1x128xf32, #tpu.memory_space<vmem>>, vector<1x1x128xf32>
    %21 = vector.shape_cast %20 : vector<1x1x128xf32> to vector<1x128xf32>
    %22 = vector.broadcast %21 : vector<1x128xf32> to vector<64x128xf32>
    %23 = arith.mulf %19, %22 : vector<64x128xf32>
    %24 = arith.addf %16, %23 : vector<64x128xf32>
    %c0_18 = arith.constant 0 : index
    %c3 = arith.constant 3 : index
    %c0_19 = arith.constant 0 : index
    %c0_20 = arith.constant 0 : index
    %25 = vector.load %arg2[%c0_18, %c3, %c0_19, %c0_20] : memref<1x9x64x128xbf16, #tpu.memory_space<vmem>>, vector<1x1x64x128xbf16>
    %26 = vector.shape_cast %25 : vector<1x1x64x128xbf16> to vector<64x128xbf16>
    %27 = arith.extf %26 : vector<64x128xbf16> to vector<64x128xf32>
    %c3_21 = arith.constant 3 : index
    %c0_22 = arith.constant 0 : index
    %c0_23 = arith.constant 0 : index
    %28 = vector.load %arg3[%c3_21, %c0_22, %c0_23] : memref<9x1x128xf32, #tpu.memory_space<vmem>>, vector<1x1x128xf32>
    %29 = vector.shape_cast %28 : vector<1x1x128xf32> to vector<1x128xf32>
    %30 = vector.broadcast %29 : vector<1x128xf32> to vector<64x128xf32>
    %31 = arith.mulf %27, %30 : vector<64x128xf32>
    %32 = arith.addf %24, %31 : vector<64x128xf32>
    %c0_24 = arith.constant 0 : index
    %c4 = arith.constant 4 : index
    %c0_25 = arith.constant 0 : index
    %c0_26 = arith.constant 0 : index
    %33 = vector.load %arg2[%c0_24, %c4, %c0_25, %c0_26] : memref<1x9x64x128xbf16, #tpu.memory_space<vmem>>, vector<1x1x64x128xbf16>
    %34 = vector.shape_cast %33 : vector<1x1x64x128xbf16> to vector<64x128xbf16>
    %35 = arith.extf %34 : vector<64x128xbf16> to vector<64x128xf32>
    %c4_27 = arith.constant 4 : index
    %c0_28 = arith.constant 0 : index
    %c0_29 = arith.constant 0 : index
    %36 = vector.load %arg3[%c4_27, %c0_28, %c0_29] : memref<9x1x128xf32, #tpu.memory_space<vmem>>, vector<1x1x128xf32>
    %37 = vector.shape_cast %36 : vector<1x1x128xf32> to vector<1x128xf32>
    %38 = vector.broadcast %37 : vector<1x128xf32> to vector<64x128xf32>
    %39 = arith.mulf %35, %38 : vector<64x128xf32>
    %40 = arith.addf %32, %39 : vector<64x128xf32>
    %c0_30 = arith.constant 0 : index
    %c5 = arith.constant 5 : index
    %c0_31 = arith.constant 0 : index
    %c0_32 = arith.constant 0 : index
    %41 = vector.load %arg2[%c0_30, %c5, %c0_31, %c0_32] : memref<1x9x64x128xbf16, #tpu.memory_space<vmem>>, vector<1x1x64x128xbf16>
    %42 = vector.shape_cast %41 : vector<1x1x64x128xbf16> to vector<64x128xbf16>
    %43 = arith.extf %42 : vector<64x128xbf16> to vector<64x128xf32>
    %c5_33 = arith.constant 5 : index
    %c0_34 = arith.constant 0 : index
    %c0_35 = arith.constant 0 : index
    %44 = vector.load %arg3[%c5_33, %c0_34, %c0_35] : memref<9x1x128xf32, #tpu.memory_space<vmem>>, vector<1x1x128xf32>
    %45 = vector.shape_cast %44 : vector<1x1x128xf32> to vector<1x128xf32>
    %46 = vector.broadcast %45 : vector<1x128xf32> to vector<64x128xf32>
    %47 = arith.mulf %43, %46 : vector<64x128xf32>
    %48 = arith.addf %40, %47 : vector<64x128xf32>
    %c0_36 = arith.constant 0 : index
    %c6 = arith.constant 6 : index
    %c0_37 = arith.constant 0 : index
    %c0_38 = arith.constant 0 : index
    %49 = vector.load %arg2[%c0_36, %c6, %c0_37, %c0_38] : memref<1x9x64x128xbf16, #tpu.memory_space<vmem>>, vector<1x1x64x128xbf16>
    %50 = vector.shape_cast %49 : vector<1x1x64x128xbf16> to vector<64x128xbf16>
    %51 = arith.extf %50 : vector<64x128xbf16> to vector<64x128xf32>
    %c6_39 = arith.constant 6 : index
    %c0_40 = arith.constant 0 : index
    %c0_41 = arith.constant 0 : index
    %52 = vector.load %arg3[%c6_39, %c0_40, %c0_41] : memref<9x1x128xf32, #tpu.memory_space<vmem>>, vector<1x1x128xf32>
    %53 = vector.shape_cast %52 : vector<1x1x128xf32> to vector<1x128xf32>
    %54 = vector.broadcast %53 : vector<1x128xf32> to vector<64x128xf32>
    %55 = arith.mulf %51, %54 : vector<64x128xf32>
    %56 = arith.addf %48, %55 : vector<64x128xf32>
    %c0_42 = arith.constant 0 : index
    %c7 = arith.constant 7 : index
    %c0_43 = arith.constant 0 : index
    %c0_44 = arith.constant 0 : index
    %57 = vector.load %arg2[%c0_42, %c7, %c0_43, %c0_44] : memref<1x9x64x128xbf16, #tpu.memory_space<vmem>>, vector<1x1x64x128xbf16>
    %58 = vector.shape_cast %57 : vector<1x1x64x128xbf16> to vector<64x128xbf16>
    %59 = arith.extf %58 : vector<64x128xbf16> to vector<64x128xf32>
    %c7_45 = arith.constant 7 : index
    %c0_46 = arith.constant 0 : index
    %c0_47 = arith.constant 0 : index
    %60 = vector.load %arg3[%c7_45, %c0_46, %c0_47] : memref<9x1x128xf32, #tpu.memory_space<vmem>>, vector<1x1x128xf32>
    %61 = vector.shape_cast %60 : vector<1x1x128xf32> to vector<1x128xf32>
    %62 = vector.broadcast %61 : vector<1x128xf32> to vector<64x128xf32>
    %63 = arith.mulf %59, %62 : vector<64x128xf32>
    %64 = arith.addf %56, %63 : vector<64x128xf32>
    %c0_48 = arith.constant 0 : index
    %c8 = arith.constant 8 : index
    %c0_49 = arith.constant 0 : index
    %c0_50 = arith.constant 0 : index
    %65 = vector.load %arg2[%c0_48, %c8, %c0_49, %c0_50] : memref<1x9x64x128xbf16, #tpu.memory_space<vmem>>, vector<1x1x64x128xbf16>
    %66 = vector.shape_cast %65 : vector<1x1x64x128xbf16> to vector<64x128xbf16>
    %67 = arith.extf %66 : vector<64x128xbf16> to vector<64x128xf32>
    %c8_51 = arith.constant 8 : index
    %c0_52 = arith.constant 0 : index
    %c0_53 = arith.constant 0 : index
    %68 = vector.load %arg3[%c8_51, %c0_52, %c0_53] : memref<9x1x128xf32, #tpu.memory_space<vmem>>, vector<1x1x128xf32>
    %69 = vector.shape_cast %68 : vector<1x1x128xf32> to vector<1x128xf32>
    %70 = vector.broadcast %69 : vector<1x128xf32> to vector<64x128xf32>
    %71 = arith.mulf %67, %70 : vector<64x128xf32>
    %72 = arith.addf %64, %71 : vector<64x128xf32>
    %c0_54 = arith.constant 0 : index
    %c0_55 = arith.constant 0 : index
    %73 = vector.load %arg4[%c0_54, %c0_55] : memref<1x128xf32, #tpu.memory_space<vmem>>, vector<1x128xf32>
    %74 = vector.broadcast %73 : vector<1x128xf32> to vector<64x128xf32>
    %75 = arith.mulf %72, %74 : vector<64x128xf32>
    %c0_56 = arith.constant 0 : index
    %c0_57 = arith.constant 0 : index
    %76 = vector.load %arg5[%c0_56, %c0_57] : memref<1x128xf32, #tpu.memory_space<vmem>>, vector<1x128xf32>
    %77 = vector.broadcast %76 : vector<1x128xf32> to vector<64x128xf32>
    %78 = arith.addf %75, %77 : vector<64x128xf32>
    %79 = arith.negf %78 : vector<64x128xf32>
    %80 = math.exp %79 : vector<64x128xf32>
    %cst_58 = arith.constant 1.000000e+00 : f32
    %81 = vector.broadcast %cst_58 : f32 to vector<64x128xf32>
    %82 = arith.addf %81, %80 : vector<64x128xf32>
    %83 = arith.divf %81, %82 : vector<64x128xf32>
    %84 = arith.mulf %78, %83 : vector<64x128xf32>
    %85 = arith.truncf %84 : vector<64x128xf32> to vector<64x128xbf16>
    %c0_59 = arith.constant 0 : index
    %c0_60 = arith.constant 0 : index
    %c0_61 = arith.constant 0 : index
    %86 = vector.load %arg6[%c0_59, %c0_60, %c0_61] : memref<1x64x128xbf16, #tpu.memory_space<vmem>>, vector<1x64x128xbf16>
    %87 = vector.shape_cast %86 : vector<1x64x128xbf16> to vector<64x128xbf16>
    %88 = vector.shape_cast %85 : vector<64x128xbf16> to vector<1x64x128xbf16>
    tpu.vector_store %arg6[%c0_59, %c0_60, %c0_61], %88 {strides = array<i32>} : memref<1x64x128xbf16, #tpu.memory_space<vmem>>, vector<1x64x128xbf16>,
    %c0_i32 = arith.constant 0 : i32
    %89 = arith.cmpi eq, %arg1, %c0_i32 : i32
    %90 = arith.extui %89 : i1 to i32
    %c0_i32_62 = arith.constant 0 : i32
    %91 = arith.cmpi ne, %90, %c0_i32_62 : i32
    scf.if %91 {
      %cst_72 = arith.constant 0.000000e+00 : f32
      %108 = vector.broadcast %cst_72 : f32 to vector<1x128xf32>
      %c0_73 = arith.constant 0 : index
      %c0_74 = arith.constant 0 : index
      %c0_75 = arith.constant 0 : index
      %109 = vector.load %arg7[%c0_73, %c0_74, %c0_75] : memref<1x1x128xf32, #tpu.memory_space<vmem>>, vector<1x1x128xf32>
      %110 = vector.shape_cast %109 : vector<1x1x128xf32> to vector<1x128xf32>
      %111 = vector.shape_cast %108 : vector<1x128xf32> to vector<1x1x128xf32>
      tpu.vector_store %arg7[%c0_73, %c0_74, %c0_75], %111 {strides = array<i32>} : memref<1x1x128xf32, #tpu.memory_space<vmem>>, vector<1x1x128xf32>,
    } else {
    }
    %c64_i32 = arith.constant 64 : i32
    %92 = arith.muli %arg1, %c64_i32 : i32
    %93 = tpu.iota {dimensions = array<i32: 0>} : vector<64x128xi32>
    %94 = vector.broadcast %92 : i32 to vector<64x128xi32>
    %95 = arith.addi %94, %93 : vector<64x128xi32>
    %c64_i32_63 = arith.constant 64 : i32
    %96 = vector.broadcast %c64_i32_63 : i32 to vector<64x128xi32>
    %97 = arith.cmpi slt, %95, %96 : vector<64x128xi32>
    %cst_64 = arith.constant 0.000000e+00 : f32
    %98 = vector.broadcast %cst_64 : f32 to vector<64x128xf32>
    %99 = arith.select %97, %84, %98 : vector<64x128xi1>, vector<64x128xf32>
    %c0_65 = arith.constant 0 : index
    %c0_66 = arith.constant 0 : index
    %c0_67 = arith.constant 0 : index
    %100 = vector.load %arg7[%c0_65, %c0_66, %c0_67] : memref<1x1x128xf32, #tpu.memory_space<vmem>>, vector<1x1x128xf32>
    %101 = vector.shape_cast %100 : vector<1x1x128xf32> to vector<1x128xf32>
    %cst_68 = arith.constant dense<0.000000e+00> : vector<128xf32>
    %102 = vector.multi_reduction <add>, %99, %cst_68 [0] : vector<64x128xf32> to vector<128xf32>
    %103 = vector.shape_cast %102 : vector<128xf32> to vector<1x128xf32>
    %104 = arith.addf %101, %103 : vector<1x128xf32>
    %c0_69 = arith.constant 0 : index
    %c0_70 = arith.constant 0 : index
    %c0_71 = arith.constant 0 : index
    %105 = vector.load %arg7[%c0_69, %c0_70, %c0_71] : memref<1x1x128xf32, #tpu.memory_space<vmem>>, vector<1x1x128xf32>
    %106 = vector.shape_cast %105 : vector<1x1x128xf32> to vector<1x128xf32>
    %107 = vector.shape_cast %104 : vector<1x128xf32> to vector<1x1x128xf32>
    tpu.vector_store %arg7[%c0_69, %c0_70, %c0_71], %107 {strides = array<i32>} : memref<1x1x128xf32, #tpu.memory_space<vmem>>, vector<1x1x128xf32>,
    return
  }
  func.func @transform_0(%arg0: i32, %arg1: i32) -> (i32, i32, i32, i32) {
    %c0_i32 = arith.constant 0 : i32
    %c0_i32_0 = arith.constant 0 : i32
    %c0_i32_1 = arith.constant 0 : i32
    return %arg0, %c0_i32, %arg1, %c0_i32_0 : i32, i32, i32, i32
  }
  func.func @transform_1(%arg0: i32, %arg1: i32) -> (i32, i32, i32) {
    %c0_i32 = arith.constant 0 : i32
    %c0_i32_0 = arith.constant 0 : i32
    %c0_i32_1 = arith.constant 0 : i32
    %c0_i32_2 = arith.constant 0 : i32
    return %c0_i32, %c0_i32_0, %c0_i32_1 : i32, i32, i32
  }
  func.func @transform_2(%arg0: i32, %arg1: i32) -> (i32, i32) {
    %c0_i32 = arith.constant 0 : i32
    %c0_i32_0 = arith.constant 0 : i32
    %c0_i32_1 = arith.constant 0 : i32
    return %c0_i32, %c0_i32_0 : i32, i32
  }
  func.func @transform_3(%arg0: i32, %arg1: i32) -> (i32, i32) {
    %c0_i32 = arith.constant 0 : i32
    %c0_i32_0 = arith.constant 0 : i32
    %c0_i32_1 = arith.constant 0 : i32
    return %c0_i32, %c0_i32_0 : i32, i32
  }
  func.func @transform_4(%arg0: i32, %arg1: i32) -> (i32, i32, i32) {
    %c0_i32 = arith.constant 0 : i32
    %c0_i32_0 = arith.constant 0 : i32
    return %arg0, %arg1, %c0_i32 : i32, i32, i32
  }
  func.func @transform_5(%arg0: i32, %arg1: i32) -> (i32, i32, i32) {
    %c0_i32 = arith.constant 0 : i32
    %c0_i32_0 = arith.constant 0 : i32
    %c0_i32_1 = arith.constant 0 : i32
    return %arg0, %c0_i32, %c0_i32_0 : i32, i32, i32
  }
}

module attributes {stable_mosaic.version = 11 : i64} {
  func.func @_mm_kernel(%arg0: i32, %arg1: i32, %arg2: i32, %arg3: i32, %arg4: memref<1x64x128xbf16, #tpu.memory_space<vmem>>, %arg5: memref<128x128xbf16, #tpu.memory_space<vmem>>, %arg6: memref<1x128xf32, #tpu.memory_space<vmem>>, %arg7: memref<1x128xf32, #tpu.memory_space<vmem>>, %arg8: memref<1x64x128xbf16, #tpu.memory_space<vmem>>, %arg9: memref<64x128xf32, #tpu.memory_space<vmem>>) attributes {dimension_semantics = [#tpu.dimension_semantics<parallel>, #tpu.dimension_semantics<parallel>, #tpu.dimension_semantics<parallel>, #tpu.dimension_semantics<arbitrary>], iteration_bounds = array<i64: 6, 1, 1, 1>, scalar_prefetch = 0 : i64, scratch_operands = 1 : i64, tpu.core_type = #tpu.core_type<tc>, window_params = [{transform_indices = @transform_0, window_bounds = array<i64: 1, 64, 128>}, {transform_indices = @transform_1, window_bounds = array<i64: 128, 128>}, {transform_indices = @transform_2, window_bounds = array<i64: 1, 128>}, {transform_indices = @transform_3, window_bounds = array<i64: 1, 128>}, {transform_indices = @transform_4, window_bounds = array<i64: 1, 64, 128>}]} {
    %c0_i32 = arith.constant 0 : i32
    %0 = arith.cmpi eq, %arg3, %c0_i32 : i32
    %1 = arith.extui %0 : i1 to i32
    %c0_i32_0 = arith.constant 0 : i32
    %2 = arith.cmpi ne, %1, %c0_i32_0 : i32
    scf.if %2 {
      %cst_11 = arith.constant 0.000000e+00 : f32
      %13 = vector.broadcast %cst_11 : f32 to vector<64x128xf32>
      %c0_12 = arith.constant 0 : index
      %c0_13 = arith.constant 0 : index
      %14 = vector.load %arg9[%c0_12, %c0_13] : memref<64x128xf32, #tpu.memory_space<vmem>>, vector<64x128xf32>
      tpu.vector_store %arg9[%c0_12, %c0_13], %13 {strides = array<i32>} : memref<64x128xf32, #tpu.memory_space<vmem>>, vector<64x128xf32>,
    } else {
    }
    %c0 = arith.constant 0 : index
    %c0_1 = arith.constant 0 : index
    %c0_2 = arith.constant 0 : index
    %3 = vector.load %arg4[%c0, %c0_1, %c0_2] : memref<1x64x128xbf16, #tpu.memory_space<vmem>>, vector<1x64x128xbf16>
    %4 = vector.shape_cast %3 : vector<1x64x128xbf16> to vector<64x128xbf16>
    %c0_3 = arith.constant 0 : index
    %c0_4 = arith.constant 0 : index
    %5 = vector.load %arg9[%c0_3, %c0_4] : memref<64x128xf32, #tpu.memory_space<vmem>>, vector<64x128xf32>
    %c0_5 = arith.constant 0 : index
    %c0_6 = arith.constant 0 : index
    %6 = vector.load %arg5[%c0_5, %c0_6] : memref<128x128xbf16, #tpu.memory_space<vmem>>, vector<128x128xbf16>
    %cst = arith.constant dense<0.000000e+00> : vector<64x128xf32>
    %7 = tpu.matmul %4, %6, %cst {dimension_numbers = #tpu.dot_dimension_numbers<[1], [0], [0], [1], [0, 0, 1, 1], [], []>} : vector<64x128xbf16>, vector<128x128xbf16>, vector<64x128xf32> -> vector<64x128xf32>
    %8 = arith.addf %5, %7 : vector<64x128xf32>
    %c0_7 = arith.constant 0 : index
    %c0_8 = arith.constant 0 : index
    %9 = vector.load %arg9[%c0_7, %c0_8] : memref<64x128xf32, #tpu.memory_space<vmem>>, vector<64x128xf32>
    tpu.vector_store %arg9[%c0_7, %c0_8], %8 {strides = array<i32>} : memref<64x128xf32, #tpu.memory_space<vmem>>, vector<64x128xf32>,
    %c0_i32_9 = arith.constant 0 : i32
    %10 = arith.cmpi eq, %arg3, %c0_i32_9 : i32
    %11 = arith.extui %10 : i1 to i32
    %c0_i32_10 = arith.constant 0 : i32
    %12 = arith.cmpi ne, %11, %c0_i32_10 : i32
    scf.if %12 {
      %c0_11 = arith.constant 0 : index
      %c0_12 = arith.constant 0 : index
      %13 = vector.load %arg9[%c0_11, %c0_12] : memref<64x128xf32, #tpu.memory_space<vmem>>, vector<64x128xf32>
      %c0_13 = arith.constant 0 : index
      %c0_14 = arith.constant 0 : index
      %14 = vector.load %arg6[%c0_13, %c0_14] : memref<1x128xf32, #tpu.memory_space<vmem>>, vector<1x128xf32>
      %15 = vector.broadcast %14 : vector<1x128xf32> to vector<64x128xf32>
      %16 = arith.mulf %13, %15 : vector<64x128xf32>
      %c0_15 = arith.constant 0 : index
      %c0_16 = arith.constant 0 : index
      %17 = vector.load %arg7[%c0_15, %c0_16] : memref<1x128xf32, #tpu.memory_space<vmem>>, vector<1x128xf32>
      %18 = vector.broadcast %17 : vector<1x128xf32> to vector<64x128xf32>
      %19 = arith.addf %16, %18 : vector<64x128xf32>
      %20 = arith.negf %19 : vector<64x128xf32>
      %21 = math.exp %20 : vector<64x128xf32>
      %cst_17 = arith.constant 1.000000e+00 : f32
      %22 = vector.broadcast %cst_17 : f32 to vector<64x128xf32>
      %23 = arith.addf %22, %21 : vector<64x128xf32>
      %24 = arith.divf %22, %23 : vector<64x128xf32>
      %25 = arith.mulf %19, %24 : vector<64x128xf32>
      %26 = arith.truncf %25 : vector<64x128xf32> to vector<64x128xbf16>
      %c0_18 = arith.constant 0 : index
      %c0_19 = arith.constant 0 : index
      %c0_20 = arith.constant 0 : index
      %27 = vector.load %arg8[%c0_18, %c0_19, %c0_20] : memref<1x64x128xbf16, #tpu.memory_space<vmem>>, vector<1x64x128xbf16>
      %28 = vector.shape_cast %27 : vector<1x64x128xbf16> to vector<64x128xbf16>
      %29 = vector.shape_cast %26 : vector<64x128xbf16> to vector<1x64x128xbf16>
      tpu.vector_store %arg8[%c0_18, %c0_19, %c0_20], %29 {strides = array<i32>} : memref<1x64x128xbf16, #tpu.memory_space<vmem>>, vector<1x64x128xbf16>,
    } else {
    }
    return
  }
  func.func @transform_0(%arg0: i32, %arg1: i32, %arg2: i32, %arg3: i32) -> (i32, i32, i32) {
    %c0_i32 = arith.constant 0 : i32
    return %arg0, %arg1, %arg3 : i32, i32, i32
  }
  func.func @transform_1(%arg0: i32, %arg1: i32, %arg2: i32, %arg3: i32) -> (i32, i32) {
    %c0_i32 = arith.constant 0 : i32
    return %arg3, %arg2 : i32, i32
  }
  func.func @transform_2(%arg0: i32, %arg1: i32, %arg2: i32, %arg3: i32) -> (i32, i32) {
    %c0_i32 = arith.constant 0 : i32
    %c0_i32_0 = arith.constant 0 : i32
    return %c0_i32, %arg2 : i32, i32
  }
  func.func @transform_3(%arg0: i32, %arg1: i32, %arg2: i32, %arg3: i32) -> (i32, i32) {
    %c0_i32 = arith.constant 0 : i32
    %c0_i32_0 = arith.constant 0 : i32
    return %c0_i32, %arg2 : i32, i32
  }
  func.func @transform_4(%arg0: i32, %arg1: i32, %arg2: i32, %arg3: i32) -> (i32, i32, i32) {
    %c0_i32 = arith.constant 0 : i32
    return %arg0, %arg1, %arg2 : i32, i32, i32
  }
}

module attributes {stable_mosaic.version = 11 : i64} {
  func.func @_mm_kernel(%arg0: i32, %arg1: i32, %arg2: i32, %arg3: i32, %arg4: memref<1x64x128xbf16, #tpu.memory_space<vmem>>, %arg5: memref<128x128xbf16, #tpu.memory_space<vmem>>, %arg6: memref<1x128xf32, #tpu.memory_space<vmem>>, %arg7: memref<1x128xf32, #tpu.memory_space<vmem>>, %arg8: memref<1x1x128xf32, #tpu.memory_space<vmem>>, %arg9: memref<1x64x128xbf16, #tpu.memory_space<vmem>>, %arg10: memref<64x128xf32, #tpu.memory_space<vmem>>) attributes {dimension_semantics = [#tpu.dimension_semantics<parallel>, #tpu.dimension_semantics<parallel>, #tpu.dimension_semantics<parallel>, #tpu.dimension_semantics<arbitrary>], iteration_bounds = array<i64: 6, 1, 1, 1>, scalar_prefetch = 0 : i64, scratch_operands = 1 : i64, tpu.core_type = #tpu.core_type<tc>, window_params = [{transform_indices = @transform_0, window_bounds = array<i64: 1, 64, 128>}, {transform_indices = @transform_1, window_bounds = array<i64: 128, 128>}, {transform_indices = @transform_2, window_bounds = array<i64: 1, 128>}, {transform_indices = @transform_3, window_bounds = array<i64: 1, 128>}, {transform_indices = @transform_4, window_bounds = array<i64: 1, 1, 128>}, {transform_indices = @transform_5, window_bounds = array<i64: 1, 64, 128>}]} {
    %c0_i32 = arith.constant 0 : i32
    %0 = arith.cmpi eq, %arg3, %c0_i32 : i32
    %1 = arith.extui %0 : i1 to i32
    %c0_i32_0 = arith.constant 0 : i32
    %2 = arith.cmpi ne, %1, %c0_i32_0 : i32
    scf.if %2 {
      %cst_14 = arith.constant 0.000000e+00 : f32
      %19 = vector.broadcast %cst_14 : f32 to vector<64x128xf32>
      %c0_15 = arith.constant 0 : index
      %c0_16 = arith.constant 0 : index
      %20 = vector.load %arg10[%c0_15, %c0_16] : memref<64x128xf32, #tpu.memory_space<vmem>>, vector<64x128xf32>
      tpu.vector_store %arg10[%c0_15, %c0_16], %19 {strides = array<i32>} : memref<64x128xf32, #tpu.memory_space<vmem>>, vector<64x128xf32>,
    } else {
    }
    %c0 = arith.constant 0 : index
    %c0_1 = arith.constant 0 : index
    %c0_2 = arith.constant 0 : index
    %3 = vector.load %arg4[%c0, %c0_1, %c0_2] : memref<1x64x128xbf16, #tpu.memory_space<vmem>>, vector<1x64x128xbf16>
    %4 = vector.shape_cast %3 : vector<1x64x128xbf16> to vector<64x128xbf16>
    %5 = arith.extf %4 : vector<64x128xbf16> to vector<64x128xf32>
    %c0_3 = arith.constant 0 : index
    %c0_4 = arith.constant 0 : index
    %c0_5 = arith.constant 0 : index
    %6 = vector.load %arg8[%c0_3, %c0_4, %c0_5] : memref<1x1x128xf32, #tpu.memory_space<vmem>>, vector<1x1x128xf32>
    %7 = vector.shape_cast %6 : vector<1x1x128xf32> to vector<1x128xf32>
    %8 = vector.broadcast %7 : vector<1x128xf32> to vector<64x128xf32>
    %9 = arith.mulf %5, %8 : vector<64x128xf32>
    %10 = arith.truncf %9 : vector<64x128xf32> to vector<64x128xbf16>
    %c0_6 = arith.constant 0 : index
    %c0_7 = arith.constant 0 : index
    %11 = vector.load %arg10[%c0_6, %c0_7] : memref<64x128xf32, #tpu.memory_space<vmem>>, vector<64x128xf32>
    %c0_8 = arith.constant 0 : index
    %c0_9 = arith.constant 0 : index
    %12 = vector.load %arg5[%c0_8, %c0_9] : memref<128x128xbf16, #tpu.memory_space<vmem>>, vector<128x128xbf16>
    %cst = arith.constant dense<0.000000e+00> : vector<64x128xf32>
    %13 = tpu.matmul %10, %12, %cst {dimension_numbers = #tpu.dot_dimension_numbers<[1], [0], [0], [1], [0, 0, 1, 1], [], []>} : vector<64x128xbf16>, vector<128x128xbf16>, vector<64x128xf32> -> vector<64x128xf32>
    %14 = arith.addf %11, %13 : vector<64x128xf32>
    %c0_10 = arith.constant 0 : index
    %c0_11 = arith.constant 0 : index
    %15 = vector.load %arg10[%c0_10, %c0_11] : memref<64x128xf32, #tpu.memory_space<vmem>>, vector<64x128xf32>
    tpu.vector_store %arg10[%c0_10, %c0_11], %14 {strides = array<i32>} : memref<64x128xf32, #tpu.memory_space<vmem>>, vector<64x128xf32>,
    %c0_i32_12 = arith.constant 0 : i32
    %16 = arith.cmpi eq, %arg3, %c0_i32_12 : i32
    %17 = arith.extui %16 : i1 to i32
    %c0_i32_13 = arith.constant 0 : i32
    %18 = arith.cmpi ne, %17, %c0_i32_13 : i32
    scf.if %18 {
      %c0_14 = arith.constant 0 : index
      %c0_15 = arith.constant 0 : index
      %19 = vector.load %arg10[%c0_14, %c0_15] : memref<64x128xf32, #tpu.memory_space<vmem>>, vector<64x128xf32>
      %c0_16 = arith.constant 0 : index
      %c0_17 = arith.constant 0 : index
      %20 = vector.load %arg6[%c0_16, %c0_17] : memref<1x128xf32, #tpu.memory_space<vmem>>, vector<1x128xf32>
      %21 = vector.broadcast %20 : vector<1x128xf32> to vector<64x128xf32>
      %22 = arith.mulf %19, %21 : vector<64x128xf32>
      %c0_18 = arith.constant 0 : index
      %c0_19 = arith.constant 0 : index
      %23 = vector.load %arg7[%c0_18, %c0_19] : memref<1x128xf32, #tpu.memory_space<vmem>>, vector<1x128xf32>
      %24 = vector.broadcast %23 : vector<1x128xf32> to vector<64x128xf32>
      %25 = arith.addf %22, %24 : vector<64x128xf32>
      %26 = arith.truncf %25 : vector<64x128xf32> to vector<64x128xbf16>
      %c0_20 = arith.constant 0 : index
      %c0_21 = arith.constant 0 : index
      %c0_22 = arith.constant 0 : index
      %27 = vector.load %arg9[%c0_20, %c0_21, %c0_22] : memref<1x64x128xbf16, #tpu.memory_space<vmem>>, vector<1x64x128xbf16>
      %28 = vector.shape_cast %27 : vector<1x64x128xbf16> to vector<64x128xbf16>
      %29 = vector.shape_cast %26 : vector<64x128xbf16> to vector<1x64x128xbf16>
      tpu.vector_store %arg9[%c0_20, %c0_21, %c0_22], %29 {strides = array<i32>} : memref<1x64x128xbf16, #tpu.memory_space<vmem>>, vector<1x64x128xbf16>,
    } else {
    }
    return
  }
  func.func @transform_0(%arg0: i32, %arg1: i32, %arg2: i32, %arg3: i32) -> (i32, i32, i32) {
    %c0_i32 = arith.constant 0 : i32
    return %arg0, %arg1, %arg3 : i32, i32, i32
  }
  func.func @transform_1(%arg0: i32, %arg1: i32, %arg2: i32, %arg3: i32) -> (i32, i32) {
    %c0_i32 = arith.constant 0 : i32
    return %arg3, %arg2 : i32, i32
  }
  func.func @transform_2(%arg0: i32, %arg1: i32, %arg2: i32, %arg3: i32) -> (i32, i32) {
    %c0_i32 = arith.constant 0 : i32
    %c0_i32_0 = arith.constant 0 : i32
    return %c0_i32, %arg2 : i32, i32
  }
  func.func @transform_3(%arg0: i32, %arg1: i32, %arg2: i32, %arg3: i32) -> (i32, i32) {
    %c0_i32 = arith.constant 0 : i32
    %c0_i32_0 = arith.constant 0 : i32
    return %c0_i32, %arg2 : i32, i32
  }
  func.func @transform_4(%arg0: i32, %arg1: i32, %arg2: i32, %arg3: i32) -> (i32, i32, i32) {
    %c0_i32 = arith.constant 0 : i32
    %c0_i32_0 = arith.constant 0 : i32
    return %arg0, %c0_i32, %arg3 : i32, i32, i32
  }
  func.func @transform_5(%arg0: i32, %arg1: i32, %arg2: i32, %arg3: i32) -> (i32, i32, i32) {
    %c0_i32 = arith.constant 0 : i32
    return %arg0, %arg1, %arg2 : i32, i32, i32
  }
}

module attributes {stable_mosaic.version = 11 : i64} {
  func.func @_dw_kernel(%arg0: i32, %arg1: i32, %arg2: memref<1x9x16x128xbf16, #tpu.memory_space<vmem>>, %arg3: memref<9x1x128xf32, #tpu.memory_space<vmem>>, %arg4: memref<1x128xf32, #tpu.memory_space<vmem>>, %arg5: memref<1x128xf32, #tpu.memory_space<vmem>>, %arg6: memref<1x16x128xbf16, #tpu.memory_space<vmem>>, %arg7: memref<1x1x128xf32, #tpu.memory_space<vmem>>) attributes {dimension_semantics = [#tpu.dimension_semantics<parallel>, #tpu.dimension_semantics<arbitrary>], iteration_bounds = array<i64: 6, 1>, scalar_prefetch = 0 : i64, scratch_operands = 0 : i64, tpu.core_type = #tpu.core_type<tc>, window_params = [{transform_indices = @transform_0, window_bounds = array<i64: 1, 9, 16, 128>}, {pipeline_mode = #tpu.pipeline_mode<synchronous>, transform_indices = @transform_1, window_bounds = array<i64: 9, 1, 128>}, {pipeline_mode = #tpu.pipeline_mode<synchronous>, transform_indices = @transform_2, window_bounds = array<i64: 1, 128>}, {pipeline_mode = #tpu.pipeline_mode<synchronous>, transform_indices = @transform_3, window_bounds = array<i64: 1, 128>}, {transform_indices = @transform_4, window_bounds = array<i64: 1, 16, 128>}, {transform_indices = @transform_5, window_bounds = array<i64: 1, 1, 128>}]} {
    %cst = arith.constant 0.000000e+00 : f32
    %0 = vector.broadcast %cst : f32 to vector<16x128xf32>
    %c0 = arith.constant 0 : index
    %c0_0 = arith.constant 0 : index
    %c0_1 = arith.constant 0 : index
    %c0_2 = arith.constant 0 : index
    %1 = vector.load %arg2[%c0, %c0_0, %c0_1, %c0_2] : memref<1x9x16x128xbf16, #tpu.memory_space<vmem>>, vector<1x1x16x128xbf16>
    %2 = vector.shape_cast %1 : vector<1x1x16x128xbf16> to vector<16x128xbf16>
    %3 = arith.extf %2 : vector<16x128xbf16> to vector<16x128xf32>
    %c0_3 = arith.constant 0 : index
    %c0_4 = arith.constant 0 : index
    %c0_5 = arith.constant 0 : index
    %4 = vector.load %arg3[%c0_3, %c0_4, %c0_5] : memref<9x1x128xf32, #tpu.memory_space<vmem>>, vector<1x1x128xf32>
    %5 = vector.shape_cast %4 : vector<1x1x128xf32> to vector<1x128xf32>
    %6 = vector.broadcast %5 : vector<1x128xf32> to vector<16x128xf32>
    %7 = arith.mulf %3, %6 : vector<16x128xf32>
    %8 = arith.addf %0, %7 : vector<16x128xf32>
    %c0_6 = arith.constant 0 : index
    %c1 = arith.constant 1 : index
    %c0_7 = arith.constant 0 : index
    %c0_8 = arith.constant 0 : index
    %9 = vector.load %arg2[%c0_6, %c1, %c0_7, %c0_8] : memref<1x9x16x128xbf16, #tpu.memory_space<vmem>>, vector<1x1x16x128xbf16>
    %10 = vector.shape_cast %9 : vector<1x1x16x128xbf16> to vector<16x128xbf16>
    %11 = arith.extf %10 : vector<16x128xbf16> to vector<16x128xf32>
    %c1_9 = arith.constant 1 : index
    %c0_10 = arith.constant 0 : index
    %c0_11 = arith.constant 0 : index
    %12 = vector.load %arg3[%c1_9, %c0_10, %c0_11] : memref<9x1x128xf32, #tpu.memory_space<vmem>>, vector<1x1x128xf32>
    %13 = vector.shape_cast %12 : vector<1x1x128xf32> to vector<1x128xf32>
    %14 = vector.broadcast %13 : vector<1x128xf32> to vector<16x128xf32>
    %15 = arith.mulf %11, %14 : vector<16x128xf32>
    %16 = arith.addf %8, %15 : vector<16x128xf32>
    %c0_12 = arith.constant 0 : index
    %c2 = arith.constant 2 : index
    %c0_13 = arith.constant 0 : index
    %c0_14 = arith.constant 0 : index
    %17 = vector.load %arg2[%c0_12, %c2, %c0_13, %c0_14] : memref<1x9x16x128xbf16, #tpu.memory_space<vmem>>, vector<1x1x16x128xbf16>
    %18 = vector.shape_cast %17 : vector<1x1x16x128xbf16> to vector<16x128xbf16>
    %19 = arith.extf %18 : vector<16x128xbf16> to vector<16x128xf32>
    %c2_15 = arith.constant 2 : index
    %c0_16 = arith.constant 0 : index
    %c0_17 = arith.constant 0 : index
    %20 = vector.load %arg3[%c2_15, %c0_16, %c0_17] : memref<9x1x128xf32, #tpu.memory_space<vmem>>, vector<1x1x128xf32>
    %21 = vector.shape_cast %20 : vector<1x1x128xf32> to vector<1x128xf32>
    %22 = vector.broadcast %21 : vector<1x128xf32> to vector<16x128xf32>
    %23 = arith.mulf %19, %22 : vector<16x128xf32>
    %24 = arith.addf %16, %23 : vector<16x128xf32>
    %c0_18 = arith.constant 0 : index
    %c3 = arith.constant 3 : index
    %c0_19 = arith.constant 0 : index
    %c0_20 = arith.constant 0 : index
    %25 = vector.load %arg2[%c0_18, %c3, %c0_19, %c0_20] : memref<1x9x16x128xbf16, #tpu.memory_space<vmem>>, vector<1x1x16x128xbf16>
    %26 = vector.shape_cast %25 : vector<1x1x16x128xbf16> to vector<16x128xbf16>
    %27 = arith.extf %26 : vector<16x128xbf16> to vector<16x128xf32>
    %c3_21 = arith.constant 3 : index
    %c0_22 = arith.constant 0 : index
    %c0_23 = arith.constant 0 : index
    %28 = vector.load %arg3[%c3_21, %c0_22, %c0_23] : memref<9x1x128xf32, #tpu.memory_space<vmem>>, vector<1x1x128xf32>
    %29 = vector.shape_cast %28 : vector<1x1x128xf32> to vector<1x128xf32>
    %30 = vector.broadcast %29 : vector<1x128xf32> to vector<16x128xf32>
    %31 = arith.mulf %27, %30 : vector<16x128xf32>
    %32 = arith.addf %24, %31 : vector<16x128xf32>
    %c0_24 = arith.constant 0 : index
    %c4 = arith.constant 4 : index
    %c0_25 = arith.constant 0 : index
    %c0_26 = arith.constant 0 : index
    %33 = vector.load %arg2[%c0_24, %c4, %c0_25, %c0_26] : memref<1x9x16x128xbf16, #tpu.memory_space<vmem>>, vector<1x1x16x128xbf16>
    %34 = vector.shape_cast %33 : vector<1x1x16x128xbf16> to vector<16x128xbf16>
    %35 = arith.extf %34 : vector<16x128xbf16> to vector<16x128xf32>
    %c4_27 = arith.constant 4 : index
    %c0_28 = arith.constant 0 : index
    %c0_29 = arith.constant 0 : index
    %36 = vector.load %arg3[%c4_27, %c0_28, %c0_29] : memref<9x1x128xf32, #tpu.memory_space<vmem>>, vector<1x1x128xf32>
    %37 = vector.shape_cast %36 : vector<1x1x128xf32> to vector<1x128xf32>
    %38 = vector.broadcast %37 : vector<1x128xf32> to vector<16x128xf32>
    %39 = arith.mulf %35, %38 : vector<16x128xf32>
    %40 = arith.addf %32, %39 : vector<16x128xf32>
    %c0_30 = arith.constant 0 : index
    %c5 = arith.constant 5 : index
    %c0_31 = arith.constant 0 : index
    %c0_32 = arith.constant 0 : index
    %41 = vector.load %arg2[%c0_30, %c5, %c0_31, %c0_32] : memref<1x9x16x128xbf16, #tpu.memory_space<vmem>>, vector<1x1x16x128xbf16>
    %42 = vector.shape_cast %41 : vector<1x1x16x128xbf16> to vector<16x128xbf16>
    %43 = arith.extf %42 : vector<16x128xbf16> to vector<16x128xf32>
    %c5_33 = arith.constant 5 : index
    %c0_34 = arith.constant 0 : index
    %c0_35 = arith.constant 0 : index
    %44 = vector.load %arg3[%c5_33, %c0_34, %c0_35] : memref<9x1x128xf32, #tpu.memory_space<vmem>>, vector<1x1x128xf32>
    %45 = vector.shape_cast %44 : vector<1x1x128xf32> to vector<1x128xf32>
    %46 = vector.broadcast %45 : vector<1x128xf32> to vector<16x128xf32>
    %47 = arith.mulf %43, %46 : vector<16x128xf32>
    %48 = arith.addf %40, %47 : vector<16x128xf32>
    %c0_36 = arith.constant 0 : index
    %c6 = arith.constant 6 : index
    %c0_37 = arith.constant 0 : index
    %c0_38 = arith.constant 0 : index
    %49 = vector.load %arg2[%c0_36, %c6, %c0_37, %c0_38] : memref<1x9x16x128xbf16, #tpu.memory_space<vmem>>, vector<1x1x16x128xbf16>
    %50 = vector.shape_cast %49 : vector<1x1x16x128xbf16> to vector<16x128xbf16>
    %51 = arith.extf %50 : vector<16x128xbf16> to vector<16x128xf32>
    %c6_39 = arith.constant 6 : index
    %c0_40 = arith.constant 0 : index
    %c0_41 = arith.constant 0 : index
    %52 = vector.load %arg3[%c6_39, %c0_40, %c0_41] : memref<9x1x128xf32, #tpu.memory_space<vmem>>, vector<1x1x128xf32>
    %53 = vector.shape_cast %52 : vector<1x1x128xf32> to vector<1x128xf32>
    %54 = vector.broadcast %53 : vector<1x128xf32> to vector<16x128xf32>
    %55 = arith.mulf %51, %54 : vector<16x128xf32>
    %56 = arith.addf %48, %55 : vector<16x128xf32>
    %c0_42 = arith.constant 0 : index
    %c7 = arith.constant 7 : index
    %c0_43 = arith.constant 0 : index
    %c0_44 = arith.constant 0 : index
    %57 = vector.load %arg2[%c0_42, %c7, %c0_43, %c0_44] : memref<1x9x16x128xbf16, #tpu.memory_space<vmem>>, vector<1x1x16x128xbf16>
    %58 = vector.shape_cast %57 : vector<1x1x16x128xbf16> to vector<16x128xbf16>
    %59 = arith.extf %58 : vector<16x128xbf16> to vector<16x128xf32>
    %c7_45 = arith.constant 7 : index
    %c0_46 = arith.constant 0 : index
    %c0_47 = arith.constant 0 : index
    %60 = vector.load %arg3[%c7_45, %c0_46, %c0_47] : memref<9x1x128xf32, #tpu.memory_space<vmem>>, vector<1x1x128xf32>
    %61 = vector.shape_cast %60 : vector<1x1x128xf32> to vector<1x128xf32>
    %62 = vector.broadcast %61 : vector<1x128xf32> to vector<16x128xf32>
    %63 = arith.mulf %59, %62 : vector<16x128xf32>
    %64 = arith.addf %56, %63 : vector<16x128xf32>
    %c0_48 = arith.constant 0 : index
    %c8 = arith.constant 8 : index
    %c0_49 = arith.constant 0 : index
    %c0_50 = arith.constant 0 : index
    %65 = vector.load %arg2[%c0_48, %c8, %c0_49, %c0_50] : memref<1x9x16x128xbf16, #tpu.memory_space<vmem>>, vector<1x1x16x128xbf16>
    %66 = vector.shape_cast %65 : vector<1x1x16x128xbf16> to vector<16x128xbf16>
    %67 = arith.extf %66 : vector<16x128xbf16> to vector<16x128xf32>
    %c8_51 = arith.constant 8 : index
    %c0_52 = arith.constant 0 : index
    %c0_53 = arith.constant 0 : index
    %68 = vector.load %arg3[%c8_51, %c0_52, %c0_53] : memref<9x1x128xf32, #tpu.memory_space<vmem>>, vector<1x1x128xf32>
    %69 = vector.shape_cast %68 : vector<1x1x128xf32> to vector<1x128xf32>
    %70 = vector.broadcast %69 : vector<1x128xf32> to vector<16x128xf32>
    %71 = arith.mulf %67, %70 : vector<16x128xf32>
    %72 = arith.addf %64, %71 : vector<16x128xf32>
    %c0_54 = arith.constant 0 : index
    %c0_55 = arith.constant 0 : index
    %73 = vector.load %arg4[%c0_54, %c0_55] : memref<1x128xf32, #tpu.memory_space<vmem>>, vector<1x128xf32>
    %74 = vector.broadcast %73 : vector<1x128xf32> to vector<16x128xf32>
    %75 = arith.mulf %72, %74 : vector<16x128xf32>
    %c0_56 = arith.constant 0 : index
    %c0_57 = arith.constant 0 : index
    %76 = vector.load %arg5[%c0_56, %c0_57] : memref<1x128xf32, #tpu.memory_space<vmem>>, vector<1x128xf32>
    %77 = vector.broadcast %76 : vector<1x128xf32> to vector<16x128xf32>
    %78 = arith.addf %75, %77 : vector<16x128xf32>
    %79 = arith.negf %78 : vector<16x128xf32>
    %80 = math.exp %79 : vector<16x128xf32>
    %cst_58 = arith.constant 1.000000e+00 : f32
    %81 = vector.broadcast %cst_58 : f32 to vector<16x128xf32>
    %82 = arith.addf %81, %80 : vector<16x128xf32>
    %83 = arith.divf %81, %82 : vector<16x128xf32>
    %84 = arith.mulf %78, %83 : vector<16x128xf32>
    %85 = arith.truncf %84 : vector<16x128xf32> to vector<16x128xbf16>
    %c0_59 = arith.constant 0 : index
    %c0_60 = arith.constant 0 : index
    %c0_61 = arith.constant 0 : index
    %86 = vector.load %arg6[%c0_59, %c0_60, %c0_61] : memref<1x16x128xbf16, #tpu.memory_space<vmem>>, vector<1x16x128xbf16>
    %87 = vector.shape_cast %86 : vector<1x16x128xbf16> to vector<16x128xbf16>
    %88 = vector.shape_cast %85 : vector<16x128xbf16> to vector<1x16x128xbf16>
    tpu.vector_store %arg6[%c0_59, %c0_60, %c0_61], %88 {strides = array<i32>} : memref<1x16x128xbf16, #tpu.memory_space<vmem>>, vector<1x16x128xbf16>,
    %c0_i32 = arith.constant 0 : i32
    %89 = arith.cmpi eq, %arg1, %c0_i32 : i32
    %90 = arith.extui %89 : i1 to i32
    %c0_i32_62 = arith.constant 0 : i32
    %91 = arith.cmpi ne, %90, %c0_i32_62 : i32
    scf.if %91 {
      %cst_72 = arith.constant 0.000000e+00 : f32
      %108 = vector.broadcast %cst_72 : f32 to vector<1x128xf32>
      %c0_73 = arith.constant 0 : index
      %c0_74 = arith.constant 0 : index
      %c0_75 = arith.constant 0 : index
      %109 = vector.load %arg7[%c0_73, %c0_74, %c0_75] : memref<1x1x128xf32, #tpu.memory_space<vmem>>, vector<1x1x128xf32>
      %110 = vector.shape_cast %109 : vector<1x1x128xf32> to vector<1x128xf32>
      %111 = vector.shape_cast %108 : vector<1x128xf32> to vector<1x1x128xf32>
      tpu.vector_store %arg7[%c0_73, %c0_74, %c0_75], %111 {strides = array<i32>} : memref<1x1x128xf32, #tpu.memory_space<vmem>>, vector<1x1x128xf32>,
    } else {
    }
    %c16_i32 = arith.constant 16 : i32
    %92 = arith.muli %arg1, %c16_i32 : i32
    %93 = tpu.iota {dimensions = array<i32: 0>} : vector<16x128xi32>
    %94 = vector.broadcast %92 : i32 to vector<16x128xi32>
    %95 = arith.addi %94, %93 : vector<16x128xi32>
    %c16_i32_63 = arith.constant 16 : i32
    %96 = vector.broadcast %c16_i32_63 : i32 to vector<16x128xi32>
    %97 = arith.cmpi slt, %95, %96 : vector<16x128xi32>
    %cst_64 = arith.constant 0.000000e+00 : f32
    %98 = vector.broadcast %cst_64 : f32 to vector<16x128xf32>
    %99 = arith.select %97, %84, %98 : vector<16x128xi1>, vector<16x128xf32>
    %c0_65 = arith.constant 0 : index
    %c0_66 = arith.constant 0 : index
    %c0_67 = arith.constant 0 : index
    %100 = vector.load %arg7[%c0_65, %c0_66, %c0_67] : memref<1x1x128xf32, #tpu.memory_space<vmem>>, vector<1x1x128xf32>
    %101 = vector.shape_cast %100 : vector<1x1x128xf32> to vector<1x128xf32>
    %cst_68 = arith.constant dense<0.000000e+00> : vector<128xf32>
    %102 = vector.multi_reduction <add>, %99, %cst_68 [0] : vector<16x128xf32> to vector<128xf32>
    %103 = vector.shape_cast %102 : vector<128xf32> to vector<1x128xf32>
    %104 = arith.addf %101, %103 : vector<1x128xf32>
    %c0_69 = arith.constant 0 : index
    %c0_70 = arith.constant 0 : index
    %c0_71 = arith.constant 0 : index
    %105 = vector.load %arg7[%c0_69, %c0_70, %c0_71] : memref<1x1x128xf32, #tpu.memory_space<vmem>>, vector<1x1x128xf32>
    %106 = vector.shape_cast %105 : vector<1x1x128xf32> to vector<1x128xf32>
    %107 = vector.shape_cast %104 : vector<1x128xf32> to vector<1x1x128xf32>
    tpu.vector_store %arg7[%c0_69, %c0_70, %c0_71], %107 {strides = array<i32>} : memref<1x1x128xf32, #tpu.memory_space<vmem>>, vector<1x1x128xf32>,
    return
  }
  func.func @transform_0(%arg0: i32, %arg1: i32) -> (i32, i32, i32, i32) {
    %c0_i32 = arith.constant 0 : i32
    %c0_i32_0 = arith.constant 0 : i32
    %c0_i32_1 = arith.constant 0 : i32
    return %arg0, %c0_i32, %arg1, %c0_i32_0 : i32, i32, i32, i32
  }
  func.func @transform_1(%arg0: i32, %arg1: i32) -> (i32, i32, i32) {
    %c0_i32 = arith.constant 0 : i32
    %c0_i32_0 = arith.constant 0 : i32
    %c0_i32_1 = arith.constant 0 : i32
    %c0_i32_2 = arith.constant 0 : i32
    return %c0_i32, %c0_i32_0, %c0_i32_1 : i32, i32, i32
  }
  func.func @transform_2(%arg0: i32, %arg1: i32) -> (i32, i32) {
    %c0_i32 = arith.constant 0 : i32
    %c0_i32_0 = arith.constant 0 : i32
    %c0_i32_1 = arith.constant 0 : i32
    return %c0_i32, %c0_i32_0 : i32, i32
  }
  func.func @transform_3(%arg0: i32, %arg1: i32) -> (i32, i32) {
    %c0_i32 = arith.constant 0 : i32
    %c0_i32_0 = arith.constant 0 : i32
    %c0_i32_1 = arith.constant 0 : i32
    return %c0_i32, %c0_i32_0 : i32, i32
  }
  func.func @transform_4(%arg0: i32, %arg1: i32) -> (i32, i32, i32) {
    %c0_i32 = arith.constant 0 : i32
    %c0_i32_0 = arith.constant 0 : i32
    return %arg0, %arg1, %c0_i32 : i32, i32, i32
  }
  func.func @transform_5(%arg0: i32, %arg1: i32) -> (i32, i32, i32) {
    %c0_i32 = arith.constant 0 : i32
    %c0_i32_0 = arith.constant 0 : i32
    %c0_i32_1 = arith.constant 0 : i32
    return %arg0, %c0_i32, %c0_i32_0 : i32, i32, i32
  }
}

module attributes {stable_mosaic.version = 11 : i64} {
  func.func @_mm_kernel(%arg0: i32, %arg1: i32, %arg2: i32, %arg3: i32, %arg4: memref<1x16x128xbf16, #tpu.memory_space<vmem>>, %arg5: memref<128x256xbf16, #tpu.memory_space<vmem>>, %arg6: memref<1x256xf32, #tpu.memory_space<vmem>>, %arg7: memref<1x256xf32, #tpu.memory_space<vmem>>, %arg8: memref<1x16x256xbf16, #tpu.memory_space<vmem>>, %arg9: memref<16x256xf32, #tpu.memory_space<vmem>>) attributes {dimension_semantics = [#tpu.dimension_semantics<parallel>, #tpu.dimension_semantics<parallel>, #tpu.dimension_semantics<parallel>, #tpu.dimension_semantics<arbitrary>], iteration_bounds = array<i64: 6, 1, 1, 1>, scalar_prefetch = 0 : i64, scratch_operands = 1 : i64, tpu.core_type = #tpu.core_type<tc>, window_params = [{transform_indices = @transform_0, window_bounds = array<i64: 1, 16, 128>}, {transform_indices = @transform_1, window_bounds = array<i64: 128, 256>}, {transform_indices = @transform_2, window_bounds = array<i64: 1, 256>}, {transform_indices = @transform_3, window_bounds = array<i64: 1, 256>}, {transform_indices = @transform_4, window_bounds = array<i64: 1, 16, 256>}]} {
    %c0_i32 = arith.constant 0 : i32
    %0 = arith.cmpi eq, %arg3, %c0_i32 : i32
    %1 = arith.extui %0 : i1 to i32
    %c0_i32_0 = arith.constant 0 : i32
    %2 = arith.cmpi ne, %1, %c0_i32_0 : i32
    scf.if %2 {
      %cst_11 = arith.constant 0.000000e+00 : f32
      %13 = vector.broadcast %cst_11 : f32 to vector<16x256xf32>
      %c0_12 = arith.constant 0 : index
      %c0_13 = arith.constant 0 : index
      %14 = vector.load %arg9[%c0_12, %c0_13] : memref<16x256xf32, #tpu.memory_space<vmem>>, vector<16x256xf32>
      tpu.vector_store %arg9[%c0_12, %c0_13], %13 {strides = array<i32>} : memref<16x256xf32, #tpu.memory_space<vmem>>, vector<16x256xf32>,
    } else {
    }
    %c0 = arith.constant 0 : index
    %c0_1 = arith.constant 0 : index
    %c0_2 = arith.constant 0 : index
    %3 = vector.load %arg4[%c0, %c0_1, %c0_2] : memref<1x16x128xbf16, #tpu.memory_space<vmem>>, vector<1x16x128xbf16>
    %4 = vector.shape_cast %3 : vector<1x16x128xbf16> to vector<16x128xbf16>
    %c0_3 = arith.constant 0 : index
    %c0_4 = arith.constant 0 : index
    %5 = vector.load %arg9[%c0_3, %c0_4] : memref<16x256xf32, #tpu.memory_space<vmem>>, vector<16x256xf32>
    %c0_5 = arith.constant 0 : index
    %c0_6 = arith.constant 0 : index
    %6 = vector.load %arg5[%c0_5, %c0_6] : memref<128x256xbf16, #tpu.memory_space<vmem>>, vector<128x256xbf16>
    %cst = arith.constant dense<0.000000e+00> : vector<16x256xf32>
    %7 = tpu.matmul %4, %6, %cst {dimension_numbers = #tpu.dot_dimension_numbers<[1], [0], [0], [1], [0, 0, 1, 1], [], []>} : vector<16x128xbf16>, vector<128x256xbf16>, vector<16x256xf32> -> vector<16x256xf32>
    %8 = arith.addf %5, %7 : vector<16x256xf32>
    %c0_7 = arith.constant 0 : index
    %c0_8 = arith.constant 0 : index
    %9 = vector.load %arg9[%c0_7, %c0_8] : memref<16x256xf32, #tpu.memory_space<vmem>>, vector<16x256xf32>
    tpu.vector_store %arg9[%c0_7, %c0_8], %8 {strides = array<i32>} : memref<16x256xf32, #tpu.memory_space<vmem>>, vector<16x256xf32>,
    %c0_i32_9 = arith.constant 0 : i32
    %10 = arith.cmpi eq, %arg3, %c0_i32_9 : i32
    %11 = arith.extui %10 : i1 to i32
    %c0_i32_10 = arith.constant 0 : i32
    %12 = arith.cmpi ne, %11, %c0_i32_10 : i32
    scf.if %12 {
      %c0_11 = arith.constant 0 : index
      %c0_12 = arith.constant 0 : index
      %13 = vector.load %arg9[%c0_11, %c0_12] : memref<16x256xf32, #tpu.memory_space<vmem>>, vector<16x256xf32>
      %c0_13 = arith.constant 0 : index
      %c0_14 = arith.constant 0 : index
      %14 = vector.load %arg6[%c0_13, %c0_14] : memref<1x256xf32, #tpu.memory_space<vmem>>, vector<1x256xf32>
      %15 = vector.broadcast %14 : vector<1x256xf32> to vector<16x256xf32>
      %16 = arith.mulf %13, %15 : vector<16x256xf32>
      %c0_15 = arith.constant 0 : index
      %c0_16 = arith.constant 0 : index
      %17 = vector.load %arg7[%c0_15, %c0_16] : memref<1x256xf32, #tpu.memory_space<vmem>>, vector<1x256xf32>
      %18 = vector.broadcast %17 : vector<1x256xf32> to vector<16x256xf32>
      %19 = arith.addf %16, %18 : vector<16x256xf32>
      %20 = arith.negf %19 : vector<16x256xf32>
      %21 = math.exp %20 : vector<16x256xf32>
      %cst_17 = arith.constant 1.000000e+00 : f32
      %22 = vector.broadcast %cst_17 : f32 to vector<16x256xf32>
      %23 = arith.addf %22, %21 : vector<16x256xf32>
      %24 = arith.divf %22, %23 : vector<16x256xf32>
      %25 = arith.mulf %19, %24 : vector<16x256xf32>
      %26 = arith.truncf %25 : vector<16x256xf32> to vector<16x256xbf16>
      %c0_18 = arith.constant 0 : index
      %c0_19 = arith.constant 0 : index
      %c0_20 = arith.constant 0 : index
      %27 = vector.load %arg8[%c0_18, %c0_19, %c0_20] : memref<1x16x256xbf16, #tpu.memory_space<vmem>>, vector<1x16x256xbf16>
      %28 = vector.shape_cast %27 : vector<1x16x256xbf16> to vector<16x256xbf16>
      %29 = vector.shape_cast %26 : vector<16x256xbf16> to vector<1x16x256xbf16>
      tpu.vector_store %arg8[%c0_18, %c0_19, %c0_20], %29 {strides = array<i32>} : memref<1x16x256xbf16, #tpu.memory_space<vmem>>, vector<1x16x256xbf16>,
    } else {
    }
    return
  }
  func.func @transform_0(%arg0: i32, %arg1: i32, %arg2: i32, %arg3: i32) -> (i32, i32, i32) {
    %c0_i32 = arith.constant 0 : i32
    return %arg0, %arg1, %arg3 : i32, i32, i32
  }
  func.func @transform_1(%arg0: i32, %arg1: i32, %arg2: i32, %arg3: i32) -> (i32, i32) {
    %c0_i32 = arith.constant 0 : i32
    return %arg3, %arg2 : i32, i32
  }
  func.func @transform_2(%arg0: i32, %arg1: i32, %arg2: i32, %arg3: i32) -> (i32, i32) {
    %c0_i32 = arith.constant 0 : i32
    %c0_i32_0 = arith.constant 0 : i32
    return %c0_i32, %arg2 : i32, i32
  }
  func.func @transform_3(%arg0: i32, %arg1: i32, %arg2: i32, %arg3: i32) -> (i32, i32) {
    %c0_i32 = arith.constant 0 : i32
    %c0_i32_0 = arith.constant 0 : i32
    return %c0_i32, %arg2 : i32, i32
  }
  func.func @transform_4(%arg0: i32, %arg1: i32, %arg2: i32, %arg3: i32) -> (i32, i32, i32) {
    %c0_i32 = arith.constant 0 : i32
    return %arg0, %arg1, %arg2 : i32, i32, i32
  }
}

module attributes {stable_mosaic.version = 11 : i64} {
  func.func @_mm_kernel(%arg0: i32, %arg1: i32, %arg2: i32, %arg3: i32, %arg4: memref<1x16x128xbf16, #tpu.memory_space<vmem>>, %arg5: memref<128x128xbf16, #tpu.memory_space<vmem>>, %arg6: memref<1x128xf32, #tpu.memory_space<vmem>>, %arg7: memref<1x128xf32, #tpu.memory_space<vmem>>, %arg8: memref<1x1x128xf32, #tpu.memory_space<vmem>>, %arg9: memref<1x16x128xbf16, #tpu.memory_space<vmem>>, %arg10: memref<16x128xf32, #tpu.memory_space<vmem>>) attributes {dimension_semantics = [#tpu.dimension_semantics<parallel>, #tpu.dimension_semantics<parallel>, #tpu.dimension_semantics<parallel>, #tpu.dimension_semantics<arbitrary>], iteration_bounds = array<i64: 6, 1, 1, 1>, scalar_prefetch = 0 : i64, scratch_operands = 1 : i64, tpu.core_type = #tpu.core_type<tc>, window_params = [{transform_indices = @transform_0, window_bounds = array<i64: 1, 16, 128>}, {transform_indices = @transform_1, window_bounds = array<i64: 128, 128>}, {transform_indices = @transform_2, window_bounds = array<i64: 1, 128>}, {transform_indices = @transform_3, window_bounds = array<i64: 1, 128>}, {transform_indices = @transform_4, window_bounds = array<i64: 1, 1, 128>}, {transform_indices = @transform_5, window_bounds = array<i64: 1, 16, 128>}]} {
    %c0_i32 = arith.constant 0 : i32
    %0 = arith.cmpi eq, %arg3, %c0_i32 : i32
    %1 = arith.extui %0 : i1 to i32
    %c0_i32_0 = arith.constant 0 : i32
    %2 = arith.cmpi ne, %1, %c0_i32_0 : i32
    scf.if %2 {
      %cst_14 = arith.constant 0.000000e+00 : f32
      %19 = vector.broadcast %cst_14 : f32 to vector<16x128xf32>
      %c0_15 = arith.constant 0 : index
      %c0_16 = arith.constant 0 : index
      %20 = vector.load %arg10[%c0_15, %c0_16] : memref<16x128xf32, #tpu.memory_space<vmem>>, vector<16x128xf32>
      tpu.vector_store %arg10[%c0_15, %c0_16], %19 {strides = array<i32>} : memref<16x128xf32, #tpu.memory_space<vmem>>, vector<16x128xf32>,
    } else {
    }
    %c0 = arith.constant 0 : index
    %c0_1 = arith.constant 0 : index
    %c0_2 = arith.constant 0 : index
    %3 = vector.load %arg4[%c0, %c0_1, %c0_2] : memref<1x16x128xbf16, #tpu.memory_space<vmem>>, vector<1x16x128xbf16>
    %4 = vector.shape_cast %3 : vector<1x16x128xbf16> to vector<16x128xbf16>
    %5 = arith.extf %4 : vector<16x128xbf16> to vector<16x128xf32>
    %c0_3 = arith.constant 0 : index
    %c0_4 = arith.constant 0 : index
    %c0_5 = arith.constant 0 : index
    %6 = vector.load %arg8[%c0_3, %c0_4, %c0_5] : memref<1x1x128xf32, #tpu.memory_space<vmem>>, vector<1x1x128xf32>
    %7 = vector.shape_cast %6 : vector<1x1x128xf32> to vector<1x128xf32>
    %8 = vector.broadcast %7 : vector<1x128xf32> to vector<16x128xf32>
    %9 = arith.mulf %5, %8 : vector<16x128xf32>
    %10 = arith.truncf %9 : vector<16x128xf32> to vector<16x128xbf16>
    %c0_6 = arith.constant 0 : index
    %c0_7 = arith.constant 0 : index
    %11 = vector.load %arg10[%c0_6, %c0_7] : memref<16x128xf32, #tpu.memory_space<vmem>>, vector<16x128xf32>
    %c0_8 = arith.constant 0 : index
    %c0_9 = arith.constant 0 : index
    %12 = vector.load %arg5[%c0_8, %c0_9] : memref<128x128xbf16, #tpu.memory_space<vmem>>, vector<128x128xbf16>
    %cst = arith.constant dense<0.000000e+00> : vector<16x128xf32>
    %13 = tpu.matmul %10, %12, %cst {dimension_numbers = #tpu.dot_dimension_numbers<[1], [0], [0], [1], [0, 0, 1, 1], [], []>} : vector<16x128xbf16>, vector<128x128xbf16>, vector<16x128xf32> -> vector<16x128xf32>
    %14 = arith.addf %11, %13 : vector<16x128xf32>
    %c0_10 = arith.constant 0 : index
    %c0_11 = arith.constant 0 : index
    %15 = vector.load %arg10[%c0_10, %c0_11] : memref<16x128xf32, #tpu.memory_space<vmem>>, vector<16x128xf32>
    tpu.vector_store %arg10[%c0_10, %c0_11], %14 {strides = array<i32>} : memref<16x128xf32, #tpu.memory_space<vmem>>, vector<16x128xf32>,
    %c0_i32_12 = arith.constant 0 : i32
    %16 = arith.cmpi eq, %arg3, %c0_i32_12 : i32
    %17 = arith.extui %16 : i1 to i32
    %c0_i32_13 = arith.constant 0 : i32
    %18 = arith.cmpi ne, %17, %c0_i32_13 : i32
    scf.if %18 {
      %c0_14 = arith.constant 0 : index
      %c0_15 = arith.constant 0 : index
      %19 = vector.load %arg10[%c0_14, %c0_15] : memref<16x128xf32, #tpu.memory_space<vmem>>, vector<16x128xf32>
      %c0_16 = arith.constant 0 : index
      %c0_17 = arith.constant 0 : index
      %20 = vector.load %arg6[%c0_16, %c0_17] : memref<1x128xf32, #tpu.memory_space<vmem>>, vector<1x128xf32>
      %21 = vector.broadcast %20 : vector<1x128xf32> to vector<16x128xf32>
      %22 = arith.mulf %19, %21 : vector<16x128xf32>
      %c0_18 = arith.constant 0 : index
      %c0_19 = arith.constant 0 : index
      %23 = vector.load %arg7[%c0_18, %c0_19] : memref<1x128xf32, #tpu.memory_space<vmem>>, vector<1x128xf32>
      %24 = vector.broadcast %23 : vector<1x128xf32> to vector<16x128xf32>
      %25 = arith.addf %22, %24 : vector<16x128xf32>
      %26 = arith.truncf %25 : vector<16x128xf32> to vector<16x128xbf16>
      %c0_20 = arith.constant 0 : index
      %c0_21 = arith.constant 0 : index
      %c0_22 = arith.constant 0 : index
      %27 = vector.load %arg9[%c0_20, %c0_21, %c0_22] : memref<1x16x128xbf16, #tpu.memory_space<vmem>>, vector<1x16x128xbf16>
      %28 = vector.shape_cast %27 : vector<1x16x128xbf16> to vector<16x128xbf16>
      %29 = vector.shape_cast %26 : vector<16x128xbf16> to vector<1x16x128xbf16>
      tpu.vector_store %arg9[%c0_20, %c0_21, %c0_22], %29 {strides = array<i32>} : memref<1x16x128xbf16, #tpu.memory_space<vmem>>, vector<1x16x128xbf16>,
    } else {
    }
    return
  }
  func.func @transform_0(%arg0: i32, %arg1: i32, %arg2: i32, %arg3: i32) -> (i32, i32, i32) {
    %c0_i32 = arith.constant 0 : i32
    return %arg0, %arg1, %arg3 : i32, i32, i32
  }
  func.func @transform_1(%arg0: i32, %arg1: i32, %arg2: i32, %arg3: i32) -> (i32, i32) {
    %c0_i32 = arith.constant 0 : i32
    return %arg3, %arg2 : i32, i32
  }
  func.func @transform_2(%arg0: i32, %arg1: i32, %arg2: i32, %arg3: i32) -> (i32, i32) {
    %c0_i32 = arith.constant 0 : i32
    %c0_i32_0 = arith.constant 0 : i32
    return %c0_i32, %arg2 : i32, i32
  }
  func.func @transform_3(%arg0: i32, %arg1: i32, %arg2: i32, %arg3: i32) -> (i32, i32) {
    %c0_i32 = arith.constant 0 : i32
    %c0_i32_0 = arith.constant 0 : i32
    return %c0_i32, %arg2 : i32, i32
  }
  func.func @transform_4(%arg0: i32, %arg1: i32, %arg2: i32, %arg3: i32) -> (i32, i32, i32) {
    %c0_i32 = arith.constant 0 : i32
    %c0_i32_0 = arith.constant 0 : i32
    return %arg0, %c0_i32, %arg3 : i32, i32, i32
  }
  func.func @transform_5(%arg0: i32, %arg1: i32, %arg2: i32, %arg3: i32) -> (i32, i32, i32) {
    %c0_i32 = arith.constant 0 : i32
    return %arg0, %arg1, %arg2 : i32, i32, i32
  }
}

module attributes {stable_mosaic.version = 11 : i64} {
  func.func @_se_gate_kernel(%arg0: memref<6x256xf32, #tpu.memory_space<vmem>>, %arg1: memref<256x128xf32, #tpu.memory_space<vmem>>, %arg2: memref<1x128xf32, #tpu.memory_space<vmem>>, %arg3: memref<128x256xf32, #tpu.memory_space<vmem>>, %arg4: memref<1x256xf32, #tpu.memory_space<vmem>>, %arg5: memref<6x256xf32, #tpu.memory_space<vmem>>) attributes {dimension_semantics = [], scalar_prefetch = 0 : i64, scratch_operands = 0 : i64, tpu.core_type = #tpu.core_type<tc>} {
    %c0 = arith.constant 0 : index
    %c0_0 = arith.constant 0 : index
    %0 = vector.load %arg0[%c0, %c0_0] : memref<6x256xf32, #tpu.memory_space<vmem>>, vector<6x256xf32>
    %c0_1 = arith.constant 0 : index
    %c0_2 = arith.constant 0 : index
    %1 = vector.load %arg1[%c0_1, %c0_2] : memref<256x128xf32, #tpu.memory_space<vmem>>, vector<256x128xf32>
    %cst = arith.constant dense<0.000000e+00> : vector<6x128xf32>
    %2 = tpu.matmul %0, %1, %cst {dimension_numbers = #tpu.dot_dimension_numbers<[1], [0], [0], [1], [0, 0, 1, 1], [], []>} : vector<6x256xf32>, vector<256x128xf32>, vector<6x128xf32> -> vector<6x128xf32>
    %c0_3 = arith.constant 0 : index
    %c0_4 = arith.constant 0 : index
    %3 = vector.load %arg2[%c0_3, %c0_4] : memref<1x128xf32, #tpu.memory_space<vmem>>, vector<1x128xf32>
    %4 = vector.broadcast %3 : vector<1x128xf32> to vector<6x128xf32>
    %5 = arith.addf %2, %4 : vector<6x128xf32>
    %6 = arith.negf %5 : vector<6x128xf32>
    %7 = math.exp %6 : vector<6x128xf32>
    %cst_5 = arith.constant 1.000000e+00 : f32
    %8 = vector.broadcast %cst_5 : f32 to vector<6x128xf32>
    %9 = arith.addf %8, %7 : vector<6x128xf32>
    %10 = arith.divf %8, %9 : vector<6x128xf32>
    %11 = arith.mulf %5, %10 : vector<6x128xf32>
    %c0_6 = arith.constant 0 : index
    %c0_7 = arith.constant 0 : index
    %12 = vector.load %arg3[%c0_6, %c0_7] : memref<128x256xf32, #tpu.memory_space<vmem>>, vector<128x256xf32>
    %cst_8 = arith.constant dense<0.000000e+00> : vector<6x256xf32>
    %13 = tpu.matmul %11, %12, %cst_8 {dimension_numbers = #tpu.dot_dimension_numbers<[1], [0], [0], [1], [0, 0, 1, 1], [], []>} : vector<6x128xf32>, vector<128x256xf32>, vector<6x256xf32> -> vector<6x256xf32>
    %c0_9 = arith.constant 0 : index
    %c0_10 = arith.constant 0 : index
    %14 = vector.load %arg4[%c0_9, %c0_10] : memref<1x256xf32, #tpu.memory_space<vmem>>, vector<1x256xf32>
    %15 = vector.broadcast %14 : vector<1x256xf32> to vector<6x256xf32>
    %16 = arith.addf %13, %15 : vector<6x256xf32>
    %17 = arith.negf %16 : vector<6x256xf32>
    %18 = math.exp %17 : vector<6x256xf32>
    %cst_11 = arith.constant 1.000000e+00 : f32
    %19 = vector.broadcast %cst_11 : f32 to vector<6x256xf32>
    %20 = arith.addf %19, %18 : vector<6x256xf32>
    %21 = arith.divf %19, %20 : vector<6x256xf32>
    %c0_12 = arith.constant 0 : index
    %c0_13 = arith.constant 0 : index
    %22 = vector.load %arg5[%c0_12, %c0_13] : memref<6x256xf32, #tpu.memory_space<vmem>>, vector<6x256xf32>
    tpu.vector_store %arg5[%c0_12, %c0_13], %21 {strides = array<i32>} : memref<6x256xf32, #tpu.memory_space<vmem>>, vector<6x256xf32>,
    return
  }
}

module attributes {stable_mosaic.version = 11 : i64} {
  func.func @_dw_kernel(%arg0: i32, %arg1: i32, %arg2: memref<1x9x16x256xbf16, #tpu.memory_space<vmem>>, %arg3: memref<9x1x256xf32, #tpu.memory_space<vmem>>, %arg4: memref<1x256xf32, #tpu.memory_space<vmem>>, %arg5: memref<1x256xf32, #tpu.memory_space<vmem>>, %arg6: memref<1x16x256xbf16, #tpu.memory_space<vmem>>, %arg7: memref<1x1x256xf32, #tpu.memory_space<vmem>>) attributes {dimension_semantics = [#tpu.dimension_semantics<parallel>, #tpu.dimension_semantics<arbitrary>], iteration_bounds = array<i64: 6, 1>, scalar_prefetch = 0 : i64, scratch_operands = 0 : i64, tpu.core_type = #tpu.core_type<tc>, window_params = [{transform_indices = @transform_0, window_bounds = array<i64: 1, 9, 16, 256>}, {pipeline_mode = #tpu.pipeline_mode<synchronous>, transform_indices = @transform_1, window_bounds = array<i64: 9, 1, 256>}, {pipeline_mode = #tpu.pipeline_mode<synchronous>, transform_indices = @transform_2, window_bounds = array<i64: 1, 256>}, {pipeline_mode = #tpu.pipeline_mode<synchronous>, transform_indices = @transform_3, window_bounds = array<i64: 1, 256>}, {transform_indices = @transform_4, window_bounds = array<i64: 1, 16, 256>}, {transform_indices = @transform_5, window_bounds = array<i64: 1, 1, 256>}]} {
    %cst = arith.constant 0.000000e+00 : f32
    %0 = vector.broadcast %cst : f32 to vector<16x256xf32>
    %c0 = arith.constant 0 : index
    %c0_0 = arith.constant 0 : index
    %c0_1 = arith.constant 0 : index
    %c0_2 = arith.constant 0 : index
    %1 = vector.load %arg2[%c0, %c0_0, %c0_1, %c0_2] : memref<1x9x16x256xbf16, #tpu.memory_space<vmem>>, vector<1x1x16x256xbf16>
    %2 = vector.shape_cast %1 : vector<1x1x16x256xbf16> to vector<16x256xbf16>
    %3 = arith.extf %2 : vector<16x256xbf16> to vector<16x256xf32>
    %c0_3 = arith.constant 0 : index
    %c0_4 = arith.constant 0 : index
    %c0_5 = arith.constant 0 : index
    %4 = vector.load %arg3[%c0_3, %c0_4, %c0_5] : memref<9x1x256xf32, #tpu.memory_space<vmem>>, vector<1x1x256xf32>
    %5 = vector.shape_cast %4 : vector<1x1x256xf32> to vector<1x256xf32>
    %6 = vector.broadcast %5 : vector<1x256xf32> to vector<16x256xf32>
    %7 = arith.mulf %3, %6 : vector<16x256xf32>
    %8 = arith.addf %0, %7 : vector<16x256xf32>
    %c0_6 = arith.constant 0 : index
    %c1 = arith.constant 1 : index
    %c0_7 = arith.constant 0 : index
    %c0_8 = arith.constant 0 : index
    %9 = vector.load %arg2[%c0_6, %c1, %c0_7, %c0_8] : memref<1x9x16x256xbf16, #tpu.memory_space<vmem>>, vector<1x1x16x256xbf16>
    %10 = vector.shape_cast %9 : vector<1x1x16x256xbf16> to vector<16x256xbf16>
    %11 = arith.extf %10 : vector<16x256xbf16> to vector<16x256xf32>
    %c1_9 = arith.constant 1 : index
    %c0_10 = arith.constant 0 : index
    %c0_11 = arith.constant 0 : index
    %12 = vector.load %arg3[%c1_9, %c0_10, %c0_11] : memref<9x1x256xf32, #tpu.memory_space<vmem>>, vector<1x1x256xf32>
    %13 = vector.shape_cast %12 : vector<1x1x256xf32> to vector<1x256xf32>
    %14 = vector.broadcast %13 : vector<1x256xf32> to vector<16x256xf32>
    %15 = arith.mulf %11, %14 : vector<16x256xf32>
    %16 = arith.addf %8, %15 : vector<16x256xf32>
    %c0_12 = arith.constant 0 : index
    %c2 = arith.constant 2 : index
    %c0_13 = arith.constant 0 : index
    %c0_14 = arith.constant 0 : index
    %17 = vector.load %arg2[%c0_12, %c2, %c0_13, %c0_14] : memref<1x9x16x256xbf16, #tpu.memory_space<vmem>>, vector<1x1x16x256xbf16>
    %18 = vector.shape_cast %17 : vector<1x1x16x256xbf16> to vector<16x256xbf16>
    %19 = arith.extf %18 : vector<16x256xbf16> to vector<16x256xf32>
    %c2_15 = arith.constant 2 : index
    %c0_16 = arith.constant 0 : index
    %c0_17 = arith.constant 0 : index
    %20 = vector.load %arg3[%c2_15, %c0_16, %c0_17] : memref<9x1x256xf32, #tpu.memory_space<vmem>>, vector<1x1x256xf32>
    %21 = vector.shape_cast %20 : vector<1x1x256xf32> to vector<1x256xf32>
    %22 = vector.broadcast %21 : vector<1x256xf32> to vector<16x256xf32>
    %23 = arith.mulf %19, %22 : vector<16x256xf32>
    %24 = arith.addf %16, %23 : vector<16x256xf32>
    %c0_18 = arith.constant 0 : index
    %c3 = arith.constant 3 : index
    %c0_19 = arith.constant 0 : index
    %c0_20 = arith.constant 0 : index
    %25 = vector.load %arg2[%c0_18, %c3, %c0_19, %c0_20] : memref<1x9x16x256xbf16, #tpu.memory_space<vmem>>, vector<1x1x16x256xbf16>
    %26 = vector.shape_cast %25 : vector<1x1x16x256xbf16> to vector<16x256xbf16>
    %27 = arith.extf %26 : vector<16x256xbf16> to vector<16x256xf32>
    %c3_21 = arith.constant 3 : index
    %c0_22 = arith.constant 0 : index
    %c0_23 = arith.constant 0 : index
    %28 = vector.load %arg3[%c3_21, %c0_22, %c0_23] : memref<9x1x256xf32, #tpu.memory_space<vmem>>, vector<1x1x256xf32>
    %29 = vector.shape_cast %28 : vector<1x1x256xf32> to vector<1x256xf32>
    %30 = vector.broadcast %29 : vector<1x256xf32> to vector<16x256xf32>
    %31 = arith.mulf %27, %30 : vector<16x256xf32>
    %32 = arith.addf %24, %31 : vector<16x256xf32>
    %c0_24 = arith.constant 0 : index
    %c4 = arith.constant 4 : index
    %c0_25 = arith.constant 0 : index
    %c0_26 = arith.constant 0 : index
    %33 = vector.load %arg2[%c0_24, %c4, %c0_25, %c0_26] : memref<1x9x16x256xbf16, #tpu.memory_space<vmem>>, vector<1x1x16x256xbf16>
    %34 = vector.shape_cast %33 : vector<1x1x16x256xbf16> to vector<16x256xbf16>
    %35 = arith.extf %34 : vector<16x256xbf16> to vector<16x256xf32>
    %c4_27 = arith.constant 4 : index
    %c0_28 = arith.constant 0 : index
    %c0_29 = arith.constant 0 : index
    %36 = vector.load %arg3[%c4_27, %c0_28, %c0_29] : memref<9x1x256xf32, #tpu.memory_space<vmem>>, vector<1x1x256xf32>
    %37 = vector.shape_cast %36 : vector<1x1x256xf32> to vector<1x256xf32>
    %38 = vector.broadcast %37 : vector<1x256xf32> to vector<16x256xf32>
    %39 = arith.mulf %35, %38 : vector<16x256xf32>
    %40 = arith.addf %32, %39 : vector<16x256xf32>
    %c0_30 = arith.constant 0 : index
    %c5 = arith.constant 5 : index
    %c0_31 = arith.constant 0 : index
    %c0_32 = arith.constant 0 : index
    %41 = vector.load %arg2[%c0_30, %c5, %c0_31, %c0_32] : memref<1x9x16x256xbf16, #tpu.memory_space<vmem>>, vector<1x1x16x256xbf16>
    %42 = vector.shape_cast %41 : vector<1x1x16x256xbf16> to vector<16x256xbf16>
    %43 = arith.extf %42 : vector<16x256xbf16> to vector<16x256xf32>
    %c5_33 = arith.constant 5 : index
    %c0_34 = arith.constant 0 : index
    %c0_35 = arith.constant 0 : index
    %44 = vector.load %arg3[%c5_33, %c0_34, %c0_35] : memref<9x1x256xf32, #tpu.memory_space<vmem>>, vector<1x1x256xf32>
    %45 = vector.shape_cast %44 : vector<1x1x256xf32> to vector<1x256xf32>
    %46 = vector.broadcast %45 : vector<1x256xf32> to vector<16x256xf32>
    %47 = arith.mulf %43, %46 : vector<16x256xf32>
    %48 = arith.addf %40, %47 : vector<16x256xf32>
    %c0_36 = arith.constant 0 : index
    %c6 = arith.constant 6 : index
    %c0_37 = arith.constant 0 : index
    %c0_38 = arith.constant 0 : index
    %49 = vector.load %arg2[%c0_36, %c6, %c0_37, %c0_38] : memref<1x9x16x256xbf16, #tpu.memory_space<vmem>>, vector<1x1x16x256xbf16>
    %50 = vector.shape_cast %49 : vector<1x1x16x256xbf16> to vector<16x256xbf16>
    %51 = arith.extf %50 : vector<16x256xbf16> to vector<16x256xf32>
    %c6_39 = arith.constant 6 : index
    %c0_40 = arith.constant 0 : index
    %c0_41 = arith.constant 0 : index
    %52 = vector.load %arg3[%c6_39, %c0_40, %c0_41] : memref<9x1x256xf32, #tpu.memory_space<vmem>>, vector<1x1x256xf32>
    %53 = vector.shape_cast %52 : vector<1x1x256xf32> to vector<1x256xf32>
    %54 = vector.broadcast %53 : vector<1x256xf32> to vector<16x256xf32>
    %55 = arith.mulf %51, %54 : vector<16x256xf32>
    %56 = arith.addf %48, %55 : vector<16x256xf32>
    %c0_42 = arith.constant 0 : index
    %c7 = arith.constant 7 : index
    %c0_43 = arith.constant 0 : index
    %c0_44 = arith.constant 0 : index
    %57 = vector.load %arg2[%c0_42, %c7, %c0_43, %c0_44] : memref<1x9x16x256xbf16, #tpu.memory_space<vmem>>, vector<1x1x16x256xbf16>
    %58 = vector.shape_cast %57 : vector<1x1x16x256xbf16> to vector<16x256xbf16>
    %59 = arith.extf %58 : vector<16x256xbf16> to vector<16x256xf32>
    %c7_45 = arith.constant 7 : index
    %c0_46 = arith.constant 0 : index
    %c0_47 = arith.constant 0 : index
    %60 = vector.load %arg3[%c7_45, %c0_46, %c0_47] : memref<9x1x256xf32, #tpu.memory_space<vmem>>, vector<1x1x256xf32>
    %61 = vector.shape_cast %60 : vector<1x1x256xf32> to vector<1x256xf32>
    %62 = vector.broadcast %61 : vector<1x256xf32> to vector<16x256xf32>
    %63 = arith.mulf %59, %62 : vector<16x256xf32>
    %64 = arith.addf %56, %63 : vector<16x256xf32>
    %c0_48 = arith.constant 0 : index
    %c8 = arith.constant 8 : index
    %c0_49 = arith.constant 0 : index
    %c0_50 = arith.constant 0 : index
    %65 = vector.load %arg2[%c0_48, %c8, %c0_49, %c0_50] : memref<1x9x16x256xbf16, #tpu.memory_space<vmem>>, vector<1x1x16x256xbf16>
    %66 = vector.shape_cast %65 : vector<1x1x16x256xbf16> to vector<16x256xbf16>
    %67 = arith.extf %66 : vector<16x256xbf16> to vector<16x256xf32>
    %c8_51 = arith.constant 8 : index
    %c0_52 = arith.constant 0 : index
    %c0_53 = arith.constant 0 : index
    %68 = vector.load %arg3[%c8_51, %c0_52, %c0_53] : memref<9x1x256xf32, #tpu.memory_space<vmem>>, vector<1x1x256xf32>
    %69 = vector.shape_cast %68 : vector<1x1x256xf32> to vector<1x256xf32>
    %70 = vector.broadcast %69 : vector<1x256xf32> to vector<16x256xf32>
    %71 = arith.mulf %67, %70 : vector<16x256xf32>
    %72 = arith.addf %64, %71 : vector<16x256xf32>
    %c0_54 = arith.constant 0 : index
    %c0_55 = arith.constant 0 : index
    %73 = vector.load %arg4[%c0_54, %c0_55] : memref<1x256xf32, #tpu.memory_space<vmem>>, vector<1x256xf32>
    %74 = vector.broadcast %73 : vector<1x256xf32> to vector<16x256xf32>
    %75 = arith.mulf %72, %74 : vector<16x256xf32>
    %c0_56 = arith.constant 0 : index
    %c0_57 = arith.constant 0 : index
    %76 = vector.load %arg5[%c0_56, %c0_57] : memref<1x256xf32, #tpu.memory_space<vmem>>, vector<1x256xf32>
    %77 = vector.broadcast %76 : vector<1x256xf32> to vector<16x256xf32>
    %78 = arith.addf %75, %77 : vector<16x256xf32>
    %79 = arith.negf %78 : vector<16x256xf32>
    %80 = math.exp %79 : vector<16x256xf32>
    %cst_58 = arith.constant 1.000000e+00 : f32
    %81 = vector.broadcast %cst_58 : f32 to vector<16x256xf32>
    %82 = arith.addf %81, %80 : vector<16x256xf32>
    %83 = arith.divf %81, %82 : vector<16x256xf32>
    %84 = arith.mulf %78, %83 : vector<16x256xf32>
    %85 = arith.truncf %84 : vector<16x256xf32> to vector<16x256xbf16>
    %c0_59 = arith.constant 0 : index
    %c0_60 = arith.constant 0 : index
    %c0_61 = arith.constant 0 : index
    %86 = vector.load %arg6[%c0_59, %c0_60, %c0_61] : memref<1x16x256xbf16, #tpu.memory_space<vmem>>, vector<1x16x256xbf16>
    %87 = vector.shape_cast %86 : vector<1x16x256xbf16> to vector<16x256xbf16>
    %88 = vector.shape_cast %85 : vector<16x256xbf16> to vector<1x16x256xbf16>
    tpu.vector_store %arg6[%c0_59, %c0_60, %c0_61], %88 {strides = array<i32>} : memref<1x16x256xbf16, #tpu.memory_space<vmem>>, vector<1x16x256xbf16>,
    %c0_i32 = arith.constant 0 : i32
    %89 = arith.cmpi eq, %arg1, %c0_i32 : i32
    %90 = arith.extui %89 : i1 to i32
    %c0_i32_62 = arith.constant 0 : i32
    %91 = arith.cmpi ne, %90, %c0_i32_62 : i32
    scf.if %91 {
      %cst_72 = arith.constant 0.000000e+00 : f32
      %108 = vector.broadcast %cst_72 : f32 to vector<1x256xf32>
      %c0_73 = arith.constant 0 : index
      %c0_74 = arith.constant 0 : index
      %c0_75 = arith.constant 0 : index
      %109 = vector.load %arg7[%c0_73, %c0_74, %c0_75] : memref<1x1x256xf32, #tpu.memory_space<vmem>>, vector<1x1x256xf32>
      %110 = vector.shape_cast %109 : vector<1x1x256xf32> to vector<1x256xf32>
      %111 = vector.shape_cast %108 : vector<1x256xf32> to vector<1x1x256xf32>
      tpu.vector_store %arg7[%c0_73, %c0_74, %c0_75], %111 {strides = array<i32>} : memref<1x1x256xf32, #tpu.memory_space<vmem>>, vector<1x1x256xf32>,
    } else {
    }
    %c16_i32 = arith.constant 16 : i32
    %92 = arith.muli %arg1, %c16_i32 : i32
    %93 = tpu.iota {dimensions = array<i32: 0>} : vector<16x256xi32>
    %94 = vector.broadcast %92 : i32 to vector<16x256xi32>
    %95 = arith.addi %94, %93 : vector<16x256xi32>
    %c16_i32_63 = arith.constant 16 : i32
    %96 = vector.broadcast %c16_i32_63 : i32 to vector<16x256xi32>
    %97 = arith.cmpi slt, %95, %96 : vector<16x256xi32>
    %cst_64 = arith.constant 0.000000e+00 : f32
    %98 = vector.broadcast %cst_64 : f32 to vector<16x256xf32>
    %99 = arith.select %97, %84, %98 : vector<16x256xi1>, vector<16x256xf32>
    %c0_65 = arith.constant 0 : index
    %c0_66 = arith.constant 0 : index
    %c0_67 = arith.constant 0 : index
    %100 = vector.load %arg7[%c0_65, %c0_66, %c0_67] : memref<1x1x256xf32, #tpu.memory_space<vmem>>, vector<1x1x256xf32>
    %101 = vector.shape_cast %100 : vector<1x1x256xf32> to vector<1x256xf32>
    %cst_68 = arith.constant dense<0.000000e+00> : vector<256xf32>
    %102 = vector.multi_reduction <add>, %99, %cst_68 [0] : vector<16x256xf32> to vector<256xf32>
    %103 = vector.shape_cast %102 : vector<256xf32> to vector<1x256xf32>
    %104 = arith.addf %101, %103 : vector<1x256xf32>
    %c0_69 = arith.constant 0 : index
    %c0_70 = arith.constant 0 : index
    %c0_71 = arith.constant 0 : index
    %105 = vector.load %arg7[%c0_69, %c0_70, %c0_71] : memref<1x1x256xf32, #tpu.memory_space<vmem>>, vector<1x1x256xf32>
    %106 = vector.shape_cast %105 : vector<1x1x256xf32> to vector<1x256xf32>
    %107 = vector.shape_cast %104 : vector<1x256xf32> to vector<1x1x256xf32>
    tpu.vector_store %arg7[%c0_69, %c0_70, %c0_71], %107 {strides = array<i32>} : memref<1x1x256xf32, #tpu.memory_space<vmem>>, vector<1x1x256xf32>,
    return
  }
  func.func @transform_0(%arg0: i32, %arg1: i32) -> (i32, i32, i32, i32) {
    %c0_i32 = arith.constant 0 : i32
    %c0_i32_0 = arith.constant 0 : i32
    %c0_i32_1 = arith.constant 0 : i32
    return %arg0, %c0_i32, %arg1, %c0_i32_0 : i32, i32, i32, i32
  }
  func.func @transform_1(%arg0: i32, %arg1: i32) -> (i32, i32, i32) {
    %c0_i32 = arith.constant 0 : i32
    %c0_i32_0 = arith.constant 0 : i32
    %c0_i32_1 = arith.constant 0 : i32
    %c0_i32_2 = arith.constant 0 : i32
    return %c0_i32, %c0_i32_0, %c0_i32_1 : i32, i32, i32
  }
  func.func @transform_2(%arg0: i32, %arg1: i32) -> (i32, i32) {
    %c0_i32 = arith.constant 0 : i32
    %c0_i32_0 = arith.constant 0 : i32
    %c0_i32_1 = arith.constant 0 : i32
    return %c0_i32, %c0_i32_0 : i32, i32
  }
  func.func @transform_3(%arg0: i32, %arg1: i32) -> (i32, i32) {
    %c0_i32 = arith.constant 0 : i32
    %c0_i32_0 = arith.constant 0 : i32
    %c0_i32_1 = arith.constant 0 : i32
    return %c0_i32, %c0_i32_0 : i32, i32
  }
  func.func @transform_4(%arg0: i32, %arg1: i32) -> (i32, i32, i32) {
    %c0_i32 = arith.constant 0 : i32
    %c0_i32_0 = arith.constant 0 : i32
    return %arg0, %arg1, %c0_i32 : i32, i32, i32
  }
  func.func @transform_5(%arg0: i32, %arg1: i32) -> (i32, i32, i32) {
    %c0_i32 = arith.constant 0 : i32
    %c0_i32_0 = arith.constant 0 : i32
    %c0_i32_1 = arith.constant 0 : i32
    return %arg0, %c0_i32, %c0_i32_0 : i32, i32, i32
  }
}

module attributes {stable_mosaic.version = 11 : i64} {
  func.func @_mm_kernel(%arg0: i32, %arg1: i32, %arg2: i32, %arg3: i32, %arg4: memref<1x16x256xbf16, #tpu.memory_space<vmem>>, %arg5: memref<256x128xbf16, #tpu.memory_space<vmem>>, %arg6: memref<1x128xf32, #tpu.memory_space<vmem>>, %arg7: memref<1x128xf32, #tpu.memory_space<vmem>>, %arg8: memref<1x1x256xf32, #tpu.memory_space<vmem>>, %arg9: memref<1x16x128xbf16, #tpu.memory_space<vmem>>, %arg10: memref<1x16x128xbf16, #tpu.memory_space<vmem>>, %arg11: memref<16x128xf32, #tpu.memory_space<vmem>>) attributes {dimension_semantics = [#tpu.dimension_semantics<parallel>, #tpu.dimension_semantics<parallel>, #tpu.dimension_semantics<parallel>, #tpu.dimension_semantics<arbitrary>], iteration_bounds = array<i64: 6, 1, 1, 1>, scalar_prefetch = 0 : i64, scratch_operands = 1 : i64, tpu.core_type = #tpu.core_type<tc>, window_params = [{transform_indices = @transform_0, window_bounds = array<i64: 1, 16, 256>}, {transform_indices = @transform_1, window_bounds = array<i64: 256, 128>}, {transform_indices = @transform_2, window_bounds = array<i64: 1, 128>}, {transform_indices = @transform_3, window_bounds = array<i64: 1, 128>}, {transform_indices = @transform_4, window_bounds = array<i64: 1, 1, 256>}, {transform_indices = @transform_5, window_bounds = array<i64: 1, 16, 128>}, {transform_indices = @transform_6, window_bounds = array<i64: 1, 16, 128>}]} {
    %c0_i32 = arith.constant 0 : i32
    %0 = arith.cmpi eq, %arg3, %c0_i32 : i32
    %1 = arith.extui %0 : i1 to i32
    %c0_i32_0 = arith.constant 0 : i32
    %2 = arith.cmpi ne, %1, %c0_i32_0 : i32
    scf.if %2 {
      %cst_14 = arith.constant 0.000000e+00 : f32
      %19 = vector.broadcast %cst_14 : f32 to vector<16x128xf32>
      %c0_15 = arith.constant 0 : index
      %c0_16 = arith.constant 0 : index
      %20 = vector.load %arg11[%c0_15, %c0_16] : memref<16x128xf32, #tpu.memory_space<vmem>>, vector<16x128xf32>
      tpu.vector_store %arg11[%c0_15, %c0_16], %19 {strides = array<i32>} : memref<16x128xf32, #tpu.memory_space<vmem>>, vector<16x128xf32>,
    } else {
    }
    %c0 = arith.constant 0 : index
    %c0_1 = arith.constant 0 : index
    %c0_2 = arith.constant 0 : index
    %3 = vector.load %arg4[%c0, %c0_1, %c0_2] : memref<1x16x256xbf16, #tpu.memory_space<vmem>>, vector<1x16x256xbf16>
    %4 = vector.shape_cast %3 : vector<1x16x256xbf16> to vector<16x256xbf16>
    %5 = arith.extf %4 : vector<16x256xbf16> to vector<16x256xf32>
    %c0_3 = arith.constant 0 : index
    %c0_4 = arith.constant 0 : index
    %c0_5 = arith.constant 0 : index
    %6 = vector.load %arg8[%c0_3, %c0_4, %c0_5] : memref<1x1x256xf32, #tpu.memory_space<vmem>>, vector<1x1x256xf32>
    %7 = vector.shape_cast %6 : vector<1x1x256xf32> to vector<1x256xf32>
    %8 = vector.broadcast %7 : vector<1x256xf32> to vector<16x256xf32>
    %9 = arith.mulf %5, %8 : vector<16x256xf32>
    %10 = arith.truncf %9 : vector<16x256xf32> to vector<16x256xbf16>
    %c0_6 = arith.constant 0 : index
    %c0_7 = arith.constant 0 : index
    %11 = vector.load %arg11[%c0_6, %c0_7] : memref<16x128xf32, #tpu.memory_space<vmem>>, vector<16x128xf32>
    %c0_8 = arith.constant 0 : index
    %c0_9 = arith.constant 0 : index
    %12 = vector.load %arg5[%c0_8, %c0_9] : memref<256x128xbf16, #tpu.memory_space<vmem>>, vector<256x128xbf16>
    %cst = arith.constant dense<0.000000e+00> : vector<16x128xf32>
    %13 = tpu.matmul %10, %12, %cst {dimension_numbers = #tpu.dot_dimension_numbers<[1], [0], [0], [1], [0, 0, 1, 1], [], []>} : vector<16x256xbf16>, vector<256x128xbf16>, vector<16x128xf32> -> vector<16x128xf32>
    %14 = arith.addf %11, %13 : vector<16x128xf32>
    %c0_10 = arith.constant 0 : index
    %c0_11 = arith.constant 0 : index
    %15 = vector.load %arg11[%c0_10, %c0_11] : memref<16x128xf32, #tpu.memory_space<vmem>>, vector<16x128xf32>
    tpu.vector_store %arg11[%c0_10, %c0_11], %14 {strides = array<i32>} : memref<16x128xf32, #tpu.memory_space<vmem>>, vector<16x128xf32>,
    %c0_i32_12 = arith.constant 0 : i32
    %16 = arith.cmpi eq, %arg3, %c0_i32_12 : i32
    %17 = arith.extui %16 : i1 to i32
    %c0_i32_13 = arith.constant 0 : i32
    %18 = arith.cmpi ne, %17, %c0_i32_13 : i32
    scf.if %18 {
      %c0_14 = arith.constant 0 : index
      %c0_15 = arith.constant 0 : index
      %19 = vector.load %arg11[%c0_14, %c0_15] : memref<16x128xf32, #tpu.memory_space<vmem>>, vector<16x128xf32>
      %c0_16 = arith.constant 0 : index
      %c0_17 = arith.constant 0 : index
      %20 = vector.load %arg6[%c0_16, %c0_17] : memref<1x128xf32, #tpu.memory_space<vmem>>, vector<1x128xf32>
      %21 = vector.broadcast %20 : vector<1x128xf32> to vector<16x128xf32>
      %22 = arith.mulf %19, %21 : vector<16x128xf32>
      %c0_18 = arith.constant 0 : index
      %c0_19 = arith.constant 0 : index
      %23 = vector.load %arg7[%c0_18, %c0_19] : memref<1x128xf32, #tpu.memory_space<vmem>>, vector<1x128xf32>
      %24 = vector.broadcast %23 : vector<1x128xf32> to vector<16x128xf32>
      %25 = arith.addf %22, %24 : vector<16x128xf32>
      %c0_20 = arith.constant 0 : index
      %c0_21 = arith.constant 0 : index
      %c0_22 = arith.constant 0 : index
      %26 = vector.load %arg9[%c0_20, %c0_21, %c0_22] : memref<1x16x128xbf16, #tpu.memory_space<vmem>>, vector<1x16x128xbf16>
      %27 = vector.shape_cast %26 : vector<1x16x128xbf16> to vector<16x128xbf16>
      %28 = arith.extf %27 : vector<16x128xbf16> to vector<16x128xf32>
      %29 = arith.addf %25, %28 : vector<16x128xf32>
      %30 = arith.truncf %29 : vector<16x128xf32> to vector<16x128xbf16>
      %c0_23 = arith.constant 0 : index
      %c0_24 = arith.constant 0 : index
      %c0_25 = arith.constant 0 : index
      %31 = vector.load %arg10[%c0_23, %c0_24, %c0_25] : memref<1x16x128xbf16, #tpu.memory_space<vmem>>, vector<1x16x128xbf16>
      %32 = vector.shape_cast %31 : vector<1x16x128xbf16> to vector<16x128xbf16>
      %33 = vector.shape_cast %30 : vector<16x128xbf16> to vector<1x16x128xbf16>
      tpu.vector_store %arg10[%c0_23, %c0_24, %c0_25], %33 {strides = array<i32>} : memref<1x16x128xbf16, #tpu.memory_space<vmem>>, vector<1x16x128xbf16>,
    } else {
    }
    return
  }
  func.func @transform_0(%arg0: i32, %arg1: i32, %arg2: i32, %arg3: i32) -> (i32, i32, i32) {
    %c0_i32 = arith.constant 0 : i32
    return %arg0, %arg1, %arg3 : i32, i32, i32
  }
  func.func @transform_1(%arg0: i32, %arg1: i32, %arg2: i32, %arg3: i32) -> (i32, i32) {
    %c0_i32 = arith.constant 0 : i32
    return %arg3, %arg2 : i32, i32
  }
  func.func @transform_2(%arg0: i32, %arg1: i32, %arg2: i32, %arg3: i32) -> (i32, i32) {
    %c0_i32 = arith.constant 0 : i32
    %c0_i32_0 = arith.constant 0 : i32
    return %c0_i32, %arg2 : i32, i32
  }
  func.func @transform_3(%arg0: i32, %arg1: i32, %arg2: i32, %arg3: i32) -> (i32, i32) {
    %c0_i32 = arith.constant 0 : i32
    %c0_i32_0 = arith.constant 0 : i32
    return %c0_i32, %arg2 : i32, i32
  }
  func.func @transform_4(%arg0: i32, %arg1: i32, %arg2: i32, %arg3: i32) -> (i32, i32, i32) {
    %c0_i32 = arith.constant 0 : i32
    %c0_i32_0 = arith.constant 0 : i32
    return %arg0, %c0_i32, %arg3 : i32, i32, i32
  }
  func.func @transform_5(%arg0: i32, %arg1: i32, %arg2: i32, %arg3: i32) -> (i32, i32, i32) {
    %c0_i32 = arith.constant 0 : i32
    return %arg0, %arg1, %arg2 : i32, i32, i32
  }
  func.func @transform_6(%arg0: i32, %arg1: i32, %arg2: i32, %arg3: i32) -> (i32, i32, i32) {
    %c0_i32 = arith.constant 0 : i32
    return %arg0, %arg1, %arg2 : i32, i32, i32
  }
}

module attributes {stable_mosaic.version = 11 : i64} {
  func.func @_mm_gap_kernel(%arg0: i32, %arg1: i32, %arg2: i32, %arg3: i32, %arg4: memref<1x16x128xbf16, #tpu.memory_space<vmem>>, %arg5: memref<128x256xbf16, #tpu.memory_space<vmem>>, %arg6: memref<1x256xf32, #tpu.memory_space<vmem>>, %arg7: memref<1x256xf32, #tpu.memory_space<vmem>>, %arg8: memref<1x1x256xf32, #tpu.memory_space<vmem>>, %arg9: memref<16x256xf32, #tpu.memory_space<vmem>>, %arg10: memref<1x256xf32, #tpu.memory_space<vmem>>) attributes {dimension_semantics = [#tpu.dimension_semantics<parallel>, #tpu.dimension_semantics<parallel>, #tpu.dimension_semantics<arbitrary>, #tpu.dimension_semantics<arbitrary>], iteration_bounds = array<i64: 6, 5, 1, 1>, scalar_prefetch = 0 : i64, scratch_operands = 2 : i64, tpu.core_type = #tpu.core_type<tc>, window_params = [{transform_indices = @transform_0, window_bounds = array<i64: 1, 16, 128>}, {transform_indices = @transform_1, window_bounds = array<i64: 128, 256>}, {transform_indices = @transform_2, window_bounds = array<i64: 1, 256>}, {transform_indices = @transform_3, window_bounds = array<i64: 1, 256>}, {transform_indices = @transform_4, window_bounds = array<i64: 1, 1, 256>}]} {
    %c0_i32 = arith.constant 0 : i32
    %0 = arith.cmpi eq, %arg2, %c0_i32 : i32
    %c0_i32_0 = arith.constant 0 : i32
    %1 = arith.cmpi eq, %arg3, %c0_i32_0 : i32
    %2 = arith.andi %0, %1 : i1
    %3 = arith.extui %2 : i1 to i32
    %c0_i32_1 = arith.constant 0 : i32
    %4 = arith.cmpi ne, %3, %c0_i32_1 : i32
    scf.if %4 {
      %cst_17 = arith.constant 0.000000e+00 : f32
      %23 = vector.broadcast %cst_17 : f32 to vector<1x256xf32>
      %c0_18 = arith.constant 0 : index
      %c0_19 = arith.constant 0 : index
      %24 = vector.load %arg10[%c0_18, %c0_19] : memref<1x256xf32, #tpu.memory_space<vmem>>, vector<1x256xf32>
      tpu.vector_store %arg10[%c0_18, %c0_19], %23 {strides = array<i32>} : memref<1x256xf32, #tpu.memory_space<vmem>>, vector<1x256xf32>,
    } else {
    }
    %c0_i32_2 = arith.constant 0 : i32
    %5 = arith.cmpi eq, %arg3, %c0_i32_2 : i32
    %6 = arith.extui %5 : i1 to i32
    %c0_i32_3 = arith.constant 0 : i32
    %7 = arith.cmpi ne, %6, %c0_i32_3 : i32
    scf.if %7 {
      %cst_17 = arith.constant 0.000000e+00 : f32
      %23 = vector.broadcast %cst_17 : f32 to vector<16x256xf32>
      %c0_18 = arith.constant 0 : index
      %c0_19 = arith.constant 0 : index
      %24 = vector.load %arg9[%c0_18, %c0_19] : memref<16x256xf32, #tpu.memory_space<vmem>>, vector<16x256xf32>
      tpu.vector_store %arg9[%c0_18, %c0_19], %23 {strides = array<i32>} : memref<16x256xf32, #tpu.memory_space<vmem>>, vector<16x256xf32>,
    } else {
    }
    %c0 = arith.constant 0 : index
    %c0_4 = arith.constant 0 : index
    %8 = vector.load %arg9[%c0, %c0_4] : memref<16x256xf32, #tpu.memory_space<vmem>>, vector<16x256xf32>
    %c0_5 = arith.constant 0 : index
    %c0_6 = arith.constant 0 : index
    %c0_7 = arith.constant 0 : index
    %9 = vector.load %arg4[%c0_5, %c0_6, %c0_7] : memref<1x16x128xbf16, #tpu.memory_space<vmem>>, vector<1x16x128xbf16>
    %10 = vector.shape_cast %9 : vector<1x16x128xbf16> to vector<16x128xbf16>
    %c0_8 = arith.constant 0 : index
    %c0_9 = arith.constant 0 : index
    %11 = vector.load %arg5[%c0_8, %c0_9] : memref<128x256xbf16, #tpu.memory_space<vmem>>, vector<128x256xbf16>
    %cst = arith.constant dense<0.000000e+00> : vector<16x256xf32>
    %12 = tpu.matmul %10, %11, %cst {dimension_numbers = #tpu.dot_dimension_numbers<[1], [0], [0], [1], [0, 0, 1, 1], [], []>} : vector<16x128xbf16>, vector<128x256xbf16>, vector<16x256xf32> -> vector<16x256xf32>
    %13 = arith.addf %8, %12 : vector<16x256xf32>
    %c0_10 = arith.constant 0 : index
    %c0_11 = arith.constant 0 : index
    %14 = vector.load %arg9[%c0_10, %c0_11] : memref<16x256xf32, #tpu.memory_space<vmem>>, vector<16x256xf32>
    tpu.vector_store %arg9[%c0_10, %c0_11], %13 {strides = array<i32>} : memref<16x256xf32, #tpu.memory_space<vmem>>, vector<16x256xf32>,
    %c0_i32_12 = arith.constant 0 : i32
    %15 = arith.cmpi eq, %arg3, %c0_i32_12 : i32
    %16 = arith.extui %15 : i1 to i32
    %c0_i32_13 = arith.constant 0 : i32
    %17 = arith.cmpi ne, %16, %c0_i32_13 : i32
    scf.if %17 {
      %c0_17 = arith.constant 0 : index
      %c0_18 = arith.constant 0 : index
      %23 = vector.load %arg9[%c0_17, %c0_18] : memref<16x256xf32, #tpu.memory_space<vmem>>, vector<16x256xf32>
      %c0_19 = arith.constant 0 : index
      %c0_20 = arith.constant 0 : index
      %24 = vector.load %arg6[%c0_19, %c0_20] : memref<1x256xf32, #tpu.memory_space<vmem>>, vector<1x256xf32>
      %25 = vector.broadcast %24 : vector<1x256xf32> to vector<16x256xf32>
      %26 = arith.mulf %23, %25 : vector<16x256xf32>
      %c0_21 = arith.constant 0 : index
      %c0_22 = arith.constant 0 : index
      %27 = vector.load %arg7[%c0_21, %c0_22] : memref<1x256xf32, #tpu.memory_space<vmem>>, vector<1x256xf32>
      %28 = vector.broadcast %27 : vector<1x256xf32> to vector<16x256xf32>
      %29 = arith.addf %26, %28 : vector<16x256xf32>
      %30 = arith.negf %29 : vector<16x256xf32>
      %31 = math.exp %30 : vector<16x256xf32>
      %cst_23 = arith.constant 1.000000e+00 : f32
      %32 = vector.broadcast %cst_23 : f32 to vector<16x256xf32>
      %33 = arith.addf %32, %31 : vector<16x256xf32>
      %34 = arith.divf %32, %33 : vector<16x256xf32>
      %35 = arith.mulf %29, %34 : vector<16x256xf32>
      %c16_i32 = arith.constant 16 : i32
      %36 = arith.muli %arg2, %c16_i32 : i32
      %37 = tpu.iota {dimensions = array<i32: 0>} : vector<16x256xi32>
      %38 = vector.broadcast %36 : i32 to vector<16x256xi32>
      %39 = arith.addi %38, %37 : vector<16x256xi32>
      %c16_i32_24 = arith.constant 16 : i32
      %40 = vector.broadcast %c16_i32_24 : i32 to vector<16x256xi32>
      %41 = arith.cmpi slt, %39, %40 : vector<16x256xi32>
      %cst_25 = arith.constant 0.000000e+00 : f32
      %42 = vector.broadcast %cst_25 : f32 to vector<16x256xf32>
      %43 = arith.select %41, %35, %42 : vector<16x256xi1>, vector<16x256xf32>
      %c0_26 = arith.constant 0 : index
      %c0_27 = arith.constant 0 : index
      %44 = vector.load %arg10[%c0_26, %c0_27] : memref<1x256xf32, #tpu.memory_space<vmem>>, vector<1x256xf32>
      %cst_28 = arith.constant dense<0.000000e+00> : vector<256xf32>
      %45 = vector.multi_reduction <add>, %43, %cst_28 [0] : vector<16x256xf32> to vector<256xf32>
      %46 = vector.shape_cast %45 : vector<256xf32> to vector<1x256xf32>
      %47 = arith.addf %44, %46 : vector<1x256xf32>
      %c0_29 = arith.constant 0 : index
      %c0_30 = arith.constant 0 : index
      %48 = vector.load %arg10[%c0_29, %c0_30] : memref<1x256xf32, #tpu.memory_space<vmem>>, vector<1x256xf32>
      tpu.vector_store %arg10[%c0_29, %c0_30], %47 {strides = array<i32>} : memref<1x256xf32, #tpu.memory_space<vmem>>, vector<1x256xf32>,
    } else {
    }
    %c0_i32_14 = arith.constant 0 : i32
    %18 = arith.cmpi eq, %arg2, %c0_i32_14 : i32
    %c0_i32_15 = arith.constant 0 : i32
    %19 = arith.cmpi eq, %arg3, %c0_i32_15 : i32
    %20 = arith.andi %18, %19 : i1
    %21 = arith.extui %20 : i1 to i32
    %c0_i32_16 = arith.constant 0 : i32
    %22 = arith.cmpi ne, %21, %c0_i32_16 : i32
    scf.if %22 {
      %c0_17 = arith.constant 0 : index
      %c0_18 = arith.constant 0 : index
      %23 = vector.load %arg10[%c0_17, %c0_18] : memref<1x256xf32, #tpu.memory_space<vmem>>, vector<1x256xf32>
      %cst_19 = arith.constant 6.250000e-02 : f32
      %24 = vector.broadcast %cst_19 : f32 to vector<1x256xf32>
      %25 = arith.mulf %23, %24 : vector<1x256xf32>
      %c0_20 = arith.constant 0 : index
      %c0_21 = arith.constant 0 : index
      %c0_22 = arith.constant 0 : index
      %26 = vector.load %arg8[%c0_20, %c0_21, %c0_22] : memref<1x1x256xf32, #tpu.memory_space<vmem>>, vector<1x1x256xf32>
      %27 = vector.shape_cast %26 : vector<1x1x256xf32> to vector<1x256xf32>
      %28 = vector.shape_cast %25 : vector<1x256xf32> to vector<1x1x256xf32>
      tpu.vector_store %arg8[%c0_20, %c0_21, %c0_22], %28 {strides = array<i32>} : memref<1x1x256xf32, #tpu.memory_space<vmem>>, vector<1x1x256xf32>,
    } else {
    }
    return
  }
  func.func @transform_0(%arg0: i32, %arg1: i32, %arg2: i32, %arg3: i32) -> (i32, i32, i32) {
    %c0_i32 = arith.constant 0 : i32
    return %arg0, %arg2, %arg3 : i32, i32, i32
  }
  func.func @transform_1(%arg0: i32, %arg1: i32, %arg2: i32, %arg3: i32) -> (i32, i32) {
    %c0_i32 = arith.constant 0 : i32
    return %arg3, %arg1 : i32, i32
  }
  func.func @transform_2(%arg0: i32, %arg1: i32, %arg2: i32, %arg3: i32) -> (i32, i32) {
    %c0_i32 = arith.constant 0 : i32
    %c0_i32_0 = arith.constant 0 : i32
    return %c0_i32, %arg1 : i32, i32
  }
  func.func @transform_3(%arg0: i32, %arg1: i32, %arg2: i32, %arg3: i32) -> (i32, i32) {
    %c0_i32 = arith.constant 0 : i32
    %c0_i32_0 = arith.constant 0 : i32
    return %c0_i32, %arg1 : i32, i32
  }
  func.func @transform_4(%arg0: i32, %arg1: i32, %arg2: i32, %arg3: i32) -> (i32, i32, i32) {
    %c0_i32 = arith.constant 0 : i32
    %c0_i32_0 = arith.constant 0 : i32
    return %arg0, %c0_i32, %arg1 : i32, i32, i32
  }
}

</mosaic_0001>

<llo_original>
// kernel: fwd.14
$region0: #{fwd.14}
  #allocation0 [shape = 'u32[]', space=smem, size = 0x4, offset = 0x4, fixed_abs, tag = 'smem constant byte address 0x4 - core index']
  #allocation1 [shape = 'u32[144,128]{1,0:T(1,128)}', space=vmem, size = 0x12000, scoped, tag = 'internal scratch']
  #allocation2 [shape = 'f32[64,128]{1,0:T(8,128)}', space=vmem, size = 0x8000, scoped, tag = 'scratch operand']
  %s0 = inlined_call_operand.vmem [shape: bf16[2,64,512], index: 0, kind: input, shape index: {}]
  %s1 = inlined_call_operand.vmem [shape: bf16[512,128], index: 1, kind: input, shape index: {}]
  %s2 = inlined_call_operand.vmem [shape: f32[1,128], index: 2, kind: input, shape index: {}]
  %s3 = inlined_call_operand.vmem [shape: f32[1,128], index: 3, kind: input, shape index: {}]
  %s4 = inlined_call_operand.vmem [shape: bf16[2,64,128], index: 4, kind: output, shape index: {}]
  %s5 = sld [smem:[#allocation0]]
  $region57: #{fwd.14} parent=0
    _
  %s7 = ssub.s32 1, %s5
  %s8 = scalar_select 0, %s7, %s5
  loop: start=0, step=1, limit=4
  $region2: #{fwd.14} parent=0 // loop_pre_header
    _
  $region3: #{fwd.14} parent=0 // loop_header
    %s10 = sphi 0, %s14
    %p11 = scmp.ge.s32.totalorder %s10, 4
    %s17 = sphi 0, %s43
    %s18 = sphi 0, %s39
    %s19 = sphi 0, %s35
    %s20 = sphi 0, %s31
    %s21 = sphi 0, %s17
    %s22 = sphi 0, %s18
    %s23 = sphi 0, %s19
    %s24 = sphi 0, %s20
    %s25 = sphi 0, %s21
    %s26 = sphi 0, %s22
    %s27 = sphi 0, %s23
    %s28 = sphi 0, %s24
    %s50 = sphi 0, %s52
    %s53 = sphi 0, %s50
    %s54 = sphi 0, %s53
    %s70 = sphi 0, %s54
    %s78 = sphi 0, %s80
    %s81 = sphi 0, %s78
    %s82 = sphi 0, %s81
    %s98 = sphi 0, %s82
    %s104 = sphi 0, %s106
    %s107 = sphi 0, %s104
    %s108 = sphi 0, %s107
    %s124 = sphi 0, %s108
    %s130 = sphi 0, %s132
    %s133 = sphi 0, %s130
    %s134 = sphi 0, %s133
    %s150 = sphi 0, %s134
    %s160 = sphi 0, %s162
    %s163 = sphi 0, %s160
    %s164 = sphi 0, %s163
    %s180 = sphi 0, %s164
  $region4: #{fwd.14} parent=0 // loop_header_branch
    %13 = sbr.rel (%p11) target = $region8
  $region5: #{fwd.14} parent=0 // loop_body
    %s15 = ssub.s32 %s10, 1
    %s16 = ssub.s32 %s10, 2
    %s29 = sadd.s32 1, %s20
    %p30 = scmp.ge.s32.totalorder %s29, 1
    %s31 = scalar_select %p30, 0, %s29
    %s32 = sadd.s32 1, %s19
    %s33 = scalar_select %p30, %s32, %s19
    %p34 = scmp.ge.s32.totalorder %s33, 1
    %s35 = scalar_select %p34, 0, %s33
    %s36 = sadd.s32 1, %s18
    %s37 = scalar_select %p34, %s36, %s18
    %p38 = scmp.ge.s32.totalorder %s37, 1
    %s39 = scalar_select %p38, 0, %s37
    %s40 = sadd.s32 1, %s17
    %s41 = scalar_select %p38, %s40, %s17
    %p42 = scmp.ge.s32.totalorder %s41, 2
    %s43 = scalar_select %p42, 0, %s41
    %s44 = ssub.s32 %s17, %s43
    %s45 = ssub.s32 %s18, %s39
    %s46 = sor.u32 %s44, %s45
    %s47 = ssub.s32 %s20, %s31
    %s48 = sor.u32 %s46, %s47
    %p49 = scmp.eq.s32.totalorder %s48, 0
    %s51 = sadd.s32 %s50, 1
    %s52 = scalar_select %p49, %s50, %s51
    %p55 = pneg %p49
    %p56 = scmp.eq.s32.totalorder %s10, 1
    %p57 = por %p55, %p56
    %p58 = scmp.ne.s32.totalorder %s50, %s53
    %p59 = scmp.eq.s32.totalorder %s10, 0
    %p60 = por %p58, %p59
    %p61 = scmp.ne.s32.totalorder %s50, %s53
    %p62 = scmp.eq.s32.totalorder %s15, 1
    %p63 = por %p61, %p62
    %p64 = scmp.ne.s32.totalorder %s53, %s54
    %p65 = scmp.eq.s32.totalorder %s15, 0
    %p66 = por %p64, %p65
    %p67 = scmp.ne.s32.totalorder %s53, %s54
    %p68 = scmp.eq.s32.totalorder %s16, 1
    %p69 = por %p67, %p68
    %p71 = scmp.ne.s32.totalorder %s54, %s70
    %p72 = scmp.eq.s32.totalorder %s16, 0
    %p73 = por %p71, %p72
    %s74 = ssub.s32 %s20, %s31
    %s75 = ssub.s32 %s19, %s35
    %s76 = sor.u32 %s74, %s75
    %p77 = scmp.eq.s32.totalorder %s76, 0
    %s79 = sadd.s32 %s78, 1
    %s80 = scalar_select %p77, %s78, %s79
    %p83 = pneg %p77
    %p84 = scmp.eq.s32.totalorder %s10, 1
    %p85 = por %p83, %p84
    %p86 = scmp.ne.s32.totalorder %s78, %s81
    %p87 = scmp.eq.s32.totalorder %s10, 0
    %p88 = por %p86, %p87
    %p89 = scmp.ne.s32.totalorder %s78, %s81
    %p90 = scmp.eq.s32.totalorder %s15, 1
    %p91 = por %p89, %p90
    %p92 = scmp.ne.s32.totalorder %s81, %s82
    %p93 = scmp.eq.s32.totalorder %s15, 0
    %p94 = por %p92, %p93
    %p95 = scmp.ne.s32.totalorder %s81, %s82
    %p96 = scmp.eq.s32.totalorder %s16, 1
    %p97 = por %p95, %p96
    %p99 = scmp.ne.s32.totalorder %s82, %s98
    %p100 = scmp.eq.s32.totalorder %s16, 0
    %p101 = por %p99, %p100
    %s102 = ssub.s32 %s19, %s35
    %p103 = scmp.eq.s32.totalorder %s102, 0
    %s105 = sadd.s32 %s104, 1
    %s106 = scalar_select %p103, %s104, %s105
    %p109 = pneg %p103
    %p110 = scmp.eq.s32.totalorder %s10, 1
    %p111 = por %p109, %p110
    %p112 = scmp.ne.s32.totalorder %s104, %s107
    %p113 = scmp.eq.s32.totalorder %s10, 0
    %p114 = por %p112, %p113
    %p115 = scmp.ne.s32.totalorder %s104, %s107
    %p116 = scmp.eq.s32.totalorder %s15, 1
    %p117 = por %p115, %p116
    %p118 = scmp.ne.s32.totalorder %s107, %s108
    %p119 = scmp.eq.s32.totalorder %s15, 0
    %p120 = por %p118, %p119
    %p121 = scmp.ne.s32.totalorder %s107, %s108
    %p122 = scmp.eq.s32.totalorder %s16, 1
    %p123 = por %p121, %p122
    %p125 = scmp.ne.s32.totalorder %s108, %s124
    %p126 = scmp.eq.s32.totalorder %s16, 0
    %p127 = por %p125, %p126
    %s128 = ssub.s32 %s19, %s35
    %p129 = scmp.eq.s32.totalorder %s128, 0
    %s131 = sadd.s32 %s130, 1
    %s132 = scalar_select %p129, %s130, %s131
    %p135 = pneg %p129
    %p136 = scmp.eq.s32.totalorder %s10, 1
    %p137 = por %p135, %p136
    %p138 = scmp.ne.s32.totalorder %s130, %s133
    %p139 = scmp.eq.s32.totalorder %s10, 0
    %p140 = por %p138, %p139
    %p141 = scmp.ne.s32.totalorder %s130, %s133
    %p142 = scmp.eq.s32.totalorder %s15, 1
    %p143 = por %p141, %p142
    %p144 = scmp.ne.s32.totalorder %s133, %s134
    %p145 = scmp.eq.s32.totalorder %s15, 0
    %p146 = por %p144, %p145
    %p147 = scmp.ne.s32.totalorder %s133, %s134
    %p148 = scmp.eq.s32.totalorder %s16, 1
    %p149 = por %p147, %p148
    %p151 = scmp.ne.s32.totalorder %s134, %s150
    %p152 = scmp.eq.s32.totalorder %s16, 0
    %p153 = por %p151, %p152
    %s154 = ssub.s32 %s17, %s43
    %s155 = ssub.s32 %s18, %s39
    %s156 = sor.u32 %s154, %s155
    %s157 = ssub.s32 %s19, %s35
    %s158 = sor.u32 %s156, %s157
    %p159 = scmp.eq.s32.totalorder %s158, 0
    %s161 = sadd.s32 %s160, 1
    %s162 = scalar_select %p159, %s160, %s161
    %p165 = pneg %p159
    %p166 = scmp.eq.s32.totalorder %s10, 1
    %p167 = por %p165, %p166
    %p168 = scmp.ne.s32.totalorder %s160, %s163
    %p169 = scmp.eq.s32.totalorder %s10, 0
    %p170 = por %p168, %p169
    %p171 = scmp.ne.s32.totalorder %s160, %s163
    %p172 = scmp.eq.s32.totalorder %s15, 1
    %p173 = por %p171, %p172
    %p174 = scmp.ne.s32.totalorder %s163, %s164
    %p175 = scmp.eq.s32.totalorder %s15, 0
    %p176 = por %p174, %p175
    %p177 = scmp.ne.s32.totalorder %s163, %s164
    %p178 = scmp.eq.s32.totalorder %s16, 1
    %p179 = por %p177, %p178
    %p181 = scmp.ne.s32.totalorder %s164, %s180
    %p182 = scmp.eq.s32.totalorder %s16, 0
    %p183 = por %p181, %p182
    %p184 = scmp.le.s32.totalorder 1, %s10
    %p185 = scmp.lt.s32.totalorder %s10, 3
    %p186 = pnand %p184, %p185
    %p187 = pneg %p186
    // Predicated region
    $region9: #{fwd.14} parent=5 // pred_check
      _
    $region10: #{fwd.14} parent=5 // pred_check_branch
      %189 = sbr.rel (%p186) target = $region12
    $region11: #{fwd.14} parent=5 // pred_region
      %s190 = ssub.s32 %s10, 1
      // Predicated region
      $region13: #{fwd.14} parent=11 // pred_check
        %p191 = pneg %p94
      $region14: #{fwd.14} parent=11 // pred_check_branch
        %193 = sbr.rel (%p191) target = $region16
      $region15: #{fwd.14} parent=11 // pred_region
        %s194 = smul.u32 64, %s24
        %p195 = scmp.lt.s32.totalorder %s194, 63
        %s196 = scalar_select %p195, %s194, 63
        %p197 = scmp.lt.s32.totalorder %s23, 0
        %s198 = scalar_select %p197, %s23, 0
        %s199 = sadd.s32 %s198, %s196
        %s200 = smul.addr %s199, 4
        %s201 = scalar_lea.vmem %s1, %s200
        %s202 = smul.u32 64, %s24
      $region16: #{fwd.14} parent=11 // pred_fallthru
        _
      // Predicated region
      $region17: #{fwd.14} parent=11 // pred_check
        %p203 = pneg %p120
      $region18: #{fwd.14} parent=11 // pred_check_branch
        %205 = sbr.rel (%p203) target = $region20
      $region19: #{fwd.14} parent=11 // pred_region
        %p206 = scmp.lt.s32.totalorder %s23, 0
        %s207 = scalar_select %p206, %s23, 0
        %s208 = scalar_lea.vmem %s2, %s207
      $region20: #{fwd.14} parent=11 // pred_fallthru
        _
      // Predicated region
      $region21: #{fwd.14} parent=11 // pred_check
        %p209 = pneg %p146
      $region22: #{fwd.14} parent=11 // pred_check_branch
        %211 = sbr.rel (%p209) target = $region24
      $region23: #{fwd.14} parent=11 // pred_region
        %p212 = scmp.lt.s32.totalorder %s23, 0
        %s213 = scalar_select %p212, %s23, 0
        %s214 = scalar_lea.vmem %s3, %s213
      $region24: #{fwd.14} parent=11 // pred_fallthru
        _
    $region12: #{fwd.14} parent=5 // pred_fallthru
      _
    %p215 = scmp.lt.s32.totalorder %s10, 2
    // Predicated region
    $region25: #{fwd.14} parent=5 // pred_check
      %p216 = pneg %p215
    $region26: #{fwd.14} parent=5 // pred_check_branch
      %218 = sbr.rel (%p216) target = $region28
    $region27: #{fwd.14} parent=5 // pred_region
      // Predicated region
      $region29: #{fwd.14} parent=27 // pred_check
        %p219 = pneg %p60
      $region30: #{fwd.14} parent=27 // pred_check_branch
        %221 = sbr.rel (%p219) target = $region32
      $region31: #{fwd.14} parent=27 // pred_region
        %s222 = smul.u32 8, %s18
        %s223 = smul.u32 4, %s20
        %p224 = scmp.lt.s32.totalorder %s17, 1
        %s225 = scalar_select %p224, %s17, 1
        %p226 = scmp.lt.s32.totalorder %s222, 7
        %s227 = scalar_select %p226, %s222, 7
        %p228 = scmp.lt.s32.totalorder %s223, 3
        %s229 = scalar_select %p228, %s223, 3
        %s230 = smul.addr %s227, 4
        %s231 = sadd.s32 %s229, %s230
        %s232 = smul.addr %s225, 32
        %s233 = sadd.s32 %s231, %s232
        %s234 = smul.addr %s233, 4
        %s235 = scalar_lea.vmem %s0, %s234
        %s236 = smul.u32 8, %s18
        %s237 = smul.u32 4, %s20
      $region32: #{fwd.14} parent=27 // pred_fallthru
        _
    $region28: #{fwd.14} parent=5 // pred_fallthru
      _
    %p238 = scmp.le.s32.totalorder 1, %s10
    %p239 = scmp.lt.s32.totalorder %s10, 3
    %p240 = pnand %p238, %p239
    %p241 = pneg %p240
    // Predicated region
    $region33: #{fwd.14} parent=5 // pred_check
      _
    $region34: #{fwd.14} parent=5 // pred_check_branch
      %243 = sbr.rel (%p240) target = $region36
    $region35: #{fwd.14} parent=5 // pred_region
      %s244 = ssub.s32 %s10, 1
      %s245 = smul.u32 8, %s22
      %s246 = smul.u32 4, %s24
      %p247 = scmp.lt.s32.totalorder %s21, 1
      %s248 = scalar_select %p247, %s21, 1
      %p249 = scmp.lt.s32.totalorder %s245, 7
      %s250 = scalar_select %p249, %s245, 7
      %p251 = scmp.lt.s32.totalorder %s246, 3
      %s252 = scalar_select %p251, %s246, 3
      %s253 = smul.addr %s250, 4
      %s254 = sadd.s32 %s252, %s253
      %s255 = smul.addr %s248, 32
      %s256 = sadd.s32 %s254, %s255
      %s257 = smul.addr %s256, 4
      %s258 = scalar_lea.vmem %s0, %s257
      %p259 = pneg %p66
      %p260 = pneg %p63
      %s261 = smul.u32 64, %s24
      %p262 = scmp.lt.s32.totalorder %s261, 63
      %s263 = scalar_select %p262, %s261, 63
      %p264 = scmp.lt.s32.totalorder %s23, 0
      %s265 = scalar_select %p264, %s23, 0
      %s266 = sadd.s32 %s265, %s263
      %s267 = smul.addr %s266, 4
      %s268 = scalar_lea.vmem %s1, %s267
      %p269 = pneg %p94
      %p270 = pneg %p91
      %p271 = scmp.lt.s32.totalorder %s23, 0
      %s272 = scalar_select %p271, %s23, 0
      %s273 = scalar_lea.vmem %s2, %s272
      %p274 = pneg %p120
      %p275 = pneg %p117
      %p276 = scmp.lt.s32.totalorder %s23, 0
      %s277 = scalar_select %p276, %s23, 0
      %s278 = scalar_lea.vmem %s3, %s277
      %p279 = pneg %p146
      %p280 = pneg %p143
      %p281 = pneg %p176
      %p282 = pneg %p173
      %s283 = smul.u32 8, %s22
      %p284 = scmp.lt.s32.totalorder %s21, 1
      %s285 = scalar_select %p284, %s21, 1
      %p286 = scmp.lt.s32.totalorder %s283, 7
      %s287 = scalar_select %p286, %s283, 7
      %p288 = scmp.lt.s32.totalorder %s23, 0
      %s289 = scalar_select %p288, %s23, 0
      %s290 = sadd.s32 %s289, %s287
      %s291 = smul.addr %s285, 8
      %s292 = sadd.s32 %s290, %s291
      %s293 = smul.addr %s292, 4
      %s294 = scalar_lea.vmem %s4, %s293
      %s295 = smul.u32 8, %s22
      %s296 = smul.u32 4, %s24
      %p297 = scmp.lt.s32.totalorder %s21, 1
      %s298 = scalar_select %p297, %s21, 1
      %p299 = scmp.lt.s32.totalorder %s295, 7
      %s300 = scalar_select %p299, %s295, 7
      %p301 = scmp.lt.s32.totalorder %s296, 3
      %s302 = scalar_select %p301, %s296, 3
      %s303 = smul.addr %s300, 4
      %s304 = sadd.s32 %s302, %s303
      %s305 = smul.addr %s298, 32
      %s306 = sadd.s32 %s304, %s305
      %s307 = smul.addr %s306, 4
      %s308 = scalar_lea.vmem %s0, %s307
      %s309 = smul.u32 8, %s22
      %s310 = smul.u32 4, %s24
      %s311 = smul.u32 64, %s24
      %p312 = scmp.lt.s32.totalorder %s311, 63
      %s313 = scalar_select %p312, %s311, 63
      %p314 = scmp.lt.s32.totalorder %s23, 0
      %s315 = scalar_select %p314, %s23, 0
      %s316 = sadd.s32 %s315, %s313
      %s317 = smul.addr %s316, 4
      %s318 = scalar_lea.vmem %s1, %s317
      %s319 = smul.u32 64, %s24
      %p320 = scmp.lt.s32.totalorder %s23, 0
      %s321 = scalar_select %p320, %s23, 0
      %s322 = scalar_lea.vmem %s2, %s321
      %p323 = scmp.lt.s32.totalorder %s23, 0
      %s324 = scalar_select %p323, %s23, 0
      %s325 = scalar_lea.vmem %s3, %s324
      %s326 = smul.u32 8, %s22
      %p327 = scmp.lt.s32.totalorder %s21, 1
      %s328 = scalar_select %p327, %s21, 1
      %p329 = scmp.lt.s32.totalorder %s326, 7
      %s330 = scalar_select %p329, %s326, 7
      %p331 = scmp.lt.s32.totalorder %s23, 0
      %s332 = scalar_select %p331, %s23, 0
      %s333 = sadd.s32 %s332, %s330
      %s334 = smul.addr %s328, 8
      %s335 = sadd.s32 %s333, %s334
      %s336 = smul.addr %s335, 4
      %s337 = scalar_lea.vmem %s4, %s336
      %s338 = smul.u32 8, %s22
      %p340 = scmp.eq.s32.totalorder %s24, 0
      // Predicated region
      $region37: #{fwd.14} parent=35 // pred_check
        %p341 = pneg %p340
      $region38: #{fwd.14} parent=35 // pred_check_branch
        %343 = sbr.rel (%p341) target = $region40
      $region39: #{fwd.14} parent=35 // pred_region
        %344 = vst [vmem:[#allocation2] sm:$0xff] 0.0
        %345 = vst [vmem:[#allocation2 + $0x8] sm:$0xff] 0.0
        %346 = vst [vmem:[#allocation2 + $0x10] sm:$0xff] 0.0
        %347 = vst [vmem:[#allocation2 + $0x18] sm:$0xff] 0.0
        %348 = vst [vmem:[#allocation2 + $0x20] sm:$0xff] 0.0
        %349 = vst [vmem:[#allocation2 + $0x28] sm:$0xff] 0.0
        %350 = vst [vmem:[#allocation2 + $0x30] sm:$0xff] 0.0
        %351 = vst [vmem:[#allocation2 + $0x38] sm:$0xff] 0.0
      $region40: #{fwd.14} parent=35 // pred_fallthru
        _
      %v352 = vld [vmem:[%s308] sm:$0xff]
      %v353 = vld [vmem:[%s308 + $0x8] sm:$0xff]
      %v354 = vld [vmem:[%s308 + $0x10] sm:$0xff]
      %v355 = vld [vmem:[%s308 + $0x18] sm:$0xff]
      %v356 = vld [vmem:[%s308 + $0x20] sm:$0xff]
      %v357 = vld [vmem:[%s308 + $0x28] sm:$0xff]
      %v358 = vld [vmem:[%s308 + $0x30] sm:$0xff]
      %v359 = vld [vmem:[%s308 + $0x38] sm:$0xff]
      %v360 = vld [vmem:[%s308 + $0x40] sm:$0xff]
      %v361 = vld [vmem:[%s308 + $0x48] sm:$0xff]
      %v362 = vld [vmem:[%s308 + $0x50] sm:$0xff]
      %v363 = vld [vmem:[%s308 + $0x58] sm:$0xff]
      %v364 = vld [vmem:[%s308 + $0x60] sm:$0xff]
      %v365 = vld [vmem:[%s308 + $0x68] sm:$0xff]
      %v366 = vld [vmem:[%s308 + $0x70] sm:$0xff]
      %v367 = vld [vmem:[%s308 + $0x78] sm:$0xff]
      %v368 = vld [vmem:[#allocation2] sm:$0xff]
      %v369 = vld [vmem:[#allocation2 + $0x8] sm:$0xff]
      %v370 = vld [vmem:[#allocation2 + $0x10] sm:$0xff]
      %v371 = vld [vmem:[#allocation2 + $0x18] sm:$0xff]
      %v372 = vld [vmem:[#allocation2 + $0x20] sm:$0xff]
      %v373 = vld [vmem:[#allocation2 + $0x28] sm:$0xff]
      %v374 = vld [vmem:[#allocation2 + $0x30] sm:$0xff]
      %v375 = vld [vmem:[#allocation2 + $0x38] sm:$0xff]
      %v376 = vld [vmem:[%s318] sm:$0xf]
      %v377 = vld [vmem:[%s318 + $0x4] sm:$0xf]
      %v378 = vld [vmem:[%s318 + $0x8] sm:$0xf]
      %v379 = vld [vmem:[%s318 + $0xc] sm:$0xf]
      %v380 = vld [vmem:[%s318 + $0x10] sm:$0xf]
      %v381 = vld [vmem:[%s318 + $0x14] sm:$0xf]
      %v382 = vld [vmem:[%s318 + $0x18] sm:$0xf]
      %v383 = vld [vmem:[%s318 + $0x1c] sm:$0xf]
      %v384 = vld [vmem:[%s318 + $0x20] sm:$0xf]
      %v385 = vld [vmem:[%s318 + $0x24] sm:$0xf]
      %v386 = vld [vmem:[%s318 + $0x28] sm:$0xf]
      %v387 = vld [vmem:[%s318 + $0x2c] sm:$0xf]
      %v388 = vld [vmem:[%s318 + $0x30] sm:$0xf]
      %v389 = vld [vmem:[%s318 + $0x34] sm:$0xf]
      %v390 = vld [vmem:[%s318 + $0x38] sm:$0xf]
      %v391 = vld [vmem:[%s318 + $0x3c] sm:$0xf]
      %v392 = vld [vmem:[%s318 + $0x40] sm:$0xf]
      %v393 = vld [vmem:[%s318 + $0x44] sm:$0xf]
      %v394 = vld [vmem:[%s318 + $0x48] sm:$0xf]
      %v395 = vld [vmem:[%s318 + $0x4c] sm:$0xf]
      %v396 = vld [vmem:[%s318 + $0x50] sm:$0xf]
      %v397 = vld [vmem:[%s318 + $0x54] sm:$0xf]
      %v398 = vld [vmem:[%s318 + $0x58] sm:$0xf]
      %v399 = vld [vmem:[%s318 + $0x5c] sm:$0xf]
      %v400 = vld [vmem:[%s318 + $0x60] sm:$0xf]
      %v401 = vld [vmem:[%s318 + $0x64] sm:$0xf]
      %v402 = vld [vmem:[%s318 + $0x68] sm:$0xf]
      %v403 = vld [vmem:[%s318 + $0x6c] sm:$0xf]
      %v404 = vld [vmem:[%s318 + $0x70] sm:$0xf]
      %v405 = vld [vmem:[%s318 + $0x74] sm:$0xf]
      %v406 = vld [vmem:[%s318 + $0x78] sm:$0xf]
      %v407 = vld [vmem:[%s318 + $0x7c] sm:$0xf]
      %v408 = vld [vmem:[%s318 + $0x80] sm:$0xf]
      %v409 = vld [vmem:[%s318 + $0x84] sm:$0xf]
      %v410 = vld [vmem:[%s318 + $0x88] sm:$0xf]
      %v411 = vld [vmem:[%s318 + $0x8c] sm:$0xf]
      %v412 = vld [vmem:[%s318 + $0x90] sm:$0xf]
      %v413 = vld [vmem:[%s318 + $0x94] sm:$0xf]
      %v414 = vld [vmem:[%s318 + $0x98] sm:$0xf]
      %v415 = vld [vmem:[%s318 + $0x9c] sm:$0xf]
      %v416 = vld [vmem:[%s318 + $0xa0] sm:$0xf]
      %v417 = vld [vmem:[%s318 + $0xa4] sm:$0xf]
      %v418 = vld [vmem:[%s318 + $0xa8] sm:$0xf]
      %v419 = vld [vmem:[%s318 + $0xac] sm:$0xf]
      %v420 = vld [vmem:[%s318 + $0xb0] sm:$0xf]
      %v421 = vld [vmem:[%s318 + $0xb4] sm:$0xf]
      %v422 = vld [vmem:[%s318 + $0xb8] sm:$0xf]
      %v423 = vld [vmem:[%s318 + $0xbc] sm:$0xf]
      %v424 = vld [vmem:[%s318 + $0xc0] sm:$0xf]
      %v425 = vld [vmem:[%s318 + $0xc4] sm:$0xf]
      %v426 = vld [vmem:[%s318 + $0xc8] sm:$0xf]
      %v427 = vld [vmem:[%s318 + $0xcc] sm:$0xf]
      %v428 = vld [vmem:[%s318 + $0xd0] sm:$0xf]
      %v429 = vld [vmem:[%s318 + $0xd4] sm:$0xf]
      %v430 = vld [vmem:[%s318 + $0xd8] sm:$0xf]
      %v431 = vld [vmem:[%s318 + $0xdc] sm:$0xf]
      %v432 = vld [vmem:[%s318 + $0xe0] sm:$0xf]
      %v433 = vld [vmem:[%s318 + $0xe4] sm:$0xf]
      %v434 = vld [vmem:[%s318 + $0xe8] sm:$0xf]
      %v435 = vld [vmem:[%s318 + $0xec] sm:$0xf]
      %v436 = vld [vmem:[%s318 + $0xf0] sm:$0xf]
      %v437 = vld [vmem:[%s318 + $0xf4] sm:$0xf]
      %v438 = vld [vmem:[%s318 + $0xf8] sm:$0xf]
      %v439 = vld [vmem:[%s318 + $0xfc] sm:$0xf]
      %v456 = vunpack.c.l.b16 %v352
      %v457 = vunpack.c.h.b16 %v352
      %v458 = vunpack.c.l.b16 %v353
      %v459 = vunpack.c.h.b16 %v353
      %v460 = vunpack.c.l.b16 %v354
      %v461 = vunpack.c.h.b16 %v354
      %v462 = vunpack.c.l.b16 %v355
      %v463 = vunpack.c.h.b16 %v355
      %v464 = vunpack.c.l.b16 %v356
      %v465 = vunpack.c.h.b16 %v356
      %v466 = vunpack.c.l.b16 %v357
      %v467 = vunpack.c.h.b16 %v357
      %v468 = vunpack.c.l.b16 %v358
      %v469 = vunpack.c.h.b16 %v358
      %v470 = vunpack.c.l.b16 %v359
      %v471 = vunpack.c.h.b16 %v359
      %v472 = vunpack.c.l.b16 %v360
      %v473 = vunpack.c.h.b16 %v360
      %v474 = vunpack.c.l.b16 %v361
      %v475 = vunpack.c.h.b16 %v361
      %v476 = vunpack.c.l.b16 %v362
      %v477 = vunpack.c.h.b16 %v362
      %v478 = vunpack.c.l.b16 %v363
      %v479 = vunpack.c.h.b16 %v363
      %v480 = vunpack.c.l.b16 %v364
      %v481 = vunpack.c.h.b16 %v364
      %v482 = vunpack.c.l.b16 %v365
      %v483 = vunpack.c.h.b16 %v365
      %v484 = vunpack.c.l.b16 %v366
      %v485 = vunpack.c.h.b16 %v366
      %v486 = vunpack.c.l.b16 %v367
      %v487 = vunpack.c.h.b16 %v367
      %v488 = vpack.c.b16 %v460, %v456
      %v489 = vpack.c.b16 %v461, %v457
      %v490 = vpack.c.b16 %v462, %v458
      %v491 = vpack.c.b16 %v463, %v459
      %v492 = vpack.c.b16 %v468, %v464
      %v493 = vpack.c.b16 %v469, %v465
      %v494 = vpack.c.b16 %v470, %v466
      %v495 = vpack.c.b16 %v471, %v467
      %v496 = vpack.c.b16 %v476, %v472
      %v497 = vpack.c.b16 %v477, %v473
      %v498 = vpack.c.b16 %v478, %v474
      %v499 = vpack.c.b16 %v479, %v475
      %v500 = vpack.c.b16 %v484, %v480
      %v501 = vpack.c.b16 %v485, %v481
      %v502 = vpack.c.b16 %v486, %v482
      %v503 = vpack.c.b16 %v487, %v483
      %v584 = vunpack.c.l.b16 %v376
      %v585 = vunpack.c.l.b16 %v377
      %v586 = vunpack.c.l.b16 %v378
      %v587 = vunpack.c.l.b16 %v379
      %v588 = vunpack.c.l.b16 %v380
      %v589 = vunpack.c.l.b16 %v381
      %v590 = vunpack.c.l.b16 %v382
      %v591 = vunpack.c.l.b16 %v383
      %v592 = vunpack.c.l.b16 %v384
      %v593 = vunpack.c.l.b16 %v385
      %v594 = vunpack.c.l.b16 %v386
      %v595 = vunpack.c.l.b16 %v387
      %v596 = vunpack.c.l.b16 %v388
      %v597 = vunpack.c.l.b16 %v389
      %v598 = vunpack.c.l.b16 %v390
      %v599 = vunpack.c.l.b16 %v391
      %v600 = vunpack.c.l.b16 %v392
      %v601 = vunpack.c.l.b16 %v393
      %v602 = vunpack.c.l.b16 %v394
      %v603 = vunpack.c.l.b16 %v395
      %v604 = vunpack.c.l.b16 %v396
      %v605 = vunpack.c.l.b16 %v397
      %v606 = vunpack.c.l.b16 %v398
      %v607 = vunpack.c.l.b16 %v399
      %v608 = vunpack.c.l.b16 %v400
      %v609 = vunpack.c.l.b16 %v401
      %v610 = vunpack.c.l.b16 %v402
      %v611 = vunpack.c.l.b16 %v403
      %v612 = vunpack.c.l.b16 %v404
      %v613 = vunpack.c.l.b16 %v405
      %v614 = vunpack.c.l.b16 %v406
      %v615 = vunpack.c.l.b16 %v407
      %v616 = vunpack.c.l.b16 %v408
      %v617 = vunpack.c.l.b16 %v409
      %v618 = vunpack.c.l.b16 %v410
      %v619 = vunpack.c.l.b16 %v411
      %v620 = vunpack.c.l.b16 %v412
      %v621 = vunpack.c.l.b16 %v413
      %v622 = vunpack.c.l.b16 %v414
      %v623 = vunpack.c.l.b16 %v415
      %v624 = vunpack.c.l.b16 %v416
      %v625 = vunpack.c.l.b16 %v417
      %v626 = vunpack.c.l.b16 %v418
      %v627 = vunpack.c.l.b16 %v419
      %v628 = vunpack.c.l.b16 %v420
      %v629 = vunpack.c.l.b16 %v421
      %v630 = vunpack.c.l.b16 %v422
      %v631 = vunpack.c.l.b16 %v423
      %v632 = vunpack.c.l.b16 %v424
      %v633 = vunpack.c.l.b16 %v425
      %v634 = vunpack.c.l.b16 %v426
      %v635 = vunpack.c.l.b16 %v427
      %v636 = vunpack.c.l.b16 %v428
      %v637 = vunpack.c.l.b16 %v429
      %v638 = vunpack.c.l.b16 %v430
      %v639 = vunpack.c.l.b16 %v431
      %v640 = vunpack.c.l.b16 %v432
      %v641 = vunpack.c.l.b16 %v433
      %v642 = vunpack.c.l.b16 %v434
      %v643 = vunpack.c.l.b16 %v435
      %v644 = vunpack.c.l.b16 %v436
      %v645 = vunpack.c.l.b16 %v437
      %v646 = vunpack.c.l.b16 %v438
      %v647 = vunpack.c.l.b16 %v439
      %v648 = vpack.c.b16 %v585, %v584
      %v649 = vpack.c.b16 %v587, %v586
      %v650 = vpack.c.b16 %v589, %v588
      %v651 = vpack.c.b16 %v591, %v590
      %v652 = vpack.c.b16 %v593, %v592
      %v653 = vpack.c.b16 %v595, %v594
      %v654 = vpack.c.b16 %v597, %v596
      %v655 = vpack.c.b16 %v599, %v598
      %v656 = vpack.c.b16 %v601, %v600
      %v657 = vpack.c.b16 %v603, %v602
      %v658 = vpack.c.b16 %v605, %v604
      %v659 = vpack.c.b16 %v607, %v606
      %v660 = vpack.c.b16 %v609, %v608
      %v661 = vpack.c.b16 %v611, %v610
      %v662 = vpack.c.b16 %v613, %v612
      %v663 = vpack.c.b16 %v615, %v614
      %v664 = vpack.c.b16 %v617, %v616
      %v665 = vpack.c.b16 %v619, %v618
      %v666 = vpack.c.b16 %v621, %v620
      %v667 = vpack.c.b16 %v623, %v622
      %v668 = vpack.c.b16 %v625, %v624
      %v669 = vpack.c.b16 %v627, %v626
      %v670 = vpack.c.b16 %v629, %v628
      %v671 = vpack.c.b16 %v631, %v630
      %v672 = vpack.c.b16 %v633, %v632
      %v673 = vpack.c.b16 %v635, %v634
      %v674 = vpack.c.b16 %v637, %v636
      %v675 = vpack.c.b16 %v639, %v638
      %v676 = vpack.c.b16 %v641, %v640
      %v677 = vpack.c.b16 %v643, %v642
      %v678 = vpack.c.b16 %v645, %v644
      %v679 = vpack.c.b16 %v647, %v646
      %712 = vmatprep.subr.bf16.mxu0 0
      %713 = vmatpush1.bf16.msra.mxu0 %v655
      %714 = vmatprep.subr.bf16.mxu0 0
      %715 = vmatpush1.bf16.msra.mxu0 %v654
      %716 = vmatprep.subr.bf16.mxu0 0
      %717 = vmatpush1.bf16.msra.mxu0 %v653
      %718 = vmatprep.subr.bf16.mxu0 0
      %719 = vmatpush1.bf16.msra.mxu0 %v652
      %720 = vmatprep.subr.bf16.mxu0 0
      %721 = vmatpush1.bf16.msra.mxu0 %v651
      %722 = vmatprep.subr.bf16.mxu0 0
      %723 = vmatpush1.bf16.msra.mxu0 %v650
      %724 = vmatprep.subr.bf16.mxu0 0
      %725 = vmatpush1.bf16.msra.mxu0 %v649
      %726 = vmatprep.subr.bf16.mxu0 0
      %727 = vmatpush1.bf16.msra.mxu0 %v648
      %728 = vmatprep.subr.bf16.mxu0 0
      %729 = vmatpush2.bf16.msra.mxu0 %v663
      %730 = vmatprep.subr.bf16.mxu0 0
      %731 = vmatpush2.bf16.msra.mxu0 %v662
      %732 = vmatprep.subr.bf16.mxu0 0
      %733 = vmatpush2.bf16.msra.mxu0 %v661
      %734 = vmatprep.subr.bf16.mxu0 0
      %735 = vmatpush2.bf16.msra.mxu0 %v660
      %736 = vmatprep.subr.bf16.mxu0 0
      %737 = vmatpush2.bf16.msra.mxu0 %v659
      %738 = vmatprep.subr.bf16.mxu0 0
      %739 = vmatpush2.bf16.msra.mxu0 %v658
      %740 = vmatprep.subr.bf16.mxu0 0
      %741 = vmatpush2.bf16.msra.mxu0 %v657
      %742 = vmatprep.subr.bf16.mxu0 0
      %743 = vmatpush2.bf16.msra.mxu0 %v656
      %744 = vmatprep.mubr.bf16.mxu0 %v489
      %745 = vmatmul.mubr.bf16.gmra.mxu0 %v488
      %v746 = vpop.f32.mrf.mxu0
      %v747 = vadd.f32 0.0, %v746
      %v748 = vpop.f32.mrf.mxu0
      %v749 = vpop.f32.mrf.mxu0
      %v750 = vadd.f32 0.0, %v749
      %v751 = vpop.f32.mrf.mxu0
      %752 = vmatprep.mubr.bf16.mxu0 %v493
      %753 = vmatmul.mubr.bf16.gmra.mxu0 %v492
      %v754 = vpop.f32.mrf.mxu0
      %v755 = vadd.f32 0.0, %v754
      %v756 = vpop.f32.mrf.mxu0
      %v757 = vpop.f32.mrf.mxu0
      %v758 = vadd.f32 0.0, %v757
      %v759 = vpop.f32.mrf.mxu0
      %760 = vmatprep.mubr.bf16.mxu0 %v497
      %761 = vmatmul.mubr.bf16.gmra.mxu0 %v496
      %v762 = vpop.f32.mrf.mxu0
      %v763 = vadd.f32 0.0, %v762
      %v764 = vpop.f32.mrf.mxu0
      %v765 = vpop.f32.mrf.mxu0
      %v766 = vadd.f32 0.0, %v765
      %v767 = vpop.f32.mrf.mxu0
      %768 = vmatprep.mubr.bf16.mxu0 %v501
      %769 = vmatmul.mubr.bf16.gmra.mxu0 %v500
      %v770 = vpop.f32.mrf.mxu0
      %v771 = vadd.f32 0.0, %v770
      %v772 = vpop.f32.mrf.mxu0
      %v773 = vpop.f32.mrf.mxu0
      %v774 = vadd.f32 0.0, %v773
      %v775 = vpop.f32.mrf.mxu0
      %776 = vdwg.mxu0
      %777 = vmatprep.subr.bf16.mxu0 0
      %778 = vmatpush1.bf16.msra.mxu0 %v671
      %779 = vmatprep.subr.bf16.mxu0 0
      %780 = vmatpush1.bf16.msra.mxu0 %v670
      %781 = vmatprep.subr.bf16.mxu0 0
      %782 = vmatpush1.bf16.msra.mxu0 %v669
      %783 = vmatprep.subr.bf16.mxu0 0
      %784 = vmatpush1.bf16.msra.mxu0 %v668
      %785 = vmatprep.subr.bf16.mxu0 0
      %786 = vmatpush1.bf16.msra.mxu0 %v667
      %787 = vmatprep.subr.bf16.mxu0 0
      %788 = vmatpush1.bf16.msra.mxu0 %v666
      %789 = vmatprep.subr.bf16.mxu0 0
      %790 = vmatpush1.bf16.msra.mxu0 %v665
      %791 = vmatprep.subr.bf16.mxu0 0
      %792 = vmatpush1.bf16.msra.mxu0 %v664
      %793 = vmatprep.subr.bf16.mxu0 0
      %794 = vmatpush2.bf16.msra.mxu0 %v679
      %795 = vmatprep.subr.bf16.mxu0 0
      %796 = vmatpush2.bf16.msra.mxu0 %v678
      %797 = vmatprep.subr.bf16.mxu0 0
      %798 = vmatpush2.bf16.msra.mxu0 %v677
      %799 = vmatprep.subr.bf16.mxu0 0
      %800 = vmatpush2.bf16.msra.mxu0 %v676
      %801 = vmatprep.subr.bf16.mxu0 0
      %802 = vmatpush2.bf16.msra.mxu0 %v675
      %803 = vmatprep.subr.bf16.mxu0 0
      %804 = vmatpush2.bf16.msra.mxu0 %v674
      %805 = vmatprep.subr.bf16.mxu0 0
      %806 = vmatpush2.bf16.msra.mxu0 %v673
      %807 = vmatprep.subr.bf16.mxu0 0
      %808 = vmatpush2.bf16.msra.mxu0 %v672
      %809 = vmatprep.mubr.bf16.mxu0 %v491
      %810 = vmatmul.mubr.bf16.gmra.mxu0 %v490
      %v811 = vpop.f32.mrf.mxu0
      %v812 = vadd.f32 %v747, %v811
      %v813 = vpop.f32.mrf.mxu0
      %v814 = vpop.f32.mrf.mxu0
      %v815 = vadd.f32 %v750, %v814
      %v816 = vpop.f32.mrf.mxu0
      %817 = vmatprep.mubr.bf16.mxu0 %v495
      %818 = vmatmul.mubr.bf16.gmra.mxu0 %v494
      %v819 = vpop.f32.mrf.mxu0
      %v820 = vadd.f32 %v755, %v819
      %v821 = vpop.f32.mrf.mxu0
      %v822 = vpop.f32.mrf.mxu0
      %v823 = vadd.f32 %v758, %v822
      %v824 = vpop.f32.mrf.mxu0
      %825 = vmatprep.mubr.bf16.mxu0 %v499
      %826 = vmatmul.mubr.bf16.gmra.mxu0 %v498
      %v827 = vpop.f32.mrf.mxu0
      %v828 = vadd.f32 %v763, %v827
      %v829 = vpop.f32.mrf.mxu0
      %v830 = vpop.f32.mrf.mxu0
      %v831 = vadd.f32 %v766, %v830
      %v832 = vpop.f32.mrf.mxu0
      %833 = vmatprep.mubr.bf16.mxu0 %v503
      %834 = vmatmul.mubr.bf16.gmra.mxu0 %v502
      %v835 = vpop.f32.mrf.mxu0
      %v836 = vadd.f32 %v771, %v835
      %v837 = vpop.f32.mrf.mxu0
      %v838 = vpop.f32.mrf.mxu0
      %v839 = vadd.f32 %v774, %v838
      %v840 = vpop.f32.mrf.mxu0
      %841 = vdwg.mxu0
      %v842 = vadd.f32 %v368, %v812
      %v843 = vadd.f32 %v369, %v815
      %v844 = vadd.f32 %v370, %v820
      %v845 = vadd.f32 %v371, %v823
      %v846 = vadd.f32 %v372, %v828
      %v847 = vadd.f32 %v373, %v831
      %v848 = vadd.f32 %v374, %v836
      %v849 = vadd.f32 %v375, %v839
      %850 = vst [vmem:[#allocation2] sm:$0xff] %v842
      %851 = vst [vmem:[#allocation2 + $0x8] sm:$0xff] %v843
      %852 = vst [vmem:[#allocation2 + $0x10] sm:$0xff] %v844
      %853 = vst [vmem:[#allocation2 + $0x18] sm:$0xff] %v845
      %854 = vst [vmem:[#allocation2 + $0x20] sm:$0xff] %v846
      %855 = vst [vmem:[#allocation2 + $0x28] sm:$0xff] %v847
      %856 = vst [vmem:[#allocation2 + $0x30] sm:$0xff] %v848
      %857 = vst [vmem:[#allocation2 + $0x38] sm:$0xff] %v849
      // Predicated region
      $region41: #{fwd.14} parent=35 // pred_check
        %p858 = pneg %p340
      $region42: #{fwd.14} parent=35 // pred_check_branch
        %860 = sbr.rel (%p858) target = $region44
      $region43: #{fwd.14} parent=35 // pred_region
        %v861 = vld [vmem:[#allocation2] sm:$0xff]
        %v862 = vld [vmem:[#allocation2 + $0x8] sm:$0xff]
        %v863 = vld [vmem:[#allocation2 + $0x10] sm:$0xff]
        %v864 = vld [vmem:[#allocation2 + $0x18] sm:$0xff]
        %v865 = vld [vmem:[#allocation2 + $0x20] sm:$0xff]
        %v866 = vld [vmem:[#allocation2 + $0x28] sm:$0xff]
        %v867 = vld [vmem:[#allocation2 + $0x30] sm:$0xff]
        %v868 = vld [vmem:[#allocation2 + $0x38] sm:$0xff]
        %v869 = vld [vmem:[%s322] sm:$0x1]
        %v871 = vlaneseq
        %v872 = vshrl.u32 %v871, 7
        %v873 = vsub.s32 0, %v872
        %v874 = vrot.slane %v869, %v873
        %v876 = vmul.f32 %v861, %v874
        %v877 = vmul.f32 %v862, %v874
        %v878 = vmul.f32 %v863, %v874
        %v879 = vmul.f32 %v864, %v874
        %v880 = vmul.f32 %v865, %v874
        %v881 = vmul.f32 %v866, %v874
        %v882 = vmul.f32 %v867, %v874
        %v883 = vmul.f32 %v868, %v874
        %v884 = vld [vmem:[%s325] sm:$0x1]
        %v886 = vlaneseq
        %v887 = vshrl.u32 %v886, 7
        %v888 = vsub.s32 0, %v887
        %v889 = vrot.slane %v884, %v888
        %v891 = vadd.f32 %v876, %v889
        %v892 = vadd.f32 %v877, %v889
        %v893 = vadd.f32 %v878, %v889
        %v894 = vadd.f32 %v879, %v889
        %v895 = vadd.f32 %v880, %v889
        %v896 = vadd.f32 %v881, %v889
        %v897 = vadd.f32 %v882, %v889
        %v898 = vadd.f32 %v883, %v889
        %v899 = vxor.u32 %v891, 2147483648
        %v900 = vxor.u32 %v892, 2147483648
        %v901 = vxor.u32 %v893, 2147483648
        %v902 = vxor.u32 %v894, 2147483648
        %v903 = vxor.u32 %v895, 2147483648
        %v904 = vxor.u32 %v896, 2147483648
        %v905 = vxor.u32 %v897, 2147483648
        %v906 = vxor.u32 %v898, 2147483648
        %v907 = vmul.f32 %v899, 1.442695
        %v908 = vpow.pop %v907
        %v909 = vmul.f32 %v900, 1.442695
        %v910 = vpow.pop %v909
        %v911 = vmul.f32 %v901, 1.442695
        %v912 = vpow.pop %v911
        %v913 = vmul.f32 %v902, 1.442695
        %v914 = vpow.pop %v913
        %v915 = vmul.f32 %v903, 1.442695
        %v916 = vpow.pop %v915
        %v917 = vmul.f32 %v904, 1.442695
        %v918 = vpow.pop %v917
        %v919 = vmul.f32 %v905, 1.442695
        %v920 = vpow.pop %v919
        %v921 = vmul.f32 %v906, 1.442695
        %v922 = vpow.pop %v921
        %v923 = vadd.f32 %v908, 1.0
        %v924 = vadd.f32 %v910, 1.0
        %v925 = vadd.f32 %v912, 1.0
        %v926 = vadd.f32 %v914, 1.0
        %v927 = vadd.f32 %v916, 1.0
        %v928 = vadd.f32 %v918, 1.0
        %v929 = vadd.f32 %v920, 1.0
        %v930 = vadd.f32 %v922, 1.0
        %v931 = vrcp.pop %v923
        %v932 = vmul.f32 1.0, %v931
        %v933 = vrcp.pop %v924
        %v934 = vmul.f32 1.0, %v933
        %v935 = vrcp.pop %v925
        %v936 = vmul.f32 1.0, %v935
        %v937 = vrcp.pop %v926
        %v938 = vmul.f32 1.0, %v937
        %v939 = vrcp.pop %v927
        %v940 = vmul.f32 1.0, %v939
        %v941 = vrcp.pop %v928
        %v942 = vmul.f32 1.0, %v941
        %v943 = vrcp.pop %v929
        %v944 = vmul.f32 1.0, %v943
        %v945 = vrcp.pop %v930
        %v946 = vmul.f32 1.0, %v945
        %v947 = vmul.f32 %v891, %v932
        %v948 = vmul.f32 %v892, %v934
        %v949 = vmul.f32 %v893, %v936
        %v950 = vmul.f32 %v894, %v938
        %v951 = vmul.f32 %v895, %v940
        %v952 = vmul.f32 %v896, %v942
        %v953 = vmul.f32 %v897, %v944
        %v954 = vmul.f32 %v898, %v946
        %v955 = vpack.c.bf16 %v948, %v947
        %v956 = vpack.c.bf16 %v950, %v949
        %v957 = vpack.c.bf16 %v952, %v951
        %v958 = vpack.c.bf16 %v954, %v953
        %v963 = vunpack.c.l.b16 %v955
        %v964 = vunpack.c.h.b16 %v955
        %v965 = vunpack.c.l.b16 %v956
        %v966 = vunpack.c.h.b16 %v956
        %v967 = vunpack.c.l.b16 %v957
        %v968 = vunpack.c.h.b16 %v957
        %v969 = vunpack.c.l.b16 %v958
        %v970 = vunpack.c.h.b16 %v958
        %v971 = vpack.c.b16 %v963, %v963
        %v972 = vpack.c.b16 %v964, %v964
        %v973 = vpack.c.b16 %v965, %v965
        %v974 = vpack.c.b16 %v966, %v966
        %v975 = vpack.c.b16 %v967, %v967
        %v976 = vpack.c.b16 %v968, %v968
        %v977 = vpack.c.b16 %v969, %v969
        %v978 = vpack.c.b16 %v970, %v970
        %987 = vst [vmem:[%s337] sm:$0xf] %v971
        %988 = vst [vmem:[%s337 + $0x4] sm:$0xf] %v972
        %989 = vst [vmem:[%s337 + $0x8] sm:$0xf] %v973
        %990 = vst [vmem:[%s337 + $0xc] sm:$0xf] %v974
        %991 = vst [vmem:[%s337 + $0x10] sm:$0xf] %v975
        %992 = vst [vmem:[%s337 + $0x14] sm:$0xf] %v976
        %993 = vst [vmem:[%s337 + $0x18] sm:$0xf] %v977
        %994 = vst [vmem:[%s337 + $0x1c] sm:$0xf] %v978
      $region44: #{fwd.14} parent=35 // pred_fallthru
        _
      %s995 = smul.u32 8, %s22
      %p996 = scmp.lt.s32.totalorder %s21, 1
      %s997 = scalar_select %p996, %s21, 1
      %p998 = scmp.lt.s32.totalorder %s995, 7
      %s999 = scalar_select %p998, %s995, 7
      %p1000 = scmp.lt.s32.totalorder %s23, 0
      %s1001 = scalar_select %p1000, %s23, 0
      %s1002 = sadd.s32 %s1001, %s999
      %s1003 = smul.addr %s997, 8
      %s1004 = sadd.s32 %s1002, %s1003
      %s1005 = smul.addr %s1004, 4
      %s1006 = scalar_lea.vmem %s4, %s1005
      // Predicated region
      $region45: #{fwd.14} parent=35 // pred_check
        %p1007 = pneg %p173
      $region46: #{fwd.14} parent=35 // pred_check_branch
        %1009 = sbr.rel (%p1007) target = $region48
      $region47: #{fwd.14} parent=35 // pred_region
        %s1010 = smul.u32 8, %s22
      $region48: #{fwd.14} parent=35 // pred_fallthru
        _
    $region36: #{fwd.14} parent=5 // pred_fallthru
      _
    %p1011 = scmp.le.s32.totalorder 2, %s10
    // Predicated region
    $region49: #{fwd.14} parent=5 // pred_check
      %p1012 = pneg %p1011
    $region50: #{fwd.14} parent=5 // pred_check_branch
      %1014 = sbr.rel (%p1012) target = $region52
    $region51: #{fwd.14} parent=5 // pred_region
      %s1015 = ssub.s32 %s10, 2
      // Predicated region
      $region53: #{fwd.14} parent=51 // pred_check
        %p1016 = pneg %p179
      $region54: #{fwd.14} parent=51 // pred_check_branch
        %1018 = sbr.rel (%p1016) target = $region56
      $region55: #{fwd.14} parent=51 // pred_region
        %s1019 = smul.u32 8, %s26
        %p1020 = scmp.lt.s32.totalorder %s25, 1
        %s1021 = scalar_select %p1020, %s25, 1
        %p1022 = scmp.lt.s32.totalorder %s1019, 7
        %s1023 = scalar_select %p1022, %s1019, 7
        %p1024 = scmp.lt.s32.totalorder %s27, 0
        %s1025 = scalar_select %p1024, %s27, 0
        %s1026 = sadd.s32 %s1025, %s1023
        %s1027 = smul.addr %s1021, 8
        %s1028 = sadd.s32 %s1026, %s1027
        %s1029 = smul.addr %s1028, 4
        %s1030 = scalar_lea.vmem %s4, %s1029
      $region56: #{fwd.14} parent=51 // pred_fallthru
        _
    $region52: #{fwd.14} parent=5 // pred_fallthru
      _
  $region6: #{fwd.14} parent=0 // loop_footer
    %s14 = sadd.s32 1, %s10
  $region7: #{fwd.14} parent=0 // loop_footer_branch
    %9 = sbr.rel target = $region3
  $region8: #{fwd.14} parent=0 // loop_exit
    _

// kernel: fwd.15
$region0: #{fwd.15}
  #allocation0 [shape = 'u32[]', space=smem, size = 0x4, offset = 0x4, fixed_abs, tag = 'smem constant byte address 0x4 - core index']
  #allocation1 [shape = 'u32[144,128]{1,0:T(1,128)}', space=vmem, size = 0x12000, scoped, tag = 'internal scratch']
  #allocation2 [shape = 'f32[64,128]{1,0:T(8,128)}', space=vmem, size = 0x8000, scoped, tag = 'scratch operand']
  %s0 = inlined_call_operand.vmem [shape: bf16[4,64,512], index: 0, kind: input, shape index: {}]
  %s1 = inlined_call_operand.vmem [shape: bf16[512,128], index: 1, kind: input, shape index: {}]
  %s2 = inlined_call_operand.vmem [shape: f32[1,128], index: 2, kind: input, shape index: {}]
  %s3 = inlined_call_operand.vmem [shape: f32[1,128], index: 3, kind: input, shape index: {}]
  %s4 = inlined_call_operand.vmem [shape: bf16[4,64,128], index: 4, kind: output, shape index: {}]
  %s5 = sld [smem:[#allocation0]]
  $region57: #{fwd.15} parent=0
    _
  %s7 = ssub.s32 1, %s5
  %s8 = scalar_select 0, %s7, %s5
  loop: start=0, step=1, limit=6
  $region2: #{fwd.15} parent=0 // loop_pre_header
    _
  $region3: #{fwd.15} parent=0 // loop_header
    %s10 = sphi 0, %s14
    %p11 = scmp.ge.s32.totalorder %s10, 6
    %s17 = sphi 0, %s43
    %s18 = sphi 0, %s39
    %s19 = sphi 0, %s35
    %s20 = sphi 0, %s31
    %s21 = sphi 0, %s17
    %s22 = sphi 0, %s18
    %s23 = sphi 0, %s19
    %s24 = sphi 0, %s20
    %s25 = sphi 0, %s21
    %s26 = sphi 0, %s22
    %s27 = sphi 0, %s23
    %s28 = sphi 0, %s24
    %s50 = sphi 0, %s52
    %s53 = sphi 0, %s50
    %s54 = sphi 0, %s53
    %s70 = sphi 0, %s54
    %s78 = sphi 0, %s80
    %s81 = sphi 0, %s78
    %s82 = sphi 0, %s81
    %s98 = sphi 0, %s82
    %s104 = sphi 0, %s106
    %s107 = sphi 0, %s104
    %s108 = sphi 0, %s107
    %s124 = sphi 0, %s108
    %s130 = sphi 0, %s132
    %s133 = sphi 0, %s130
    %s134 = sphi 0, %s133
    %s150 = sphi 0, %s134
    %s160 = sphi 0, %s162
    %s163 = sphi 0, %s160
    %s164 = sphi 0, %s163
    %s180 = sphi 0, %s164
  $region4: #{fwd.15} parent=0 // loop_header_branch
    %13 = sbr.rel (%p11) target = $region8
  $region5: #{fwd.15} parent=0 // loop_body
    %s15 = ssub.s32 %s10, 1
    %s16 = ssub.s32 %s10, 2
    %s29 = sadd.s32 1, %s20
    %p30 = scmp.ge.s32.totalorder %s29, 1
    %s31 = scalar_select %p30, 0, %s29
    %s32 = sadd.s32 1, %s19
    %s33 = scalar_select %p30, %s32, %s19
    %p34 = scmp.ge.s32.totalorder %s33, 1
    %s35 = scalar_select %p34, 0, %s33
    %s36 = sadd.s32 1, %s18
    %s37 = scalar_select %p34, %s36, %s18
    %p38 = scmp.ge.s32.totalorder %s37, 1
    %s39 = scalar_select %p38, 0, %s37
    %s40 = sadd.s32 1, %s17
    %s41 = scalar_select %p38, %s40, %s17
    %p42 = scmp.ge.s32.totalorder %s41, 4
    %s43 = scalar_select %p42, 0, %s41
    %s44 = ssub.s32 %s17, %s43
    %s45 = ssub.s32 %s18, %s39
    %s46 = sor.u32 %s44, %s45
    %s47 = ssub.s32 %s20, %s31
    %s48 = sor.u32 %s46, %s47
    %p49 = scmp.eq.s32.totalorder %s48, 0
    %s51 = sadd.s32 %s50, 1
    %s52 = scalar_select %p49, %s50, %s51
    %p55 = pneg %p49
    %p56 = scmp.eq.s32.totalorder %s10, 3
    %p57 = por %p55, %p56
    %p58 = scmp.ne.s32.totalorder %s50, %s53
    %p59 = scmp.eq.s32.totalorder %s10, 0
    %p60 = por %p58, %p59
    %p61 = scmp.ne.s32.totalorder %s50, %s53
    %p62 = scmp.eq.s32.totalorder %s15, 3
    %p63 = por %p61, %p62
    %p64 = scmp.ne.s32.totalorder %s53, %s54
    %p65 = scmp.eq.s32.totalorder %s15, 0
    %p66 = por %p64, %p65
    %p67 = scmp.ne.s32.totalorder %s53, %s54
    %p68 = scmp.eq.s32.totalorder %s16, 3
    %p69 = por %p67, %p68
    %p71 = scmp.ne.s32.totalorder %s54, %s70
    %p72 = scmp.eq.s32.totalorder %s16, 0
    %p73 = por %p71, %p72
    %s74 = ssub.s32 %s20, %s31
    %s75 = ssub.s32 %s19, %s35
    %s76 = sor.u32 %s74, %s75
    %p77 = scmp.eq.s32.totalorder %s76, 0
    %s79 = sadd.s32 %s78, 1
    %s80 = scalar_select %p77, %s78, %s79
    %p83 = pneg %p77
    %p84 = scmp.eq.s32.totalorder %s10, 3
    %p85 = por %p83, %p84
    %p86 = scmp.ne.s32.totalorder %s78, %s81
    %p87 = scmp.eq.s32.totalorder %s10, 0
    %p88 = por %p86, %p87
    %p89 = scmp.ne.s32.totalorder %s78, %s81
    %p90 = scmp.eq.s32.totalorder %s15, 3
    %p91 = por %p89, %p90
    %p92 = scmp.ne.s32.totalorder %s81, %s82
    %p93 = scmp.eq.s32.totalorder %s15, 0
    %p94 = por %p92, %p93
    %p95 = scmp.ne.s32.totalorder %s81, %s82
    %p96 = scmp.eq.s32.totalorder %s16, 3
    %p97 = por %p95, %p96
    %p99 = scmp.ne.s32.totalorder %s82, %s98
    %p100 = scmp.eq.s32.totalorder %s16, 0
    %p101 = por %p99, %p100
    %s102 = ssub.s32 %s19, %s35
    %p103 = scmp.eq.s32.totalorder %s102, 0
    %s105 = sadd.s32 %s104, 1
    %s106 = scalar_select %p103, %s104, %s105
    %p109 = pneg %p103
    %p110 = scmp.eq.s32.totalorder %s10, 3
    %p111 = por %p109, %p110
    %p112 = scmp.ne.s32.totalorder %s104, %s107
    %p113 = scmp.eq.s32.totalorder %s10, 0
    %p114 = por %p112, %p113
    %p115 = scmp.ne.s32.totalorder %s104, %s107
    %p116 = scmp.eq.s32.totalorder %s15, 3
    %p117 = por %p115, %p116
    %p118 = scmp.ne.s32.totalorder %s107, %s108
    %p119 = scmp.eq.s32.totalorder %s15, 0
    %p120 = por %p118, %p119
    %p121 = scmp.ne.s32.totalorder %s107, %s108
    %p122 = scmp.eq.s32.totalorder %s16, 3
    %p123 = por %p121, %p122
    %p125 = scmp.ne.s32.totalorder %s108, %s124
    %p126 = scmp.eq.s32.totalorder %s16, 0
    %p127 = por %p125, %p126
    %s128 = ssub.s32 %s19, %s35
    %p129 = scmp.eq.s32.totalorder %s128, 0
    %s131 = sadd.s32 %s130, 1
    %s132 = scalar_select %p129, %s130, %s131
    %p135 = pneg %p129
    %p136 = scmp.eq.s32.totalorder %s10, 3
    %p137 = por %p135, %p136
    %p138 = scmp.ne.s32.totalorder %s130, %s133
    %p139 = scmp.eq.s32.totalorder %s10, 0
    %p140 = por %p138, %p139
    %p141 = scmp.ne.s32.totalorder %s130, %s133
    %p142 = scmp.eq.s32.totalorder %s15, 3
    %p143 = por %p141, %p142
    %p144 = scmp.ne.s32.totalorder %s133, %s134
    %p145 = scmp.eq.s32.totalorder %s15, 0
    %p146 = por %p144, %p145
    %p147 = scmp.ne.s32.totalorder %s133, %s134
    %p148 = scmp.eq.s32.totalorder %s16, 3
    %p149 = por %p147, %p148
    %p151 = scmp.ne.s32.totalorder %s134, %s150
    %p152 = scmp.eq.s32.totalorder %s16, 0
    %p153 = por %p151, %p152
    %s154 = ssub.s32 %s17, %s43
    %s155 = ssub.s32 %s18, %s39
    %s156 = sor.u32 %s154, %s155
    %s157 = ssub.s32 %s19, %s35
    %s158 = sor.u32 %s156, %s157
    %p159 = scmp.eq.s32.totalorder %s158, 0
    %s161 = sadd.s32 %s160, 1
    %s162 = scalar_select %p159, %s160, %s161
    %p165 = pneg %p159
    %p166 = scmp.eq.s32.totalorder %s10, 3
    %p167 = por %p165, %p166
    %p168 = scmp.ne.s32.totalorder %s160, %s163
    %p169 = scmp.eq.s32.totalorder %s10, 0
    %p170 = por %p168, %p169
    %p171 = scmp.ne.s32.totalorder %s160, %s163
    %p172 = scmp.eq.s32.totalorder %s15, 3
    %p173 = por %p171, %p172
    %p174 = scmp.ne.s32.totalorder %s163, %s164
    %p175 = scmp.eq.s32.totalorder %s15, 0
    %p176 = por %p174, %p175
    %p177 = scmp.ne.s32.totalorder %s163, %s164
    %p178 = scmp.eq.s32.totalorder %s16, 3
    %p179 = por %p177, %p178
    %p181 = scmp.ne.s32.totalorder %s164, %s180
    %p182 = scmp.eq.s32.totalorder %s16, 0
    %p183 = por %p181, %p182
    %p184 = scmp.le.s32.totalorder 1, %s10
    %p185 = scmp.lt.s32.totalorder %s10, 5
    %p186 = pnand %p184, %p185
    %p187 = pneg %p186
    // Predicated region
    $region9: #{fwd.15} parent=5 // pred_check
      _
    $region10: #{fwd.15} parent=5 // pred_check_branch
      %189 = sbr.rel (%p186) target = $region12
    $region11: #{fwd.15} parent=5 // pred_region
      %s190 = ssub.s32 %s10, 1
      // Predicated region
      $region13: #{fwd.15} parent=11 // pred_check
        %p191 = pneg %p94
      $region14: #{fwd.15} parent=11 // pred_check_branch
        %193 = sbr.rel (%p191) target = $region16
      $region15: #{fwd.15} parent=11 // pred_region
        %s194 = smul.u32 64, %s24
        %p195 = scmp.lt.s32.totalorder %s194, 63
        %s196 = scalar_select %p195, %s194, 63
        %p197 = scmp.lt.s32.totalorder %s23, 0
        %s198 = scalar_select %p197, %s23, 0
        %s199 = sadd.s32 %s198, %s196
        %s200 = smul.addr %s199, 4
        %s201 = scalar_lea.vmem %s1, %s200
        %s202 = smul.u32 64, %s24
      $region16: #{fwd.15} parent=11 // pred_fallthru
        _
      // Predicated region
      $region17: #{fwd.15} parent=11 // pred_check
        %p203 = pneg %p120
      $region18: #{fwd.15} parent=11 // pred_check_branch
        %205 = sbr.rel (%p203) target = $region20
      $region19: #{fwd.15} parent=11 // pred_region
        %p206 = scmp.lt.s32.totalorder %s23, 0
        %s207 = scalar_select %p206, %s23, 0
        %s208 = scalar_lea.vmem %s2, %s207
      $region20: #{fwd.15} parent=11 // pred_fallthru
        _
      // Predicated region
      $region21: #{fwd.15} parent=11 // pred_check
        %p209 = pneg %p146
      $region22: #{fwd.15} parent=11 // pred_check_branch
        %211 = sbr.rel (%p209) target = $region24
      $region23: #{fwd.15} parent=11 // pred_region
        %p212 = scmp.lt.s32.totalorder %s23, 0
        %s213 = scalar_select %p212, %s23, 0
        %s214 = scalar_lea.vmem %s3, %s213
      $region24: #{fwd.15} parent=11 // pred_fallthru
        _
    $region12: #{fwd.15} parent=5 // pred_fallthru
      _
    %p215 = scmp.lt.s32.totalorder %s10, 4
    // Predicated region
    $region25: #{fwd.15} parent=5 // pred_check
      %p216 = pneg %p215
    $region26: #{fwd.15} parent=5 // pred_check_branch
      %218 = sbr.rel (%p216) target = $region28
    $region27: #{fwd.15} parent=5 // pred_region
      // Predicated region
      $region29: #{fwd.15} parent=27 // pred_check
        %p219 = pneg %p60
      $region30: #{fwd.15} parent=27 // pred_check_branch
        %221 = sbr.rel (%p219) target = $region32
      $region31: #{fwd.15} parent=27 // pred_region
        %s222 = smul.u32 8, %s18
        %s223 = smul.u32 4, %s20
        %p224 = scmp.lt.s32.totalorder %s17, 3
        %s225 = scalar_select %p224, %s17, 3
        %p226 = scmp.lt.s32.totalorder %s222, 7
        %s227 = scalar_select %p226, %s222, 7
        %p228 = scmp.lt.s32.totalorder %s223, 3
        %s229 = scalar_select %p228, %s223, 3
        %s230 = smul.addr %s227, 4
        %s231 = sadd.s32 %s229, %s230
        %s232 = smul.addr %s225, 32
        %s233 = sadd.s32 %s231, %s232
        %s234 = smul.addr %s233, 4
        %s235 = scalar_lea.vmem %s0, %s234
        %s236 = smul.u32 8, %s18
        %s237 = smul.u32 4, %s20
      $region32: #{fwd.15} parent=27 // pred_fallthru
        _
    $region28: #{fwd.15} parent=5 // pred_fallthru
      _
    %p238 = scmp.le.s32.totalorder 1, %s10
    %p239 = scmp.lt.s32.totalorder %s10, 5
    %p240 = pnand %p238, %p239
    %p241 = pneg %p240
    // Predicated region
    $region33: #{fwd.15} parent=5 // pred_check
      _
    $region34: #{fwd.15} parent=5 // pred_check_branch
      %243 = sbr.rel (%p240) target = $region36
    $region35: #{fwd.15} parent=5 // pred_region
      %s244 = ssub.s32 %s10, 1
      %s245 = smul.u32 8, %s22
      %s246 = smul.u32 4, %s24
      %p247 = scmp.lt.s32.totalorder %s21, 3
      %s248 = scalar_select %p247, %s21, 3
      %p249 = scmp.lt.s32.totalorder %s245, 7
      %s250 = scalar_select %p249, %s245, 7
      %p251 = scmp.lt.s32.totalorder %s246, 3
      %s252 = scalar_select %p251, %s246, 3
      %s253 = smul.addr %s250, 4
      %s254 = sadd.s32 %s252, %s253
      %s255 = smul.addr %s248, 32
      %s256 = sadd.s32 %s254, %s255
      %s257 = smul.addr %s256, 4
      %s258 = scalar_lea.vmem %s0, %s257
      %p259 = pneg %p66
      %p260 = pneg %p63
      %s261 = smul.u32 64, %s24
      %p262 = scmp.lt.s32.totalorder %s261, 63
      %s263 = scalar_select %p262, %s261, 63
      %p264 = scmp.lt.s32.totalorder %s23, 0
      %s265 = scalar_select %p264, %s23, 0
      %s266 = sadd.s32 %s265, %s263
      %s267 = smul.addr %s266, 4
      %s268 = scalar_lea.vmem %s1, %s267
      %p269 = pneg %p94
      %p270 = pneg %p91
      %p271 = scmp.lt.s32.totalorder %s23, 0
      %s272 = scalar_select %p271, %s23, 0
      %s273 = scalar_lea.vmem %s2, %s272
      %p274 = pneg %p120
      %p275 = pneg %p117
      %p276 = scmp.lt.s32.totalorder %s23, 0
      %s277 = scalar_select %p276, %s23, 0
      %s278 = scalar_lea.vmem %s3, %s277
      %p279 = pneg %p146
      %p280 = pneg %p143
      %p281 = pneg %p176
      %p282 = pneg %p173
      %s283 = smul.u32 8, %s22
      %p284 = scmp.lt.s32.totalorder %s21, 3
      %s285 = scalar_select %p284, %s21, 3
      %p286 = scmp.lt.s32.totalorder %s283, 7
      %s287 = scalar_select %p286, %s283, 7
      %p288 = scmp.lt.s32.totalorder %s23, 0
      %s289 = scalar_select %p288, %s23, 0
      %s290 = sadd.s32 %s289, %s287
      %s291 = smul.addr %s285, 8
      %s292 = sadd.s32 %s290, %s291
      %s293 = smul.addr %s292, 4
      %s294 = scalar_lea.vmem %s4, %s293
      %s295 = smul.u32 8, %s22
      %s296 = smul.u32 4, %s24
      %p297 = scmp.lt.s32.totalorder %s21, 3
      %s298 = scalar_select %p297, %s21, 3
      %p299 = scmp.lt.s32.totalorder %s295, 7
      %s300 = scalar_select %p299, %s295, 7
      %p301 = scmp.lt.s32.totalorder %s296, 3
      %s302 = scalar_select %p301, %s296, 3
      %s303 = smul.addr %s300, 4
      %s304 = sadd.s32 %s302, %s303
      %s305 = smul.addr %s298, 32
      %s306 = sadd.s32 %s304, %s305
      %s307 = smul.addr %s306, 4
      %s308 = scalar_lea.vmem %s0, %s307
      %s309 = smul.u32 8, %s22
      %s310 = smul.u32 4, %s24
      %s311 = smul.u32 64, %s24
      %p312 = scmp.lt.s32.totalorder %s311, 63
      %s313 = scalar_select %p312, %s311, 63
      %p314 = scmp.lt.s32.totalorder %s23, 0
      %s315 = scalar_select %p314, %s23, 0
      %s316 = sadd.s32 %s315, %s313
      %s317 = smul.addr %s316, 4
      %s318 = scalar_lea.vmem %s1, %s317
      %s319 = smul.u32 64, %s24
      %p320 = scmp.lt.s32.totalorder %s23, 0
      %s321 = scalar_select %p320, %s23, 0
      %s322 = scalar_lea.vmem %s2, %s321
      %p323 = scmp.lt.s32.totalorder %s23, 0
      %s324 = scalar_select %p323, %s23, 0
      %s325 = scalar_lea.vmem %s3, %s324
      %s326 = smul.u32 8, %s22
      %p327 = scmp.lt.s32.totalorder %s21, 3
      %s328 = scalar_select %p327, %s21, 3
      %p329 = scmp.lt.s32.totalorder %s326, 7
      %s330 = scalar_select %p329, %s326, 7
      %p331 = scmp.lt.s32.totalorder %s23, 0
      %s332 = scalar_select %p331, %s23, 0
      %s333 = sadd.s32 %s332, %s330
      %s334 = smul.addr %s328, 8
      %s335 = sadd.s32 %s333, %s334
      %s336 = smul.addr %s335, 4
      %s337 = scalar_lea.vmem %s4, %s336
      %s338 = smul.u32 8, %s22
      %p340 = scmp.eq.s32.totalorder %s24, 0
      // Predicated region
      $region37: #{fwd.15} parent=35 // pred_check
        %p341 = pneg %p340
      $region38: #{fwd.15} parent=35 // pred_check_branch
        %343 = sbr.rel (%p341) target = $region40
      $region39: #{fwd.15} parent=35 // pred_region
        %344 = vst [vmem:[#allocation2] sm:$0xff] 0.0
        %345 = vst [vmem:[#allocation2 + $0x8] sm:$0xff] 0.0
        %346 = vst [vmem:[#allocation2 + $0x10] sm:$0xff] 0.0
        %347 = vst [vmem:[#allocation2 + $0x18] sm:$0xff] 0.0
        %348 = vst [vmem:[#allocation2 + $0x20] sm:$0xff] 0.0
        %349 = vst [vmem:[#allocation2 + $0x28] sm:$0xff] 0.0
        %350 = vst [vmem:[#allocation2 + $0x30] sm:$0xff] 0.0
        %351 = vst [vmem:[#allocation2 + $0x38] sm:$0xff] 0.0
      $region40: #{fwd.15} parent=35 // pred_fallthru
        _
      %v352 = vld [vmem:[%s308] sm:$0xff]
      %v353 = vld [vmem:[%s308 + $0x8] sm:$0xff]
      %v354 = vld [vmem:[%s308 + $0x10] sm:$0xff]
      %v355 = vld [vmem:[%s308 + $0x18] sm:$0xff]
      %v356 = vld [vmem:[%s308 + $0x20] sm:$0xff]
      %v357 = vld [vmem:[%s308 + $0x28] sm:$0xff]
      %v358 = vld [vmem:[%s308 + $0x30] sm:$0xff]
      %v359 = vld [vmem:[%s308 + $0x38] sm:$0xff]
      %v360 = vld [vmem:[%s308 + $0x40] sm:$0xff]
      %v361 = vld [vmem:[%s308 + $0x48] sm:$0xff]
      %v362 = vld [vmem:[%s308 + $0x50] sm:$0xff]
      %v363 = vld [vmem:[%s308 + $0x58] sm:$0xff]
      %v364 = vld [vmem:[%s308 + $0x60] sm:$0xff]
      %v365 = vld [vmem:[%s308 + $0x68] sm:$0xff]
      %v366 = vld [vmem:[%s308 + $0x70] sm:$0xff]
      %v367 = vld [vmem:[%s308 + $0x78] sm:$0xff]
      %v368 = vld [vmem:[#allocation2] sm:$0xff]
      %v369 = vld [vmem:[#allocation2 + $0x8] sm:$0xff]
      %v370 = vld [vmem:[#allocation2 + $0x10] sm:$0xff]
      %v371 = vld [vmem:[#allocation2 + $0x18] sm:$0xff]
      %v372 = vld [vmem:[#allocation2 + $0x20] sm:$0xff]
      %v373 = vld [vmem:[#allocation2 + $0x28] sm:$0xff]
      %v374 = vld [vmem:[#allocation2 + $0x30] sm:$0xff]
      %v375 = vld [vmem:[#allocation2 + $0x38] sm:$0xff]
      %v376 = vld [vmem:[%s318] sm:$0xf]
      %v377 = vld [vmem:[%s318 + $0x4] sm:$0xf]
      %v378 = vld [vmem:[%s318 + $0x8] sm:$0xf]
      %v379 = vld [vmem:[%s318 + $0xc] sm:$0xf]
      %v380 = vld [vmem:[%s318 + $0x10] sm:$0xf]
      %v381 = vld [vmem:[%s318 + $0x14] sm:$0xf]
      %v382 = vld [vmem:[%s318 + $0x18] sm:$0xf]
      %v383 = vld [vmem:[%s318 + $0x1c] sm:$0xf]
      %v384 = vld [vmem:[%s318 + $0x20] sm:$0xf]
      %v385 = vld [vmem:[%s318 + $0x24] sm:$0xf]
      %v386 = vld [vmem:[%s318 + $0x28] sm:$0xf]
      %v387 = vld [vmem:[%s318 + $0x2c] sm:$0xf]
      %v388 = vld [vmem:[%s318 + $0x30] sm:$0xf]
      %v389 = vld [vmem:[%s318 + $0x34] sm:$0xf]
      %v390 = vld [vmem:[%s318 + $0x38] sm:$0xf]
      %v391 = vld [vmem:[%s318 + $0x3c] sm:$0xf]
      %v392 = vld [vmem:[%s318 + $0x40] sm:$0xf]
      %v393 = vld [vmem:[%s318 + $0x44] sm:$0xf]
      %v394 = vld [vmem:[%s318 + $0x48] sm:$0xf]
      %v395 = vld [vmem:[%s318 + $0x4c] sm:$0xf]
      %v396 = vld [vmem:[%s318 + $0x50] sm:$0xf]
      %v397 = vld [vmem:[%s318 + $0x54] sm:$0xf]
      %v398 = vld [vmem:[%s318 + $0x58] sm:$0xf]
      %v399 = vld [vmem:[%s318 + $0x5c] sm:$0xf]
      %v400 = vld [vmem:[%s318 + $0x60] sm:$0xf]
      %v401 = vld [vmem:[%s318 + $0x64] sm:$0xf]
      %v402 = vld [vmem:[%s318 + $0x68] sm:$0xf]
      %v403 = vld [vmem:[%s318 + $0x6c] sm:$0xf]
      %v404 = vld [vmem:[%s318 + $0x70] sm:$0xf]
      %v405 = vld [vmem:[%s318 + $0x74] sm:$0xf]
      %v406 = vld [vmem:[%s318 + $0x78] sm:$0xf]
      %v407 = vld [vmem:[%s318 + $0x7c] sm:$0xf]
      %v408 = vld [vmem:[%s318 + $0x80] sm:$0xf]
      %v409 = vld [vmem:[%s318 + $0x84] sm:$0xf]
      %v410 = vld [vmem:[%s318 + $0x88] sm:$0xf]
      %v411 = vld [vmem:[%s318 + $0x8c] sm:$0xf]
      %v412 = vld [vmem:[%s318 + $0x90] sm:$0xf]
      %v413 = vld [vmem:[%s318 + $0x94] sm:$0xf]
      %v414 = vld [vmem:[%s318 + $0x98] sm:$0xf]
      %v415 = vld [vmem:[%s318 + $0x9c] sm:$0xf]
      %v416 = vld [vmem:[%s318 + $0xa0] sm:$0xf]
      %v417 = vld [vmem:[%s318 + $0xa4] sm:$0xf]
      %v418 = vld [vmem:[%s318 + $0xa8] sm:$0xf]
      %v419 = vld [vmem:[%s318 + $0xac] sm:$0xf]
      %v420 = vld [vmem:[%s318 + $0xb0] sm:$0xf]
      %v421 = vld [vmem:[%s318 + $0xb4] sm:$0xf]
      %v422 = vld [vmem:[%s318 + $0xb8] sm:$0xf]
      %v423 = vld [vmem:[%s318 + $0xbc] sm:$0xf]
      %v424 = vld [vmem:[%s318 + $0xc0] sm:$0xf]
      %v425 = vld [vmem:[%s318 + $0xc4] sm:$0xf]
      %v426 = vld [vmem:[%s318 + $0xc8] sm:$0xf]
      %v427 = vld [vmem:[%s318 + $0xcc] sm:$0xf]
      %v428 = vld [vmem:[%s318 + $0xd0] sm:$0xf]
      %v429 = vld [vmem:[%s318 + $0xd4] sm:$0xf]
      %v430 = vld [vmem:[%s318 + $0xd8] sm:$0xf]
      %v431 = vld [vmem:[%s318 + $0xdc] sm:$0xf]
      %v432 = vld [vmem:[%s318 + $0xe0] sm:$0xf]
      %v433 = vld [vmem:[%s318 + $0xe4] sm:$0xf]
      %v434 = vld [vmem:[%s318 + $0xe8] sm:$0xf]
      %v435 = vld [vmem:[%s318 + $0xec] sm:$0xf]
      %v436 = vld [vmem:[%s318 + $0xf0] sm:$0xf]
      %v437 = vld [vmem:[%s318 + $0xf4] sm:$0xf]
      %v438 = vld [vmem:[%s318 + $0xf8] sm:$0xf]
      %v439 = vld [vmem:[%s318 + $0xfc] sm:$0xf]
      %v456 = vunpack.c.l.b16 %v352
      %v457 = vunpack.c.h.b16 %v352
      %v458 = vunpack.c.l.b16 %v353
      %v459 = vunpack.c.h.b16 %v353
      %v460 = vunpack.c.l.b16 %v354
      %v461 = vunpack.c.h.b16 %v354
      %v462 = vunpack.c.l.b16 %v355
      %v463 = vunpack.c.h.b16 %v355
      %v464 = vunpack.c.l.b16 %v356
      %v465 = vunpack.c.h.b16 %v356
      %v466 = vunpack.c.l.b16 %v357
      %v467 = vunpack.c.h.b16 %v357
      %v468 = vunpack.c.l.b16 %v358
      %v469 = vunpack.c.h.b16 %v358
      %v470 = vunpack.c.l.b16 %v359
      %v471 = vunpack.c.h.b16 %v359
      %v472 = vunpack.c.l.b16 %v360
      %v473 = vunpack.c.h.b16 %v360
      %v474 = vunpack.c.l.b16 %v361
      %v475 = vunpack.c.h.b16 %v361
      %v476 = vunpack.c.l.b16 %v362
      %v477 = vunpack.c.h.b16 %v362
      %v478 = vunpack.c.l.b16 %v363
      %v479 = vunpack.c.h.b16 %v363
      %v480 = vunpack.c.l.b16 %v364
      %v481 = vunpack.c.h.b16 %v364
      %v482 = vunpack.c.l.b16 %v365
      %v483 = vunpack.c.h.b16 %v365
      %v484 = vunpack.c.l.b16 %v366
      %v485 = vunpack.c.h.b16 %v366
      %v486 = vunpack.c.l.b16 %v367
      %v487 = vunpack.c.h.b16 %v367
      %v488 = vpack.c.b16 %v460, %v456
      %v489 = vpack.c.b16 %v461, %v457
      %v490 = vpack.c.b16 %v462, %v458
      %v491 = vpack.c.b16 %v463, %v459
      %v492 = vpack.c.b16 %v468, %v464
      %v493 = vpack.c.b16 %v469, %v465
      %v494 = vpack.c.b16 %v470, %v466
      %v495 = vpack.c.b16 %v471, %v467
      %v496 = vpack.c.b16 %v476, %v472
      %v497 = vpack.c.b16 %v477, %v473
      %v498 = vpack.c.b16 %v478, %v474
      %v499 = vpack.c.b16 %v479, %v475
      %v500 = vpack.c.b16 %v484, %v480
      %v501 = vpack.c.b16 %v485, %v481
      %v502 = vpack.c.b16 %v486, %v482
      %v503 = vpack.c.b16 %v487, %v483
      %v584 = vunpack.c.l.b16 %v376
      %v585 = vunpack.c.l.b16 %v377
      %v586 = vunpack.c.l.b16 %v378
      %v587 = vunpack.c.l.b16 %v379
      %v588 = vunpack.c.l.b16 %v380
      %v589 = vunpack.c.l.b16 %v381
      %v590 = vunpack.c.l.b16 %v382
      %v591 = vunpack.c.l.b16 %v383
      %v592 = vunpack.c.l.b16 %v384
      %v593 = vunpack.c.l.b16 %v385
      %v594 = vunpack.c.l.b16 %v386
      %v595 = vunpack.c.l.b16 %v387
      %v596 = vunpack.c.l.b16 %v388
      %v597 = vunpack.c.l.b16 %v389
      %v598 = vunpack.c.l.b16 %v390
      %v599 = vunpack.c.l.b16 %v391
      %v600 = vunpack.c.l.b16 %v392
      %v601 = vunpack.c.l.b16 %v393
      %v602 = vunpack.c.l.b16 %v394
      %v603 = vunpack.c.l.b16 %v395
      %v604 = vunpack.c.l.b16 %v396
      %v605 = vunpack.c.l.b16 %v397
      %v606 = vunpack.c.l.b16 %v398
      %v607 = vunpack.c.l.b16 %v399
      %v608 = vunpack.c.l.b16 %v400
      %v609 = vunpack.c.l.b16 %v401
      %v610 = vunpack.c.l.b16 %v402
      %v611 = vunpack.c.l.b16 %v403
      %v612 = vunpack.c.l.b16 %v404
      %v613 = vunpack.c.l.b16 %v405
      %v614 = vunpack.c.l.b16 %v406
      %v615 = vunpack.c.l.b16 %v407
      %v616 = vunpack.c.l.b16 %v408
      %v617 = vunpack.c.l.b16 %v409
      %v618 = vunpack.c.l.b16 %v410
      %v619 = vunpack.c.l.b16 %v411
      %v620 = vunpack.c.l.b16 %v412
      %v621 = vunpack.c.l.b16 %v413
      %v622 = vunpack.c.l.b16 %v414
      %v623 = vunpack.c.l.b16 %v415
      %v624 = vunpack.c.l.b16 %v416
      %v625 = vunpack.c.l.b16 %v417
      %v626 = vunpack.c.l.b16 %v418
      %v627 = vunpack.c.l.b16 %v419
      %v628 = vunpack.c.l.b16 %v420
      %v629 = vunpack.c.l.b16 %v421
      %v630 = vunpack.c.l.b16 %v422
      %v631 = vunpack.c.l.b16 %v423
      %v632 = vunpack.c.l.b16 %v424
      %v633 = vunpack.c.l.b16 %v425
      %v634 = vunpack.c.l.b16 %v426
      %v635 = vunpack.c.l.b16 %v427
      %v636 = vunpack.c.l.b16 %v428
      %v637 = vunpack.c.l.b16 %v429
      %v638 = vunpack.c.l.b16 %v430
      %v639 = vunpack.c.l.b16 %v431
      %v640 = vunpack.c.l.b16 %v432
      %v641 = vunpack.c.l.b16 %v433
      %v642 = vunpack.c.l.b16 %v434
      %v643 = vunpack.c.l.b16 %v435
      %v644 = vunpack.c.l.b16 %v436
      %v645 = vunpack.c.l.b16 %v437
      %v646 = vunpack.c.l.b16 %v438
      %v647 = vunpack.c.l.b16 %v439
      %v648 = vpack.c.b16 %v585, %v584
      %v649 = vpack.c.b16 %v587, %v586
      %v650 = vpack.c.b16 %v589, %v588
      %v651 = vpack.c.b16 %v591, %v590
      %v652 = vpack.c.b16 %v593, %v592
      %v653 = vpack.c.b16 %v595, %v594
      %v654 = vpack.c.b16 %v597, %v596
      %v655 = vpack.c.b16 %v599, %v598
      %v656 = vpack.c.b16 %v601, %v600
      %v657 = vpack.c.b16 %v603, %v602
      %v658 = vpack.c.b16 %v605, %v604
      %v659 = vpack.c.b16 %v607, %v606
      %v660 = vpack.c.b16 %v609, %v608
      %v661 = vpack.c.b16 %v611, %v610
      %v662 = vpack.c.b16 %v613, %v612
      %v663 = vpack.c.b16 %v615, %v614
      %v664 = vpack.c.b16 %v617, %v616
      %v665 = vpack.c.b16 %v619, %v618
      %v666 = vpack.c.b16 %v621, %v620
      %v667 = vpack.c.b16 %v623, %v622
      %v668 = vpack.c.b16 %v625, %v624
      %v669 = vpack.c.b16 %v627, %v626
      %v670 = vpack.c.b16 %v629, %v628
      %v671 = vpack.c.b16 %v631, %v630
      %v672 = vpack.c.b16 %v633, %v632
      %v673 = vpack.c.b16 %v635, %v634
      %v674 = vpack.c.b16 %v637, %v636
      %v675 = vpack.c.b16 %v639, %v638
      %v676 = vpack.c.b16 %v641, %v640
      %v677 = vpack.c.b16 %v643, %v642
      %v678 = vpack.c.b16 %v645, %v644
      %v679 = vpack.c.b16 %v647, %v646
      %712 = vmatprep.subr.bf16.mxu0 0
      %713 = vmatpush1.bf16.msra.mxu0 %v655
      %714 = vmatprep.subr.bf16.mxu0 0
      %715 = vmatpush1.bf16.msra.mxu0 %v654
      %716 = vmatprep.subr.bf16.mxu0 0
      %717 = vmatpush1.bf16.msra.mxu0 %v653
      %718 = vmatprep.subr.bf16.mxu0 0
      %719 = vmatpush1.bf16.msra.mxu0 %v652
      %720 = vmatprep.subr.bf16.mxu0 0
      %721 = vmatpush1.bf16.msra.mxu0 %v651
      %722 = vmatprep.subr.bf16.mxu0 0
      %723 = vmatpush1.bf16.msra.mxu0 %v650
      %724 = vmatprep.subr.bf16.mxu0 0
      %725 = vmatpush1.bf16.msra.mxu0 %v649
      %726 = vmatprep.subr.bf16.mxu0 0
      %727 = vmatpush1.bf16.msra.mxu0 %v648
      %728 = vmatprep.subr.bf16.mxu0 0
      %729 = vmatpush2.bf16.msra.mxu0 %v663
      %730 = vmatprep.subr.bf16.mxu0 0
      %731 = vmatpush2.bf16.msra.mxu0 %v662
      %732 = vmatprep.subr.bf16.mxu0 0
      %733 = vmatpush2.bf16.msra.mxu0 %v661
      %734 = vmatprep.subr.bf16.mxu0 0
      %735 = vmatpush2.bf16.msra.mxu0 %v660
      %736 = vmatprep.subr.bf16.mxu0 0
      %737 = vmatpush2.bf16.msra.mxu0 %v659
      %738 = vmatprep.subr.bf16.mxu0 0
      %739 = vmatpush2.bf16.msra.mxu0 %v658
      %740 = vmatprep.subr.bf16.mxu0 0
      %741 = vmatpush2.bf16.msra.mxu0 %v657
      %742 = vmatprep.subr.bf16.mxu0 0
      %743 = vmatpush2.bf16.msra.mxu0 %v656
      %744 = vmatprep.mubr.bf16.mxu0 %v489
      %745 = vmatmul.mubr.bf16.gmra.mxu0 %v488
      %v746 = vpop.f32.mrf.mxu0
      %v747 = vadd.f32 0.0, %v746
      %v748 = vpop.f32.mrf.mxu0
      %v749 = vpop.f32.mrf.mxu0
      %v750 = vadd.f32 0.0, %v749
      %v751 = vpop.f32.mrf.mxu0
      %752 = vmatprep.mubr.bf16.mxu0 %v493
      %753 = vmatmul.mubr.bf16.gmra.mxu0 %v492
      %v754 = vpop.f32.mrf.mxu0
      %v755 = vadd.f32 0.0, %v754
      %v756 = vpop.f32.mrf.mxu0
      %v757 = vpop.f32.mrf.mxu0
      %v758 = vadd.f32 0.0, %v757
      %v759 = vpop.f32.mrf.mxu0
      %760 = vmatprep.mubr.bf16.mxu0 %v497
      %761 = vmatmul.mubr.bf16.gmra.mxu0 %v496
      %v762 = vpop.f32.mrf.mxu0
      %v763 = vadd.f32 0.0, %v762
      %v764 = vpop.f32.mrf.mxu0
      %v765 = vpop.f32.mrf.mxu0
      %v766 = vadd.f32 0.0, %v765
      %v767 = vpop.f32.mrf.mxu0
      %768 = vmatprep.mubr.bf16.mxu0 %v501
      %769 = vmatmul.mubr.bf16.gmra.mxu0 %v500
      %v770 = vpop.f32.mrf.mxu0
      %v771 = vadd.f32 0.0, %v770
      %v772 = vpop.f32.mrf.mxu0
      %v773 = vpop.f32.mrf.mxu0
      %v774 = vadd.f32 0.0, %v773
      %v775 = vpop.f32.mrf.mxu0
      %776 = vdwg.mxu0
      %777 = vmatprep.subr.bf16.mxu0 0
      %778 = vmatpush1.bf16.msra.mxu0 %v671
      %779 = vmatprep.subr.bf16.mxu0 0
      %780 = vmatpush1.bf16.msra.mxu0 %v670
      %781 = vmatprep.subr.bf16.mxu0 0
      %782 = vmatpush1.bf16.msra.mxu0 %v669
      %783 = vmatprep.subr.bf16.mxu0 0
      %784 = vmatpush1.bf16.msra.mxu0 %v668
      %785 = vmatprep.subr.bf16.mxu0 0
      %786 = vmatpush1.bf16.msra.mxu0 %v667
      %787 = vmatprep.subr.bf16.mxu0 0
      %788 = vmatpush1.bf16.msra.mxu0 %v666
      %789 = vmatprep.subr.bf16.mxu0 0
      %790 = vmatpush1.bf16.msra.mxu0 %v665
      %791 = vmatprep.subr.bf16.mxu0 0
      %792 = vmatpush1.bf16.msra.mxu0 %v664
      %793 = vmatprep.subr.bf16.mxu0 0
      %794 = vmatpush2.bf16.msra.mxu0 %v679
      %795 = vmatprep.subr.bf16.mxu0 0
      %796 = vmatpush2.bf16.msra.mxu0 %v678
      %797 = vmatprep.subr.bf16.mxu0 0
      %798 = vmatpush2.bf16.msra.mxu0 %v677
      %799 = vmatprep.subr.bf16.mxu0 0
      %800 = vmatpush2.bf16.msra.mxu0 %v676
      %801 = vmatprep.subr.bf16.mxu0 0
      %802 = vmatpush2.bf16.msra.mxu0 %v675
      %803 = vmatprep.subr.bf16.mxu0 0
      %804 = vmatpush2.bf16.msra.mxu0 %v674
      %805 = vmatprep.subr.bf16.mxu0 0
      %806 = vmatpush2.bf16.msra.mxu0 %v673
      %807 = vmatprep.subr.bf16.mxu0 0
      %808 = vmatpush2.bf16.msra.mxu0 %v672
      %809 = vmatprep.mubr.bf16.mxu0 %v491
      %810 = vmatmul.mubr.bf16.gmra.mxu0 %v490
      %v811 = vpop.f32.mrf.mxu0
      %v812 = vadd.f32 %v747, %v811
      %v813 = vpop.f32.mrf.mxu0
      %v814 = vpop.f32.mrf.mxu0
      %v815 = vadd.f32 %v750, %v814
      %v816 = vpop.f32.mrf.mxu0
      %817 = vmatprep.mubr.bf16.mxu0 %v495
      %818 = vmatmul.mubr.bf16.gmra.mxu0 %v494
      %v819 = vpop.f32.mrf.mxu0
      %v820 = vadd.f32 %v755, %v819
      %v821 = vpop.f32.mrf.mxu0
      %v822 = vpop.f32.mrf.mxu0
      %v823 = vadd.f32 %v758, %v822
      %v824 = vpop.f32.mrf.mxu0
      %825 = vmatprep.mubr.bf16.mxu0 %v499
      %826 = vmatmul.mubr.bf16.gmra.mxu0 %v498
      %v827 = vpop.f32.mrf.mxu0
      %v828 = vadd.f32 %v763, %v827
      %v829 = vpop.f32.mrf.mxu0
      %v830 = vpop.f32.mrf.mxu0
      %v831 = vadd.f32 %v766, %v830
      %v832 = vpop.f32.mrf.mxu0
      %833 = vmatprep.mubr.bf16.mxu0 %v503
      %834 = vmatmul.mubr.bf16.gmra.mxu0 %v502
      %v835 = vpop.f32.mrf.mxu0
      %v836 = vadd.f32 %v771, %v835
      %v837 = vpop.f32.mrf.mxu0
      %v838 = vpop.f32.mrf.mxu0
      %v839 = vadd.f32 %v774, %v838
      %v840 = vpop.f32.mrf.mxu0
      %841 = vdwg.mxu0
      %v842 = vadd.f32 %v368, %v812
      %v843 = vadd.f32 %v369, %v815
      %v844 = vadd.f32 %v370, %v820
      %v845 = vadd.f32 %v371, %v823
      %v846 = vadd.f32 %v372, %v828
      %v847 = vadd.f32 %v373, %v831
      %v848 = vadd.f32 %v374, %v836
      %v849 = vadd.f32 %v375, %v839
      %850 = vst [vmem:[#allocation2] sm:$0xff] %v842
      %851 = vst [vmem:[#allocation2 + $0x8] sm:$0xff] %v843
      %852 = vst [vmem:[#allocation2 + $0x10] sm:$0xff] %v844
      %853 = vst [vmem:[#allocation2 + $0x18] sm:$0xff] %v845
      %854 = vst [vmem:[#allocation2 + $0x20] sm:$0xff] %v846
      %855 = vst [vmem:[#allocation2 + $0x28] sm:$0xff] %v847
      %856 = vst [vmem:[#allocation2 + $0x30] sm:$0xff] %v848
      %857 = vst [vmem:[#allocation2 + $0x38] sm:$0xff] %v849
      // Predicated region
      $region41: #{fwd.15} parent=35 // pred_check
        %p858 = pneg %p340
      $region42: #{fwd.15} parent=35 // pred_check_branch
        %860 = sbr.rel (%p858) target = $region44
      $region43: #{fwd.15} parent=35 // pred_region
        %v861 = vld [vmem:[#allocation2] sm:$0xff]
        %v862 = vld [vmem:[#allocation2 + $0x8] sm:$0xff]
        %v863 = vld [vmem:[#allocation2 + $0x10] sm:$0xff]
        %v864 = vld [vmem:[#allocation2 + $0x18] sm:$0xff]
        %v865 = vld [vmem:[#allocation2 + $0x20] sm:$0xff]
        %v866 = vld [vmem:[#allocation2 + $0x28] sm:$0xff]
        %v867 = vld [vmem:[#allocation2 + $0x30] sm:$0xff]
        %v868 = vld [vmem:[#allocation2 + $0x38] sm:$0xff]
        %v869 = vld [vmem:[%s322] sm:$0x1]
        %v871 = vlaneseq
        %v872 = vshrl.u32 %v871, 7
        %v873 = vsub.s32 0, %v872
        %v874 = vrot.slane %v869, %v873
        %v876 = vmul.f32 %v861, %v874
        %v877 = vmul.f32 %v862, %v874
        %v878 = vmul.f32 %v863, %v874
        %v879 = vmul.f32 %v864, %v874
        %v880 = vmul.f32 %v865, %v874
        %v881 = vmul.f32 %v866, %v874
        %v882 = vmul.f32 %v867, %v874
        %v883 = vmul.f32 %v868, %v874
        %v884 = vld [vmem:[%s325] sm:$0x1]
        %v886 = vlaneseq
        %v887 = vshrl.u32 %v886, 7
        %v888 = vsub.s32 0, %v887
        %v889 = vrot.slane %v884, %v888
        %v891 = vadd.f32 %v876, %v889
        %v892 = vadd.f32 %v877, %v889
        %v893 = vadd.f32 %v878, %v889
        %v894 = vadd.f32 %v879, %v889
        %v895 = vadd.f32 %v880, %v889
        %v896 = vadd.f32 %v881, %v889
        %v897 = vadd.f32 %v882, %v889
        %v898 = vadd.f32 %v883, %v889
        %v899 = vxor.u32 %v891, 2147483648
        %v900 = vxor.u32 %v892, 2147483648
        %v901 = vxor.u32 %v893, 2147483648
        %v902 = vxor.u32 %v894, 2147483648
        %v903 = vxor.u32 %v895, 2147483648
        %v904 = vxor.u32 %v896, 2147483648
        %v905 = vxor.u32 %v897, 2147483648
        %v906 = vxor.u32 %v898, 2147483648
        %v907 = vmul.f32 %v899, 1.442695
        %v908 = vpow.pop %v907
        %v909 = vmul.f32 %v900, 1.442695
        %v910 = vpow.pop %v909
        %v911 = vmul.f32 %v901, 1.442695
        %v912 = vpow.pop %v911
        %v913 = vmul.f32 %v902, 1.442695
        %v914 = vpow.pop %v913
        %v915 = vmul.f32 %v903, 1.442695
        %v916 = vpow.pop %v915
        %v917 = vmul.f32 %v904, 1.442695
        %v918 = vpow.pop %v917
        %v919 = vmul.f32 %v905, 1.442695
        %v920 = vpow.pop %v919
        %v921 = vmul.f32 %v906, 1.442695
        %v922 = vpow.pop %v921
        %v923 = vadd.f32 %v908, 1.0
        %v924 = vadd.f32 %v910, 1.0
        %v925 = vadd.f32 %v912, 1.0
        %v926 = vadd.f32 %v914, 1.0
        %v927 = vadd.f32 %v916, 1.0
        %v928 = vadd.f32 %v918, 1.0
        %v929 = vadd.f32 %v920, 1.0
        %v930 = vadd.f32 %v922, 1.0
        %v931 = vrcp.pop %v923
        %v932 = vmul.f32 1.0, %v931
        %v933 = vrcp.pop %v924
        %v934 = vmul.f32 1.0, %v933
        %v935 = vrcp.pop %v925
        %v936 = vmul.f32 1.0, %v935
        %v937 = vrcp.pop %v926
        %v938 = vmul.f32 1.0, %v937
        %v939 = vrcp.pop %v927
        %v940 = vmul.f32 1.0, %v939
        %v941 = vrcp.pop %v928
        %v942 = vmul.f32 1.0, %v941
        %v943 = vrcp.pop %v929
        %v944 = vmul.f32 1.0, %v943
        %v945 = vrcp.pop %v930
        %v946 = vmul.f32 1.0, %v945
        %v947 = vmul.f32 %v891, %v932
        %v948 = vmul.f32 %v892, %v934
        %v949 = vmul.f32 %v893, %v936
        %v950 = vmul.f32 %v894, %v938
        %v951 = vmul.f32 %v895, %v940
        %v952 = vmul.f32 %v896, %v942
        %v953 = vmul.f32 %v897, %v944
        %v954 = vmul.f32 %v898, %v946
        %v955 = vpack.c.bf16 %v948, %v947
        %v956 = vpack.c.bf16 %v950, %v949
        %v957 = vpack.c.bf16 %v952, %v951
        %v958 = vpack.c.bf16 %v954, %v953
        %v963 = vunpack.c.l.b16 %v955
        %v964 = vunpack.c.h.b16 %v955
        %v965 = vunpack.c.l.b16 %v956
        %v966 = vunpack.c.h.b16 %v956
        %v967 = vunpack.c.l.b16 %v957
        %v968 = vunpack.c.h.b16 %v957
        %v969 = vunpack.c.l.b16 %v958
        %v970 = vunpack.c.h.b16 %v958
        %v971 = vpack.c.b16 %v963, %v963
        %v972 = vpack.c.b16 %v964, %v964
        %v973 = vpack.c.b16 %v965, %v965
        %v974 = vpack.c.b16 %v966, %v966
        %v975 = vpack.c.b16 %v967, %v967
        %v976 = vpack.c.b16 %v968, %v968
        %v977 = vpack.c.b16 %v969, %v969
        %v978 = vpack.c.b16 %v970, %v970
        %987 = vst [vmem:[%s337] sm:$0xf] %v971
        %988 = vst [vmem:[%s337 + $0x4] sm:$0xf] %v972
        %989 = vst [vmem:[%s337 + $0x8] sm:$0xf] %v973
        %990 = vst [vmem:[%s337 + $0xc] sm:$0xf] %v974
        %991 = vst [vmem:[%s337 + $0x10] sm:$0xf] %v975
        %992 = vst [vmem:[%s337 + $0x14] sm:$0xf] %v976
        %993 = vst [vmem:[%s337 + $0x18] sm:$0xf] %v977
        %994 = vst [vmem:[%s337 + $0x1c] sm:$0xf] %v978
      $region44: #{fwd.15} parent=35 // pred_fallthru
        _
      %s995 = smul.u32 8, %s22
      %p996 = scmp.lt.s32.totalorder %s21, 3
      %s997 = scalar_select %p996, %s21, 3
      %p998 = scmp.lt.s32.totalorder %s995, 7
      %s999 = scalar_select %p998, %s995, 7
      %p1000 = scmp.lt.s32.totalorder %s23, 0
      %s1001 = scalar_select %p1000, %s23, 0
      %s1002 = sadd.s32 %s1001, %s999
      %s1003 = smul.addr %s997, 8
      %s1004 = sadd.s32 %s1002, %s1003
      %s1005 = smul.addr %s1004, 4
      %s1006 = scalar_lea.vmem %s4, %s1005
      // Predicated region
      $region45: #{fwd.15} parent=35 // pred_check
        %p1007 = pneg %p173
      $region46: #{fwd.15} parent=35 // pred_check_branch
        %1009 = sbr.rel (%p1007) target = $region48
      $region47: #{fwd.15} parent=35 // pred_region
        %s1010 = smul.u32 8, %s22
      $region48: #{fwd.15} parent=35 // pred_fallthru
        _
    $region36: #{fwd.15} parent=5 // pred_fallthru
      _
    %p1011 = scmp.le.s32.totalorder 2, %s10
    // Predicated region
    $region49: #{fwd.15} parent=5 // pred_check
      %p1012 = pneg %p1011
    $region50: #{fwd.15} parent=5 // pred_check_branch
      %1014 = sbr.rel (%p1012) target = $region52
    $region51: #{fwd.15} parent=5 // pred_region
      %s1015 = ssub.s32 %s10, 2
      // Predicated region
      $region53: #{fwd.15} parent=51 // pred_check
        %p1016 = pneg %p179
      $region54: #{fwd.15} parent=51 // pred_check_branch
        %1018 = sbr.rel (%p1016) target = $region56
      $region55: #{fwd.15} parent=51 // pred_region
        %s1019 = smul.u32 8, %s26
        %p1020 = scmp.lt.s32.totalorder %s25, 3
        %s1021 = scalar_select %p1020, %s25, 3
        %p1022 = scmp.lt.s32.totalorder %s1019, 7
        %s1023 = scalar_select %p1022, %s1019, 7
        %p1024 = scmp.lt.s32.totalorder %s27, 0
        %s1025 = scalar_select %p1024, %s27, 0
        %s1026 = sadd.s32 %s1025, %s1023
        %s1027 = smul.addr %s1021, 8
        %s1028 = sadd.s32 %s1026, %s1027
        %s1029 = smul.addr %s1028, 4
        %s1030 = scalar_lea.vmem %s4, %s1029
      $region56: #{fwd.15} parent=51 // pred_fallthru
        _
    $region52: #{fwd.15} parent=5 // pred_fallthru
      _
  $region6: #{fwd.15} parent=0 // loop_footer
    %s14 = sadd.s32 1, %s10
  $region7: #{fwd.15} parent=0 // loop_footer_branch
    %9 = sbr.rel target = $region3
  $region8: #{fwd.15} parent=0 // loop_exit
    _

// kernel: fwd.17
$region0: #{fwd.17}
  #allocation0 [shape = 'u32[]', space=smem, size = 0x4, offset = 0x4, fixed_abs, tag = 'smem constant byte address 0x4 - core index']
  #allocation1 [shape = 'u32[144,128]{1,0:T(1,128)}', space=vmem, size = 0x12000, scoped, tag = 'internal scratch']
  %s0 = inlined_call_operand.vmem [shape: f32[6,128], index: 0, kind: input, shape index: {}]
  %s1 = inlined_call_operand.vmem [shape: f32[128,128], index: 1, kind: input, shape index: {}]
  %s2 = inlined_call_operand.vmem [shape: f32[1,128], index: 2, kind: input, shape index: {}]
  %s3 = inlined_call_operand.vmem [shape: f32[128,128], index: 3, kind: input, shape index: {}]
  %s4 = inlined_call_operand.vmem [shape: f32[1,128], index: 4, kind: input, shape index: {}]
  %s5 = inlined_call_operand.vmem [shape: f32[6,128], index: 5, kind: output, shape index: {}]
  %s6 = sld [smem:[#allocation0]]
  $region30: #{fwd.17} parent=0
    _
  %s8 = ssub.s32 1, %s6
  %s9 = scalar_select 0, %s8, %s6
  // Predicated region
  $region2: #{fwd.17} parent=0 // pred_check
    _
  $region3: #{fwd.17} parent=0 // pred_check_branch
    %11 = sbr.rel (0) target = $region5
  $region4: #{fwd.17} parent=0 // pred_region
    _
  $region5: #{fwd.17} parent=0 // pred_fallthru
    _
  // Predicated region
  $region6: #{fwd.17} parent=0 // pred_check
    _
  $region7: #{fwd.17} parent=0 // pred_check_branch
    %13 = sbr.rel (0) target = $region9
  $region8: #{fwd.17} parent=0 // pred_region
    _
  $region9: #{fwd.17} parent=0 // pred_fallthru
    _
  // Predicated region
  $region10: #{fwd.17} parent=0 // pred_check
    _
  $region11: #{fwd.17} parent=0 // pred_check_branch
    %15 = sbr.rel (0) target = $region13
  $region12: #{fwd.17} parent=0 // pred_region
    _
  $region13: #{fwd.17} parent=0 // pred_fallthru
    _
  // Predicated region
  $region14: #{fwd.17} parent=0 // pred_check
    _
  $region15: #{fwd.17} parent=0 // pred_check_branch
    %17 = sbr.rel (0) target = $region17
  $region16: #{fwd.17} parent=0 // pred_region
    _
  $region17: #{fwd.17} parent=0 // pred_fallthru
    _
  // Predicated region
  $region18: #{fwd.17} parent=0 // pred_check
    _
  $region19: #{fwd.17} parent=0 // pred_check_branch
    %19 = sbr.rel (0) target = $region21
  $region20: #{fwd.17} parent=0 // pred_region
    _
  $region21: #{fwd.17} parent=0 // pred_fallthru
    _
  %v20 = vld [vmem:[%s0] sm:$0x3f]
  %v21 = vld [vmem:[%s1] sm:$0xff]
  %v22 = vld [vmem:[%s1 + $0x8] sm:$0xff]
  %v23 = vld [vmem:[%s1 + $0x10] sm:$0xff]
  %v24 = vld [vmem:[%s1 + $0x18] sm:$0xff]
  %v25 = vld [vmem:[%s1 + $0x20] sm:$0xff]
  %v26 = vld [vmem:[%s1 + $0x28] sm:$0xff]
  %v27 = vld [vmem:[%s1 + $0x30] sm:$0xff]
  %v28 = vld [vmem:[%s1 + $0x38] sm:$0xff]
  %v29 = vld [vmem:[%s1 + $0x40] sm:$0xff]
  %v30 = vld [vmem:[%s1 + $0x48] sm:$0xff]
  %v31 = vld [vmem:[%s1 + $0x50] sm:$0xff]
  %v32 = vld [vmem:[%s1 + $0x58] sm:$0xff]
  %v33 = vld [vmem:[%s1 + $0x60] sm:$0xff]
  %v34 = vld [vmem:[%s1 + $0x68] sm:$0xff]
  %v35 = vld [vmem:[%s1 + $0x70] sm:$0xff]
  %v36 = vld [vmem:[%s1 + $0x78] sm:$0xff]
  %v37 = vld [vmem:[%s2] sm:$0x1]
  %v39 = vlaneseq
  %v40 = vshrl.u32 %v39, 7
  %v41 = vsub.s32 0, %v40
  %v42 = vrot.slane %v37, %v41
  %44 = vmatprep.subr.mxu0 0.0
  %45 = vmatpush1.msra.mxu0 %v36
  %46 = vmatprep.subr.mxu0 0.0
  %47 = vmatpush1.msra.mxu0 %v35
  %48 = vmatprep.subr.mxu0 0.0
  %49 = vmatpush1.msra.mxu0 %v34
  %50 = vmatprep.subr.mxu0 0.0
  %51 = vmatpush1.msra.mxu0 %v33
  %52 = vmatprep.subr.mxu0 0.0
  %53 = vmatpush1.msra.mxu0 %v32
  %54 = vmatprep.subr.mxu0 0.0
  %55 = vmatpush1.msra.mxu0 %v31
  %56 = vmatprep.subr.mxu0 0.0
  %57 = vmatpush1.msra.mxu0 %v30
  %58 = vmatprep.subr.mxu0 0.0
  %59 = vmatpush1.msra.mxu0 %v29
  %60 = vmatprep.subr.mxu0 0.0
  %61 = vmatpush1.msra.mxu0 %v28
  %62 = vmatprep.subr.mxu0 0.0
  %63 = vmatpush1.msra.mxu0 %v27
  %64 = vmatprep.subr.mxu0 0.0
  %65 = vmatpush1.msra.mxu0 %v26
  %66 = vmatprep.subr.mxu0 0.0
  %67 = vmatpush1.msra.mxu0 %v25
  %68 = vmatprep.subr.mxu0 0.0
  %69 = vmatpush1.msra.mxu0 %v24
  %70 = vmatprep.subr.mxu0 0.0
  %71 = vmatpush1.msra.mxu0 %v23
  %72 = vmatprep.subr.mxu0 0.0
  %73 = vmatpush1.msra.mxu0 %v22
  %74 = vmatprep.subr.mxu0 0.0
  %75 = vmatpush1.msra.mxu0 %v21
  %76 = vmatprep.subr.mxu0 0.0
  %77 = vmatpush2.msra.mxu0 0.0
  %78 = vmatprep.subr.mxu0 0.0
  %79 = vmatpush2.msra.mxu0 0.0
  %80 = vmatprep.subr.mxu0 0.0
  %81 = vmatpush2.msra.mxu0 0.0
  %82 = vmatprep.subr.mxu0 0.0
  %83 = vmatpush2.msra.mxu0 0.0
  %84 = vmatprep.subr.mxu0 0.0
  %85 = vmatpush2.msra.mxu0 0.0
  %86 = vmatprep.subr.mxu0 0.0
  %87 = vmatpush2.msra.mxu0 0.0
  %88 = vmatprep.subr.mxu0 0.0
  %89 = vmatpush2.msra.mxu0 0.0
  %90 = vmatprep.subr.mxu0 0.0
  %91 = vmatpush2.msra.mxu0 0.0
  %92 = vmatprep.subr.mxu0 0.0
  %93 = vmatpush2.msra.mxu0 0.0
  %94 = vmatprep.subr.mxu0 0.0
  %95 = vmatpush2.msra.mxu0 0.0
  %96 = vmatprep.subr.mxu0 0.0
  %97 = vmatpush2.msra.mxu0 0.0
  %98 = vmatprep.subr.mxu0 0.0
  %99 = vmatpush2.msra.mxu0 0.0
  %100 = vmatprep.subr.mxu0 0.0
  %101 = vmatpush2.msra.mxu0 0.0
  %102 = vmatprep.subr.mxu0 0.0
  %103 = vmatpush2.msra.mxu0 0.0
  %104 = vmatprep.subr.mxu0 0.0
  %105 = vmatpush2.msra.mxu0 0.0
  %106 = vmatprep.subr.mxu0 0.0
  %107 = vmatpush2.msra.mxu0 0.0
  %108 = vmatprep.mubr.f32.mxu0 0.0
  %109 = vmatmul.mubr.f32.gmra.mxu0 %v20
  %v110 = vpop.f32.mrf.mxu0
  %v111 = vadd.f32 %v42, %v110
  %v112 = vpop.f32.mrf.mxu0
  %113 = vdwg.mxu0
  %v114 = vxor.u32 %v111, 2147483648
  %v115 = vmul.f32 %v114, 1.442695
  %v116 = vpow.pop %v115
  %v117 = vadd.f32 %v116, 1.0
  %v118 = vrcp.pop %v117
  %v119 = vmul.f32 1.0, %v118
  %v120 = vmul.f32 %v111, %v119
  %v121 = vld [vmem:[%s3] sm:$0xff]
  %v122 = vld [vmem:[%s3 + $0x8] sm:$0xff]
  %v123 = vld [vmem:[%s3 + $0x10] sm:$0xff]
  %v124 = vld [vmem:[%s3 + $0x18] sm:$0xff]
  %v125 = vld [vmem:[%s3 + $0x20] sm:$0xff]
  %v126 = vld [vmem:[%s3 + $0x28] sm:$0xff]
  %v127 = vld [vmem:[%s3 + $0x30] sm:$0xff]
  %v128 = vld [vmem:[%s3 + $0x38] sm:$0xff]
  %v129 = vld [vmem:[%s3 + $0x40] sm:$0xff]
  %v130 = vld [vmem:[%s3 + $0x48] sm:$0xff]
  %v131 = vld [vmem:[%s3 + $0x50] sm:$0xff]
  %v132 = vld [vmem:[%s3 + $0x58] sm:$0xff]
  %v133 = vld [vmem:[%s3 + $0x60] sm:$0xff]
  %v134 = vld [vmem:[%s3 + $0x68] sm:$0xff]
  %v135 = vld [vmem:[%s3 + $0x70] sm:$0xff]
  %v136 = vld [vmem:[%s3 + $0x78] sm:$0xff]
  %v137 = vld [vmem:[%s4] sm:$0x1]
  %v139 = vlaneseq
  %v140 = vshrl.u32 %v139, 7
  %v141 = vsub.s32 0, %v140
  %v142 = vrot.slane %v137, %v141
  %144 = vmatprep.subr.mxu0 0.0
  %145 = vmatpush1.msra.mxu0 %v136
  %146 = vmatprep.subr.mxu0 0.0
  %147 = vmatpush1.msra.mxu0 %v135
  %148 = vmatprep.subr.mxu0 0.0
  %149 = vmatpush1.msra.mxu0 %v134
  %150 = vmatprep.subr.mxu0 0.0
  %151 = vmatpush1.msra.mxu0 %v133
  %152 = vmatprep.subr.mxu0 0.0
  %153 = vmatpush1.msra.mxu0 %v132
  %154 = vmatprep.subr.mxu0 0.0
  %155 = vmatpush1.msra.mxu0 %v131
  %156 = vmatprep.subr.mxu0 0.0
  %157 = vmatpush1.msra.mxu0 %v130
  %158 = vmatprep.subr.mxu0 0.0
  %159 = vmatpush1.msra.mxu0 %v129
  %160 = vmatprep.subr.mxu0 0.0
  %161 = vmatpush1.msra.mxu0 %v128
  %162 = vmatprep.subr.mxu0 0.0
  %163 = vmatpush1.msra.mxu0 %v127
  %164 = vmatprep.subr.mxu0 0.0
  %165 = vmatpush1.msra.mxu0 %v126
  %166 = vmatprep.subr.mxu0 0.0
  %167 = vmatpush1.msra.mxu0 %v125
  %168 = vmatprep.subr.mxu0 0.0
  %169 = vmatpush1.msra.mxu0 %v124
  %170 = vmatprep.subr.mxu0 0.0
  %171 = vmatpush1.msra.mxu0 %v123
  %172 = vmatprep.subr.mxu0 0.0
  %173 = vmatpush1.msra.mxu0 %v122
  %174 = vmatprep.subr.mxu0 0.0
  %175 = vmatpush1.msra.mxu0 %v121
  %176 = vmatprep.subr.mxu0 0.0
  %177 = vmatpush2.msra.mxu0 0.0
  %178 = vmatprep.subr.mxu0 0.0
  %179 = vmatpush2.msra.mxu0 0.0
  %180 = vmatprep.subr.mxu0 0.0
  %181 = vmatpush2.msra.mxu0 0.0
  %182 = vmatprep.subr.mxu0 0.0
  %183 = vmatpush2.msra.mxu0 0.0
  %184 = vmatprep.subr.mxu0 0.0
  %185 = vmatpush2.msra.mxu0 0.0
  %186 = vmatprep.subr.mxu0 0.0
  %187 = vmatpush2.msra.mxu0 0.0
  %188 = vmatprep.subr.mxu0 0.0
  %189 = vmatpush2.msra.mxu0 0.0
  %190 = vmatprep.subr.mxu0 0.0
  %191 = vmatpush2.msra.mxu0 0.0
  %192 = vmatprep.subr.mxu0 0.0
  %193 = vmatpush2.msra.mxu0 0.0
  %194 = vmatprep.subr.mxu0 0.0
  %195 = vmatpush2.msra.mxu0 0.0
  %196 = vmatprep.subr.mxu0 0.0
  %197 = vmatpush2.msra.mxu0 0.0
  %198 = vmatprep.subr.mxu0 0.0
  %199 = vmatpush2.msra.mxu0 0.0
  %200 = vmatprep.subr.mxu0 0.0
  %201 = vmatpush2.msra.mxu0 0.0
  %202 = vmatprep.subr.mxu0 0.0
  %203 = vmatpush2.msra.mxu0 0.0
  %204 = vmatprep.subr.mxu0 0.0
  %205 = vmatpush2.msra.mxu0 0.0
  %206 = vmatprep.subr.mxu0 0.0
  %207 = vmatpush2.msra.mxu0 0.0
  %208 = vmatprep.mubr.f32.mxu0 0.0
  %209 = vmatmul.mubr.f32.gmra.mxu0 %v120
  %v210 = vpop.f32.mrf.mxu0
  %v211 = vadd.f32 %v142, %v210
  %v212 = vpop.f32.mrf.mxu0
  %213 = vdwg.mxu0
  %v214 = vxor.u32 %v211, 2147483648
  %v215 = vmul.f32 %v214, 1.442695
  %v216 = vpow.pop %v215
  %v217 = vadd.f32 %v216, 1.0
  %v218 = vrcp.pop %v217
  %v219 = vmul.f32 1.0, %v218
  %220 = vst [vmem:[%s5] sm:$0x3f] %v219
  // Predicated region
  $region22: #{fwd.17} parent=0 // pred_check
    _
  $region23: #{fwd.17} parent=0 // pred_check_branch
    %222 = sbr.rel (0) target = $region25
  $region24: #{fwd.17} parent=0 // pred_region
    _
  $region25: #{fwd.17} parent=0 // pred_fallthru
    _
  // Predicated region
  $region26: #{fwd.17} parent=0 // pred_check
    _
  $region27: #{fwd.17} parent=0 // pred_check_branch
    %224 = sbr.rel (0) target = $region29
  $region28: #{fwd.17} parent=0 // pred_region
    _
  $region29: #{fwd.17} parent=0 // pred_fallthru
    _

// kernel: fwd.19
$region0: #{fwd.19}
  #allocation0 [shape = 'u32[]', space=smem, size = 0x4, offset = 0x4, fixed_abs, tag = 'smem constant byte address 0x4 - core index']
  #allocation1 [shape = 'u32[144,128]{1,0:T(1,128)}', space=vmem, size = 0x12000, scoped, tag = 'internal scratch']
  #allocation2 [shape = 'f32[64,128]{1,0:T(8,128)}', space=vmem, size = 0x8000, scoped, tag = 'scratch operand']
  %s0 = inlined_call_operand.vmem [shape: bf16[6,64,128], index: 0, kind: input, shape index: {}]
  %s1 = inlined_call_operand.vmem [shape: bf16[128,128], index: 1, kind: input, shape index: {}]
  %s2 = inlined_call_operand.vmem [shape: f32[1,128], index: 2, kind: input, shape index: {}]
  %s3 = inlined_call_operand.vmem [shape: f32[1,128], index: 3, kind: input, shape index: {}]
  %s4 = inlined_call_operand.vmem [shape: bf16[6,64,128], index: 4, kind: output, shape index: {}]
  %s5 = sld [smem:[#allocation0]]
  $region57: #{fwd.19} parent=0
    _
  %s7 = ssub.s32 1, %s5
  %s8 = scalar_select 0, %s7, %s5
  loop: start=0, step=1, limit=8
  $region2: #{fwd.19} parent=0 // loop_pre_header
    _
  $region3: #{fwd.19} parent=0 // loop_header
    %s10 = sphi 0, %s14
    %p11 = scmp.ge.s32.totalorder %s10, 8
    %s17 = sphi 0, %s43
    %s18 = sphi 0, %s39
    %s19 = sphi 0, %s35
    %s20 = sphi 0, %s31
    %s21 = sphi 0, %s17
    %s22 = sphi 0, %s18
    %s23 = sphi 0, %s19
    %s24 = sphi 0, %s20
    %s25 = sphi 0, %s21
    %s26 = sphi 0, %s22
    %s27 = sphi 0, %s23
    %s28 = sphi 0, %s24
    %s50 = sphi 0, %s52
    %s53 = sphi 0, %s50
    %s54 = sphi 0, %s53
    %s70 = sphi 0, %s54
    %s78 = sphi 0, %s80
    %s81 = sphi 0, %s78
    %s82 = sphi 0, %s81
    %s98 = sphi 0, %s82
    %s104 = sphi 0, %s106
    %s107 = sphi 0, %s104
    %s108 = sphi 0, %s107
    %s124 = sphi 0, %s108
    %s130 = sphi 0, %s132
    %s133 = sphi 0, %s130
    %s134 = sphi 0, %s133
    %s150 = sphi 0, %s134
    %s160 = sphi 0, %s162
    %s163 = sphi 0, %s160
    %s164 = sphi 0, %s163
    %s180 = sphi 0, %s164
  $region4: #{fwd.19} parent=0 // loop_header_branch
    %13 = sbr.rel (%p11) target = $region8
  $region5: #{fwd.19} parent=0 // loop_body
    %s15 = ssub.s32 %s10, 1
    %s16 = ssub.s32 %s10, 2
    %s29 = sadd.s32 1, %s20
    %p30 = scmp.ge.s32.totalorder %s29, 1
    %s31 = scalar_select %p30, 0, %s29
    %s32 = sadd.s32 1, %s19
    %s33 = scalar_select %p30, %s32, %s19
    %p34 = scmp.ge.s32.totalorder %s33, 1
    %s35 = scalar_select %p34, 0, %s33
    %s36 = sadd.s32 1, %s18
    %s37 = scalar_select %p34, %s36, %s18
    %p38 = scmp.ge.s32.totalorder %s37, 1
    %s39 = scalar_select %p38, 0, %s37
    %s40 = sadd.s32 1, %s17
    %s41 = scalar_select %p38, %s40, %s17
    %p42 = scmp.ge.s32.totalorder %s41, 6
    %s43 = scalar_select %p42, 0, %s41
    %s44 = ssub.s32 %s17, %s43
    %s45 = ssub.s32 %s18, %s39
    %s46 = sor.u32 %s44, %s45
    %s47 = ssub.s32 %s20, %s31
    %s48 = sor.u32 %s46, %s47
    %p49 = scmp.eq.s32.totalorder %s48, 0
    %s51 = sadd.s32 %s50, 1
    %s52 = scalar_select %p49, %s50, %s51
    %p55 = pneg %p49
    %p56 = scmp.eq.s32.totalorder %s10, 5
    %p57 = por %p55, %p56
    %p58 = scmp.ne.s32.totalorder %s50, %s53
    %p59 = scmp.eq.s32.totalorder %s10, 0
    %p60 = por %p58, %p59
    %p61 = scmp.ne.s32.totalorder %s50, %s53
    %p62 = scmp.eq.s32.totalorder %s15, 5
    %p63 = por %p61, %p62
    %p64 = scmp.ne.s32.totalorder %s53, %s54
    %p65 = scmp.eq.s32.totalorder %s15, 0
    %p66 = por %p64, %p65
    %p67 = scmp.ne.s32.totalorder %s53, %s54
    %p68 = scmp.eq.s32.totalorder %s16, 5
    %p69 = por %p67, %p68
    %p71 = scmp.ne.s32.totalorder %s54, %s70
    %p72 = scmp.eq.s32.totalorder %s16, 0
    %p73 = por %p71, %p72
    %s74 = ssub.s32 %s20, %s31
    %s75 = ssub.s32 %s19, %s35
    %s76 = sor.u32 %s74, %s75
    %p77 = scmp.eq.s32.totalorder %s76, 0
    %s79 = sadd.s32 %s78, 1
    %s80 = scalar_select %p77, %s78, %s79
    %p83 = pneg %p77
    %p84 = scmp.eq.s32.totalorder %s10, 5
    %p85 = por %p83, %p84
    %p86 = scmp.ne.s32.totalorder %s78, %s81
    %p87 = scmp.eq.s32.totalorder %s10, 0
    %p88 = por %p86, %p87
    %p89 = scmp.ne.s32.totalorder %s78, %s81
    %p90 = scmp.eq.s32.totalorder %s15, 5
    %p91 = por %p89, %p90
    %p92 = scmp.ne.s32.totalorder %s81, %s82
    %p93 = scmp.eq.s32.totalorder %s15, 0
    %p94 = por %p92, %p93
    %p95 = scmp.ne.s32.totalorder %s81, %s82
    %p96 = scmp.eq.s32.totalorder %s16, 5
    %p97 = por %p95, %p96
    %p99 = scmp.ne.s32.totalorder %s82, %s98
    %p100 = scmp.eq.s32.totalorder %s16, 0
    %p101 = por %p99, %p100
    %s102 = ssub.s32 %s19, %s35
    %p103 = scmp.eq.s32.totalorder %s102, 0
    %s105 = sadd.s32 %s104, 1
    %s106 = scalar_select %p103, %s104, %s105
    %p109 = pneg %p103
    %p110 = scmp.eq.s32.totalorder %s10, 5
    %p111 = por %p109, %p110
    %p112 = scmp.ne.s32.totalorder %s104, %s107
    %p113 = scmp.eq.s32.totalorder %s10, 0
    %p114 = por %p112, %p113
    %p115 = scmp.ne.s32.totalorder %s104, %s107
    %p116 = scmp.eq.s32.totalorder %s15, 5
    %p117 = por %p115, %p116
    %p118 = scmp.ne.s32.totalorder %s107, %s108
    %p119 = scmp.eq.s32.totalorder %s15, 0
    %p120 = por %p118, %p119
    %p121 = scmp.ne.s32.totalorder %s107, %s108
    %p122 = scmp.eq.s32.totalorder %s16, 5
    %p123 = por %p121, %p122
    %p125 = scmp.ne.s32.totalorder %s108, %s124
    %p126 = scmp.eq.s32.totalorder %s16, 0
    %p127 = por %p125, %p126
    %s128 = ssub.s32 %s19, %s35
    %p129 = scmp.eq.s32.totalorder %s128, 0
    %s131 = sadd.s32 %s130, 1
    %s132 = scalar_select %p129, %s130, %s131
    %p135 = pneg %p129
    %p136 = scmp.eq.s32.totalorder %s10, 5
    %p137 = por %p135, %p136
    %p138 = scmp.ne.s32.totalorder %s130, %s133
    %p139 = scmp.eq.s32.totalorder %s10, 0
    %p140 = por %p138, %p139
    %p141 = scmp.ne.s32.totalorder %s130, %s133
    %p142 = scmp.eq.s32.totalorder %s15, 5
    %p143 = por %p141, %p142
    %p144 = scmp.ne.s32.totalorder %s133, %s134
    %p145 = scmp.eq.s32.totalorder %s15, 0
    %p146 = por %p144, %p145
    %p147 = scmp.ne.s32.totalorder %s133, %s134
    %p148 = scmp.eq.s32.totalorder %s16, 5
    %p149 = por %p147, %p148
    %p151 = scmp.ne.s32.totalorder %s134, %s150
    %p152 = scmp.eq.s32.totalorder %s16, 0
    %p153 = por %p151, %p152
    %s154 = ssub.s32 %s17, %s43
    %s155 = ssub.s32 %s18, %s39
    %s156 = sor.u32 %s154, %s155
    %s157 = ssub.s32 %s19, %s35
    %s158 = sor.u32 %s156, %s157
    %p159 = scmp.eq.s32.totalorder %s158, 0
    %s161 = sadd.s32 %s160, 1
    %s162 = scalar_select %p159, %s160, %s161
    %p165 = pneg %p159
    %p166 = scmp.eq.s32.totalorder %s10, 5
    %p167 = por %p165, %p166
    %p168 = scmp.ne.s32.totalorder %s160, %s163
    %p169 = scmp.eq.s32.totalorder %s10, 0
    %p170 = por %p168, %p169
    %p171 = scmp.ne.s32.totalorder %s160, %s163
    %p172 = scmp.eq.s32.totalorder %s15, 5
    %p173 = por %p171, %p172
    %p174 = scmp.ne.s32.totalorder %s163, %s164
    %p175 = scmp.eq.s32.totalorder %s15, 0
    %p176 = por %p174, %p175
    %p177 = scmp.ne.s32.totalorder %s163, %s164
    %p178 = scmp.eq.s32.totalorder %s16, 5
    %p179 = por %p177, %p178
    %p181 = scmp.ne.s32.totalorder %s164, %s180
    %p182 = scmp.eq.s32.totalorder %s16, 0
    %p183 = por %p181, %p182
    %p184 = scmp.le.s32.totalorder 1, %s10
    %p185 = scmp.lt.s32.totalorder %s10, 7
    %p186 = pnand %p184, %p185
    %p187 = pneg %p186
    // Predicated region
    $region9: #{fwd.19} parent=5 // pred_check
      _
    $region10: #{fwd.19} parent=5 // pred_check_branch
      %189 = sbr.rel (%p186) target = $region12
    $region11: #{fwd.19} parent=5 // pred_region
      %s190 = ssub.s32 %s10, 1
      // Predicated region
      $region13: #{fwd.19} parent=11 // pred_check
        %p191 = pneg %p94
      $region14: #{fwd.19} parent=11 // pred_check_branch
        %193 = sbr.rel (%p191) target = $region16
      $region15: #{fwd.19} parent=11 // pred_region
        %s194 = smul.u32 16, %s24
        %p195 = scmp.lt.s32.totalorder %s194, 15
        %s196 = scalar_select %p195, %s194, 15
        %p197 = scmp.lt.s32.totalorder %s23, 0
        %s198 = scalar_select %p197, %s23, 0
        %s199 = sadd.s32 %s198, %s196
        %s200 = smul.addr %s199, 4
        %s201 = scalar_lea.vmem %s1, %s200
        %s202 = smul.u32 16, %s24
      $region16: #{fwd.19} parent=11 // pred_fallthru
        _
      // Predicated region
      $region17: #{fwd.19} parent=11 // pred_check
        %p203 = pneg %p120
      $region18: #{fwd.19} parent=11 // pred_check_branch
        %205 = sbr.rel (%p203) target = $region20
      $region19: #{fwd.19} parent=11 // pred_region
        %p206 = scmp.lt.s32.totalorder %s23, 0
        %s207 = scalar_select %p206, %s23, 0
        %s208 = scalar_lea.vmem %s2, %s207
      $region20: #{fwd.19} parent=11 // pred_fallthru
        _
      // Predicated region
      $region21: #{fwd.19} parent=11 // pred_check
        %p209 = pneg %p146
      $region22: #{fwd.19} parent=11 // pred_check_branch
        %211 = sbr.rel (%p209) target = $region24
      $region23: #{fwd.19} parent=11 // pred_region
        %p212 = scmp.lt.s32.totalorder %s23, 0
        %s213 = scalar_select %p212, %s23, 0
        %s214 = scalar_lea.vmem %s3, %s213
      $region24: #{fwd.19} parent=11 // pred_fallthru
        _
    $region12: #{fwd.19} parent=5 // pred_fallthru
      _
    %p215 = scmp.lt.s32.totalorder %s10, 6
    // Predicated region
    $region25: #{fwd.19} parent=5 // pred_check
      %p216 = pneg %p215
    $region26: #{fwd.19} parent=5 // pred_check_branch
      %218 = sbr.rel (%p216) target = $region28
    $region27: #{fwd.19} parent=5 // pred_region
      // Predicated region
      $region29: #{fwd.19} parent=27 // pred_check
        %p219 = pneg %p60
      $region30: #{fwd.19} parent=27 // pred_check_branch
        %221 = sbr.rel (%p219) target = $region32
      $region31: #{fwd.19} parent=27 // pred_region
        %s222 = smul.u32 8, %s18
        %p223 = scmp.lt.s32.totalorder %s17, 5
        %s224 = scalar_select %p223, %s17, 5
        %p225 = scmp.lt.s32.totalorder %s222, 7
        %s226 = scalar_select %p225, %s222, 7
        %p227 = scmp.lt.s32.totalorder %s20, 0
        %s228 = scalar_select %p227, %s20, 0
        %s229 = sadd.s32 %s228, %s226
        %s230 = smul.addr %s224, 8
        %s231 = sadd.s32 %s229, %s230
        %s232 = smul.addr %s231, 4
        %s233 = scalar_lea.vmem %s0, %s232
        %s234 = smul.u32 8, %s18
      $region32: #{fwd.19} parent=27 // pred_fallthru
        _
    $region28: #{fwd.19} parent=5 // pred_fallthru
      _
    %p235 = scmp.le.s32.totalorder 1, %s10
    %p236 = scmp.lt.s32.totalorder %s10, 7
    %p237 = pnand %p235, %p236
    %p238 = pneg %p237
    // Predicated region
    $region33: #{fwd.19} parent=5 // pred_check
      _
    $region34: #{fwd.19} parent=5 // pred_check_branch
      %240 = sbr.rel (%p237) target = $region36
    $region35: #{fwd.19} parent=5 // pred_region
      %s241 = ssub.s32 %s10, 1
      %s242 = smul.u32 8, %s22
      %p243 = scmp.lt.s32.totalorder %s21, 5
      %s244 = scalar_select %p243, %s21, 5
      %p245 = scmp.lt.s32.totalorder %s242, 7
      %s246 = scalar_select %p245, %s242, 7
      %p247 = scmp.lt.s32.totalorder %s24, 0
      %s248 = scalar_select %p247, %s24, 0
      %s249 = sadd.s32 %s248, %s246
      %s250 = smul.addr %s244, 8
      %s251 = sadd.s32 %s249, %s250
      %s252 = smul.addr %s251, 4
      %s253 = scalar_lea.vmem %s0, %s252
      %p254 = pneg %p66
      %p255 = pneg %p63
      %s256 = smul.u32 16, %s24
      %p257 = scmp.lt.s32.totalorder %s256, 15
      %s258 = scalar_select %p257, %s256, 15
      %p259 = scmp.lt.s32.totalorder %s23, 0
      %s260 = scalar_select %p259, %s23, 0
      %s261 = sadd.s32 %s260, %s258
      %s262 = smul.addr %s261, 4
      %s263 = scalar_lea.vmem %s1, %s262
      %p264 = pneg %p94
      %p265 = pneg %p91
      %p266 = scmp.lt.s32.totalorder %s23, 0
      %s267 = scalar_select %p266, %s23, 0
      %s268 = scalar_lea.vmem %s2, %s267
      %p269 = pneg %p120
      %p270 = pneg %p117
      %p271 = scmp.lt.s32.totalorder %s23, 0
      %s272 = scalar_select %p271, %s23, 0
      %s273 = scalar_lea.vmem %s3, %s272
      %p274 = pneg %p146
      %p275 = pneg %p143
      %p276 = pneg %p176
      %p277 = pneg %p173
      %s278 = smul.u32 8, %s22
      %p279 = scmp.lt.s32.totalorder %s21, 5
      %s280 = scalar_select %p279, %s21, 5
      %p281 = scmp.lt.s32.totalorder %s278, 7
      %s282 = scalar_select %p281, %s278, 7
      %p283 = scmp.lt.s32.totalorder %s23, 0
      %s284 = scalar_select %p283, %s23, 0
      %s285 = sadd.s32 %s284, %s282
      %s286 = smul.addr %s280, 8
      %s287 = sadd.s32 %s285, %s286
      %s288 = smul.addr %s287, 4
      %s289 = scalar_lea.vmem %s4, %s288
      %s290 = smul.u32 8, %s22
      %p291 = scmp.lt.s32.totalorder %s21, 5
      %s292 = scalar_select %p291, %s21, 5
      %p293 = scmp.lt.s32.totalorder %s290, 7
      %s294 = scalar_select %p293, %s290, 7
      %p295 = scmp.lt.s32.totalorder %s24, 0
      %s296 = scalar_select %p295, %s24, 0
      %s297 = sadd.s32 %s296, %s294
      %s298 = smul.addr %s292, 8
      %s299 = sadd.s32 %s297, %s298
      %s300 = smul.addr %s299, 4
      %s301 = scalar_lea.vmem %s0, %s300
      %s302 = smul.u32 8, %s22
      %s303 = smul.u32 16, %s24
      %p304 = scmp.lt.s32.totalorder %s303, 15
      %s305 = scalar_select %p304, %s303, 15
      %p306 = scmp.lt.s32.totalorder %s23, 0
      %s307 = scalar_select %p306, %s23, 0
      %s308 = sadd.s32 %s307, %s305
      %s309 = smul.addr %s308, 4
      %s310 = scalar_lea.vmem %s1, %s309
      %s311 = smul.u32 16, %s24
      %p312 = scmp.lt.s32.totalorder %s23, 0
      %s313 = scalar_select %p312, %s23, 0
      %s314 = scalar_lea.vmem %s2, %s313
      %p315 = scmp.lt.s32.totalorder %s23, 0
      %s316 = scalar_select %p315, %s23, 0
      %s317 = scalar_lea.vmem %s3, %s316
      %s318 = smul.u32 8, %s22
      %p319 = scmp.lt.s32.totalorder %s21, 5
      %s320 = scalar_select %p319, %s21, 5
      %p321 = scmp.lt.s32.totalorder %s318, 7
      %s322 = scalar_select %p321, %s318, 7
      %p323 = scmp.lt.s32.totalorder %s23, 0
      %s324 = scalar_select %p323, %s23, 0
      %s325 = sadd.s32 %s324, %s322
      %s326 = smul.addr %s320, 8
      %s327 = sadd.s32 %s325, %s326
      %s328 = smul.addr %s327, 4
      %s329 = scalar_lea.vmem %s4, %s328
      %s330 = smul.u32 8, %s22
      %p332 = scmp.eq.s32.totalorder %s24, 0
      // Predicated region
      $region37: #{fwd.19} parent=35 // pred_check
        %p333 = pneg %p332
      $region38: #{fwd.19} parent=35 // pred_check_branch
        %335 = sbr.rel (%p333) target = $region40
      $region39: #{fwd.19} parent=35 // pred_region
        %336 = vst [vmem:[#allocation2] sm:$0xff] 0.0
        %337 = vst [vmem:[#allocation2 + $0x8] sm:$0xff] 0.0
        %338 = vst [vmem:[#allocation2 + $0x10] sm:$0xff] 0.0
        %339 = vst [vmem:[#allocation2 + $0x18] sm:$0xff] 0.0
        %340 = vst [vmem:[#allocation2 + $0x20] sm:$0xff] 0.0
        %341 = vst [vmem:[#allocation2 + $0x28] sm:$0xff] 0.0
        %342 = vst [vmem:[#allocation2 + $0x30] sm:$0xff] 0.0
        %343 = vst [vmem:[#allocation2 + $0x38] sm:$0xff] 0.0
      $region40: #{fwd.19} parent=35 // pred_fallthru
        _
      %v344 = vld [vmem:[%s301] sm:$0xf]
      %v345 = vld [vmem:[%s301 + $0x4] sm:$0xf]
      %v346 = vld [vmem:[%s301 + $0x8] sm:$0xf]
      %v347 = vld [vmem:[%s301 + $0xc] sm:$0xf]
      %v348 = vld [vmem:[%s301 + $0x10] sm:$0xf]
      %v349 = vld [vmem:[%s301 + $0x14] sm:$0xf]
      %v350 = vld [vmem:[%s301 + $0x18] sm:$0xf]
      %v351 = vld [vmem:[%s301 + $0x1c] sm:$0xf]
      %v352 = vld [vmem:[#allocation2] sm:$0xff]
      %v353 = vld [vmem:[#allocation2 + $0x8] sm:$0xff]
      %v354 = vld [vmem:[#allocation2 + $0x10] sm:$0xff]
      %v355 = vld [vmem:[#allocation2 + $0x18] sm:$0xff]
      %v356 = vld [vmem:[#allocation2 + $0x20] sm:$0xff]
      %v357 = vld [vmem:[#allocation2 + $0x28] sm:$0xff]
      %v358 = vld [vmem:[#allocation2 + $0x30] sm:$0xff]
      %v359 = vld [vmem:[#allocation2 + $0x38] sm:$0xff]
      %v360 = vld [vmem:[%s310] sm:$0xf]
      %v361 = vld [vmem:[%s310 + $0x4] sm:$0xf]
      %v362 = vld [vmem:[%s310 + $0x8] sm:$0xf]
      %v363 = vld [vmem:[%s310 + $0xc] sm:$0xf]
      %v364 = vld [vmem:[%s310 + $0x10] sm:$0xf]
      %v365 = vld [vmem:[%s310 + $0x14] sm:$0xf]
      %v366 = vld [vmem:[%s310 + $0x18] sm:$0xf]
      %v367 = vld [vmem:[%s310 + $0x1c] sm:$0xf]
      %v368 = vld [vmem:[%s310 + $0x20] sm:$0xf]
      %v369 = vld [vmem:[%s310 + $0x24] sm:$0xf]
      %v370 = vld [vmem:[%s310 + $0x28] sm:$0xf]
      %v371 = vld [vmem:[%s310 + $0x2c] sm:$0xf]
      %v372 = vld [vmem:[%s310 + $0x30] sm:$0xf]
      %v373 = vld [vmem:[%s310 + $0x34] sm:$0xf]
      %v374 = vld [vmem:[%s310 + $0x38] sm:$0xf]
      %v375 = vld [vmem:[%s310 + $0x3c] sm:$0xf]
      %v384 = vunpack.c.l.b16 %v344
      %v385 = vunpack.c.l.b16 %v345
      %v386 = vunpack.c.l.b16 %v346
      %v387 = vunpack.c.l.b16 %v347
      %v388 = vunpack.c.l.b16 %v348
      %v389 = vunpack.c.l.b16 %v349
      %v390 = vunpack.c.l.b16 %v350
      %v391 = vunpack.c.l.b16 %v351
      %v392 = vpack.c.b16 %v385, %v384
      %v393 = vpack.c.b16 %v387, %v386
      %v394 = vpack.c.b16 %v389, %v388
      %v395 = vpack.c.b16 %v391, %v390
      %v416 = vunpack.c.l.b16 %v360
      %v417 = vunpack.c.l.b16 %v361
      %v418 = vunpack.c.l.b16 %v362
      %v419 = vunpack.c.l.b16 %v363
      %v420 = vunpack.c.l.b16 %v364
      %v421 = vunpack.c.l.b16 %v365
      %v422 = vunpack.c.l.b16 %v366
      %v423 = vunpack.c.l.b16 %v367
      %v424 = vunpack.c.l.b16 %v368
      %v425 = vunpack.c.l.b16 %v369
      %v426 = vunpack.c.l.b16 %v370
      %v427 = vunpack.c.l.b16 %v371
      %v428 = vunpack.c.l.b16 %v372
      %v429 = vunpack.c.l.b16 %v373
      %v430 = vunpack.c.l.b16 %v374
      %v431 = vunpack.c.l.b16 %v375
      %v432 = vpack.c.b16 %v417, %v416
      %v433 = vpack.c.b16 %v419, %v418
      %v434 = vpack.c.b16 %v421, %v420
      %v435 = vpack.c.b16 %v423, %v422
      %v436 = vpack.c.b16 %v425, %v424
      %v437 = vpack.c.b16 %v427, %v426
      %v438 = vpack.c.b16 %v429, %v428
      %v439 = vpack.c.b16 %v431, %v430
      %448 = vmatprep.subr.bf16.mxu0 0
      %449 = vmatpush1.bf16.msra.mxu0 %v439
      %450 = vmatprep.subr.bf16.mxu0 0
      %451 = vmatpush1.bf16.msra.mxu0 %v438
      %452 = vmatprep.subr.bf16.mxu0 0
      %453 = vmatpush1.bf16.msra.mxu0 %v437
      %454 = vmatprep.subr.bf16.mxu0 0
      %455 = vmatpush1.bf16.msra.mxu0 %v436
      %456 = vmatprep.subr.bf16.mxu0 0
      %457 = vmatpush1.bf16.msra.mxu0 %v435
      %458 = vmatprep.subr.bf16.mxu0 0
      %459 = vmatpush1.bf16.msra.mxu0 %v434
      %460 = vmatprep.subr.bf16.mxu0 0
      %461 = vmatpush1.bf16.msra.mxu0 %v433
      %462 = vmatprep.subr.bf16.mxu0 0
      %463 = vmatpush1.bf16.msra.mxu0 %v432
      %464 = vmatprep.subr.bf16.mxu0 0
      %465 = vmatpush2.bf16.msra.mxu0 0
      %466 = vmatprep.subr.bf16.mxu0 0
      %467 = vmatpush2.bf16.msra.mxu0 0
      %468 = vmatprep.subr.bf16.mxu0 0
      %469 = vmatpush2.bf16.msra.mxu0 0
      %470 = vmatprep.subr.bf16.mxu0 0
      %471 = vmatpush2.bf16.msra.mxu0 0
      %472 = vmatprep.subr.bf16.mxu0 0
      %473 = vmatpush2.bf16.msra.mxu0 0
      %474 = vmatprep.subr.bf16.mxu0 0
      %475 = vmatpush2.bf16.msra.mxu0 0
      %476 = vmatprep.subr.bf16.mxu0 0
      %477 = vmatpush2.bf16.msra.mxu0 0
      %478 = vmatprep.subr.bf16.mxu0 0
      %479 = vmatpush2.bf16.msra.mxu0 0
      %480 = vmatprep.mubr.bf16.mxu0 0
      %481 = vmatmul.mubr.bf16.gmra.mxu0 %v392
      %v482 = vpop.f32.mrf.mxu0
      %v483 = vadd.f32 0.0, %v482
      %v484 = vpop.f32.mrf.mxu0
      %v485 = vpop.f32.mrf.mxu0
      %v486 = vadd.f32 0.0, %v485
      %v487 = vpop.f32.mrf.mxu0
      %488 = vmatprep.mubr.bf16.mxu0 0
      %489 = vmatmul.mubr.bf16.gmra.mxu0 %v393
      %v490 = vpop.f32.mrf.mxu0
      %v491 = vadd.f32 0.0, %v490
      %v492 = vpop.f32.mrf.mxu0
      %v493 = vpop.f32.mrf.mxu0
      %v494 = vadd.f32 0.0, %v493
      %v495 = vpop.f32.mrf.mxu0
      %496 = vmatprep.mubr.bf16.mxu0 0
      %497 = vmatmul.mubr.bf16.gmra.mxu0 %v394
      %v498 = vpop.f32.mrf.mxu0
      %v499 = vadd.f32 0.0, %v498
      %v500 = vpop.f32.mrf.mxu0
      %v501 = vpop.f32.mrf.mxu0
      %v502 = vadd.f32 0.0, %v501
      %v503 = vpop.f32.mrf.mxu0
      %504 = vmatprep.mubr.bf16.mxu0 0
      %505 = vmatmul.mubr.bf16.gmra.mxu0 %v395
      %v506 = vpop.f32.mrf.mxu0
      %v507 = vadd.f32 0.0, %v506
      %v508 = vpop.f32.mrf.mxu0
      %v509 = vpop.f32.mrf.mxu0
      %v510 = vadd.f32 0.0, %v509
      %v511 = vpop.f32.mrf.mxu0
      %512 = vdwg.mxu0
      %v513 = vadd.f32 %v352, %v483
      %v514 = vadd.f32 %v353, %v486
      %v515 = vadd.f32 %v354, %v491
      %v516 = vadd.f32 %v355, %v494
      %v517 = vadd.f32 %v356, %v499
      %v518 = vadd.f32 %v357, %v502
      %v519 = vadd.f32 %v358, %v507
      %v520 = vadd.f32 %v359, %v510
      %521 = vst [vmem:[#allocation2] sm:$0xff] %v513
      %522 = vst [vmem:[#allocation2 + $0x8] sm:$0xff] %v514
      %523 = vst [vmem:[#allocation2 + $0x10] sm:$0xff] %v515
      %524 = vst [vmem:[#allocation2 + $0x18] sm:$0xff] %v516
      %525 = vst [vmem:[#allocation2 + $0x20] sm:$0xff] %v517
      %526 = vst [vmem:[#allocation2 + $0x28] sm:$0xff] %v518
      %527 = vst [vmem:[#allocation2 + $0x30] sm:$0xff] %v519
      %528 = vst [vmem:[#allocation2 + $0x38] sm:$0xff] %v520
      // Predicated region
      $region41: #{fwd.19} parent=35 // pred_check
        %p529 = pneg %p332
      $region42: #{fwd.19} parent=35 // pred_check_branch
        %531 = sbr.rel (%p529) target = $region44
      $region43: #{fwd.19} parent=35 // pred_region
        %v532 = vld [vmem:[#allocation2] sm:$0xff]
        %v533 = vld [vmem:[#allocation2 + $0x8] sm:$0xff]
        %v534 = vld [vmem:[#allocation2 + $0x10] sm:$0xff]
        %v535 = vld [vmem:[#allocation2 + $0x18] sm:$0xff]
        %v536 = vld [vmem:[#allocation2 + $0x20] sm:$0xff]
        %v537 = vld [vmem:[#allocation2 + $0x28] sm:$0xff]
        %v538 = vld [vmem:[#allocation2 + $0x30] sm:$0xff]
        %v539 = vld [vmem:[#allocation2 + $0x38] sm:$0xff]
        %v540 = vld [vmem:[%s314] sm:$0x1]
        %v542 = vlaneseq
        %v543 = vshrl.u32 %v542, 7
        %v544 = vsub.s32 0, %v543
        %v545 = vrot.slane %v540, %v544
        %v547 = vmul.f32 %v532, %v545
        %v548 = vmul.f32 %v533, %v545
        %v549 = vmul.f32 %v534, %v545
        %v550 = vmul.f32 %v535, %v545
        %v551 = vmul.f32 %v536, %v545
        %v552 = vmul.f32 %v537, %v545
        %v553 = vmul.f32 %v538, %v545
        %v554 = vmul.f32 %v539, %v545
        %v555 = vld [vmem:[%s317] sm:$0x1]
        %v557 = vlaneseq
        %v558 = vshrl.u32 %v557, 7
        %v559 = vsub.s32 0, %v558
        %v560 = vrot.slane %v555, %v559
        %v562 = vadd.f32 %v547, %v560
        %v563 = vadd.f32 %v548, %v560
        %v564 = vadd.f32 %v549, %v560
        %v565 = vadd.f32 %v550, %v560
        %v566 = vadd.f32 %v551, %v560
        %v567 = vadd.f32 %v552, %v560
        %v568 = vadd.f32 %v553, %v560
        %v569 = vadd.f32 %v554, %v560
        %v570 = vxor.u32 %v562, 2147483648
        %v571 = vxor.u32 %v563, 2147483648
        %v572 = vxor.u32 %v564, 2147483648
        %v573 = vxor.u32 %v565, 2147483648
        %v574 = vxor.u32 %v566, 2147483648
        %v575 = vxor.u32 %v567, 2147483648
        %v576 = vxor.u32 %v568, 2147483648
        %v577 = vxor.u32 %v569, 2147483648
        %v578 = vmul.f32 %v570, 1.442695
        %v579 = vpow.pop %v578
        %v580 = vmul.f32 %v571, 1.442695
        %v581 = vpow.pop %v580
        %v582 = vmul.f32 %v572, 1.442695
        %v583 = vpow.pop %v582
        %v584 = vmul.f32 %v573, 1.442695
        %v585 = vpow.pop %v584
        %v586 = vmul.f32 %v574, 1.442695
        %v587 = vpow.pop %v586
        %v588 = vmul.f32 %v575, 1.442695
        %v589 = vpow.pop %v588
        %v590 = vmul.f32 %v576, 1.442695
        %v591 = vpow.pop %v590
        %v592 = vmul.f32 %v577, 1.442695
        %v593 = vpow.pop %v592
        %v594 = vadd.f32 %v579, 1.0
        %v595 = vadd.f32 %v581, 1.0
        %v596 = vadd.f32 %v583, 1.0
        %v597 = vadd.f32 %v585, 1.0
        %v598 = vadd.f32 %v587, 1.0
        %v599 = vadd.f32 %v589, 1.0
        %v600 = vadd.f32 %v591, 1.0
        %v601 = vadd.f32 %v593, 1.0
        %v602 = vrcp.pop %v594
        %v603 = vmul.f32 1.0, %v602
        %v604 = vrcp.pop %v595
        %v605 = vmul.f32 1.0, %v604
        %v606 = vrcp.pop %v596
        %v607 = vmul.f32 1.0, %v606
        %v608 = vrcp.pop %v597
        %v609 = vmul.f32 1.0, %v608
        %v610 = vrcp.pop %v598
        %v611 = vmul.f32 1.0, %v610
        %v612 = vrcp.pop %v599
        %v613 = vmul.f32 1.0, %v612
        %v614 = vrcp.pop %v600
        %v615 = vmul.f32 1.0, %v614
        %v616 = vrcp.pop %v601
        %v617 = vmul.f32 1.0, %v616
        %v618 = vmul.f32 %v562, %v603
        %v619 = vmul.f32 %v563, %v605
        %v620 = vmul.f32 %v564, %v607
        %v621 = vmul.f32 %v565, %v609
        %v622 = vmul.f32 %v566, %v611
        %v623 = vmul.f32 %v567, %v613
        %v624 = vmul.f32 %v568, %v615
        %v625 = vmul.f32 %v569, %v617
        %v626 = vpack.c.bf16 %v619, %v618
        %v627 = vpack.c.bf16 %v621, %v620
        %v628 = vpack.c.bf16 %v623, %v622
        %v629 = vpack.c.bf16 %v625, %v624
        %v634 = vunpack.c.l.b16 %v626
        %v635 = vunpack.c.h.b16 %v626
        %v636 = vunpack.c.l.b16 %v627
        %v637 = vunpack.c.h.b16 %v627
        %v638 = vunpack.c.l.b16 %v628
        %v639 = vunpack.c.h.b16 %v628
        %v640 = vunpack.c.l.b16 %v629
        %v641 = vunpack.c.h.b16 %v629
        %v642 = vpack.c.b16 %v634, %v634
        %v643 = vpack.c.b16 %v635, %v635
        %v644 = vpack.c.b16 %v636, %v636
        %v645 = vpack.c.b16 %v637, %v637
        %v646 = vpack.c.b16 %v638, %v638
        %v647 = vpack.c.b16 %v639, %v639
        %v648 = vpack.c.b16 %v640, %v640
        %v649 = vpack.c.b16 %v641, %v641
        %658 = vst [vmem:[%s329] sm:$0xf] %v642
        %659 = vst [vmem:[%s329 + $0x4] sm:$0xf] %v643
        %660 = vst [vmem:[%s329 + $0x8] sm:$0xf] %v644
        %661 = vst [vmem:[%s329 + $0xc] sm:$0xf] %v645
        %662 = vst [vmem:[%s329 + $0x10] sm:$0xf] %v646
        %663 = vst [vmem:[%s329 + $0x14] sm:$0xf] %v647
        %664 = vst [vmem:[%s329 + $0x18] sm:$0xf] %v648
        %665 = vst [vmem:[%s329 + $0x1c] sm:$0xf] %v649
      $region44: #{fwd.19} parent=35 // pred_fallthru
        _
      %s666 = smul.u32 8, %s22
      %p667 = scmp.lt.s32.totalorder %s21, 5
      %s668 = scalar_select %p667, %s21, 5
      %p669 = scmp.lt.s32.totalorder %s666, 7
      %s670 = scalar_select %p669, %s666, 7
      %p671 = scmp.lt.s32.totalorder %s23, 0
      %s672 = scalar_select %p671, %s23, 0
      %s673 = sadd.s32 %s672, %s670
      %s674 = smul.addr %s668, 8
      %s675 = sadd.s32 %s673, %s674
      %s676 = smul.addr %s675, 4
      %s677 = scalar_lea.vmem %s4, %s676
      // Predicated region
      $region45: #{fwd.19} parent=35 // pred_check
        %p678 = pneg %p173
      $region46: #{fwd.19} parent=35 // pred_check_branch
        %680 = sbr.rel (%p678) target = $region48
      $region47: #{fwd.19} parent=35 // pred_region
        %s681 = smul.u32 8, %s22
      $region48: #{fwd.19} parent=35 // pred_fallthru
        _
    $region36: #{fwd.19} parent=5 // pred_fallthru
      _
    %p682 = scmp.le.s32.totalorder 2, %s10
    // Predicated region
    $region49: #{fwd.19} parent=5 // pred_check
      %p683 = pneg %p682
    $region50: #{fwd.19} parent=5 // pred_check_branch
      %685 = sbr.rel (%p683) target = $region52
    $region51: #{fwd.19} parent=5 // pred_region
      %s686 = ssub.s32 %s10, 2
      // Predicated region
      $region53: #{fwd.19} parent=51 // pred_check
        %p687 = pneg %p179
      $region54: #{fwd.19} parent=51 // pred_check_branch
        %689 = sbr.rel (%p687) target = $region56
      $region55: #{fwd.19} parent=51 // pred_region
        %s690 = smul.u32 8, %s26
        %p691 = scmp.lt.s32.totalorder %s25, 5
        %s692 = scalar_select %p691, %s25, 5
        %p693 = scmp.lt.s32.totalorder %s690, 7
        %s694 = scalar_select %p693, %s690, 7
        %p695 = scmp.lt.s32.totalorder %s27, 0
        %s696 = scalar_select %p695, %s27, 0
        %s697 = sadd.s32 %s696, %s694
        %s698 = smul.addr %s692, 8
        %s699 = sadd.s32 %s697, %s698
        %s700 = smul.addr %s699, 4
        %s701 = scalar_lea.vmem %s4, %s700
      $region56: #{fwd.19} parent=51 // pred_fallthru
        _
    $region52: #{fwd.19} parent=5 // pred_fallthru
      _
  $region6: #{fwd.19} parent=0 // loop_footer
    %s14 = sadd.s32 1, %s10
  $region7: #{fwd.19} parent=0 // loop_footer_branch
    %9 = sbr.rel target = $region3
  $region8: #{fwd.19} parent=0 // loop_exit
    _

// kernel: fwd.18
$region0: #{fwd.18}
  #allocation0 [shape = 'u32[]', space=smem, size = 0x4, offset = 0x4, fixed_abs, tag = 'smem constant byte address 0x4 - core index']
  #allocation1 [shape = 'u32[144,128]{1,0:T(1,128)}', space=vmem, size = 0x12000, scoped, tag = 'internal scratch']
  #allocation2 [shape = 'f32[64,128]{1,0:T(8,128)}', space=vmem, size = 0x8000, scoped, tag = 'scratch operand']
  %s0 = inlined_call_operand.vmem [shape: bf16[6,64,128], index: 0, kind: input, shape index: {}]
  %s1 = inlined_call_operand.vmem [shape: bf16[128,128], index: 1, kind: input, shape index: {}]
  %s2 = inlined_call_operand.vmem [shape: f32[1,128], index: 2, kind: input, shape index: {}]
  %s3 = inlined_call_operand.vmem [shape: f32[1,128], index: 3, kind: input, shape index: {}]
  %s4 = inlined_call_operand.vmem [shape: f32[6,1,128], index: 4, kind: input, shape index: {}]
  %s5 = inlined_call_operand.vmem [shape: bf16[6,64,128], index: 5, kind: output, shape index: {}]
  %s6 = sld [smem:[#allocation0]]
  $region61: #{fwd.18} parent=0
    _
  %s8 = ssub.s32 1, %s6
  %s9 = scalar_select 0, %s8, %s6
  loop: start=0, step=1, limit=8
  $region2: #{fwd.18} parent=0 // loop_pre_header
    _
  $region3: #{fwd.18} parent=0 // loop_header
    %s11 = sphi 0, %s15
    %p12 = scmp.ge.s32.totalorder %s11, 8
    %s18 = sphi 0, %s44
    %s19 = sphi 0, %s40
    %s20 = sphi 0, %s36
    %s21 = sphi 0, %s32
    %s22 = sphi 0, %s18
    %s23 = sphi 0, %s19
    %s24 = sphi 0, %s20
    %s25 = sphi 0, %s21
    %s26 = sphi 0, %s22
    %s27 = sphi 0, %s23
    %s28 = sphi 0, %s24
    %s29 = sphi 0, %s25
    %s51 = sphi 0, %s53
    %s54 = sphi 0, %s51
    %s55 = sphi 0, %s54
    %s71 = sphi 0, %s55
    %s79 = sphi 0, %s81
    %s82 = sphi 0, %s79
    %s83 = sphi 0, %s82
    %s99 = sphi 0, %s83
    %s105 = sphi 0, %s107
    %s108 = sphi 0, %s105
    %s109 = sphi 0, %s108
    %s125 = sphi 0, %s109
    %s131 = sphi 0, %s133
    %s134 = sphi 0, %s131
    %s135 = sphi 0, %s134
    %s151 = sphi 0, %s135
    %s159 = sphi 0, %s161
    %s162 = sphi 0, %s159
    %s163 = sphi 0, %s162
    %s179 = sphi 0, %s163
    %s189 = sphi 0, %s191
    %s192 = sphi 0, %s189
    %s193 = sphi 0, %s192
    %s209 = sphi 0, %s193
  $region4: #{fwd.18} parent=0 // loop_header_branch
    %14 = sbr.rel (%p12) target = $region8
  $region5: #{fwd.18} parent=0 // loop_body
    %s16 = ssub.s32 %s11, 1
    %s17 = ssub.s32 %s11, 2
    %s30 = sadd.s32 1, %s21
    %p31 = scmp.ge.s32.totalorder %s30, 1
    %s32 = scalar_select %p31, 0, %s30
    %s33 = sadd.s32 1, %s20
    %s34 = scalar_select %p31, %s33, %s20
    %p35 = scmp.ge.s32.totalorder %s34, 1
    %s36 = scalar_select %p35, 0, %s34
    %s37 = sadd.s32 1, %s19
    %s38 = scalar_select %p35, %s37, %s19
    %p39 = scmp.ge.s32.totalorder %s38, 1
    %s40 = scalar_select %p39, 0, %s38
    %s41 = sadd.s32 1, %s18
    %s42 = scalar_select %p39, %s41, %s18
    %p43 = scmp.ge.s32.totalorder %s42, 6
    %s44 = scalar_select %p43, 0, %s42
    %s45 = ssub.s32 %s18, %s44
    %s46 = ssub.s32 %s19, %s40
    %s47 = sor.u32 %s45, %s46
    %s48 = ssub.s32 %s21, %s32
    %s49 = sor.u32 %s47, %s48
    %p50 = scmp.eq.s32.totalorder %s49, 0
    %s52 = sadd.s32 %s51, 1
    %s53 = scalar_select %p50, %s51, %s52
    %p56 = pneg %p50
    %p57 = scmp.eq.s32.totalorder %s11, 5
    %p58 = por %p56, %p57
    %p59 = scmp.ne.s32.totalorder %s51, %s54
    %p60 = scmp.eq.s32.totalorder %s11, 0
    %p61 = por %p59, %p60
    %p62 = scmp.ne.s32.totalorder %s51, %s54
    %p63 = scmp.eq.s32.totalorder %s16, 5
    %p64 = por %p62, %p63
    %p65 = scmp.ne.s32.totalorder %s54, %s55
    %p66 = scmp.eq.s32.totalorder %s16, 0
    %p67 = por %p65, %p66
    %p68 = scmp.ne.s32.totalorder %s54, %s55
    %p69 = scmp.eq.s32.totalorder %s17, 5
    %p70 = por %p68, %p69
    %p72 = scmp.ne.s32.totalorder %s55, %s71
    %p73 = scmp.eq.s32.totalorder %s17, 0
    %p74 = por %p72, %p73
    %s75 = ssub.s32 %s21, %s32
    %s76 = ssub.s32 %s20, %s36
    %s77 = sor.u32 %s75, %s76
    %p78 = scmp.eq.s32.totalorder %s77, 0
    %s80 = sadd.s32 %s79, 1
    %s81 = scalar_select %p78, %s79, %s80
    %p84 = pneg %p78
    %p85 = scmp.eq.s32.totalorder %s11, 5
    %p86 = por %p84, %p85
    %p87 = scmp.ne.s32.totalorder %s79, %s82
    %p88 = scmp.eq.s32.totalorder %s11, 0
    %p89 = por %p87, %p88
    %p90 = scmp.ne.s32.totalorder %s79, %s82
    %p91 = scmp.eq.s32.totalorder %s16, 5
    %p92 = por %p90, %p91
    %p93 = scmp.ne.s32.totalorder %s82, %s83
    %p94 = scmp.eq.s32.totalorder %s16, 0
    %p95 = por %p93, %p94
    %p96 = scmp.ne.s32.totalorder %s82, %s83
    %p97 = scmp.eq.s32.totalorder %s17, 5
    %p98 = por %p96, %p97
    %p100 = scmp.ne.s32.totalorder %s83, %s99
    %p101 = scmp.eq.s32.totalorder %s17, 0
    %p102 = por %p100, %p101
    %s103 = ssub.s32 %s20, %s36
    %p104 = scmp.eq.s32.totalorder %s103, 0
    %s106 = sadd.s32 %s105, 1
    %s107 = scalar_select %p104, %s105, %s106
    %p110 = pneg %p104
    %p111 = scmp.eq.s32.totalorder %s11, 5
    %p112 = por %p110, %p111
    %p113 = scmp.ne.s32.totalorder %s105, %s108
    %p114 = scmp.eq.s32.totalorder %s11, 0
    %p115 = por %p113, %p114
    %p116 = scmp.ne.s32.totalorder %s105, %s108
    %p117 = scmp.eq.s32.totalorder %s16, 5
    %p118 = por %p116, %p117
    %p119 = scmp.ne.s32.totalorder %s108, %s109
    %p120 = scmp.eq.s32.totalorder %s16, 0
    %p121 = por %p119, %p120
    %p122 = scmp.ne.s32.totalorder %s108, %s109
    %p123 = scmp.eq.s32.totalorder %s17, 5
    %p124 = por %p122, %p123
    %p126 = scmp.ne.s32.totalorder %s109, %s125
    %p127 = scmp.eq.s32.totalorder %s17, 0
    %p128 = por %p126, %p127
    %s129 = ssub.s32 %s20, %s36
    %p130 = scmp.eq.s32.totalorder %s129, 0
    %s132 = sadd.s32 %s131, 1
    %s133 = scalar_select %p130, %s131, %s132
    %p136 = pneg %p130
    %p137 = scmp.eq.s32.totalorder %s11, 5
    %p138 = por %p136, %p137
    %p139 = scmp.ne.s32.totalorder %s131, %s134
    %p140 = scmp.eq.s32.totalorder %s11, 0
    %p141 = por %p139, %p140
    %p142 = scmp.ne.s32.totalorder %s131, %s134
    %p143 = scmp.eq.s32.totalorder %s16, 5
    %p144 = por %p142, %p143
    %p145 = scmp.ne.s32.totalorder %s134, %s135
    %p146 = scmp.eq.s32.totalorder %s16, 0
    %p147 = por %p145, %p146
    %p148 = scmp.ne.s32.totalorder %s134, %s135
    %p149 = scmp.eq.s32.totalorder %s17, 5
    %p150 = por %p148, %p149
    %p152 = scmp.ne.s32.totalorder %s135, %s151
    %p153 = scmp.eq.s32.totalorder %s17, 0
    %p154 = por %p152, %p153
    %s155 = ssub.s32 %s18, %s44
    %s156 = ssub.s32 %s21, %s32
    %s157 = sor.u32 %s155, %s156
    %p158 = scmp.eq.s32.totalorder %s157, 0
    %s160 = sadd.s32 %s159, 1
    %s161 = scalar_select %p158, %s159, %s160
    %p164 = pneg %p158
    %p165 = scmp.eq.s32.totalorder %s11, 5
    %p166 = por %p164, %p165
    %p167 = scmp.ne.s32.totalorder %s159, %s162
    %p168 = scmp.eq.s32.totalorder %s11, 0
    %p169 = por %p167, %p168
    %p170 = scmp.ne.s32.totalorder %s159, %s162
    %p171 = scmp.eq.s32.totalorder %s16, 5
    %p172 = por %p170, %p171
    %p173 = scmp.ne.s32.totalorder %s162, %s163
    %p174 = scmp.eq.s32.totalorder %s16, 0
    %p175 = por %p173, %p174
    %p176 = scmp.ne.s32.totalorder %s162, %s163
    %p177 = scmp.eq.s32.totalorder %s17, 5
    %p178 = por %p176, %p177
    %p180 = scmp.ne.s32.totalorder %s163, %s179
    %p181 = scmp.eq.s32.totalorder %s17, 0
    %p182 = por %p180, %p181
    %s183 = ssub.s32 %s18, %s44
    %s184 = ssub.s32 %s19, %s40
    %s185 = sor.u32 %s183, %s184
    %s186 = ssub.s32 %s20, %s36
    %s187 = sor.u32 %s185, %s186
    %p188 = scmp.eq.s32.totalorder %s187, 0
    %s190 = sadd.s32 %s189, 1
    %s191 = scalar_select %p188, %s189, %s190
    %p194 = pneg %p188
    %p195 = scmp.eq.s32.totalorder %s11, 5
    %p196 = por %p194, %p195
    %p197 = scmp.ne.s32.totalorder %s189, %s192
    %p198 = scmp.eq.s32.totalorder %s11, 0
    %p199 = por %p197, %p198
    %p200 = scmp.ne.s32.totalorder %s189, %s192
    %p201 = scmp.eq.s32.totalorder %s16, 5
    %p202 = por %p200, %p201
    %p203 = scmp.ne.s32.totalorder %s192, %s193
    %p204 = scmp.eq.s32.totalorder %s16, 0
    %p205 = por %p203, %p204
    %p206 = scmp.ne.s32.totalorder %s192, %s193
    %p207 = scmp.eq.s32.totalorder %s17, 5
    %p208 = por %p206, %p207
    %p210 = scmp.ne.s32.totalorder %s193, %s209
    %p211 = scmp.eq.s32.totalorder %s17, 0
    %p212 = por %p210, %p211
    %p213 = scmp.le.s32.totalorder 1, %s11
    %p214 = scmp.lt.s32.totalorder %s11, 7
    %p215 = pnand %p213, %p214
    %p216 = pneg %p215
    // Predicated region
    $region9: #{fwd.18} parent=5 // pred_check
      _
    $region10: #{fwd.18} parent=5 // pred_check_branch
      %218 = sbr.rel (%p215) target = $region12
    $region11: #{fwd.18} parent=5 // pred_region
      %s219 = ssub.s32 %s11, 1
      // Predicated region
      $region13: #{fwd.18} parent=11 // pred_check
        %p220 = pneg %p95
      $region14: #{fwd.18} parent=11 // pred_check_branch
        %222 = sbr.rel (%p220) target = $region16
      $region15: #{fwd.18} parent=11 // pred_region
        %s223 = smul.u32 16, %s25
        %p224 = scmp.lt.s32.totalorder %s223, 15
        %s225 = scalar_select %p224, %s223, 15
        %p226 = scmp.lt.s32.totalorder %s24, 0
        %s227 = scalar_select %p226, %s24, 0
        %s228 = sadd.s32 %s227, %s225
        %s229 = smul.addr %s228, 4
        %s230 = scalar_lea.vmem %s1, %s229
        %s231 = smul.u32 16, %s25
      $region16: #{fwd.18} parent=11 // pred_fallthru
        _
      // Predicated region
      $region17: #{fwd.18} parent=11 // pred_check
        %p232 = pneg %p121
      $region18: #{fwd.18} parent=11 // pred_check_branch
        %234 = sbr.rel (%p232) target = $region20
      $region19: #{fwd.18} parent=11 // pred_region
        %p235 = scmp.lt.s32.totalorder %s24, 0
        %s236 = scalar_select %p235, %s24, 0
        %s237 = scalar_lea.vmem %s2, %s236
      $region20: #{fwd.18} parent=11 // pred_fallthru
        _
      // Predicated region
      $region21: #{fwd.18} parent=11 // pred_check
        %p238 = pneg %p147
      $region22: #{fwd.18} parent=11 // pred_check_branch
        %240 = sbr.rel (%p238) target = $region24
      $region23: #{fwd.18} parent=11 // pred_region
        %p241 = scmp.lt.s32.totalorder %s24, 0
        %s242 = scalar_select %p241, %s24, 0
        %s243 = scalar_lea.vmem %s3, %s242
      $region24: #{fwd.18} parent=11 // pred_fallthru
        _
    $region12: #{fwd.18} parent=5 // pred_fallthru
      _
    %p244 = scmp.lt.s32.totalorder %s11, 6
    // Predicated region
    $region25: #{fwd.18} parent=5 // pred_check
      %p245 = pneg %p244
    $region26: #{fwd.18} parent=5 // pred_check_branch
      %247 = sbr.rel (%p245) target = $region28
    $region27: #{fwd.18} parent=5 // pred_region
      // Predicated region
      $region29: #{fwd.18} parent=27 // pred_check
        %p248 = pneg %p61
      $region30: #{fwd.18} parent=27 // pred_check_branch
        %250 = sbr.rel (%p248) target = $region32
      $region31: #{fwd.18} parent=27 // pred_region
        %s251 = smul.u32 8, %s19
        %p252 = scmp.lt.s32.totalorder %s18, 5
        %s253 = scalar_select %p252, %s18, 5
        %p254 = scmp.lt.s32.totalorder %s251, 7
        %s255 = scalar_select %p254, %s251, 7
        %p256 = scmp.lt.s32.totalorder %s21, 0
        %s257 = scalar_select %p256, %s21, 0
        %s258 = sadd.s32 %s257, %s255
        %s259 = smul.addr %s253, 8
        %s260 = sadd.s32 %s258, %s259
        %s261 = smul.addr %s260, 4
        %s262 = scalar_lea.vmem %s0, %s261
        %s263 = smul.u32 8, %s19
      $region32: #{fwd.18} parent=27 // pred_fallthru
        _
      // Predicated region
      $region33: #{fwd.18} parent=27 // pred_check
        %p264 = pneg %p169
      $region34: #{fwd.18} parent=27 // pred_check_branch
        %266 = sbr.rel (%p264) target = $region36
      $region35: #{fwd.18} parent=27 // pred_region
        %p267 = scmp.lt.s32.totalorder %s18, 5
        %s268 = scalar_select %p267, %s18, 5
        %p269 = scmp.lt.s32.totalorder %s21, 0
        %s270 = scalar_select %p269, %s21, 0
        %s271 = sadd.s32 %s270, %s268
        %s272 = scalar_lea.vmem %s4, %s271
      $region36: #{fwd.18} parent=27 // pred_fallthru
        _
    $region28: #{fwd.18} parent=5 // pred_fallthru
      _
    %p273 = scmp.le.s32.totalorder 1, %s11
    %p274 = scmp.lt.s32.totalorder %s11, 7
    %p275 = pnand %p273, %p274
    %p276 = pneg %p275
    // Predicated region
    $region37: #{fwd.18} parent=5 // pred_check
      _
    $region38: #{fwd.18} parent=5 // pred_check_branch
      %278 = sbr.rel (%p275) target = $region40
    $region39: #{fwd.18} parent=5 // pred_region
      %s279 = ssub.s32 %s11, 1
      %s280 = smul.u32 8, %s23
      %p281 = scmp.lt.s32.totalorder %s22, 5
      %s282 = scalar_select %p281, %s22, 5
      %p283 = scmp.lt.s32.totalorder %s280, 7
      %s284 = scalar_select %p283, %s280, 7
      %p285 = scmp.lt.s32.totalorder %s25, 0
      %s286 = scalar_select %p285, %s25, 0
      %s287 = sadd.s32 %s286, %s284
      %s288 = smul.addr %s282, 8
      %s289 = sadd.s32 %s287, %s288
      %s290 = smul.addr %s289, 4
      %s291 = scalar_lea.vmem %s0, %s290
      %p292 = pneg %p67
      %p293 = pneg %p64
      %s294 = smul.u32 16, %s25
      %p295 = scmp.lt.s32.totalorder %s294, 15
      %s296 = scalar_select %p295, %s294, 15
      %p297 = scmp.lt.s32.totalorder %s24, 0
      %s298 = scalar_select %p297, %s24, 0
      %s299 = sadd.s32 %s298, %s296
      %s300 = smul.addr %s299, 4
      %s301 = scalar_lea.vmem %s1, %s300
      %p302 = pneg %p95
      %p303 = pneg %p92
      %p304 = scmp.lt.s32.totalorder %s24, 0
      %s305 = scalar_select %p304, %s24, 0
      %s306 = scalar_lea.vmem %s2, %s305
      %p307 = pneg %p121
      %p308 = pneg %p118
      %p309 = scmp.lt.s32.totalorder %s24, 0
      %s310 = scalar_select %p309, %s24, 0
      %s311 = scalar_lea.vmem %s3, %s310
      %p312 = pneg %p147
      %p313 = pneg %p144
      %p314 = scmp.lt.s32.totalorder %s22, 5
      %s315 = scalar_select %p314, %s22, 5
      %p316 = scmp.lt.s32.totalorder %s25, 0
      %s317 = scalar_select %p316, %s25, 0
      %s318 = sadd.s32 %s317, %s315
      %s319 = scalar_lea.vmem %s4, %s318
      %p320 = pneg %p175
      %p321 = pneg %p172
      %p322 = pneg %p205
      %p323 = pneg %p202
      %s324 = smul.u32 8, %s23
      %p325 = scmp.lt.s32.totalorder %s22, 5
      %s326 = scalar_select %p325, %s22, 5
      %p327 = scmp.lt.s32.totalorder %s324, 7
      %s328 = scalar_select %p327, %s324, 7
      %p329 = scmp.lt.s32.totalorder %s24, 0
      %s330 = scalar_select %p329, %s24, 0
      %s331 = sadd.s32 %s330, %s328
      %s332 = smul.addr %s326, 8
      %s333 = sadd.s32 %s331, %s332
      %s334 = smul.addr %s333, 4
      %s335 = scalar_lea.vmem %s5, %s334
      %s336 = smul.u32 8, %s23
      %p337 = scmp.lt.s32.totalorder %s22, 5
      %s338 = scalar_select %p337, %s22, 5
      %p339 = scmp.lt.s32.totalorder %s336, 7
      %s340 = scalar_select %p339, %s336, 7
      %p341 = scmp.lt.s32.totalorder %s25, 0
      %s342 = scalar_select %p341, %s25, 0
      %s343 = sadd.s32 %s342, %s340
      %s344 = smul.addr %s338, 8
      %s345 = sadd.s32 %s343, %s344
      %s346 = smul.addr %s345, 4
      %s347 = scalar_lea.vmem %s0, %s346
      %s348 = smul.u32 8, %s23
      %s349 = smul.u32 16, %s25
      %p350 = scmp.lt.s32.totalorder %s349, 15
      %s351 = scalar_select %p350, %s349, 15
      %p352 = scmp.lt.s32.totalorder %s24, 0
      %s353 = scalar_select %p352, %s24, 0
      %s354 = sadd.s32 %s353, %s351
      %s355 = smul.addr %s354, 4
      %s356 = scalar_lea.vmem %s1, %s355
      %s357 = smul.u32 16, %s25
      %p358 = scmp.lt.s32.totalorder %s24, 0
      %s359 = scalar_select %p358, %s24, 0
      %s360 = scalar_lea.vmem %s2, %s359
      %p361 = scmp.lt.s32.totalorder %s24, 0
      %s362 = scalar_select %p361, %s24, 0
      %s363 = scalar_lea.vmem %s3, %s362
      %p364 = scmp.lt.s32.totalorder %s22, 5
      %s365 = scalar_select %p364, %s22, 5
      %p366 = scmp.lt.s32.totalorder %s25, 0
      %s367 = scalar_select %p366, %s25, 0
      %s368 = sadd.s32 %s367, %s365
      %s369 = scalar_lea.vmem %s4, %s368
      %s370 = smul.u32 8, %s23
      %p371 = scmp.lt.s32.totalorder %s22, 5
      %s372 = scalar_select %p371, %s22, 5
      %p373 = scmp.lt.s32.totalorder %s370, 7
      %s374 = scalar_select %p373, %s370, 7
      %p375 = scmp.lt.s32.totalorder %s24, 0
      %s376 = scalar_select %p375, %s24, 0
      %s377 = sadd.s32 %s376, %s374
      %s378 = smul.addr %s372, 8
      %s379 = sadd.s32 %s377, %s378
      %s380 = smul.addr %s379, 4
      %s381 = scalar_lea.vmem %s5, %s380
      %s382 = smul.u32 8, %s23
      %p384 = scmp.eq.s32.totalorder %s25, 0
      // Predicated region
      $region41: #{fwd.18} parent=39 // pred_check
        %p385 = pneg %p384
      $region42: #{fwd.18} parent=39 // pred_check_branch
        %387 = sbr.rel (%p385) target = $region44
      $region43: #{fwd.18} parent=39 // pred_region
        %388 = vst [vmem:[#allocation2] sm:$0xff] 0.0
        %389 = vst [vmem:[#allocation2 + $0x8] sm:$0xff] 0.0
        %390 = vst [vmem:[#allocation2 + $0x10] sm:$0xff] 0.0
        %391 = vst [vmem:[#allocation2 + $0x18] sm:$0xff] 0.0
        %392 = vst [vmem:[#allocation2 + $0x20] sm:$0xff] 0.0
        %393 = vst [vmem:[#allocation2 + $0x28] sm:$0xff] 0.0
        %394 = vst [vmem:[#allocation2 + $0x30] sm:$0xff] 0.0
        %395 = vst [vmem:[#allocation2 + $0x38] sm:$0xff] 0.0
      $region44: #{fwd.18} parent=39 // pred_fallthru
        _
      %v396 = vld [vmem:[%s347] sm:$0xf]
      %v397 = vld [vmem:[%s347 + $0x4] sm:$0xf]
      %v398 = vld [vmem:[%s347 + $0x8] sm:$0xf]
      %v399 = vld [vmem:[%s347 + $0xc] sm:$0xf]
      %v400 = vld [vmem:[%s347 + $0x10] sm:$0xf]
      %v401 = vld [vmem:[%s347 + $0x14] sm:$0xf]
      %v402 = vld [vmem:[%s347 + $0x18] sm:$0xf]
      %v403 = vld [vmem:[%s347 + $0x1c] sm:$0xf]
      %v404 = vunpack.c.l.bf16 %v396
      %v405 = vunpack.c.l.bf16 %v397
      %v406 = vunpack.c.l.bf16 %v398
      %v407 = vunpack.c.l.bf16 %v399
      %v408 = vunpack.c.l.bf16 %v400
      %v409 = vunpack.c.l.bf16 %v401
      %v410 = vunpack.c.l.bf16 %v402
      %v411 = vunpack.c.l.bf16 %v403
      %v412 = vld [vmem:[%s369] sm:$0x1]
      %v414 = vlaneseq
      %v415 = vshrl.u32 %v414, 7
      %v416 = vsub.s32 0, %v415
      %v417 = vrot.slane %v412, %v416
      %v419 = vmul.f32 %v404, %v417
      %v420 = vmul.f32 %v405, %v417
      %v421 = vmul.f32 %v406, %v417
      %v422 = vmul.f32 %v407, %v417
      %v423 = vmul.f32 %v408, %v417
      %v424 = vmul.f32 %v409, %v417
      %v425 = vmul.f32 %v410, %v417
      %v426 = vmul.f32 %v411, %v417
      %v427 = vpack.c.bf16 %v420, %v419
      %v428 = vpack.c.bf16 %v422, %v421
      %v429 = vpack.c.bf16 %v424, %v423
      %v430 = vpack.c.bf16 %v426, %v425
      %v431 = vld [vmem:[#allocation2] sm:$0xff]
      %v432 = vld [vmem:[#allocation2 + $0x8] sm:$0xff]
      %v433 = vld [vmem:[#allocation2 + $0x10] sm:$0xff]
      %v434 = vld [vmem:[#allocation2 + $0x18] sm:$0xff]
      %v435 = vld [vmem:[#allocation2 + $0x20] sm:$0xff]
      %v436 = vld [vmem:[#allocation2 + $0x28] sm:$0xff]
      %v437 = vld [vmem:[#allocation2 + $0x30] sm:$0xff]
      %v438 = vld [vmem:[#allocation2 + $0x38] sm:$0xff]
      %v439 = vld [vmem:[%s356] sm:$0xf]
      %v440 = vld [vmem:[%s356 + $0x4] sm:$0xf]
      %v441 = vld [vmem:[%s356 + $0x8] sm:$0xf]
      %v442 = vld [vmem:[%s356 + $0xc] sm:$0xf]
      %v443 = vld [vmem:[%s356 + $0x10] sm:$0xf]
      %v444 = vld [vmem:[%s356 + $0x14] sm:$0xf]
      %v445 = vld [vmem:[%s356 + $0x18] sm:$0xf]
      %v446 = vld [vmem:[%s356 + $0x1c] sm:$0xf]
      %v447 = vld [vmem:[%s356 + $0x20] sm:$0xf]
      %v448 = vld [vmem:[%s356 + $0x24] sm:$0xf]
      %v449 = vld [vmem:[%s356 + $0x28] sm:$0xf]
      %v450 = vld [vmem:[%s356 + $0x2c] sm:$0xf]
      %v451 = vld [vmem:[%s356 + $0x30] sm:$0xf]
      %v452 = vld [vmem:[%s356 + $0x34] sm:$0xf]
      %v453 = vld [vmem:[%s356 + $0x38] sm:$0xf]
      %v454 = vld [vmem:[%s356 + $0x3c] sm:$0xf]
      %v471 = vunpack.c.l.b16 %v439
      %v472 = vunpack.c.l.b16 %v440
      %v473 = vunpack.c.l.b16 %v441
      %v474 = vunpack.c.l.b16 %v442
      %v475 = vunpack.c.l.b16 %v443
      %v476 = vunpack.c.l.b16 %v444
      %v477 = vunpack.c.l.b16 %v445
      %v478 = vunpack.c.l.b16 %v446
      %v479 = vunpack.c.l.b16 %v447
      %v480 = vunpack.c.l.b16 %v448
      %v481 = vunpack.c.l.b16 %v449
      %v482 = vunpack.c.l.b16 %v450
      %v483 = vunpack.c.l.b16 %v451
      %v484 = vunpack.c.l.b16 %v452
      %v485 = vunpack.c.l.b16 %v453
      %v486 = vunpack.c.l.b16 %v454
      %v487 = vpack.c.b16 %v472, %v471
      %v488 = vpack.c.b16 %v474, %v473
      %v489 = vpack.c.b16 %v476, %v475
      %v490 = vpack.c.b16 %v478, %v477
      %v491 = vpack.c.b16 %v480, %v479
      %v492 = vpack.c.b16 %v482, %v481
      %v493 = vpack.c.b16 %v484, %v483
      %v494 = vpack.c.b16 %v486, %v485
      %503 = vmatprep.subr.bf16.mxu0 0
      %504 = vmatpush1.bf16.msra.mxu0 %v494
      %505 = vmatprep.subr.bf16.mxu0 0
      %506 = vmatpush1.bf16.msra.mxu0 %v493
      %507 = vmatprep.subr.bf16.mxu0 0
      %508 = vmatpush1.bf16.msra.mxu0 %v492
      %509 = vmatprep.subr.bf16.mxu0 0
      %510 = vmatpush1.bf16.msra.mxu0 %v491
      %511 = vmatprep.subr.bf16.mxu0 0
      %512 = vmatpush1.bf16.msra.mxu0 %v490
      %513 = vmatprep.subr.bf16.mxu0 0
      %514 = vmatpush1.bf16.msra.mxu0 %v489
      %515 = vmatprep.subr.bf16.mxu0 0
      %516 = vmatpush1.bf16.msra.mxu0 %v488
      %517 = vmatprep.subr.bf16.mxu0 0
      %518 = vmatpush1.bf16.msra.mxu0 %v487
      %519 = vmatprep.subr.bf16.mxu0 0
      %520 = vmatpush2.bf16.msra.mxu0 0
      %521 = vmatprep.subr.bf16.mxu0 0
      %522 = vmatpush2.bf16.msra.mxu0 0
      %523 = vmatprep.subr.bf16.mxu0 0
      %524 = vmatpush2.bf16.msra.mxu0 0
      %525 = vmatprep.subr.bf16.mxu0 0
      %526 = vmatpush2.bf16.msra.mxu0 0
      %527 = vmatprep.subr.bf16.mxu0 0
      %528 = vmatpush2.bf16.msra.mxu0 0
      %529 = vmatprep.subr.bf16.mxu0 0
      %530 = vmatpush2.bf16.msra.mxu0 0
      %531 = vmatprep.subr.bf16.mxu0 0
      %532 = vmatpush2.bf16.msra.mxu0 0
      %533 = vmatprep.subr.bf16.mxu0 0
      %534 = vmatpush2.bf16.msra.mxu0 0
      %535 = vmatprep.mubr.bf16.mxu0 0
      %536 = vmatmul.mubr.bf16.gmra.mxu0 %v427
      %v537 = vpop.f32.mrf.mxu0
      %v538 = vadd.f32 0.0, %v537
      %v539 = vpop.f32.mrf.mxu0
      %v540 = vpop.f32.mrf.mxu0
      %v541 = vadd.f32 0.0, %v540
      %v542 = vpop.f32.mrf.mxu0
      %543 = vmatprep.mubr.bf16.mxu0 0
      %544 = vmatmul.mubr.bf16.gmra.mxu0 %v428
      %v545 = vpop.f32.mrf.mxu0
      %v546 = vadd.f32 0.0, %v545
      %v547 = vpop.f32.mrf.mxu0
      %v548 = vpop.f32.mrf.mxu0
      %v549 = vadd.f32 0.0, %v548
      %v550 = vpop.f32.mrf.mxu0
      %551 = vmatprep.mubr.bf16.mxu0 0
      %552 = vmatmul.mubr.bf16.gmra.mxu0 %v429
      %v553 = vpop.f32.mrf.mxu0
      %v554 = vadd.f32 0.0, %v553
      %v555 = vpop.f32.mrf.mxu0
      %v556 = vpop.f32.mrf.mxu0
      %v557 = vadd.f32 0.0, %v556
      %v558 = vpop.f32.mrf.mxu0
      %559 = vmatprep.mubr.bf16.mxu0 0
      %560 = vmatmul.mubr.bf16.gmra.mxu0 %v430
      %v561 = vpop.f32.mrf.mxu0
      %v562 = vadd.f32 0.0, %v561
      %v563 = vpop.f32.mrf.mxu0
      %v564 = vpop.f32.mrf.mxu0
      %v565 = vadd.f32 0.0, %v564
      %v566 = vpop.f32.mrf.mxu0
      %567 = vdwg.mxu0
      %v568 = vadd.f32 %v431, %v538
      %v569 = vadd.f32 %v432, %v541
      %v570 = vadd.f32 %v433, %v546
      %v571 = vadd.f32 %v434, %v549
      %v572 = vadd.f32 %v435, %v554
      %v573 = vadd.f32 %v436, %v557
      %v574 = vadd.f32 %v437, %v562
      %v575 = vadd.f32 %v438, %v565
      %576 = vst [vmem:[#allocation2] sm:$0xff] %v568
      %577 = vst [vmem:[#allocation2 + $0x8] sm:$0xff] %v569
      %578 = vst [vmem:[#allocation2 + $0x10] sm:$0xff] %v570
      %579 = vst [vmem:[#allocation2 + $0x18] sm:$0xff] %v571
      %580 = vst [vmem:[#allocation2 + $0x20] sm:$0xff] %v572
      %581 = vst [vmem:[#allocation2 + $0x28] sm:$0xff] %v573
      %582 = vst [vmem:[#allocation2 + $0x30] sm:$0xff] %v574
      %583 = vst [vmem:[#allocation2 + $0x38] sm:$0xff] %v575
      // Predicated region
      $region45: #{fwd.18} parent=39 // pred_check
        %p584 = pneg %p384
      $region46: #{fwd.18} parent=39 // pred_check_branch
        %586 = sbr.rel (%p584) target = $region48
      $region47: #{fwd.18} parent=39 // pred_region
        %v587 = vld [vmem:[#allocation2] sm:$0xff]
        %v588 = vld [vmem:[#allocation2 + $0x8] sm:$0xff]
        %v589 = vld [vmem:[#allocation2 + $0x10] sm:$0xff]
        %v590 = vld [vmem:[#allocation2 + $0x18] sm:$0xff]
        %v591 = vld [vmem:[#allocation2 + $0x20] sm:$0xff]
        %v592 = vld [vmem:[#allocation2 + $0x28] sm:$0xff]
        %v593 = vld [vmem:[#allocation2 + $0x30] sm:$0xff]
        %v594 = vld [vmem:[#allocation2 + $0x38] sm:$0xff]
        %v595 = vld [vmem:[%s360] sm:$0x1]
        %v597 = vlaneseq
        %v598 = vshrl.u32 %v597, 7
        %v599 = vsub.s32 0, %v598
        %v600 = vrot.slane %v595, %v599
        %v602 = vmul.f32 %v587, %v600
        %v603 = vmul.f32 %v588, %v600
        %v604 = vmul.f32 %v589, %v600
        %v605 = vmul.f32 %v590, %v600
        %v606 = vmul.f32 %v591, %v600
        %v607 = vmul.f32 %v592, %v600
        %v608 = vmul.f32 %v593, %v600
        %v609 = vmul.f32 %v594, %v600
        %v610 = vld [vmem:[%s363] sm:$0x1]
        %v612 = vlaneseq
        %v613 = vshrl.u32 %v612, 7
        %v614 = vsub.s32 0, %v613
        %v615 = vrot.slane %v610, %v614
        %v617 = vadd.f32 %v602, %v615
        %v618 = vadd.f32 %v603, %v615
        %v619 = vadd.f32 %v604, %v615
        %v620 = vadd.f32 %v605, %v615
        %v621 = vadd.f32 %v606, %v615
        %v622 = vadd.f32 %v607, %v615
        %v623 = vadd.f32 %v608, %v615
        %v624 = vadd.f32 %v609, %v615
        %v625 = vpack.c.bf16 %v618, %v617
        %v626 = vpack.c.bf16 %v620, %v619
        %v627 = vpack.c.bf16 %v622, %v621
        %v628 = vpack.c.bf16 %v624, %v623
        %v633 = vunpack.c.l.b16 %v625
        %v634 = vunpack.c.h.b16 %v625
        %v635 = vunpack.c.l.b16 %v626
        %v636 = vunpack.c.h.b16 %v626
        %v637 = vunpack.c.l.b16 %v627
        %v638 = vunpack.c.h.b16 %v627
        %v639 = vunpack.c.l.b16 %v628
        %v640 = vunpack.c.h.b16 %v628
        %v641 = vpack.c.b16 %v633, %v633
        %v642 = vpack.c.b16 %v634, %v634
        %v643 = vpack.c.b16 %v635, %v635
        %v644 = vpack.c.b16 %v636, %v636
        %v645 = vpack.c.b16 %v637, %v637
        %v646 = vpack.c.b16 %v638, %v638
        %v647 = vpack.c.b16 %v639, %v639
        %v648 = vpack.c.b16 %v640, %v640
        %657 = vst [vmem:[%s381] sm:$0xf] %v641
        %658 = vst [vmem:[%s381 + $0x4] sm:$0xf] %v642
        %659 = vst [vmem:[%s381 + $0x8] sm:$0xf] %v643
        %660 = vst [vmem:[%s381 + $0xc] sm:$0xf] %v644
        %661 = vst [vmem:[%s381 + $0x10] sm:$0xf] %v645
        %662 = vst [vmem:[%s381 + $0x14] sm:$0xf] %v646
        %663 = vst [vmem:[%s381 + $0x18] sm:$0xf] %v647
        %664 = vst [vmem:[%s381 + $0x1c] sm:$0xf] %v648
      $region48: #{fwd.18} parent=39 // pred_fallthru
        _
      %s665 = smul.u32 8, %s23
      %p666 = scmp.lt.s32.totalorder %s22, 5
      %s667 = scalar_select %p666, %s22, 5
      %p668 = scmp.lt.s32.totalorder %s665, 7
      %s669 = scalar_select %p668, %s665, 7
      %p670 = scmp.lt.s32.totalorder %s24, 0
      %s671 = scalar_select %p670, %s24, 0
      %s672 = sadd.s32 %s671, %s669
      %s673 = smul.addr %s667, 8
      %s674 = sadd.s32 %s672, %s673
      %s675 = smul.addr %s674, 4
      %s676 = scalar_lea.vmem %s5, %s675
      // Predicated region
      $region49: #{fwd.18} parent=39 // pred_check
        %p677 = pneg %p202
      $region50: #{fwd.18} parent=39 // pred_check_branch
        %679 = sbr.rel (%p677) target = $region52
      $region51: #{fwd.18} parent=39 // pred_region
        %s680 = smul.u32 8, %s23
      $region52: #{fwd.18} parent=39 // pred_fallthru
        _
    $region40: #{fwd.18} parent=5 // pred_fallthru
      _
    %p681 = scmp.le.s32.totalorder 2, %s11
    // Predicated region
    $region53: #{fwd.18} parent=5 // pred_check
      %p682 = pneg %p681
    $region54: #{fwd.18} parent=5 // pred_check_branch
      %684 = sbr.rel (%p682) target = $region56
    $region55: #{fwd.18} parent=5 // pred_region
      %s685 = ssub.s32 %s11, 2
      // Predicated region
      $region57: #{fwd.18} parent=55 // pred_check
        %p686 = pneg %p208
      $region58: #{fwd.18} parent=55 // pred_check_branch
        %688 = sbr.rel (%p686) target = $region60
      $region59: #{fwd.18} parent=55 // pred_region
        %s689 = smul.u32 8, %s27
        %p690 = scmp.lt.s32.totalorder %s26, 5
        %s691 = scalar_select %p690, %s26, 5
        %p692 = scmp.lt.s32.totalorder %s689, 7
        %s693 = scalar_select %p692, %s689, 7
        %p694 = scmp.lt.s32.totalorder %s28, 0
        %s695 = scalar_select %p694, %s28, 0
        %s696 = sadd.s32 %s695, %s693
        %s697 = smul.addr %s691, 8
        %s698 = sadd.s32 %s696, %s697
        %s699 = smul.addr %s698, 4
        %s700 = scalar_lea.vmem %s5, %s699
      $region60: #{fwd.18} parent=55 // pred_fallthru
        _
    $region56: #{fwd.18} parent=5 // pred_fallthru
      _
  $region6: #{fwd.18} parent=0 // loop_footer
    %s15 = sadd.s32 1, %s11
  $region7: #{fwd.18} parent=0 // loop_footer_branch
    %10 = sbr.rel target = $region3
  $region8: #{fwd.18} parent=0 // loop_exit
    _

// kernel: fwd.16
$region0: #{fwd.16}
  #allocation0 [shape = 'u32[]', space=smem, size = 0x4, offset = 0x4, fixed_abs, tag = 'smem constant byte address 0x4 - core index']
  #allocation1 [shape = 'u32[144,128]{1,0:T(1,128)}', space=vmem, size = 0x12000, scoped, tag = 'internal scratch']
  %s0 = inlined_call_operand.vmem [shape: bf16[6,9,64,128], index: 0, kind: input, shape index: {}]
  %s1 = inlined_call_operand.vmem [shape: f32[9,1,128], index: 1, kind: input, shape index: {}]
  %s2 = inlined_call_operand.vmem [shape: f32[1,128], index: 2, kind: input, shape index: {}]
  %s3 = inlined_call_operand.vmem [shape: f32[1,128], index: 3, kind: input, shape index: {}]
  %s4 = inlined_call_operand.vmem [shape: bf16[6,64,128], index: 4, kind: output, shape index: {0}]
  %s5 = inlined_call_operand.vmem [shape: f32[6,1,128], index: 5, kind: output, shape index: {1}]
  %6 = xla_tuple %s4, %s5
  %s7 = sld [smem:[#allocation0]]
  $region61: #{fwd.16} parent=0
    _
  %s9 = ssub.s32 1, %s7
  %s10 = scalar_select 0, %s9, %s7
  loop: start=0, step=1, limit=8
  $region2: #{fwd.16} parent=0 // loop_pre_header
    _
  $region3: #{fwd.16} parent=0 // loop_header
    %s12 = sphi 0, %s16
    %p13 = scmp.ge.s32.totalorder %s12, 8
    %s19 = sphi 0, %s31
    %s20 = sphi 0, %s27
    %s21 = sphi 0, %s19
    %s22 = sphi 0, %s20
    %s23 = sphi 0, %s21
    %s24 = sphi 0, %s22
    %s36 = sphi 0, %s38
    %s39 = sphi 0, %s36
    %s40 = sphi 0, %s39
    %s56 = sphi 0, %s40
    %s60 = sphi 0, %s60
    %s62 = sphi 0, %s60
    %s63 = sphi 0, %s62
    %s77 = sphi 0, %s63
    %s81 = sphi 0, %s81
    %s83 = sphi 0, %s81
    %s84 = sphi 0, %s83
    %s98 = sphi 0, %s84
    %s102 = sphi 0, %s102
    %s104 = sphi 0, %s102
    %s105 = sphi 0, %s104
    %s119 = sphi 0, %s105
    %s127 = sphi 0, %s129
    %s130 = sphi 0, %s127
    %s131 = sphi 0, %s130
    %s147 = sphi 0, %s131
    %s153 = sphi 0, %s155
    %s156 = sphi 0, %s153
    %s157 = sphi 0, %s156
    %s173 = sphi 0, %s157
  $region4: #{fwd.16} parent=0 // loop_header_branch
    %15 = sbr.rel (%p13) target = $region8
  $region5: #{fwd.16} parent=0 // loop_body
    %s17 = ssub.s32 %s12, 1
    %s18 = ssub.s32 %s12, 2
    %s25 = sadd.s32 1, %s20
    %p26 = scmp.ge.s32.totalorder %s25, 1
    %s27 = scalar_select %p26, 0, %s25
    %s28 = sadd.s32 1, %s19
    %s29 = scalar_select %p26, %s28, %s19
    %p30 = scmp.ge.s32.totalorder %s29, 6
    %s31 = scalar_select %p30, 0, %s29
    %s32 = ssub.s32 %s19, %s31
    %s33 = ssub.s32 %s20, %s27
    %s34 = sor.u32 %s32, %s33
    %p35 = scmp.eq.s32.totalorder %s34, 0
    %s37 = sadd.s32 %s36, 1
    %s38 = scalar_select %p35, %s36, %s37
    %p41 = pneg %p35
    %p42 = scmp.eq.s32.totalorder %s12, 5
    %p43 = por %p41, %p42
    %p44 = scmp.ne.s32.totalorder %s36, %s39
    %p45 = scmp.eq.s32.totalorder %s12, 0
    %p46 = por %p44, %p45
    %p47 = scmp.ne.s32.totalorder %s36, %s39
    %p48 = scmp.eq.s32.totalorder %s17, 5
    %p49 = por %p47, %p48
    %p50 = scmp.ne.s32.totalorder %s39, %s40
    %p51 = scmp.eq.s32.totalorder %s17, 0
    %p52 = por %p50, %p51
    %p53 = scmp.ne.s32.totalorder %s39, %s40
    %p54 = scmp.eq.s32.totalorder %s18, 5
    %p55 = por %p53, %p54
    %p57 = scmp.ne.s32.totalorder %s40, %s56
    %p58 = scmp.eq.s32.totalorder %s18, 0
    %p59 = por %p57, %p58
    %s61 = sadd.s32 %s60, 1
    %p64 = scmp.eq.s32.totalorder %s12, 5
    %p65 = scmp.ne.s32.totalorder %s60, %s62
    %p66 = scmp.eq.s32.totalorder %s12, 0
    %p67 = por %p65, %p66
    %p68 = scmp.ne.s32.totalorder %s60, %s62
    %p69 = scmp.eq.s32.totalorder %s17, 5
    %p70 = por %p68, %p69
    %p71 = scmp.ne.s32.totalorder %s62, %s63
    %p72 = scmp.eq.s32.totalorder %s17, 0
    %p73 = por %p71, %p72
    %p74 = scmp.ne.s32.totalorder %s62, %s63
    %p75 = scmp.eq.s32.totalorder %s18, 5
    %p76 = por %p74, %p75
    %p78 = scmp.ne.s32.totalorder %s63, %s77
    %p79 = scmp.eq.s32.totalorder %s18, 0
    %p80 = por %p78, %p79
    %s82 = sadd.s32 %s81, 1
    %p85 = scmp.eq.s32.totalorder %s12, 5
    %p86 = scmp.ne.s32.totalorder %s81, %s83
    %p87 = scmp.eq.s32.totalorder %s12, 0
    %p88 = por %p86, %p87
    %p89 = scmp.ne.s32.totalorder %s81, %s83
    %p90 = scmp.eq.s32.totalorder %s17, 5
    %p91 = por %p89, %p90
    %p92 = scmp.ne.s32.totalorder %s83, %s84
    %p93 = scmp.eq.s32.totalorder %s17, 0
    %p94 = por %p92, %p93
    %p95 = scmp.ne.s32.totalorder %s83, %s84
    %p96 = scmp.eq.s32.totalorder %s18, 5
    %p97 = por %p95, %p96
    %p99 = scmp.ne.s32.totalorder %s84, %s98
    %p100 = scmp.eq.s32.totalorder %s18, 0
    %p101 = por %p99, %p100
    %s103 = sadd.s32 %s102, 1
    %p106 = scmp.eq.s32.totalorder %s12, 5
    %p107 = scmp.ne.s32.totalorder %s102, %s104
    %p108 = scmp.eq.s32.totalorder %s12, 0
    %p109 = por %p107, %p108
    %p110 = scmp.ne.s32.totalorder %s102, %s104
    %p111 = scmp.eq.s32.totalorder %s17, 5
    %p112 = por %p110, %p111
    %p113 = scmp.ne.s32.totalorder %s104, %s105
    %p114 = scmp.eq.s32.totalorder %s17, 0
    %p115 = por %p113, %p114
    %p116 = scmp.ne.s32.totalorder %s104, %s105
    %p117 = scmp.eq.s32.totalorder %s18, 5
    %p118 = por %p116, %p117
    %p120 = scmp.ne.s32.totalorder %s105, %s119
    %p121 = scmp.eq.s32.totalorder %s18, 0
    %p122 = por %p120, %p121
    %s123 = ssub.s32 %s19, %s31
    %s124 = ssub.s32 %s20, %s27
    %s125 = sor.u32 %s123, %s124
    %p126 = scmp.eq.s32.totalorder %s125, 0
    %s128 = sadd.s32 %s127, 1
    %s129 = scalar_select %p126, %s127, %s128
    %p132 = pneg %p126
    %p133 = scmp.eq.s32.totalorder %s12, 5
    %p134 = por %p132, %p133
    %p135 = scmp.ne.s32.totalorder %s127, %s130
    %p136 = scmp.eq.s32.totalorder %s12, 0
    %p137 = por %p135, %p136
    %p138 = scmp.ne.s32.totalorder %s127, %s130
    %p139 = scmp.eq.s32.totalorder %s17, 5
    %p140 = por %p138, %p139
    %p141 = scmp.ne.s32.totalorder %s130, %s131
    %p142 = scmp.eq.s32.totalorder %s17, 0
    %p143 = por %p141, %p142
    %p144 = scmp.ne.s32.totalorder %s130, %s131
    %p145 = scmp.eq.s32.totalorder %s18, 5
    %p146 = por %p144, %p145
    %p148 = scmp.ne.s32.totalorder %s131, %s147
    %p149 = scmp.eq.s32.totalorder %s18, 0
    %p150 = por %p148, %p149
    %s151 = ssub.s32 %s19, %s31
    %p152 = scmp.eq.s32.totalorder %s151, 0
    %s154 = sadd.s32 %s153, 1
    %s155 = scalar_select %p152, %s153, %s154
    %p158 = pneg %p152
    %p159 = scmp.eq.s32.totalorder %s12, 5
    %p160 = por %p158, %p159
    %p161 = scmp.ne.s32.totalorder %s153, %s156
    %p162 = scmp.eq.s32.totalorder %s12, 0
    %p163 = por %p161, %p162
    %p164 = scmp.ne.s32.totalorder %s153, %s156
    %p165 = scmp.eq.s32.totalorder %s17, 5
    %p166 = por %p164, %p165
    %p167 = scmp.ne.s32.totalorder %s156, %s157
    %p168 = scmp.eq.s32.totalorder %s17, 0
    %p169 = por %p167, %p168
    %p170 = scmp.ne.s32.totalorder %s156, %s157
    %p171 = scmp.eq.s32.totalorder %s18, 5
    %p172 = por %p170, %p171
    %p174 = scmp.ne.s32.totalorder %s157, %s173
    %p175 = scmp.eq.s32.totalorder %s18, 0
    %p176 = por %p174, %p175
    %p177 = scmp.le.s32.totalorder 1, %s12
    %p178 = scmp.lt.s32.totalorder %s12, 7
    %p179 = pnand %p177, %p178
    %p180 = pneg %p179
    // Predicated region
    $region9: #{fwd.16} parent=5 // pred_check
      _
    $region10: #{fwd.16} parent=5 // pred_check_branch
      %182 = sbr.rel (%p179) target = $region12
    $region11: #{fwd.16} parent=5 // pred_region
      %s183 = ssub.s32 %s12, 1
      // Predicated region
      $region13: #{fwd.16} parent=11 // pred_check
        %p184 = pneg %p73
      $region14: #{fwd.16} parent=11 // pred_check_branch
        %186 = sbr.rel (%p184) target = $region16
      $region15: #{fwd.16} parent=11 // pred_region
        _
      $region16: #{fwd.16} parent=11 // pred_fallthru
        _
      // Predicated region
      $region17: #{fwd.16} parent=11 // pred_check
        %p187 = pneg %p94
      $region18: #{fwd.16} parent=11 // pred_check_branch
        %189 = sbr.rel (%p187) target = $region20
      $region19: #{fwd.16} parent=11 // pred_region
        _
      $region20: #{fwd.16} parent=11 // pred_fallthru
        _
      // Predicated region
      $region21: #{fwd.16} parent=11 // pred_check
        %p190 = pneg %p115
      $region22: #{fwd.16} parent=11 // pred_check_branch
        %192 = sbr.rel (%p190) target = $region24
      $region23: #{fwd.16} parent=11 // pred_region
        _
      $region24: #{fwd.16} parent=11 // pred_fallthru
        _
    $region12: #{fwd.16} parent=5 // pred_fallthru
      _
    %p193 = scmp.lt.s32.totalorder %s12, 6
    // Predicated region
    $region25: #{fwd.16} parent=5 // pred_check
      %p194 = pneg %p193
    $region26: #{fwd.16} parent=5 // pred_check_branch
      %196 = sbr.rel (%p194) target = $region28
    $region27: #{fwd.16} parent=5 // pred_region
      // Predicated region
      $region29: #{fwd.16} parent=27 // pred_check
        %p197 = pneg %p46
      $region30: #{fwd.16} parent=27 // pred_check_branch
        %199 = sbr.rel (%p197) target = $region32
      $region31: #{fwd.16} parent=27 // pred_region
        %s200 = smul.u32 8, %s20
        %p201 = scmp.lt.s32.totalorder %s19, 5
        %s202 = scalar_select %p201, %s19, 5
        %p203 = scmp.lt.s32.totalorder %s200, 7
        %s204 = scalar_select %p203, %s200, 7
        %s205 = smul.addr %s202, 72
        %s206 = sadd.s32 %s204, %s205
        %s207 = smul.addr %s206, 4
        %s208 = scalar_lea.vmem %s0, %s207
        %s209 = smul.u32 8, %s20
      $region32: #{fwd.16} parent=27 // pred_fallthru
        _
    $region28: #{fwd.16} parent=5 // pred_fallthru
      _
    %p210 = scmp.le.s32.totalorder 1, %s12
    %p211 = scmp.lt.s32.totalorder %s12, 7
    %p212 = pnand %p210, %p211
    %p213 = pneg %p212
    // Predicated region
    $region33: #{fwd.16} parent=5 // pred_check
      _
    $region34: #{fwd.16} parent=5 // pred_check_branch
      %215 = sbr.rel (%p212) target = $region36
    $region35: #{fwd.16} parent=5 // pred_region
      %s216 = ssub.s32 %s12, 1
      %s217 = smul.u32 8, %s22
      %p218 = scmp.lt.s32.totalorder %s21, 5
      %s219 = scalar_select %p218, %s21, 5
      %p220 = scmp.lt.s32.totalorder %s217, 7
      %s221 = scalar_select %p220, %s217, 7
      %s222 = smul.addr %s219, 72
      %s223 = sadd.s32 %s221, %s222
      %s224 = smul.addr %s223, 4
      %s225 = scalar_lea.vmem %s0, %s224
      %p226 = pneg %p52
      %p227 = pneg %p49
      %p228 = pneg %p73
      %p229 = pneg %p70
      %p230 = pneg %p94
      %p231 = pneg %p91
      %p232 = pneg %p115
      %p233 = pneg %p112
      %p234 = pneg %p143
      %p235 = pneg %p140
      %s236 = smul.u32 8, %s22
      %p237 = scmp.lt.s32.totalorder %s21, 5
      %s238 = scalar_select %p237, %s21, 5
      %p239 = scmp.lt.s32.totalorder %s236, 7
      %s240 = scalar_select %p239, %s236, 7
      %s241 = smul.addr %s238, 8
      %s242 = sadd.s32 %s240, %s241
      %s243 = smul.addr %s242, 4
      %s244 = scalar_lea.vmem %s4, %s243
      %p245 = pneg %p169
      %p246 = pneg %p166
      %p247 = scmp.lt.s32.totalorder %s21, 5
      %s248 = scalar_select %p247, %s21, 5
      %s249 = scalar_lea.vmem %s5, %s248
      %s250 = smul.u32 8, %s22
      %p251 = scmp.lt.s32.totalorder %s21, 5
      %s252 = scalar_select %p251, %s21, 5
      %p253 = scmp.lt.s32.totalorder %s250, 7
      %s254 = scalar_select %p253, %s250, 7
      %s255 = smul.addr %s252, 72
      %s256 = sadd.s32 %s254, %s255
      %s257 = smul.addr %s256, 4
      %s258 = scalar_lea.vmem %s0, %s257
      %s259 = smul.u32 8, %s22
      %s260 = smul.u32 8, %s22
      %p261 = scmp.lt.s32.totalorder %s21, 5
      %s262 = scalar_select %p261, %s21, 5
      %p263 = scmp.lt.s32.totalorder %s260, 7
      %s264 = scalar_select %p263, %s260, 7
      %s265 = smul.addr %s262, 8
      %s266 = sadd.s32 %s264, %s265
      %s267 = smul.addr %s266, 4
      %s268 = scalar_lea.vmem %s4, %s267
      %s269 = smul.u32 8, %s22
      %p270 = scmp.lt.s32.totalorder %s21, 5
      %s271 = scalar_select %p270, %s21, 5
      %s272 = scalar_lea.vmem %s5, %s271
      %v273 = vld [vmem:[%s258] sm:$0xf]
      %v274 = vld [vmem:[%s258 + $0x4] sm:$0xf]
      %v275 = vld [vmem:[%s258 + $0x8] sm:$0xf]
      %v276 = vld [vmem:[%s258 + $0xc] sm:$0xf]
      %v277 = vld [vmem:[%s258 + $0x10] sm:$0xf]
      %v278 = vld [vmem:[%s258 + $0x14] sm:$0xf]
      %v279 = vld [vmem:[%s258 + $0x18] sm:$0xf]
      %v280 = vld [vmem:[%s258 + $0x1c] sm:$0xf]
      %v281 = vunpack.c.l.bf16 %v273
      %v282 = vunpack.c.l.bf16 %v274
      %v283 = vunpack.c.l.bf16 %v275
      %v284 = vunpack.c.l.bf16 %v276
      %v285 = vunpack.c.l.bf16 %v277
      %v286 = vunpack.c.l.bf16 %v278
      %v287 = vunpack.c.l.bf16 %v279
      %v288 = vunpack.c.l.bf16 %v280
      %v289 = vld [vmem:[%s1] sm:$0x1]
      %v291 = vlaneseq
      %v292 = vshrl.u32 %v291, 7
      %v293 = vsub.s32 0, %v292
      %v294 = vrot.slane %v289, %v293
      %v296 = vmul.f32 %v281, %v294
      %v297 = vmul.f32 %v282, %v294
      %v298 = vmul.f32 %v283, %v294
      %v299 = vmul.f32 %v284, %v294
      %v300 = vmul.f32 %v285, %v294
      %v301 = vmul.f32 %v286, %v294
      %v302 = vmul.f32 %v287, %v294
      %v303 = vmul.f32 %v288, %v294
      %v304 = vadd.f32 %v296, 0.0
      %v305 = vadd.f32 %v297, 0.0
      %v306 = vadd.f32 %v298, 0.0
      %v307 = vadd.f32 %v299, 0.0
      %v308 = vadd.f32 %v300, 0.0
      %v309 = vadd.f32 %v301, 0.0
      %v310 = vadd.f32 %v302, 0.0
      %v311 = vadd.f32 %v303, 0.0
      %s312 = scalar_lea.vmem %s258, 32
      %v313 = vld [vmem:[%s312] sm:$0xf]
      %v314 = vld [vmem:[%s312 + $0x4] sm:$0xf]
      %v315 = vld [vmem:[%s312 + $0x8] sm:$0xf]
      %v316 = vld [vmem:[%s312 + $0xc] sm:$0xf]
      %v317 = vld [vmem:[%s312 + $0x10] sm:$0xf]
      %v318 = vld [vmem:[%s312 + $0x14] sm:$0xf]
      %v319 = vld [vmem:[%s312 + $0x18] sm:$0xf]
      %v320 = vld [vmem:[%s312 + $0x1c] sm:$0xf]
      %v321 = vunpack.c.l.bf16 %v313
      %v322 = vunpack.c.l.bf16 %v314
      %v323 = vunpack.c.l.bf16 %v315
      %v324 = vunpack.c.l.bf16 %v316
      %v325 = vunpack.c.l.bf16 %v317
      %v326 = vunpack.c.l.bf16 %v318
      %v327 = vunpack.c.l.bf16 %v319
      %v328 = vunpack.c.l.bf16 %v320
      %s329 = scalar_lea.vmem %s1, 1
      %v330 = vld [vmem:[%s329] sm:$0x1]
      %v332 = vlaneseq
      %v333 = vshrl.u32 %v332, 7
      %v334 = vsub.s32 0, %v333
      %v335 = vrot.slane %v330, %v334
      %v337 = vmul.f32 %v321, %v335
      %v338 = vmul.f32 %v322, %v335
      %v339 = vmul.f32 %v323, %v335
      %v340 = vmul.f32 %v324, %v335
      %v341 = vmul.f32 %v325, %v335
      %v342 = vmul.f32 %v326, %v335
      %v343 = vmul.f32 %v327, %v335
      %v344 = vmul.f32 %v328, %v335
      %v345 = vadd.f32 %v304, %v337
      %v346 = vadd.f32 %v305, %v338
      %v347 = vadd.f32 %v306, %v339
      %v348 = vadd.f32 %v307, %v340
      %v349 = vadd.f32 %v308, %v341
      %v350 = vadd.f32 %v309, %v342
      %v351 = vadd.f32 %v310, %v343
      %v352 = vadd.f32 %v311, %v344
      %s353 = scalar_lea.vmem %s258, 64
      %v354 = vld [vmem:[%s353] sm:$0xf]
      %v355 = vld [vmem:[%s353 + $0x4] sm:$0xf]
      %v356 = vld [vmem:[%s353 + $0x8] sm:$0xf]
      %v357 = vld [vmem:[%s353 + $0xc] sm:$0xf]
      %v358 = vld [vmem:[%s353 + $0x10] sm:$0xf]
      %v359 = vld [vmem:[%s353 + $0x14] sm:$0xf]
      %v360 = vld [vmem:[%s353 + $0x18] sm:$0xf]
      %v361 = vld [vmem:[%s353 + $0x1c] sm:$0xf]
      %v362 = vunpack.c.l.bf16 %v354
      %v363 = vunpack.c.l.bf16 %v355
      %v364 = vunpack.c.l.bf16 %v356
      %v365 = vunpack.c.l.bf16 %v357
      %v366 = vunpack.c.l.bf16 %v358
      %v367 = vunpack.c.l.bf16 %v359
      %v368 = vunpack.c.l.bf16 %v360
      %v369 = vunpack.c.l.bf16 %v361
      %s370 = scalar_lea.vmem %s1, 2
      %v371 = vld [vmem:[%s370] sm:$0x1]
      %v373 = vlaneseq
      %v374 = vshrl.u32 %v373, 7
      %v375 = vsub.s32 0, %v374
      %v376 = vrot.slane %v371, %v375
      %v378 = vmul.f32 %v362, %v376
      %v379 = vmul.f32 %v363, %v376
      %v380 = vmul.f32 %v364, %v376
      %v381 = vmul.f32 %v365, %v376
      %v382 = vmul.f32 %v366, %v376
      %v383 = vmul.f32 %v367, %v376
      %v384 = vmul.f32 %v368, %v376
      %v385 = vmul.f32 %v369, %v376
      %v386 = vadd.f32 %v345, %v378
      %v387 = vadd.f32 %v346, %v379
      %v388 = vadd.f32 %v347, %v380
      %v389 = vadd.f32 %v348, %v381
      %v390 = vadd.f32 %v349, %v382
      %v391 = vadd.f32 %v350, %v383
      %v392 = vadd.f32 %v351, %v384
      %v393 = vadd.f32 %v352, %v385
      %s394 = scalar_lea.vmem %s258, 96
      %v395 = vld [vmem:[%s394] sm:$0xf]
      %v396 = vld [vmem:[%s394 + $0x4] sm:$0xf]
      %v397 = vld [vmem:[%s394 + $0x8] sm:$0xf]
      %v398 = vld [vmem:[%s394 + $0xc] sm:$0xf]
      %v399 = vld [vmem:[%s394 + $0x10] sm:$0xf]
      %v400 = vld [vmem:[%s394 + $0x14] sm:$0xf]
      %v401 = vld [vmem:[%s394 + $0x18] sm:$0xf]
      %v402 = vld [vmem:[%s394 + $0x1c] sm:$0xf]
      %v403 = vunpack.c.l.bf16 %v395
      %v404 = vunpack.c.l.bf16 %v396
      %v405 = vunpack.c.l.bf16 %v397
      %v406 = vunpack.c.l.bf16 %v398
      %v407 = vunpack.c.l.bf16 %v399
      %v408 = vunpack.c.l.bf16 %v400
      %v409 = vunpack.c.l.bf16 %v401
      %v410 = vunpack.c.l.bf16 %v402
      %s411 = scalar_lea.vmem %s1, 3
      %v412 = vld [vmem:[%s411] sm:$0x1]
      %v414 = vlaneseq
      %v415 = vshrl.u32 %v414, 7
      %v416 = vsub.s32 0, %v415
      %v417 = vrot.slane %v412, %v416
      %v419 = vmul.f32 %v403, %v417
      %v420 = vmul.f32 %v404, %v417
      %v421 = vmul.f32 %v405, %v417
      %v422 = vmul.f32 %v406, %v417
      %v423 = vmul.f32 %v407, %v417
      %v424 = vmul.f32 %v408, %v417
      %v425 = vmul.f32 %v409, %v417
      %v426 = vmul.f32 %v410, %v417
      %v427 = vadd.f32 %v386, %v419
      %v428 = vadd.f32 %v387, %v420
      %v429 = vadd.f32 %v388, %v421
      %v430 = vadd.f32 %v389, %v422
      %v431 = vadd.f32 %v390, %v423
      %v432 = vadd.f32 %v391, %v424
      %v433 = vadd.f32 %v392, %v425
      %v434 = vadd.f32 %v393, %v426
      %s435 = scalar_lea.vmem %s258, 128
      %v436 = vld [vmem:[%s435] sm:$0xf]
      %v437 = vld [vmem:[%s435 + $0x4] sm:$0xf]
      %v438 = vld [vmem:[%s435 + $0x8] sm:$0xf]
      %v439 = vld [vmem:[%s435 + $0xc] sm:$0xf]
      %v440 = vld [vmem:[%s435 + $0x10] sm:$0xf]
      %v441 = vld [vmem:[%s435 + $0x14] sm:$0xf]
      %v442 = vld [vmem:[%s435 + $0x18] sm:$0xf]
      %v443 = vld [vmem:[%s435 + $0x1c] sm:$0xf]
      %v444 = vunpack.c.l.bf16 %v436
      %v445 = vunpack.c.l.bf16 %v437
      %v446 = vunpack.c.l.bf16 %v438
      %v447 = vunpack.c.l.bf16 %v439
      %v448 = vunpack.c.l.bf16 %v440
      %v449 = vunpack.c.l.bf16 %v441
      %v450 = vunpack.c.l.bf16 %v442
      %v451 = vunpack.c.l.bf16 %v443
      %s452 = scalar_lea.vmem %s1, 4
      %v453 = vld [vmem:[%s452] sm:$0x1]
      %v455 = vlaneseq
      %v456 = vshrl.u32 %v455, 7
      %v457 = vsub.s32 0, %v456
      %v458 = vrot.slane %v453, %v457
      %v460 = vmul.f32 %v444, %v458
      %v461 = vmul.f32 %v445, %v458
      %v462 = vmul.f32 %v446, %v458
      %v463 = vmul.f32 %v447, %v458
      %v464 = vmul.f32 %v448, %v458
      %v465 = vmul.f32 %v449, %v458
      %v466 = vmul.f32 %v450, %v458
      %v467 = vmul.f32 %v451, %v458
      %v468 = vadd.f32 %v427, %v460
      %v469 = vadd.f32 %v428, %v461
      %v470 = vadd.f32 %v429, %v462
      %v471 = vadd.f32 %v430, %v463
      %v472 = vadd.f32 %v431, %v464
      %v473 = vadd.f32 %v432, %v465
      %v474 = vadd.f32 %v433, %v466
      %v475 = vadd.f32 %v434, %v467
      %s476 = scalar_lea.vmem %s258, 160
      %v477 = vld [vmem:[%s476] sm:$0xf]
      %v478 = vld [vmem:[%s476 + $0x4] sm:$0xf]
      %v479 = vld [vmem:[%s476 + $0x8] sm:$0xf]
      %v480 = vld [vmem:[%s476 + $0xc] sm:$0xf]
      %v481 = vld [vmem:[%s476 + $0x10] sm:$0xf]
      %v482 = vld [vmem:[%s476 + $0x14] sm:$0xf]
      %v483 = vld [vmem:[%s476 + $0x18] sm:$0xf]
      %v484 = vld [vmem:[%s476 + $0x1c] sm:$0xf]
      %v485 = vunpack.c.l.bf16 %v477
      %v486 = vunpack.c.l.bf16 %v478
      %v487 = vunpack.c.l.bf16 %v479
      %v488 = vunpack.c.l.bf16 %v480
      %v489 = vunpack.c.l.bf16 %v481
      %v490 = vunpack.c.l.bf16 %v482
      %v491 = vunpack.c.l.bf16 %v483
      %v492 = vunpack.c.l.bf16 %v484
      %s493 = scalar_lea.vmem %s1, 5
      %v494 = vld [vmem:[%s493] sm:$0x1]
      %v496 = vlaneseq
      %v497 = vshrl.u32 %v496, 7
      %v498 = vsub.s32 0, %v497
      %v499 = vrot.slane %v494, %v498
      %v501 = vmul.f32 %v485, %v499
      %v502 = vmul.f32 %v486, %v499
      %v503 = vmul.f32 %v487, %v499
      %v504 = vmul.f32 %v488, %v499
      %v505 = vmul.f32 %v489, %v499
      %v506 = vmul.f32 %v490, %v499
      %v507 = vmul.f32 %v491, %v499
      %v508 = vmul.f32 %v492, %v499
      %v509 = vadd.f32 %v468, %v501
      %v510 = vadd.f32 %v469, %v502
      %v511 = vadd.f32 %v470, %v503
      %v512 = vadd.f32 %v471, %v504
      %v513 = vadd.f32 %v472, %v505
      %v514 = vadd.f32 %v473, %v506
      %v515 = vadd.f32 %v474, %v507
      %v516 = vadd.f32 %v475, %v508
      %s517 = scalar_lea.vmem %s258, 192
      %v518 = vld [vmem:[%s517] sm:$0xf]
      %v519 = vld [vmem:[%s517 + $0x4] sm:$0xf]
      %v520 = vld [vmem:[%s517 + $0x8] sm:$0xf]
      %v521 = vld [vmem:[%s517 + $0xc] sm:$0xf]
      %v522 = vld [vmem:[%s517 + $0x10] sm:$0xf]
      %v523 = vld [vmem:[%s517 + $0x14] sm:$0xf]
      %v524 = vld [vmem:[%s517 + $0x18] sm:$0xf]
      %v525 = vld [vmem:[%s517 + $0x1c] sm:$0xf]
      %v526 = vunpack.c.l.bf16 %v518
      %v527 = vunpack.c.l.bf16 %v519
      %v528 = vunpack.c.l.bf16 %v520
      %v529 = vunpack.c.l.bf16 %v521
      %v530 = vunpack.c.l.bf16 %v522
      %v531 = vunpack.c.l.bf16 %v523
      %v532 = vunpack.c.l.bf16 %v524
      %v533 = vunpack.c.l.bf16 %v525
      %s534 = scalar_lea.vmem %s1, 6
      %v535 = vld [vmem:[%s534] sm:$0x1]
      %v537 = vlaneseq
      %v538 = vshrl.u32 %v537, 7
      %v539 = vsub.s32 0, %v538
      %v540 = vrot.slane %v535, %v539
      %v542 = vmul.f32 %v526, %v540
      %v543 = vmul.f32 %v527, %v540
      %v544 = vmul.f32 %v528, %v540
      %v545 = vmul.f32 %v529, %v540
      %v546 = vmul.f32 %v530, %v540
      %v547 = vmul.f32 %v531, %v540
      %v548 = vmul.f32 %v532, %v540
      %v549 = vmul.f32 %v533, %v540
      %v550 = vadd.f32 %v509, %v542
      %v551 = vadd.f32 %v510, %v543
      %v552 = vadd.f32 %v511, %v544
      %v553 = vadd.f32 %v512, %v545
      %v554 = vadd.f32 %v513, %v546
      %v555 = vadd.f32 %v514, %v547
      %v556 = vadd.f32 %v515, %v548
      %v557 = vadd.f32 %v516, %v549
      %s558 = scalar_lea.vmem %s258, 224
      %v559 = vld [vmem:[%s558] sm:$0xf]
      %v560 = vld [vmem:[%s558 + $0x4] sm:$0xf]
      %v561 = vld [vmem:[%s558 + $0x8] sm:$0xf]
      %v562 = vld [vmem:[%s558 + $0xc] sm:$0xf]
      %v563 = vld [vmem:[%s558 + $0x10] sm:$0xf]
      %v564 = vld [vmem:[%s558 + $0x14] sm:$0xf]
      %v565 = vld [vmem:[%s558 + $0x18] sm:$0xf]
      %v566 = vld [vmem:[%s558 + $0x1c] sm:$0xf]
      %v567 = vunpack.c.l.bf16 %v559
      %v568 = vunpack.c.l.bf16 %v560
      %v569 = vunpack.c.l.bf16 %v561
      %v570 = vunpack.c.l.bf16 %v562
      %v571 = vunpack.c.l.bf16 %v563
      %v572 = vunpack.c.l.bf16 %v564
      %v573 = vunpack.c.l.bf16 %v565
      %v574 = vunpack.c.l.bf16 %v566
      %s575 = scalar_lea.vmem %s1, 7
      %v576 = vld [vmem:[%s575] sm:$0x1]
      %v578 = vlaneseq
      %v579 = vshrl.u32 %v578, 7
      %v580 = vsub.s32 0, %v579
      %v581 = vrot.slane %v576, %v580
      %v583 = vmul.f32 %v567, %v581
      %v584 = vmul.f32 %v568, %v581
      %v585 = vmul.f32 %v569, %v581
      %v586 = vmul.f32 %v570, %v581
      %v587 = vmul.f32 %v571, %v581
      %v588 = vmul.f32 %v572, %v581
      %v589 = vmul.f32 %v573, %v581
      %v590 = vmul.f32 %v574, %v581
      %v591 = vadd.f32 %v550, %v583
      %v592 = vadd.f32 %v551, %v584
      %v593 = vadd.f32 %v552, %v585
      %v594 = vadd.f32 %v553, %v586
      %v595 = vadd.f32 %v554, %v587
      %v596 = vadd.f32 %v555, %v588
      %v597 = vadd.f32 %v556, %v589
      %v598 = vadd.f32 %v557, %v590
      %s599 = scalar_lea.vmem %s258, 256
      %v600 = vld [vmem:[%s599] sm:$0xf]
      %v601 = vld [vmem:[%s599 + $0x4] sm:$0xf]
      %v602 = vld [vmem:[%s599 + $0x8] sm:$0xf]
      %v603 = vld [vmem:[%s599 + $0xc] sm:$0xf]
      %v604 = vld [vmem:[%s599 + $0x10] sm:$0xf]
      %v605 = vld [vmem:[%s599 + $0x14] sm:$0xf]
      %v606 = vld [vmem:[%s599 + $0x18] sm:$0xf]
      %v607 = vld [vmem:[%s599 + $0x1c] sm:$0xf]
      %v608 = vunpack.c.l.bf16 %v600
      %v609 = vunpack.c.l.bf16 %v601
      %v610 = vunpack.c.l.bf16 %v602
      %v611 = vunpack.c.l.bf16 %v603
      %v612 = vunpack.c.l.bf16 %v604
      %v613 = vunpack.c.l.bf16 %v605
      %v614 = vunpack.c.l.bf16 %v606
      %v615 = vunpack.c.l.bf16 %v607
      %s616 = scalar_lea.vmem %s1, 8
      %v617 = vld [vmem:[%s616] sm:$0x1]
      %v619 = vlaneseq
      %v620 = vshrl.u32 %v619, 7
      %v621 = vsub.s32 0, %v620
      %v622 = vrot.slane %v617, %v621
      %v624 = vmul.f32 %v608, %v622
      %v625 = vmul.f32 %v609, %v622
      %v626 = vmul.f32 %v610, %v622
      %v627 = vmul.f32 %v611, %v622
      %v628 = vmul.f32 %v612, %v622
      %v629 = vmul.f32 %v613, %v622
      %v630 = vmul.f32 %v614, %v622
      %v631 = vmul.f32 %v615, %v622
      %v632 = vadd.f32 %v591, %v624
      %v633 = vadd.f32 %v592, %v625
      %v634 = vadd.f32 %v593, %v626
      %v635 = vadd.f32 %v594, %v627
      %v636 = vadd.f32 %v595, %v628
      %v637 = vadd.f32 %v596, %v629
      %v638 = vadd.f32 %v597, %v630
      %v639 = vadd.f32 %v598, %v631
      %v640 = vld [vmem:[%s2] sm:$0x1]
      %v642 = vlaneseq
      %v643 = vshrl.u32 %v642, 7
      %v644 = vsub.s32 0, %v643
      %v645 = vrot.slane %v640, %v644
      %v647 = vmul.f32 %v632, %v645
      %v648 = vmul.f32 %v633, %v645
      %v649 = vmul.f32 %v634, %v645
      %v650 = vmul.f32 %v635, %v645
      %v651 = vmul.f32 %v636, %v645
      %v652 = vmul.f32 %v637, %v645
      %v653 = vmul.f32 %v638, %v645
      %v654 = vmul.f32 %v639, %v645
      %v655 = vld [vmem:[%s3] sm:$0x1]
      %v657 = vlaneseq
      %v658 = vshrl.u32 %v657, 7
      %v659 = vsub.s32 0, %v658
      %v660 = vrot.slane %v655, %v659
      %v662 = vadd.f32 %v647, %v660
      %v663 = vadd.f32 %v648, %v660
      %v664 = vadd.f32 %v649, %v660
      %v665 = vadd.f32 %v650, %v660
      %v666 = vadd.f32 %v651, %v660
      %v667 = vadd.f32 %v652, %v660
      %v668 = vadd.f32 %v653, %v660
      %v669 = vadd.f32 %v654, %v660
      %v670 = vxor.u32 %v662, 2147483648
      %v671 = vxor.u32 %v663, 2147483648
      %v672 = vxor.u32 %v664, 2147483648
      %v673 = vxor.u32 %v665, 2147483648
      %v674 = vxor.u32 %v666, 2147483648
      %v675 = vxor.u32 %v667, 2147483648
      %v676 = vxor.u32 %v668, 2147483648
      %v677 = vxor.u32 %v669, 2147483648
      %v678 = vmul.f32 %v670, 1.442695
      %v679 = vpow.pop %v678
      %v680 = vmul.f32 %v671, 1.442695
      %v681 = vpow.pop %v680
      %v682 = vmul.f32 %v672, 1.442695
      %v683 = vpow.pop %v682
      %v684 = vmul.f32 %v673, 1.442695
      %v685 = vpow.pop %v684
      %v686 = vmul.f32 %v674, 1.442695
      %v687 = vpow.pop %v686
      %v688 = vmul.f32 %v675, 1.442695
      %v689 = vpow.pop %v688
      %v690 = vmul.f32 %v676, 1.442695
      %v691 = vpow.pop %v690
      %v692 = vmul.f32 %v677, 1.442695
      %v693 = vpow.pop %v692
      %v694 = vadd.f32 %v679, 1.0
      %v695 = vadd.f32 %v681, 1.0
      %v696 = vadd.f32 %v683, 1.0
      %v697 = vadd.f32 %v685, 1.0
      %v698 = vadd.f32 %v687, 1.0
      %v699 = vadd.f32 %v689, 1.0
      %v700 = vadd.f32 %v691, 1.0
      %v701 = vadd.f32 %v693, 1.0
      %v702 = vrcp.pop %v694
      %v703 = vmul.f32 1.0, %v702
      %v704 = vrcp.pop %v695
      %v705 = vmul.f32 1.0, %v704
      %v706 = vrcp.pop %v696
      %v707 = vmul.f32 1.0, %v706
      %v708 = vrcp.pop %v697
      %v709 = vmul.f32 1.0, %v708
      %v710 = vrcp.pop %v698
      %v711 = vmul.f32 1.0, %v710
      %v712 = vrcp.pop %v699
      %v713 = vmul.f32 1.0, %v712
      %v714 = vrcp.pop %v700
      %v715 = vmul.f32 1.0, %v714
      %v716 = vrcp.pop %v701
      %v717 = vmul.f32 1.0, %v716
      %v718 = vmul.f32 %v662, %v703
      %v719 = vmul.f32 %v663, %v705
      %v720 = vmul.f32 %v664, %v707
      %v721 = vmul.f32 %v665, %v709
      %v722 = vmul.f32 %v666, %v711
      %v723 = vmul.f32 %v667, %v713
      %v724 = vmul.f32 %v668, %v715
      %v725 = vmul.f32 %v669, %v717
      %v726 = vpack.c.bf16 %v719, %v718
      %v727 = vpack.c.bf16 %v721, %v720
      %v728 = vpack.c.bf16 %v723, %v722
      %v729 = vpack.c.bf16 %v725, %v724
      %v734 = vunpack.c.l.b16 %v726
      %v735 = vunpack.c.h.b16 %v726
      %v736 = vunpack.c.l.b16 %v727
      %v737 = vunpack.c.h.b16 %v727
      %v738 = vunpack.c.l.b16 %v728
      %v739 = vunpack.c.h.b16 %v728
      %v740 = vunpack.c.l.b16 %v729
      %v741 = vunpack.c.h.b16 %v729
      %v742 = vpack.c.b16 %v734, %v734
      %v743 = vpack.c.b16 %v735, %v735
      %v744 = vpack.c.b16 %v736, %v736
      %v745 = vpack.c.b16 %v737, %v737
      %v746 = vpack.c.b16 %v738, %v738
      %v747 = vpack.c.b16 %v739, %v739
      %v748 = vpack.c.b16 %v740, %v740
      %v749 = vpack.c.b16 %v741, %v741
      %758 = vst [vmem:[%s268] sm:$0xf] %v742
      %759 = vst [vmem:[%s268 + $0x4] sm:$0xf] %v743
      %760 = vst [vmem:[%s268 + $0x8] sm:$0xf] %v744
      %761 = vst [vmem:[%s268 + $0xc] sm:$0xf] %v745
      %762 = vst [vmem:[%s268 + $0x10] sm:$0xf] %v746
      %763 = vst [vmem:[%s268 + $0x14] sm:$0xf] %v747
      %764 = vst [vmem:[%s268 + $0x18] sm:$0xf] %v748
      %765 = vst [vmem:[%s268 + $0x1c] sm:$0xf] %v749
      %p766 = scmp.eq.s32.totalorder %s22, 0
      // Predicated region
      $region37: #{fwd.16} parent=35 // pred_check
        %p767 = pneg %p766
      $region38: #{fwd.16} parent=35 // pred_check_branch
        %769 = sbr.rel (%p767) target = $region40
      $region39: #{fwd.16} parent=35 // pred_region
        %770 = vst [vmem:[%s272] sm:$0x1] 0.0
      $region40: #{fwd.16} parent=35 // pred_fallthru
        _
      %s771 = smul.u32 %s22, 64
      %v772 = vlaneseq
      %v773 = vshrl.u32 %v772, 7
      %v774 = vadd.s32 %v773, 8
      %v775 = vadd.s32 %v773, 16
      %v776 = vadd.s32 %v773, 24
      %v777 = vadd.s32 %v773, 32
      %v778 = vadd.s32 %v773, 40
      %v779 = vadd.s32 %v773, 48
      %v780 = vadd.s32 %v773, 56
      %v781 = vstv %s771
      %v782 = vadd.s32 %v781, %v773
      %v783 = vadd.s32 %v781, %v774
      %v784 = vadd.s32 %v781, %v775
      %v785 = vadd.s32 %v781, %v776
      %v786 = vadd.s32 %v781, %v777
      %v787 = vadd.s32 %v781, %v778
      %v788 = vadd.s32 %v781, %v779
      %v789 = vadd.s32 %v781, %v780
      %vm790 = vcmp.lt.s32.totalorder %v782, 64
      %vm791 = vcmp.lt.s32.totalorder %v783, 64
      %vm792 = vcmp.lt.s32.totalorder %v784, 64
      %vm793 = vcmp.lt.s32.totalorder %v785, 64
      %vm794 = vcmp.lt.s32.totalorder %v786, 64
      %vm795 = vcmp.lt.s32.totalorder %v787, 64
      %vm796 = vcmp.lt.s32.totalorder %v788, 64
      %vm797 = vcmp.lt.s32.totalorder %v789, 64
      %v798 = vsel %vm790, %v718, 0.0
      %v799 = vsel %vm791, %v719, 0.0
      %v800 = vsel %vm792, %v720, 0.0
      %v801 = vsel %vm793, %v721, 0.0
      %v802 = vsel %vm794, %v722, 0.0
      %v803 = vsel %vm795, %v723, 0.0
      %v804 = vsel %vm796, %v724, 0.0
      %v805 = vsel %vm797, %v725, 0.0
      %v806 = vld [vmem:[%s272] sm:$0x1]
      %v807 = vadd.f32 %v798, %v799
      %v808 = vadd.f32 %v807, %v800
      %v809 = vadd.f32 %v808, %v801
      %v810 = vadd.f32 %v809, %v802
      %v811 = vadd.f32 %v810, %v803
      %v812 = vadd.f32 %v811, %v804
      %v813 = vadd.f32 %v812, %v805
      %v814 = vrot.slane %v813, 4
      %v815 = vadd.f32 %v813, %v814
      %v816 = vrot.slane %v815, 2
      %v817 = vadd.f32 %v815, %v816
      %v818 = vrot.slane %v817, 1
      %v819 = vadd.f32 %v817, %v818
      %v820 = vadd.f32 %v806, %v819
      %821 = vst [vmem:[%s272] sm:$0x1] %v820
      %s822 = smul.u32 8, %s22
      %p823 = scmp.lt.s32.totalorder %s21, 5
      %s824 = scalar_select %p823, %s21, 5
      %p825 = scmp.lt.s32.totalorder %s822, 7
      %s826 = scalar_select %p825, %s822, 7
      %s827 = smul.addr %s824, 8
      %s828 = sadd.s32 %s826, %s827
      %s829 = smul.addr %s828, 4
      %s830 = scalar_lea.vmem %s4, %s829
      %p831 = scmp.lt.s32.totalorder %s21, 5
      %s832 = scalar_select %p831, %s21, 5
      %s833 = scalar_lea.vmem %s5, %s832
      // Predicated region
      $region41: #{fwd.16} parent=35 // pred_check
        %p834 = pneg %p140
      $region42: #{fwd.16} parent=35 // pred_check_branch
        %836 = sbr.rel (%p834) target = $region44
      $region43: #{fwd.16} parent=35 // pred_region
        %s837 = smul.u32 8, %s22
      $region44: #{fwd.16} parent=35 // pred_fallthru
        _
      // Predicated region
      $region45: #{fwd.16} parent=35 // pred_check
        %p838 = pneg %p166
      $region46: #{fwd.16} parent=35 // pred_check_branch
        %840 = sbr.rel (%p838) target = $region48
      $region47: #{fwd.16} parent=35 // pred_region
        _
      $region48: #{fwd.16} parent=35 // pred_fallthru
        _
    $region36: #{fwd.16} parent=5 // pred_fallthru
      _
    %p841 = scmp.le.s32.totalorder 2, %s12
    // Predicated region
    $region49: #{fwd.16} parent=5 // pred_check
      %p842 = pneg %p841
    $region50: #{fwd.16} parent=5 // pred_check_branch
      %844 = sbr.rel (%p842) target = $region52
    $region51: #{fwd.16} parent=5 // pred_region
      %s845 = ssub.s32 %s12, 2
      // Predicated region
      $region53: #{fwd.16} parent=51 // pred_check
        %p846 = pneg %p146
      $region54: #{fwd.16} parent=51 // pred_check_branch
        %848 = sbr.rel (%p846) target = $region56
      $region55: #{fwd.16} parent=51 // pred_region
        %s849 = smul.u32 8, %s24
        %p850 = scmp.lt.s32.totalorder %s23, 5
        %s851 = scalar_select %p850, %s23, 5
        %p852 = scmp.lt.s32.totalorder %s849, 7
        %s853 = scalar_select %p852, %s849, 7
        %s854 = smul.addr %s851, 8
        %s855 = sadd.s32 %s853, %s854
        %s856 = smul.addr %s855, 4
        %s857 = scalar_lea.vmem %s4, %s856
      $region56: #{fwd.16} parent=51 // pred_fallthru
        _
      // Predicated region
      $region57: #{fwd.16} parent=51 // pred_check
        %p858 = pneg %p172
      $region58: #{fwd.16} parent=51 // pred_check_branch
        %860 = sbr.rel (%p858) target = $region60
      $region59: #{fwd.16} parent=51 // pred_region
        %p861 = scmp.lt.s32.totalorder %s23, 5
        %s862 = scalar_select %p861, %s23, 5
        %s863 = scalar_lea.vmem %s5, %s862
      $region60: #{fwd.16} parent=51 // pred_fallthru
        _
    $region52: #{fwd.16} parent=5 // pred_fallthru
      _
  $region6: #{fwd.16} parent=0 // loop_footer
    %s16 = sadd.s32 1, %s12
  $region7: #{fwd.16} parent=0 // loop_footer_branch
    %11 = sbr.rel target = $region3
  $region8: #{fwd.16} parent=0 // loop_exit
    _

// kernel: fwd.20
$region0: #{fwd.20}
  #allocation0 [shape = 'u32[]', space=smem, size = 0x4, offset = 0x4, fixed_abs, tag = 'smem constant byte address 0x4 - core index']
  #allocation1 [shape = 'u32[144,128]{1,0:T(1,128)}', space=vmem, size = 0x12000, scoped, tag = 'internal scratch']
  %s0 = inlined_call_operand.vmem [shape: bf16[6,9,16,128], index: 0, kind: input, shape index: {}]
  %s1 = inlined_call_operand.vmem [shape: f32[9,1,128], index: 1, kind: input, shape index: {}]
  %s2 = inlined_call_operand.vmem [shape: f32[1,128], index: 2, kind: input, shape index: {}]
  %s3 = inlined_call_operand.vmem [shape: f32[1,128], index: 3, kind: input, shape index: {}]
  %s4 = inlined_call_operand.vmem [shape: bf16[6,16,128], index: 4, kind: output, shape index: {0}]
  %s5 = inlined_call_operand.vmem [shape: f32[6,1,128], index: 5, kind: output, shape index: {1}]
  %6 = xla_tuple %s4, %s5
  %s7 = sld [smem:[#allocation0]]
  $region61: #{fwd.20} parent=0
    _
  %s9 = ssub.s32 1, %s7
  %s10 = scalar_select 0, %s9, %s7
  loop: start=0, step=1, limit=8
  $region2: #{fwd.20} parent=0 // loop_pre_header
    _
  $region3: #{fwd.20} parent=0 // loop_header
    %s12 = sphi 0, %s16
    %p13 = scmp.ge.s32.totalorder %s12, 8
    %s19 = sphi 0, %s31
    %s20 = sphi 0, %s27
    %s21 = sphi 0, %s19
    %s22 = sphi 0, %s20
    %s23 = sphi 0, %s21
    %s24 = sphi 0, %s22
    %s36 = sphi 0, %s38
    %s39 = sphi 0, %s36
    %s40 = sphi 0, %s39
    %s56 = sphi 0, %s40
    %s60 = sphi 0, %s60
    %s62 = sphi 0, %s60
    %s63 = sphi 0, %s62
    %s77 = sphi 0, %s63
    %s81 = sphi 0, %s81
    %s83 = sphi 0, %s81
    %s84 = sphi 0, %s83
    %s98 = sphi 0, %s84
    %s102 = sphi 0, %s102
    %s104 = sphi 0, %s102
    %s105 = sphi 0, %s104
    %s119 = sphi 0, %s105
    %s127 = sphi 0, %s129
    %s130 = sphi 0, %s127
    %s131 = sphi 0, %s130
    %s147 = sphi 0, %s131
    %s153 = sphi 0, %s155
    %s156 = sphi 0, %s153
    %s157 = sphi 0, %s156
    %s173 = sphi 0, %s157
  $region4: #{fwd.20} parent=0 // loop_header_branch
    %15 = sbr.rel (%p13) target = $region8
  $region5: #{fwd.20} parent=0 // loop_body
    %s17 = ssub.s32 %s12, 1
    %s18 = ssub.s32 %s12, 2
    %s25 = sadd.s32 1, %s20
    %p26 = scmp.ge.s32.totalorder %s25, 1
    %s27 = scalar_select %p26, 0, %s25
    %s28 = sadd.s32 1, %s19
    %s29 = scalar_select %p26, %s28, %s19
    %p30 = scmp.ge.s32.totalorder %s29, 6
    %s31 = scalar_select %p30, 0, %s29
    %s32 = ssub.s32 %s19, %s31
    %s33 = ssub.s32 %s20, %s27
    %s34 = sor.u32 %s32, %s33
    %p35 = scmp.eq.s32.totalorder %s34, 0
    %s37 = sadd.s32 %s36, 1
    %s38 = scalar_select %p35, %s36, %s37
    %p41 = pneg %p35
    %p42 = scmp.eq.s32.totalorder %s12, 5
    %p43 = por %p41, %p42
    %p44 = scmp.ne.s32.totalorder %s36, %s39
    %p45 = scmp.eq.s32.totalorder %s12, 0
    %p46 = por %p44, %p45
    %p47 = scmp.ne.s32.totalorder %s36, %s39
    %p48 = scmp.eq.s32.totalorder %s17, 5
    %p49 = por %p47, %p48
    %p50 = scmp.ne.s32.totalorder %s39, %s40
    %p51 = scmp.eq.s32.totalorder %s17, 0
    %p52 = por %p50, %p51
    %p53 = scmp.ne.s32.totalorder %s39, %s40
    %p54 = scmp.eq.s32.totalorder %s18, 5
    %p55 = por %p53, %p54
    %p57 = scmp.ne.s32.totalorder %s40, %s56
    %p58 = scmp.eq.s32.totalorder %s18, 0
    %p59 = por %p57, %p58
    %s61 = sadd.s32 %s60, 1
    %p64 = scmp.eq.s32.totalorder %s12, 5
    %p65 = scmp.ne.s32.totalorder %s60, %s62
    %p66 = scmp.eq.s32.totalorder %s12, 0
    %p67 = por %p65, %p66
    %p68 = scmp.ne.s32.totalorder %s60, %s62
    %p69 = scmp.eq.s32.totalorder %s17, 5
    %p70 = por %p68, %p69
    %p71 = scmp.ne.s32.totalorder %s62, %s63
    %p72 = scmp.eq.s32.totalorder %s17, 0
    %p73 = por %p71, %p72
    %p74 = scmp.ne.s32.totalorder %s62, %s63
    %p75 = scmp.eq.s32.totalorder %s18, 5
    %p76 = por %p74, %p75
    %p78 = scmp.ne.s32.totalorder %s63, %s77
    %p79 = scmp.eq.s32.totalorder %s18, 0
    %p80 = por %p78, %p79
    %s82 = sadd.s32 %s81, 1
    %p85 = scmp.eq.s32.totalorder %s12, 5
    %p86 = scmp.ne.s32.totalorder %s81, %s83
    %p87 = scmp.eq.s32.totalorder %s12, 0
    %p88 = por %p86, %p87
    %p89 = scmp.ne.s32.totalorder %s81, %s83
    %p90 = scmp.eq.s32.totalorder %s17, 5
    %p91 = por %p89, %p90
    %p92 = scmp.ne.s32.totalorder %s83, %s84
    %p93 = scmp.eq.s32.totalorder %s17, 0
    %p94 = por %p92, %p93
    %p95 = scmp.ne.s32.totalorder %s83, %s84
    %p96 = scmp.eq.s32.totalorder %s18, 5
    %p97 = por %p95, %p96
    %p99 = scmp.ne.s32.totalorder %s84, %s98
    %p100 = scmp.eq.s32.totalorder %s18, 0
    %p101 = por %p99, %p100
    %s103 = sadd.s32 %s102, 1
    %p106 = scmp.eq.s32.totalorder %s12, 5
    %p107 = scmp.ne.s32.totalorder %s102, %s104
    %p108 = scmp.eq.s32.totalorder %s12, 0
    %p109 = por %p107, %p108
    %p110 = scmp.ne.s32.totalorder %s102, %s104
    %p111 = scmp.eq.s32.totalorder %s17, 5
    %p112 = por %p110, %p111
    %p113 = scmp.ne.s32.totalorder %s104, %s105
    %p114 = scmp.eq.s32.totalorder %s17, 0
    %p115 = por %p113, %p114
    %p116 = scmp.ne.s32.totalorder %s104, %s105
    %p117 = scmp.eq.s32.totalorder %s18, 5
    %p118 = por %p116, %p117
    %p120 = scmp.ne.s32.totalorder %s105, %s119
    %p121 = scmp.eq.s32.totalorder %s18, 0
    %p122 = por %p120, %p121
    %s123 = ssub.s32 %s19, %s31
    %s124 = ssub.s32 %s20, %s27
    %s125 = sor.u32 %s123, %s124
    %p126 = scmp.eq.s32.totalorder %s125, 0
    %s128 = sadd.s32 %s127, 1
    %s129 = scalar_select %p126, %s127, %s128
    %p132 = pneg %p126
    %p133 = scmp.eq.s32.totalorder %s12, 5
    %p134 = por %p132, %p133
    %p135 = scmp.ne.s32.totalorder %s127, %s130
    %p136 = scmp.eq.s32.totalorder %s12, 0
    %p137 = por %p135, %p136
    %p138 = scmp.ne.s32.totalorder %s127, %s130
    %p139 = scmp.eq.s32.totalorder %s17, 5
    %p140 = por %p138, %p139
    %p141 = scmp.ne.s32.totalorder %s130, %s131
    %p142 = scmp.eq.s32.totalorder %s17, 0
    %p143 = por %p141, %p142
    %p144 = scmp.ne.s32.totalorder %s130, %s131
    %p145 = scmp.eq.s32.totalorder %s18, 5
    %p146 = por %p144, %p145
    %p148 = scmp.ne.s32.totalorder %s131, %s147
    %p149 = scmp.eq.s32.totalorder %s18, 0
    %p150 = por %p148, %p149
    %s151 = ssub.s32 %s19, %s31
    %p152 = scmp.eq.s32.totalorder %s151, 0
    %s154 = sadd.s32 %s153, 1
    %s155 = scalar_select %p152, %s153, %s154
    %p158 = pneg %p152
    %p159 = scmp.eq.s32.totalorder %s12, 5
    %p160 = por %p158, %p159
    %p161 = scmp.ne.s32.totalorder %s153, %s156
    %p162 = scmp.eq.s32.totalorder %s12, 0
    %p163 = por %p161, %p162
    %p164 = scmp.ne.s32.totalorder %s153, %s156
    %p165 = scmp.eq.s32.totalorder %s17, 5
    %p166 = por %p164, %p165
    %p167 = scmp.ne.s32.totalorder %s156, %s157
    %p168 = scmp.eq.s32.totalorder %s17, 0
    %p169 = por %p167, %p168
    %p170 = scmp.ne.s32.totalorder %s156, %s157
    %p171 = scmp.eq.s32.totalorder %s18, 5
    %p172 = por %p170, %p171
    %p174 = scmp.ne.s32.totalorder %s157, %s173
    %p175 = scmp.eq.s32.totalorder %s18, 0
    %p176 = por %p174, %p175
    %p177 = scmp.le.s32.totalorder 1, %s12
    %p178 = scmp.lt.s32.totalorder %s12, 7
    %p179 = pnand %p177, %p178
    %p180 = pneg %p179
    // Predicated region
    $region9: #{fwd.20} parent=5 // pred_check
      _
    $region10: #{fwd.20} parent=5 // pred_check_branch
      %182 = sbr.rel (%p179) target = $region12
    $region11: #{fwd.20} parent=5 // pred_region
      %s183 = ssub.s32 %s12, 1
      // Predicated region
      $region13: #{fwd.20} parent=11 // pred_check
        %p184 = pneg %p73
      $region14: #{fwd.20} parent=11 // pred_check_branch
        %186 = sbr.rel (%p184) target = $region16
      $region15: #{fwd.20} parent=11 // pred_region
        _
      $region16: #{fwd.20} parent=11 // pred_fallthru
        _
      // Predicated region
      $region17: #{fwd.20} parent=11 // pred_check
        %p187 = pneg %p94
      $region18: #{fwd.20} parent=11 // pred_check_branch
        %189 = sbr.rel (%p187) target = $region20
      $region19: #{fwd.20} parent=11 // pred_region
        _
      $region20: #{fwd.20} parent=11 // pred_fallthru
        _
      // Predicated region
      $region21: #{fwd.20} parent=11 // pred_check
        %p190 = pneg %p115
      $region22: #{fwd.20} parent=11 // pred_check_branch
        %192 = sbr.rel (%p190) target = $region24
      $region23: #{fwd.20} parent=11 // pred_region
        _
      $region24: #{fwd.20} parent=11 // pred_fallthru
        _
    $region12: #{fwd.20} parent=5 // pred_fallthru
      _
    %p193 = scmp.lt.s32.totalorder %s12, 6
    // Predicated region
    $region25: #{fwd.20} parent=5 // pred_check
      %p194 = pneg %p193
    $region26: #{fwd.20} parent=5 // pred_check_branch
      %196 = sbr.rel (%p194) target = $region28
    $region27: #{fwd.20} parent=5 // pred_region
      // Predicated region
      $region29: #{fwd.20} parent=27 // pred_check
        %p197 = pneg %p46
      $region30: #{fwd.20} parent=27 // pred_check_branch
        %199 = sbr.rel (%p197) target = $region32
      $region31: #{fwd.20} parent=27 // pred_region
        %s200 = smul.u32 2, %s20
        %p201 = scmp.lt.s32.totalorder %s19, 5
        %s202 = scalar_select %p201, %s19, 5
        %p203 = scmp.lt.s32.totalorder %s200, 1
        %s204 = scalar_select %p203, %s200, 1
        %s205 = smul.addr %s202, 18
        %s206 = sadd.s32 %s204, %s205
        %s207 = smul.addr %s206, 4
        %s208 = scalar_lea.vmem %s0, %s207
        %s209 = smul.u32 2, %s20
      $region32: #{fwd.20} parent=27 // pred_fallthru
        _
    $region28: #{fwd.20} parent=5 // pred_fallthru
      _
    %p210 = scmp.le.s32.totalorder 1, %s12
    %p211 = scmp.lt.s32.totalorder %s12, 7
    %p212 = pnand %p210, %p211
    %p213 = pneg %p212
    // Predicated region
    $region33: #{fwd.20} parent=5 // pred_check
      _
    $region34: #{fwd.20} parent=5 // pred_check_branch
      %215 = sbr.rel (%p212) target = $region36
    $region35: #{fwd.20} parent=5 // pred_region
      %s216 = ssub.s32 %s12, 1
      %s217 = smul.u32 2, %s22
      %p218 = scmp.lt.s32.totalorder %s21, 5
      %s219 = scalar_select %p218, %s21, 5
      %p220 = scmp.lt.s32.totalorder %s217, 1
      %s221 = scalar_select %p220, %s217, 1
      %s222 = smul.addr %s219, 18
      %s223 = sadd.s32 %s221, %s222
      %s224 = smul.addr %s223, 4
      %s225 = scalar_lea.vmem %s0, %s224
      %p226 = pneg %p52
      %p227 = pneg %p49
      %p228 = pneg %p73
      %p229 = pneg %p70
      %p230 = pneg %p94
      %p231 = pneg %p91
      %p232 = pneg %p115
      %p233 = pneg %p112
      %p234 = pneg %p143
      %p235 = pneg %p140
      %s236 = smul.u32 2, %s22
      %p237 = scmp.lt.s32.totalorder %s21, 5
      %s238 = scalar_select %p237, %s21, 5
      %p239 = scmp.lt.s32.totalorder %s236, 1
      %s240 = scalar_select %p239, %s236, 1
      %s241 = smul.addr %s238, 2
      %s242 = sadd.s32 %s240, %s241
      %s243 = smul.addr %s242, 4
      %s244 = scalar_lea.vmem %s4, %s243
      %p245 = pneg %p169
      %p246 = pneg %p166
      %p247 = scmp.lt.s32.totalorder %s21, 5
      %s248 = scalar_select %p247, %s21, 5
      %s249 = scalar_lea.vmem %s5, %s248
      %s250 = smul.u32 2, %s22
      %p251 = scmp.lt.s32.totalorder %s21, 5
      %s252 = scalar_select %p251, %s21, 5
      %p253 = scmp.lt.s32.totalorder %s250, 1
      %s254 = scalar_select %p253, %s250, 1
      %s255 = smul.addr %s252, 18
      %s256 = sadd.s32 %s254, %s255
      %s257 = smul.addr %s256, 4
      %s258 = scalar_lea.vmem %s0, %s257
      %s259 = smul.u32 2, %s22
      %s260 = smul.u32 2, %s22
      %p261 = scmp.lt.s32.totalorder %s21, 5
      %s262 = scalar_select %p261, %s21, 5
      %p263 = scmp.lt.s32.totalorder %s260, 1
      %s264 = scalar_select %p263, %s260, 1
      %s265 = smul.addr %s262, 2
      %s266 = sadd.s32 %s264, %s265
      %s267 = smul.addr %s266, 4
      %s268 = scalar_lea.vmem %s4, %s267
      %s269 = smul.u32 2, %s22
      %p270 = scmp.lt.s32.totalorder %s21, 5
      %s271 = scalar_select %p270, %s21, 5
      %s272 = scalar_lea.vmem %s5, %s271
      %v273 = vld [vmem:[%s258] sm:$0xf]
      %v274 = vld [vmem:[%s258 + $0x4] sm:$0xf]
      %v275 = vunpack.c.l.bf16 %v273
      %v276 = vunpack.c.l.bf16 %v274
      %v277 = vld [vmem:[%s1] sm:$0x1]
      %v279 = vlaneseq
      %v280 = vshrl.u32 %v279, 7
      %v281 = vsub.s32 0, %v280
      %v282 = vrot.slane %v277, %v281
      %v284 = vmul.f32 %v275, %v282
      %v285 = vmul.f32 %v276, %v282
      %v286 = vadd.f32 %v284, 0.0
      %v287 = vadd.f32 %v285, 0.0
      %s288 = scalar_lea.vmem %s258, 8
      %v289 = vld [vmem:[%s288] sm:$0xf]
      %v290 = vld [vmem:[%s288 + $0x4] sm:$0xf]
      %v291 = vunpack.c.l.bf16 %v289
      %v292 = vunpack.c.l.bf16 %v290
      %s293 = scalar_lea.vmem %s1, 1
      %v294 = vld [vmem:[%s293] sm:$0x1]
      %v296 = vlaneseq
      %v297 = vshrl.u32 %v296, 7
      %v298 = vsub.s32 0, %v297
      %v299 = vrot.slane %v294, %v298
      %v301 = vmul.f32 %v291, %v299
      %v302 = vmul.f32 %v292, %v299
      %v303 = vadd.f32 %v286, %v301
      %v304 = vadd.f32 %v287, %v302
      %s305 = scalar_lea.vmem %s258, 16
      %v306 = vld [vmem:[%s305] sm:$0xf]
      %v307 = vld [vmem:[%s305 + $0x4] sm:$0xf]
      %v308 = vunpack.c.l.bf16 %v306
      %v309 = vunpack.c.l.bf16 %v307
      %s310 = scalar_lea.vmem %s1, 2
      %v311 = vld [vmem:[%s310] sm:$0x1]
      %v313 = vlaneseq
      %v314 = vshrl.u32 %v313, 7
      %v315 = vsub.s32 0, %v314
      %v316 = vrot.slane %v311, %v315
      %v318 = vmul.f32 %v308, %v316
      %v319 = vmul.f32 %v309, %v316
      %v320 = vadd.f32 %v303, %v318
      %v321 = vadd.f32 %v304, %v319
      %s322 = scalar_lea.vmem %s258, 24
      %v323 = vld [vmem:[%s322] sm:$0xf]
      %v324 = vld [vmem:[%s322 + $0x4] sm:$0xf]
      %v325 = vunpack.c.l.bf16 %v323
      %v326 = vunpack.c.l.bf16 %v324
      %s327 = scalar_lea.vmem %s1, 3
      %v328 = vld [vmem:[%s327] sm:$0x1]
      %v330 = vlaneseq
      %v331 = vshrl.u32 %v330, 7
      %v332 = vsub.s32 0, %v331
      %v333 = vrot.slane %v328, %v332
      %v335 = vmul.f32 %v325, %v333
      %v336 = vmul.f32 %v326, %v333
      %v337 = vadd.f32 %v320, %v335
      %v338 = vadd.f32 %v321, %v336
      %s339 = scalar_lea.vmem %s258, 32
      %v340 = vld [vmem:[%s339] sm:$0xf]
      %v341 = vld [vmem:[%s339 + $0x4] sm:$0xf]
      %v342 = vunpack.c.l.bf16 %v340
      %v343 = vunpack.c.l.bf16 %v341
      %s344 = scalar_lea.vmem %s1, 4
      %v345 = vld [vmem:[%s344] sm:$0x1]
      %v347 = vlaneseq
      %v348 = vshrl.u32 %v347, 7
      %v349 = vsub.s32 0, %v348
      %v350 = vrot.slane %v345, %v349
      %v352 = vmul.f32 %v342, %v350
      %v353 = vmul.f32 %v343, %v350
      %v354 = vadd.f32 %v337, %v352
      %v355 = vadd.f32 %v338, %v353
      %s356 = scalar_lea.vmem %s258, 40
      %v357 = vld [vmem:[%s356] sm:$0xf]
      %v358 = vld [vmem:[%s356 + $0x4] sm:$0xf]
      %v359 = vunpack.c.l.bf16 %v357
      %v360 = vunpack.c.l.bf16 %v358
      %s361 = scalar_lea.vmem %s1, 5
      %v362 = vld [vmem:[%s361] sm:$0x1]
      %v364 = vlaneseq
      %v365 = vshrl.u32 %v364, 7
      %v366 = vsub.s32 0, %v365
      %v367 = vrot.slane %v362, %v366
      %v369 = vmul.f32 %v359, %v367
      %v370 = vmul.f32 %v360, %v367
      %v371 = vadd.f32 %v354, %v369
      %v372 = vadd.f32 %v355, %v370
      %s373 = scalar_lea.vmem %s258, 48
      %v374 = vld [vmem:[%s373] sm:$0xf]
      %v375 = vld [vmem:[%s373 + $0x4] sm:$0xf]
      %v376 = vunpack.c.l.bf16 %v374
      %v377 = vunpack.c.l.bf16 %v375
      %s378 = scalar_lea.vmem %s1, 6
      %v379 = vld [vmem:[%s378] sm:$0x1]
      %v381 = vlaneseq
      %v382 = vshrl.u32 %v381, 7
      %v383 = vsub.s32 0, %v382
      %v384 = vrot.slane %v379, %v383
      %v386 = vmul.f32 %v376, %v384
      %v387 = vmul.f32 %v377, %v384
      %v388 = vadd.f32 %v371, %v386
      %v389 = vadd.f32 %v372, %v387
      %s390 = scalar_lea.vmem %s258, 56
      %v391 = vld [vmem:[%s390] sm:$0xf]
      %v392 = vld [vmem:[%s390 + $0x4] sm:$0xf]
      %v393 = vunpack.c.l.bf16 %v391
      %v394 = vunpack.c.l.bf16 %v392
      %s395 = scalar_lea.vmem %s1, 7
      %v396 = vld [vmem:[%s395] sm:$0x1]
      %v398 = vlaneseq
      %v399 = vshrl.u32 %v398, 7
      %v400 = vsub.s32 0, %v399
      %v401 = vrot.slane %v396, %v400
      %v403 = vmul.f32 %v393, %v401
      %v404 = vmul.f32 %v394, %v401
      %v405 = vadd.f32 %v388, %v403
      %v406 = vadd.f32 %v389, %v404
      %s407 = scalar_lea.vmem %s258, 64
      %v408 = vld [vmem:[%s407] sm:$0xf]
      %v409 = vld [vmem:[%s407 + $0x4] sm:$0xf]
      %v410 = vunpack.c.l.bf16 %v408
      %v411 = vunpack.c.l.bf16 %v409
      %s412 = scalar_lea.vmem %s1, 8
      %v413 = vld [vmem:[%s412] sm:$0x1]
      %v415 = vlaneseq
      %v416 = vshrl.u32 %v415, 7
      %v417 = vsub.s32 0, %v416
      %v418 = vrot.slane %v413, %v417
      %v420 = vmul.f32 %v410, %v418
      %v421 = vmul.f32 %v411, %v418
      %v422 = vadd.f32 %v405, %v420
      %v423 = vadd.f32 %v406, %v421
      %v424 = vld [vmem:[%s2] sm:$0x1]
      %v426 = vlaneseq
      %v427 = vshrl.u32 %v426, 7
      %v428 = vsub.s32 0, %v427
      %v429 = vrot.slane %v424, %v428
      %v431 = vmul.f32 %v422, %v429
      %v432 = vmul.f32 %v423, %v429
      %v433 = vld [vmem:[%s3] sm:$0x1]
      %v435 = vlaneseq
      %v436 = vshrl.u32 %v435, 7
      %v437 = vsub.s32 0, %v436
      %v438 = vrot.slane %v433, %v437
      %v440 = vadd.f32 %v431, %v438
      %v441 = vadd.f32 %v432, %v438
      %v442 = vxor.u32 %v440, 2147483648
      %v443 = vxor.u32 %v441, 2147483648
      %v444 = vmul.f32 %v442, 1.442695
      %v445 = vpow.pop %v444
      %v446 = vmul.f32 %v443, 1.442695
      %v447 = vpow.pop %v446
      %v448 = vadd.f32 %v445, 1.0
      %v449 = vadd.f32 %v447, 1.0
      %v450 = vrcp.pop %v448
      %v451 = vmul.f32 1.0, %v450
      %v452 = vrcp.pop %v449
      %v453 = vmul.f32 1.0, %v452
      %v454 = vmul.f32 %v440, %v451
      %v455 = vmul.f32 %v441, %v453
      %v456 = vpack.c.bf16 %v455, %v454
      %v458 = vunpack.c.l.b16 %v456
      %v459 = vunpack.c.h.b16 %v456
      %v460 = vpack.c.b16 %v458, %v458
      %v461 = vpack.c.b16 %v459, %v459
      %464 = vst [vmem:[%s268] sm:$0xf] %v460
      %465 = vst [vmem:[%s268 + $0x4] sm:$0xf] %v461
      %p466 = scmp.eq.s32.totalorder %s22, 0
      // Predicated region
      $region37: #{fwd.20} parent=35 // pred_check
        %p467 = pneg %p466
      $region38: #{fwd.20} parent=35 // pred_check_branch
        %469 = sbr.rel (%p467) target = $region40
      $region39: #{fwd.20} parent=35 // pred_region
        %470 = vst [vmem:[%s272] sm:$0x1] 0.0
      $region40: #{fwd.20} parent=35 // pred_fallthru
        _
      %s471 = smul.u32 %s22, 16
      %v472 = vlaneseq
      %v473 = vshrl.u32 %v472, 7
      %v474 = vadd.s32 %v473, 8
      %v475 = vstv %s471
      %v476 = vadd.s32 %v475, %v473
      %v477 = vadd.s32 %v475, %v474
      %vm478 = vcmp.lt.s32.totalorder %v476, 16
      %vm479 = vcmp.lt.s32.totalorder %v477, 16
      %v480 = vsel %vm478, %v454, 0.0
      %v481 = vsel %vm479, %v455, 0.0
      %v482 = vld [vmem:[%s272] sm:$0x1]
      %v483 = vadd.f32 %v480, %v481
      %v484 = vrot.slane %v483, 4
      %v485 = vadd.f32 %v483, %v484
      %v486 = vrot.slane %v485, 2
      %v487 = vadd.f32 %v485, %v486
      %v488 = vrot.slane %v487, 1
      %v489 = vadd.f32 %v487, %v488
      %v490 = vadd.f32 %v482, %v489
      %491 = vst [vmem:[%s272] sm:$0x1] %v490
      %s492 = smul.u32 2, %s22
      %p493 = scmp.lt.s32.totalorder %s21, 5
      %s494 = scalar_select %p493, %s21, 5
      %p495 = scmp.lt.s32.totalorder %s492, 1
      %s496 = scalar_select %p495, %s492, 1
      %s497 = smul.addr %s494, 2
      %s498 = sadd.s32 %s496, %s497
      %s499 = smul.addr %s498, 4
      %s500 = scalar_lea.vmem %s4, %s499
      %p501 = scmp.lt.s32.totalorder %s21, 5
      %s502 = scalar_select %p501, %s21, 5
      %s503 = scalar_lea.vmem %s5, %s502
      // Predicated region
      $region41: #{fwd.20} parent=35 // pred_check
        %p504 = pneg %p140
      $region42: #{fwd.20} parent=35 // pred_check_branch
        %506 = sbr.rel (%p504) target = $region44
      $region43: #{fwd.20} parent=35 // pred_region
        %s507 = smul.u32 2, %s22
      $region44: #{fwd.20} parent=35 // pred_fallthru
        _
      // Predicated region
      $region45: #{fwd.20} parent=35 // pred_check
        %p508 = pneg %p166
      $region46: #{fwd.20} parent=35 // pred_check_branch
        %510 = sbr.rel (%p508) target = $region48
      $region47: #{fwd.20} parent=35 // pred_region
        _
      $region48: #{fwd.20} parent=35 // pred_fallthru
        _
    $region36: #{fwd.20} parent=5 // pred_fallthru
      _
    %p511 = scmp.le.s32.totalorder 2, %s12
    // Predicated region
    $region49: #{fwd.20} parent=5 // pred_check
      %p512 = pneg %p511
    $region50: #{fwd.20} parent=5 // pred_check_branch
      %514 = sbr.rel (%p512) target = $region52
    $region51: #{fwd.20} parent=5 // pred_region
      %s515 = ssub.s32 %s12, 2
      // Predicated region
      $region53: #{fwd.20} parent=51 // pred_check
        %p516 = pneg %p146
      $region54: #{fwd.20} parent=51 // pred_check_branch
        %518 = sbr.rel (%p516) target = $region56
      $region55: #{fwd.20} parent=51 // pred_region
        %s519 = smul.u32 2, %s24
        %p520 = scmp.lt.s32.totalorder %s23, 5
        %s521 = scalar_select %p520, %s23, 5
        %p522 = scmp.lt.s32.totalorder %s519, 1
        %s523 = scalar_select %p522, %s519, 1
        %s524 = smul.addr %s521, 2
        %s525 = sadd.s32 %s523, %s524
        %s526 = smul.addr %s525, 4
        %s527 = scalar_lea.vmem %s4, %s526
      $region56: #{fwd.20} parent=51 // pred_fallthru
        _
      // Predicated region
      $region57: #{fwd.20} parent=51 // pred_check
        %p528 = pneg %p172
      $region58: #{fwd.20} parent=51 // pred_check_branch
        %530 = sbr.rel (%p528) target = $region60
      $region59: #{fwd.20} parent=51 // pred_region
        %p531 = scmp.lt.s32.totalorder %s23, 5
        %s532 = scalar_select %p531, %s23, 5
        %s533 = scalar_lea.vmem %s5, %s532
      $region60: #{fwd.20} parent=51 // pred_fallthru
        _
    $region52: #{fwd.20} parent=5 // pred_fallthru
      _
  $region6: #{fwd.20} parent=0 // loop_footer
    %s16 = sadd.s32 1, %s12
  $region7: #{fwd.20} parent=0 // loop_footer_branch
    %11 = sbr.rel target = $region3
  $region8: #{fwd.20} parent=0 // loop_exit
    _

// kernel: fwd.23
$region0: #{fwd.23}
  #allocation0 [shape = 'u32[]', space=smem, size = 0x4, offset = 0x4, fixed_abs, tag = 'smem constant byte address 0x4 - core index']
  #allocation1 [shape = 'u32[144,128]{1,0:T(1,128)}', space=vmem, size = 0x12000, scoped, tag = 'internal scratch']
  #allocation2 [shape = 'f32[16,256]{1,0:T(8,128)}', space=vmem, size = 0x4000, scoped, tag = 'scratch operand']
  %s0 = inlined_call_operand.vmem [shape: bf16[6,16,128], index: 0, kind: input, shape index: {}]
  %s1 = inlined_call_operand.vmem [shape: bf16[128,256], index: 1, kind: input, shape index: {}]
  %s2 = inlined_call_operand.vmem [shape: f32[1,256], index: 2, kind: input, shape index: {}]
  %s3 = inlined_call_operand.vmem [shape: f32[1,256], index: 3, kind: input, shape index: {}]
  %s4 = inlined_call_operand.vmem [shape: bf16[6,16,256], index: 4, kind: output, shape index: {}]
  %s5 = sld [smem:[#allocation0]]
  $region57: #{fwd.23} parent=0
    _
  %s7 = ssub.s32 1, %s5
  %s8 = scalar_select 0, %s7, %s5
  loop: start=0, step=1, limit=8
  $region2: #{fwd.23} parent=0 // loop_pre_header
    _
  $region3: #{fwd.23} parent=0 // loop_header
    %s10 = sphi 0, %s14
    %p11 = scmp.ge.s32.totalorder %s10, 8
    %s17 = sphi 0, %s43
    %s18 = sphi 0, %s39
    %s19 = sphi 0, %s35
    %s20 = sphi 0, %s31
    %s21 = sphi 0, %s17
    %s22 = sphi 0, %s18
    %s23 = sphi 0, %s19
    %s24 = sphi 0, %s20
    %s25 = sphi 0, %s21
    %s26 = sphi 0, %s22
    %s27 = sphi 0, %s23
    %s28 = sphi 0, %s24
    %s50 = sphi 0, %s52
    %s53 = sphi 0, %s50
    %s54 = sphi 0, %s53
    %s70 = sphi 0, %s54
    %s78 = sphi 0, %s80
    %s81 = sphi 0, %s78
    %s82 = sphi 0, %s81
    %s98 = sphi 0, %s82
    %s104 = sphi 0, %s106
    %s107 = sphi 0, %s104
    %s108 = sphi 0, %s107
    %s124 = sphi 0, %s108
    %s130 = sphi 0, %s132
    %s133 = sphi 0, %s130
    %s134 = sphi 0, %s133
    %s150 = sphi 0, %s134
    %s160 = sphi 0, %s162
    %s163 = sphi 0, %s160
    %s164 = sphi 0, %s163
    %s180 = sphi 0, %s164
  $region4: #{fwd.23} parent=0 // loop_header_branch
    %13 = sbr.rel (%p11) target = $region8
  $region5: #{fwd.23} parent=0 // loop_body
    %s15 = ssub.s32 %s10, 1
    %s16 = ssub.s32 %s10, 2
    %s29 = sadd.s32 1, %s20
    %p30 = scmp.ge.s32.totalorder %s29, 1
    %s31 = scalar_select %p30, 0, %s29
    %s32 = sadd.s32 1, %s19
    %s33 = scalar_select %p30, %s32, %s19
    %p34 = scmp.ge.s32.totalorder %s33, 1
    %s35 = scalar_select %p34, 0, %s33
    %s36 = sadd.s32 1, %s18
    %s37 = scalar_select %p34, %s36, %s18
    %p38 = scmp.ge.s32.totalorder %s37, 1
    %s39 = scalar_select %p38, 0, %s37
    %s40 = sadd.s32 1, %s17
    %s41 = scalar_select %p38, %s40, %s17
    %p42 = scmp.ge.s32.totalorder %s41, 6
    %s43 = scalar_select %p42, 0, %s41
    %s44 = ssub.s32 %s17, %s43
    %s45 = ssub.s32 %s18, %s39
    %s46 = sor.u32 %s44, %s45
    %s47 = ssub.s32 %s20, %s31
    %s48 = sor.u32 %s46, %s47
    %p49 = scmp.eq.s32.totalorder %s48, 0
    %s51 = sadd.s32 %s50, 1
    %s52 = scalar_select %p49, %s50, %s51
    %p55 = pneg %p49
    %p56 = scmp.eq.s32.totalorder %s10, 5
    %p57 = por %p55, %p56
    %p58 = scmp.ne.s32.totalorder %s50, %s53
    %p59 = scmp.eq.s32.totalorder %s10, 0
    %p60 = por %p58, %p59
    %p61 = scmp.ne.s32.totalorder %s50, %s53
    %p62 = scmp.eq.s32.totalorder %s15, 5
    %p63 = por %p61, %p62
    %p64 = scmp.ne.s32.totalorder %s53, %s54
    %p65 = scmp.eq.s32.totalorder %s15, 0
    %p66 = por %p64, %p65
    %p67 = scmp.ne.s32.totalorder %s53, %s54
    %p68 = scmp.eq.s32.totalorder %s16, 5
    %p69 = por %p67, %p68
    %p71 = scmp.ne.s32.totalorder %s54, %s70
    %p72 = scmp.eq.s32.totalorder %s16, 0
    %p73 = por %p71, %p72
    %s74 = ssub.s32 %s20, %s31
    %s75 = ssub.s32 %s19, %s35
    %s76 = sor.u32 %s74, %s75
    %p77 = scmp.eq.s32.totalorder %s76, 0
    %s79 = sadd.s32 %s78, 1
    %s80 = scalar_select %p77, %s78, %s79
    %p83 = pneg %p77
    %p84 = scmp.eq.s32.totalorder %s10, 5
    %p85 = por %p83, %p84
    %p86 = scmp.ne.s32.totalorder %s78, %s81
    %p87 = scmp.eq.s32.totalorder %s10, 0
    %p88 = por %p86, %p87
    %p89 = scmp.ne.s32.totalorder %s78, %s81
    %p90 = scmp.eq.s32.totalorder %s15, 5
    %p91 = por %p89, %p90
    %p92 = scmp.ne.s32.totalorder %s81, %s82
    %p93 = scmp.eq.s32.totalorder %s15, 0
    %p94 = por %p92, %p93
    %p95 = scmp.ne.s32.totalorder %s81, %s82
    %p96 = scmp.eq.s32.totalorder %s16, 5
    %p97 = por %p95, %p96
    %p99 = scmp.ne.s32.totalorder %s82, %s98
    %p100 = scmp.eq.s32.totalorder %s16, 0
    %p101 = por %p99, %p100
    %s102 = ssub.s32 %s19, %s35
    %p103 = scmp.eq.s32.totalorder %s102, 0
    %s105 = sadd.s32 %s104, 1
    %s106 = scalar_select %p103, %s104, %s105
    %p109 = pneg %p103
    %p110 = scmp.eq.s32.totalorder %s10, 5
    %p111 = por %p109, %p110
    %p112 = scmp.ne.s32.totalorder %s104, %s107
    %p113 = scmp.eq.s32.totalorder %s10, 0
    %p114 = por %p112, %p113
    %p115 = scmp.ne.s32.totalorder %s104, %s107
    %p116 = scmp.eq.s32.totalorder %s15, 5
    %p117 = por %p115, %p116
    %p118 = scmp.ne.s32.totalorder %s107, %s108
    %p119 = scmp.eq.s32.totalorder %s15, 0
    %p120 = por %p118, %p119
    %p121 = scmp.ne.s32.totalorder %s107, %s108
    %p122 = scmp.eq.s32.totalorder %s16, 5
    %p123 = por %p121, %p122
    %p125 = scmp.ne.s32.totalorder %s108, %s124
    %p126 = scmp.eq.s32.totalorder %s16, 0
    %p127 = por %p125, %p126
    %s128 = ssub.s32 %s19, %s35
    %p129 = scmp.eq.s32.totalorder %s128, 0
    %s131 = sadd.s32 %s130, 1
    %s132 = scalar_select %p129, %s130, %s131
    %p135 = pneg %p129
    %p136 = scmp.eq.s32.totalorder %s10, 5
    %p137 = por %p135, %p136
    %p138 = scmp.ne.s32.totalorder %s130, %s133
    %p139 = scmp.eq.s32.totalorder %s10, 0
    %p140 = por %p138, %p139
    %p141 = scmp.ne.s32.totalorder %s130, %s133
    %p142 = scmp.eq.s32.totalorder %s15, 5
    %p143 = por %p141, %p142
    %p144 = scmp.ne.s32.totalorder %s133, %s134
    %p145 = scmp.eq.s32.totalorder %s15, 0
    %p146 = por %p144, %p145
    %p147 = scmp.ne.s32.totalorder %s133, %s134
    %p148 = scmp.eq.s32.totalorder %s16, 5
    %p149 = por %p147, %p148
    %p151 = scmp.ne.s32.totalorder %s134, %s150
    %p152 = scmp.eq.s32.totalorder %s16, 0
    %p153 = por %p151, %p152
    %s154 = ssub.s32 %s17, %s43
    %s155 = ssub.s32 %s18, %s39
    %s156 = sor.u32 %s154, %s155
    %s157 = ssub.s32 %s19, %s35
    %s158 = sor.u32 %s156, %s157
    %p159 = scmp.eq.s32.totalorder %s158, 0
    %s161 = sadd.s32 %s160, 1
    %s162 = scalar_select %p159, %s160, %s161
    %p165 = pneg %p159
    %p166 = scmp.eq.s32.totalorder %s10, 5
    %p167 = por %p165, %p166
    %p168 = scmp.ne.s32.totalorder %s160, %s163
    %p169 = scmp.eq.s32.totalorder %s10, 0
    %p170 = por %p168, %p169
    %p171 = scmp.ne.s32.totalorder %s160, %s163
    %p172 = scmp.eq.s32.totalorder %s15, 5
    %p173 = por %p171, %p172
    %p174 = scmp.ne.s32.totalorder %s163, %s164
    %p175 = scmp.eq.s32.totalorder %s15, 0
    %p176 = por %p174, %p175
    %p177 = scmp.ne.s32.totalorder %s163, %s164
    %p178 = scmp.eq.s32.totalorder %s16, 5
    %p179 = por %p177, %p178
    %p181 = scmp.ne.s32.totalorder %s164, %s180
    %p182 = scmp.eq.s32.totalorder %s16, 0
    %p183 = por %p181, %p182
    %p184 = scmp.le.s32.totalorder 1, %s10
    %p185 = scmp.lt.s32.totalorder %s10, 7
    %p186 = pnand %p184, %p185
    %p187 = pneg %p186
    // Predicated region
    $region9: #{fwd.23} parent=5 // pred_check
      _
    $region10: #{fwd.23} parent=5 // pred_check_branch
      %189 = sbr.rel (%p186) target = $region12
    $region11: #{fwd.23} parent=5 // pred_region
      %s190 = ssub.s32 %s10, 1
      // Predicated region
      $region13: #{fwd.23} parent=11 // pred_check
        %p191 = pneg %p94
      $region14: #{fwd.23} parent=11 // pred_check_branch
        %193 = sbr.rel (%p191) target = $region16
      $region15: #{fwd.23} parent=11 // pred_region
        %s194 = smul.u32 16, %s24
        %s195 = smul.u32 2, %s23
        %p196 = scmp.lt.s32.totalorder %s194, 15
        %s197 = scalar_select %p196, %s194, 15
        %p198 = scmp.lt.s32.totalorder %s195, 1
        %s199 = scalar_select %p198, %s195, 1
        %s200 = smul.addr %s197, 2
        %s201 = sadd.s32 %s199, %s200
        %s202 = smul.addr %s201, 4
        %s203 = scalar_lea.vmem %s1, %s202
        %s204 = smul.u32 16, %s24
        %s205 = smul.u32 2, %s23
      $region16: #{fwd.23} parent=11 // pred_fallthru
        _
      // Predicated region
      $region17: #{fwd.23} parent=11 // pred_check
        %p206 = pneg %p120
      $region18: #{fwd.23} parent=11 // pred_check_branch
        %208 = sbr.rel (%p206) target = $region20
      $region19: #{fwd.23} parent=11 // pred_region
        %s209 = smul.u32 2, %s23
        %p210 = scmp.lt.s32.totalorder %s209, 1
        %s211 = scalar_select %p210, %s209, 1
        %s212 = scalar_lea.vmem %s2, %s211
        %s213 = smul.u32 2, %s23
      $region20: #{fwd.23} parent=11 // pred_fallthru
        _
      // Predicated region
      $region21: #{fwd.23} parent=11 // pred_check
        %p214 = pneg %p146
      $region22: #{fwd.23} parent=11 // pred_check_branch
        %216 = sbr.rel (%p214) target = $region24
      $region23: #{fwd.23} parent=11 // pred_region
        %s217 = smul.u32 2, %s23
        %p218 = scmp.lt.s32.totalorder %s217, 1
        %s219 = scalar_select %p218, %s217, 1
        %s220 = scalar_lea.vmem %s3, %s219
        %s221 = smul.u32 2, %s23
      $region24: #{fwd.23} parent=11 // pred_fallthru
        _
    $region12: #{fwd.23} parent=5 // pred_fallthru
      _
    %p222 = scmp.lt.s32.totalorder %s10, 6
    // Predicated region
    $region25: #{fwd.23} parent=5 // pred_check
      %p223 = pneg %p222
    $region26: #{fwd.23} parent=5 // pred_check_branch
      %225 = sbr.rel (%p223) target = $region28
    $region27: #{fwd.23} parent=5 // pred_region
      // Predicated region
      $region29: #{fwd.23} parent=27 // pred_check
        %p226 = pneg %p60
      $region30: #{fwd.23} parent=27 // pred_check_branch
        %228 = sbr.rel (%p226) target = $region32
      $region31: #{fwd.23} parent=27 // pred_region
        %s229 = smul.u32 2, %s18
        %p230 = scmp.lt.s32.totalorder %s17, 5
        %s231 = scalar_select %p230, %s17, 5
        %p232 = scmp.lt.s32.totalorder %s229, 1
        %s233 = scalar_select %p232, %s229, 1
        %p234 = scmp.lt.s32.totalorder %s20, 0
        %s235 = scalar_select %p234, %s20, 0
        %s236 = sadd.s32 %s235, %s233
        %s237 = smul.addr %s231, 2
        %s238 = sadd.s32 %s236, %s237
        %s239 = smul.addr %s238, 4
        %s240 = scalar_lea.vmem %s0, %s239
        %s241 = smul.u32 2, %s18
      $region32: #{fwd.23} parent=27 // pred_fallthru
        _
    $region28: #{fwd.23} parent=5 // pred_fallthru
      _
    %p242 = scmp.le.s32.totalorder 1, %s10
    %p243 = scmp.lt.s32.totalorder %s10, 7
    %p244 = pnand %p242, %p243
    %p245 = pneg %p244
    // Predicated region
    $region33: #{fwd.23} parent=5 // pred_check
      _
    $region34: #{fwd.23} parent=5 // pred_check_branch
      %247 = sbr.rel (%p244) target = $region36
    $region35: #{fwd.23} parent=5 // pred_region
      %s248 = ssub.s32 %s10, 1
      %s249 = smul.u32 2, %s22
      %p250 = scmp.lt.s32.totalorder %s21, 5
      %s251 = scalar_select %p250, %s21, 5
      %p252 = scmp.lt.s32.totalorder %s249, 1
      %s253 = scalar_select %p252, %s249, 1
      %p254 = scmp.lt.s32.totalorder %s24, 0
      %s255 = scalar_select %p254, %s24, 0
      %s256 = sadd.s32 %s255, %s253
      %s257 = smul.addr %s251, 2
      %s258 = sadd.s32 %s256, %s257
      %s259 = smul.addr %s258, 4
      %s260 = scalar_lea.vmem %s0, %s259
      %p261 = pneg %p66
      %p262 = pneg %p63
      %s263 = smul.u32 16, %s24
      %s264 = smul.u32 2, %s23
      %p265 = scmp.lt.s32.totalorder %s263, 15
      %s266 = scalar_select %p265, %s263, 15
      %p267 = scmp.lt.s32.totalorder %s264, 1
      %s268 = scalar_select %p267, %s264, 1
      %s269 = smul.addr %s266, 2
      %s270 = sadd.s32 %s268, %s269
      %s271 = smul.addr %s270, 4
      %s272 = scalar_lea.vmem %s1, %s271
      %p273 = pneg %p94
      %p274 = pneg %p91
      %s275 = smul.u32 2, %s23
      %p276 = scmp.lt.s32.totalorder %s275, 1
      %s277 = scalar_select %p276, %s275, 1
      %s278 = scalar_lea.vmem %s2, %s277
      %p279 = pneg %p120
      %p280 = pneg %p117
      %s281 = smul.u32 2, %s23
      %p282 = scmp.lt.s32.totalorder %s281, 1
      %s283 = scalar_select %p282, %s281, 1
      %s284 = scalar_lea.vmem %s3, %s283
      %p285 = pneg %p146
      %p286 = pneg %p143
      %p287 = pneg %p176
      %p288 = pneg %p173
      %s289 = smul.u32 2, %s22
      %s290 = smul.u32 2, %s23
      %p291 = scmp.lt.s32.totalorder %s21, 5
      %s292 = scalar_select %p291, %s21, 5
      %p293 = scmp.lt.s32.totalorder %s289, 1
      %s294 = scalar_select %p293, %s289, 1
      %p295 = scmp.lt.s32.totalorder %s290, 1
      %s296 = scalar_select %p295, %s290, 1
      %s297 = smul.addr %s294, 2
      %s298 = sadd.s32 %s296, %s297
      %s299 = smul.addr %s292, 4
      %s300 = sadd.s32 %s298, %s299
      %s301 = smul.addr %s300, 4
      %s302 = scalar_lea.vmem %s4, %s301
      %s303 = smul.u32 2, %s22
      %p304 = scmp.lt.s32.totalorder %s21, 5
      %s305 = scalar_select %p304, %s21, 5
      %p306 = scmp.lt.s32.totalorder %s303, 1
      %s307 = scalar_select %p306, %s303, 1
      %p308 = scmp.lt.s32.totalorder %s24, 0
      %s309 = scalar_select %p308, %s24, 0
      %s310 = sadd.s32 %s309, %s307
      %s311 = smul.addr %s305, 2
      %s312 = sadd.s32 %s310, %s311
      %s313 = smul.addr %s312, 4
      %s314 = scalar_lea.vmem %s0, %s313
      %s315 = smul.u32 2, %s22
      %s316 = smul.u32 16, %s24
      %s317 = smul.u32 2, %s23
      %p318 = scmp.lt.s32.totalorder %s316, 15
      %s319 = scalar_select %p318, %s316, 15
      %p320 = scmp.lt.s32.totalorder %s317, 1
      %s321 = scalar_select %p320, %s317, 1
      %s322 = smul.addr %s319, 2
      %s323 = sadd.s32 %s321, %s322
      %s324 = smul.addr %s323, 4
      %s325 = scalar_lea.vmem %s1, %s324
      %s326 = smul.u32 16, %s24
      %s327 = smul.u32 2, %s23
      %s328 = smul.u32 2, %s23
      %p329 = scmp.lt.s32.totalorder %s328, 1
      %s330 = scalar_select %p329, %s328, 1
      %s331 = scalar_lea.vmem %s2, %s330
      %s332 = smul.u32 2, %s23
      %s333 = smul.u32 2, %s23
      %p334 = scmp.lt.s32.totalorder %s333, 1
      %s335 = scalar_select %p334, %s333, 1
      %s336 = scalar_lea.vmem %s3, %s335
      %s337 = smul.u32 2, %s23
      %s338 = smul.u32 2, %s22
      %s339 = smul.u32 2, %s23
      %p340 = scmp.lt.s32.totalorder %s21, 5
      %s341 = scalar_select %p340, %s21, 5
      %p342 = scmp.lt.s32.totalorder %s338, 1
      %s343 = scalar_select %p342, %s338, 1
      %p344 = scmp.lt.s32.totalorder %s339, 1
      %s345 = scalar_select %p344, %s339, 1
      %s346 = smul.addr %s343, 2
      %s347 = sadd.s32 %s345, %s346
      %s348 = smul.addr %s341, 4
      %s349 = sadd.s32 %s347, %s348
      %s350 = smul.addr %s349, 4
      %s351 = scalar_lea.vmem %s4, %s350
      %s352 = smul.u32 2, %s22
      %s353 = smul.u32 2, %s23
      %p355 = scmp.eq.s32.totalorder %s24, 0
      // Predicated region
      $region37: #{fwd.23} parent=35 // pred_check
        %p356 = pneg %p355
      $region38: #{fwd.23} parent=35 // pred_check_branch
        %358 = sbr.rel (%p356) target = $region40
      $region39: #{fwd.23} parent=35 // pred_region
        %359 = vst [vmem:[#allocation2] sm:$0xff] 0.0
        %360 = vst [vmem:[#allocation2 + $0x8] sm:$0xff] 0.0
        %361 = vst [vmem:[#allocation2 + $0x10] sm:$0xff] 0.0
        %362 = vst [vmem:[#allocation2 + $0x18] sm:$0xff] 0.0
      $region40: #{fwd.23} parent=35 // pred_fallthru
        _
      %v363 = vld [vmem:[%s314] sm:$0xf]
      %v364 = vld [vmem:[%s314 + $0x4] sm:$0xf]
      %v365 = vld [vmem:[#allocation2] sm:$0xff]
      %v366 = vld [vmem:[#allocation2 + $0x8] sm:$0xff]
      %v367 = vld [vmem:[#allocation2 + $0x10] sm:$0xff]
      %v368 = vld [vmem:[#allocation2 + $0x18] sm:$0xff]
      %v369 = vld [vmem:[%s325] sm:$0xff]
      %v370 = vld [vmem:[%s325 + $0x8] sm:$0xff]
      %v371 = vld [vmem:[%s325 + $0x10] sm:$0xff]
      %v372 = vld [vmem:[%s325 + $0x18] sm:$0xff]
      %v373 = vld [vmem:[%s325 + $0x20] sm:$0xff]
      %v374 = vld [vmem:[%s325 + $0x28] sm:$0xff]
      %v375 = vld [vmem:[%s325 + $0x30] sm:$0xff]
      %v376 = vld [vmem:[%s325 + $0x38] sm:$0xff]
      %v377 = vld [vmem:[%s325 + $0x40] sm:$0xff]
      %v378 = vld [vmem:[%s325 + $0x48] sm:$0xff]
      %v379 = vld [vmem:[%s325 + $0x50] sm:$0xff]
      %v380 = vld [vmem:[%s325 + $0x58] sm:$0xff]
      %v381 = vld [vmem:[%s325 + $0x60] sm:$0xff]
      %v382 = vld [vmem:[%s325 + $0x68] sm:$0xff]
      %v383 = vld [vmem:[%s325 + $0x70] sm:$0xff]
      %v384 = vld [vmem:[%s325 + $0x78] sm:$0xff]
      %v387 = vunpack.c.l.b16 %v363
      %v388 = vunpack.c.l.b16 %v364
      %v389 = vpack.c.b16 %v388, %v387
      %v407 = vunpack.c.l.b16 %v369
      %v408 = vunpack.c.h.b16 %v369
      %v409 = vunpack.c.l.b16 %v370
      %v410 = vunpack.c.h.b16 %v370
      %v411 = vunpack.c.l.b16 %v371
      %v412 = vunpack.c.h.b16 %v371
      %v413 = vunpack.c.l.b16 %v372
      %v414 = vunpack.c.h.b16 %v372
      %v415 = vunpack.c.l.b16 %v373
      %v416 = vunpack.c.h.b16 %v373
      %v417 = vunpack.c.l.b16 %v374
      %v418 = vunpack.c.h.b16 %v374
      %v419 = vunpack.c.l.b16 %v375
      %v420 = vunpack.c.h.b16 %v375
      %v421 = vunpack.c.l.b16 %v376
      %v422 = vunpack.c.h.b16 %v376
      %v423 = vunpack.c.l.b16 %v377
      %v424 = vunpack.c.h.b16 %v377
      %v425 = vunpack.c.l.b16 %v378
      %v426 = vunpack.c.h.b16 %v378
      %v427 = vunpack.c.l.b16 %v379
      %v428 = vunpack.c.h.b16 %v379
      %v429 = vunpack.c.l.b16 %v380
      %v430 = vunpack.c.h.b16 %v380
      %v431 = vunpack.c.l.b16 %v381
      %v432 = vunpack.c.h.b16 %v381
      %v433 = vunpack.c.l.b16 %v382
      %v434 = vunpack.c.h.b16 %v382
      %v435 = vunpack.c.l.b16 %v383
      %v436 = vunpack.c.h.b16 %v383
      %v437 = vunpack.c.l.b16 %v384
      %v438 = vunpack.c.h.b16 %v384
      %v439 = vpack.c.b16 %v409, %v407
      %v440 = vpack.c.b16 %v410, %v408
      %v441 = vpack.c.b16 %v413, %v411
      %v442 = vpack.c.b16 %v414, %v412
      %v443 = vpack.c.b16 %v417, %v415
      %v444 = vpack.c.b16 %v418, %v416
      %v445 = vpack.c.b16 %v421, %v419
      %v446 = vpack.c.b16 %v422, %v420
      %v447 = vpack.c.b16 %v425, %v423
      %v448 = vpack.c.b16 %v426, %v424
      %v449 = vpack.c.b16 %v429, %v427
      %v450 = vpack.c.b16 %v430, %v428
      %v451 = vpack.c.b16 %v433, %v431
      %v452 = vpack.c.b16 %v434, %v432
      %v453 = vpack.c.b16 %v437, %v435
      %v454 = vpack.c.b16 %v438, %v436
      %471 = vmatprep.subr.bf16.mxu0 %v454
      %472 = vmatpush1.bf16.msra.mxu0 %v453
      %473 = vmatprep.subr.bf16.mxu0 %v452
      %474 = vmatpush1.bf16.msra.mxu0 %v451
      %475 = vmatprep.subr.bf16.mxu0 %v450
      %476 = vmatpush1.bf16.msra.mxu0 %v449
      %477 = vmatprep.subr.bf16.mxu0 %v448
      %478 = vmatpush1.bf16.msra.mxu0 %v447
      %479 = vmatprep.subr.bf16.mxu0 %v446
      %480 = vmatpush1.bf16.msra.mxu0 %v445
      %481 = vmatprep.subr.bf16.mxu0 %v444
      %482 = vmatpush1.bf16.msra.mxu0 %v443
      %483 = vmatprep.subr.bf16.mxu0 %v442
      %484 = vmatpush1.bf16.msra.mxu0 %v441
      %485 = vmatprep.subr.bf16.mxu0 %v440
      %486 = vmatpush1.bf16.msra.mxu0 %v439
      %487 = vmatprep.subr.bf16.mxu0 0
      %488 = vmatpush2.bf16.msra.mxu0 0
      %489 = vmatprep.subr.bf16.mxu0 0
      %490 = vmatpush2.bf16.msra.mxu0 0
      %491 = vmatprep.subr.bf16.mxu0 0
      %492 = vmatpush2.bf16.msra.mxu0 0
      %493 = vmatprep.subr.bf16.mxu0 0
      %494 = vmatpush2.bf16.msra.mxu0 0
      %495 = vmatprep.subr.bf16.mxu0 0
      %496 = vmatpush2.bf16.msra.mxu0 0
      %497 = vmatprep.subr.bf16.mxu0 0
      %498 = vmatpush2.bf16.msra.mxu0 0
      %499 = vmatprep.subr.bf16.mxu0 0
      %500 = vmatpush2.bf16.msra.mxu0 0
      %501 = vmatprep.subr.bf16.mxu0 0
      %502 = vmatpush2.bf16.msra.mxu0 0
      %503 = vmatprep.mubr.bf16.mxu0 0
      %504 = vmatmul.mubr.bf16.gmra.mxu0 %v389
      %v505 = vpop.f32.mrf.mxu0
      %v506 = vadd.f32 0.0, %v505
      %v507 = vpop.f32.mrf.mxu0
      %v508 = vadd.f32 0.0, %v507
      %v509 = vpop.f32.mrf.mxu0
      %v510 = vadd.f32 0.0, %v509
      %v511 = vpop.f32.mrf.mxu0
      %v512 = vadd.f32 0.0, %v511
      %513 = vdwg.mxu0
      %v514 = vadd.f32 %v365, %v506
      %v515 = vadd.f32 %v366, %v508
      %v516 = vadd.f32 %v367, %v510
      %v517 = vadd.f32 %v368, %v512
      %518 = vst [vmem:[#allocation2] sm:$0xff] %v514
      %519 = vst [vmem:[#allocation2 + $0x8] sm:$0xff] %v515
      %520 = vst [vmem:[#allocation2 + $0x10] sm:$0xff] %v516
      %521 = vst [vmem:[#allocation2 + $0x18] sm:$0xff] %v517
      // Predicated region
      $region41: #{fwd.23} parent=35 // pred_check
        %p522 = pneg %p355
      $region42: #{fwd.23} parent=35 // pred_check_branch
        %524 = sbr.rel (%p522) target = $region44
      $region43: #{fwd.23} parent=35 // pred_region
        %v525 = vld [vmem:[#allocation2] sm:$0xff]
        %v526 = vld [vmem:[#allocation2 + $0x8] sm:$0xff]
        %v527 = vld [vmem:[#allocation2 + $0x10] sm:$0xff]
        %v528 = vld [vmem:[#allocation2 + $0x18] sm:$0xff]
        %v529 = vld [vmem:[%s331] sm:$0x3]
        %v531 = vlaneseq
        %v532 = vshrl.u32 %v531, 7
        %v533 = vsub.s32 0, %v532
        %v534 = vrot.slane %v529, %v533
        %v535 = vlaneseq
        %v536 = vshrl.u32 %v535, 7
        %v537 = vsub.s32 1, %v536
        %v538 = vrot.slane %v529, %v537
        %v541 = vmul.f32 %v525, %v534
        %v542 = vmul.f32 %v526, %v538
        %v543 = vmul.f32 %v527, %v534
        %v544 = vmul.f32 %v528, %v538
        %v545 = vld [vmem:[%s336] sm:$0x3]
        %v547 = vlaneseq
        %v548 = vshrl.u32 %v547, 7
        %v549 = vsub.s32 0, %v548
        %v550 = vrot.slane %v545, %v549
        %v551 = vlaneseq
        %v552 = vshrl.u32 %v551, 7
        %v553 = vsub.s32 1, %v552
        %v554 = vrot.slane %v545, %v553
        %v557 = vadd.f32 %v541, %v550
        %v558 = vadd.f32 %v542, %v554
        %v559 = vadd.f32 %v543, %v550
        %v560 = vadd.f32 %v544, %v554
        %v561 = vxor.u32 %v557, 2147483648
        %v562 = vxor.u32 %v558, 2147483648
        %v563 = vxor.u32 %v559, 2147483648
        %v564 = vxor.u32 %v560, 2147483648
        %v565 = vmul.f32 %v561, 1.442695
        %v566 = vpow.pop %v565
        %v567 = vmul.f32 %v562, 1.442695
        %v568 = vpow.pop %v567
        %v569 = vmul.f32 %v563, 1.442695
        %v570 = vpow.pop %v569
        %v571 = vmul.f32 %v564, 1.442695
        %v572 = vpow.pop %v571
        %v573 = vadd.f32 %v566, 1.0
        %v574 = vadd.f32 %v568, 1.0
        %v575 = vadd.f32 %v570, 1.0
        %v576 = vadd.f32 %v572, 1.0
        %v577 = vrcp.pop %v573
        %v578 = vmul.f32 1.0, %v577
        %v579 = vrcp.pop %v574
        %v580 = vmul.f32 1.0, %v579
        %v581 = vrcp.pop %v575
        %v582 = vmul.f32 1.0, %v581
        %v583 = vrcp.pop %v576
        %v584 = vmul.f32 1.0, %v583
        %v585 = vmul.f32 %v557, %v578
        %v586 = vmul.f32 %v558, %v580
        %v587 = vmul.f32 %v559, %v582
        %v588 = vmul.f32 %v560, %v584
        %v589 = vpack.c.bf16 %v587, %v585
        %v590 = vpack.c.bf16 %v588, %v586
        %v593 = vunpack.c.l.b16 %v589
        %v594 = vunpack.c.l.b16 %v590
        %v595 = vunpack.c.h.b16 %v589
        %v596 = vunpack.c.h.b16 %v590
        %v597 = vpack.c.b16 %v594, %v593
        %v598 = vpack.c.b16 %v596, %v595
        %601 = vst [vmem:[%s351] sm:$0xff] %v597
        %602 = vst [vmem:[%s351 + $0x8] sm:$0xff] %v598
      $region44: #{fwd.23} parent=35 // pred_fallthru
        _
      %s603 = smul.u32 2, %s22
      %s604 = smul.u32 2, %s23
      %p605 = scmp.lt.s32.totalorder %s21, 5
      %s606 = scalar_select %p605, %s21, 5
      %p607 = scmp.lt.s32.totalorder %s603, 1
      %s608 = scalar_select %p607, %s603, 1
      %p609 = scmp.lt.s32.totalorder %s604, 1
      %s610 = scalar_select %p609, %s604, 1
      %s611 = smul.addr %s608, 2
      %s612 = sadd.s32 %s610, %s611
      %s613 = smul.addr %s606, 4
      %s614 = sadd.s32 %s612, %s613
      %s615 = smul.addr %s614, 4
      %s616 = scalar_lea.vmem %s4, %s615
      // Predicated region
      $region45: #{fwd.23} parent=35 // pred_check
        %p617 = pneg %p173
      $region46: #{fwd.23} parent=35 // pred_check_branch
        %619 = sbr.rel (%p617) target = $region48
      $region47: #{fwd.23} parent=35 // pred_region
        %s620 = smul.u32 2, %s22
        %s621 = smul.u32 2, %s23
      $region48: #{fwd.23} parent=35 // pred_fallthru
        _
    $region36: #{fwd.23} parent=5 // pred_fallthru
      _
    %p622 = scmp.le.s32.totalorder 2, %s10
    // Predicated region
    $region49: #{fwd.23} parent=5 // pred_check
      %p623 = pneg %p622
    $region50: #{fwd.23} parent=5 // pred_check_branch
      %625 = sbr.rel (%p623) target = $region52
    $region51: #{fwd.23} parent=5 // pred_region
      %s626 = ssub.s32 %s10, 2
      // Predicated region
      $region53: #{fwd.23} parent=51 // pred_check
        %p627 = pneg %p179
      $region54: #{fwd.23} parent=51 // pred_check_branch
        %629 = sbr.rel (%p627) target = $region56
      $region55: #{fwd.23} parent=51 // pred_region
        %s630 = smul.u32 2, %s26
        %s631 = smul.u32 2, %s27
        %p632 = scmp.lt.s32.totalorder %s25, 5
        %s633 = scalar_select %p632, %s25, 5
        %p634 = scmp.lt.s32.totalorder %s630, 1
        %s635 = scalar_select %p634, %s630, 1
        %p636 = scmp.lt.s32.totalorder %s631, 1
        %s637 = scalar_select %p636, %s631, 1
        %s638 = smul.addr %s635, 2
        %s639 = sadd.s32 %s637, %s638
        %s640 = smul.addr %s633, 4
        %s641 = sadd.s32 %s639, %s640
        %s642 = smul.addr %s641, 4
        %s643 = scalar_lea.vmem %s4, %s642
      $region56: #{fwd.23} parent=51 // pred_fallthru
        _
    $region52: #{fwd.23} parent=5 // pred_fallthru
      _
  $region6: #{fwd.23} parent=0 // loop_footer
    %s14 = sadd.s32 1, %s10
  $region7: #{fwd.23} parent=0 // loop_footer_branch
    %9 = sbr.rel target = $region3
  $region8: #{fwd.23} parent=0 // loop_exit
    _

// kernel: fwd.22
$region0: #{fwd.22}
  #allocation0 [shape = 'u32[]', space=smem, size = 0x4, offset = 0x4, fixed_abs, tag = 'smem constant byte address 0x4 - core index']
  #allocation1 [shape = 'u32[144,128]{1,0:T(1,128)}', space=vmem, size = 0x12000, scoped, tag = 'internal scratch']
  #allocation2 [shape = 'f32[16,128]{1,0:T(8,128)}', space=vmem, size = 0x2000, scoped, tag = 'scratch operand']
  %s0 = inlined_call_operand.vmem [shape: bf16[6,16,128], index: 0, kind: input, shape index: {}]
  %s1 = inlined_call_operand.vmem [shape: bf16[128,128], index: 1, kind: input, shape index: {}]
  %s2 = inlined_call_operand.vmem [shape: f32[1,128], index: 2, kind: input, shape index: {}]
  %s3 = inlined_call_operand.vmem [shape: f32[1,128], index: 3, kind: input, shape index: {}]
  %s4 = inlined_call_operand.vmem [shape: f32[6,1,128], index: 4, kind: input, shape index: {}]
  %s5 = inlined_call_operand.vmem [shape: bf16[6,16,128], index: 5, kind: output, shape index: {}]
  %s6 = sld [smem:[#allocation0]]
  $region61: #{fwd.22} parent=0
    _
  %s8 = ssub.s32 1, %s6
  %s9 = scalar_select 0, %s8, %s6
  loop: start=0, step=1, limit=8
  $region2: #{fwd.22} parent=0 // loop_pre_header
    _
  $region3: #{fwd.22} parent=0 // loop_header
    %s11 = sphi 0, %s15
    %p12 = scmp.ge.s32.totalorder %s11, 8
    %s18 = sphi 0, %s44
    %s19 = sphi 0, %s40
    %s20 = sphi 0, %s36
    %s21 = sphi 0, %s32
    %s22 = sphi 0, %s18
    %s23 = sphi 0, %s19
    %s24 = sphi 0, %s20
    %s25 = sphi 0, %s21
    %s26 = sphi 0, %s22
    %s27 = sphi 0, %s23
    %s28 = sphi 0, %s24
    %s29 = sphi 0, %s25
    %s51 = sphi 0, %s53
    %s54 = sphi 0, %s51
    %s55 = sphi 0, %s54
    %s71 = sphi 0, %s55
    %s79 = sphi 0, %s81
    %s82 = sphi 0, %s79
    %s83 = sphi 0, %s82
    %s99 = sphi 0, %s83
    %s105 = sphi 0, %s107
    %s108 = sphi 0, %s105
    %s109 = sphi 0, %s108
    %s125 = sphi 0, %s109
    %s131 = sphi 0, %s133
    %s134 = sphi 0, %s131
    %s135 = sphi 0, %s134
    %s151 = sphi 0, %s135
    %s159 = sphi 0, %s161
    %s162 = sphi 0, %s159
    %s163 = sphi 0, %s162
    %s179 = sphi 0, %s163
    %s189 = sphi 0, %s191
    %s192 = sphi 0, %s189
    %s193 = sphi 0, %s192
    %s209 = sphi 0, %s193
  $region4: #{fwd.22} parent=0 // loop_header_branch
    %14 = sbr.rel (%p12) target = $region8
  $region5: #{fwd.22} parent=0 // loop_body
    %s16 = ssub.s32 %s11, 1
    %s17 = ssub.s32 %s11, 2
    %s30 = sadd.s32 1, %s21
    %p31 = scmp.ge.s32.totalorder %s30, 1
    %s32 = scalar_select %p31, 0, %s30
    %s33 = sadd.s32 1, %s20
    %s34 = scalar_select %p31, %s33, %s20
    %p35 = scmp.ge.s32.totalorder %s34, 1
    %s36 = scalar_select %p35, 0, %s34
    %s37 = sadd.s32 1, %s19
    %s38 = scalar_select %p35, %s37, %s19
    %p39 = scmp.ge.s32.totalorder %s38, 1
    %s40 = scalar_select %p39, 0, %s38
    %s41 = sadd.s32 1, %s18
    %s42 = scalar_select %p39, %s41, %s18
    %p43 = scmp.ge.s32.totalorder %s42, 6
    %s44 = scalar_select %p43, 0, %s42
    %s45 = ssub.s32 %s18, %s44
    %s46 = ssub.s32 %s19, %s40
    %s47 = sor.u32 %s45, %s46
    %s48 = ssub.s32 %s21, %s32
    %s49 = sor.u32 %s47, %s48
    %p50 = scmp.eq.s32.totalorder %s49, 0
    %s52 = sadd.s32 %s51, 1
    %s53 = scalar_select %p50, %s51, %s52
    %p56 = pneg %p50
    %p57 = scmp.eq.s32.totalorder %s11, 5
    %p58 = por %p56, %p57
    %p59 = scmp.ne.s32.totalorder %s51, %s54
    %p60 = scmp.eq.s32.totalorder %s11, 0
    %p61 = por %p59, %p60
    %p62 = scmp.ne.s32.totalorder %s51, %s54
    %p63 = scmp.eq.s32.totalorder %s16, 5
    %p64 = por %p62, %p63
    %p65 = scmp.ne.s32.totalorder %s54, %s55
    %p66 = scmp.eq.s32.totalorder %s16, 0
    %p67 = por %p65, %p66
    %p68 = scmp.ne.s32.totalorder %s54, %s55
    %p69 = scmp.eq.s32.totalorder %s17, 5
    %p70 = por %p68, %p69
    %p72 = scmp.ne.s32.totalorder %s55, %s71
    %p73 = scmp.eq.s32.totalorder %s17, 0
    %p74 = por %p72, %p73
    %s75 = ssub.s32 %s21, %s32
    %s76 = ssub.s32 %s20, %s36
    %s77 = sor.u32 %s75, %s76
    %p78 = scmp.eq.s32.totalorder %s77, 0
    %s80 = sadd.s32 %s79, 1
    %s81 = scalar_select %p78, %s79, %s80
    %p84 = pneg %p78
    %p85 = scmp.eq.s32.totalorder %s11, 5
    %p86 = por %p84, %p85
    %p87 = scmp.ne.s32.totalorder %s79, %s82
    %p88 = scmp.eq.s32.totalorder %s11, 0
    %p89 = por %p87, %p88
    %p90 = scmp.ne.s32.totalorder %s79, %s82
    %p91 = scmp.eq.s32.totalorder %s16, 5
    %p92 = por %p90, %p91
    %p93 = scmp.ne.s32.totalorder %s82, %s83
    %p94 = scmp.eq.s32.totalorder %s16, 0
    %p95 = por %p93, %p94
    %p96 = scmp.ne.s32.totalorder %s82, %s83
    %p97 = scmp.eq.s32.totalorder %s17, 5
    %p98 = por %p96, %p97
    %p100 = scmp.ne.s32.totalorder %s83, %s99
    %p101 = scmp.eq.s32.totalorder %s17, 0
    %p102 = por %p100, %p101
    %s103 = ssub.s32 %s20, %s36
    %p104 = scmp.eq.s32.totalorder %s103, 0
    %s106 = sadd.s32 %s105, 1
    %s107 = scalar_select %p104, %s105, %s106
    %p110 = pneg %p104
    %p111 = scmp.eq.s32.totalorder %s11, 5
    %p112 = por %p110, %p111
    %p113 = scmp.ne.s32.totalorder %s105, %s108
    %p114 = scmp.eq.s32.totalorder %s11, 0
    %p115 = por %p113, %p114
    %p116 = scmp.ne.s32.totalorder %s105, %s108
    %p117 = scmp.eq.s32.totalorder %s16, 5
    %p118 = por %p116, %p117
    %p119 = scmp.ne.s32.totalorder %s108, %s109
    %p120 = scmp.eq.s32.totalorder %s16, 0
    %p121 = por %p119, %p120
    %p122 = scmp.ne.s32.totalorder %s108, %s109
    %p123 = scmp.eq.s32.totalorder %s17, 5
    %p124 = por %p122, %p123
    %p126 = scmp.ne.s32.totalorder %s109, %s125
    %p127 = scmp.eq.s32.totalorder %s17, 0
    %p128 = por %p126, %p127
    %s129 = ssub.s32 %s20, %s36
    %p130 = scmp.eq.s32.totalorder %s129, 0
    %s132 = sadd.s32 %s131, 1
    %s133 = scalar_select %p130, %s131, %s132
    %p136 = pneg %p130
    %p137 = scmp.eq.s32.totalorder %s11, 5
    %p138 = por %p136, %p137
    %p139 = scmp.ne.s32.totalorder %s131, %s134
    %p140 = scmp.eq.s32.totalorder %s11, 0
    %p141 = por %p139, %p140
    %p142 = scmp.ne.s32.totalorder %s131, %s134
    %p143 = scmp.eq.s32.totalorder %s16, 5
    %p144 = por %p142, %p143
    %p145 = scmp.ne.s32.totalorder %s134, %s135
    %p146 = scmp.eq.s32.totalorder %s16, 0
    %p147 = por %p145, %p146
    %p148 = scmp.ne.s32.totalorder %s134, %s135
    %p149 = scmp.eq.s32.totalorder %s17, 5
    %p150 = por %p148, %p149
    %p152 = scmp.ne.s32.totalorder %s135, %s151
    %p153 = scmp.eq.s32.totalorder %s17, 0
    %p154 = por %p152, %p153
    %s155 = ssub.s32 %s18, %s44
    %s156 = ssub.s32 %s21, %s32
    %s157 = sor.u32 %s155, %s156
    %p158 = scmp.eq.s32.totalorder %s157, 0
    %s160 = sadd.s32 %s159, 1
    %s161 = scalar_select %p158, %s159, %s160
    %p164 = pneg %p158
    %p165 = scmp.eq.s32.totalorder %s11, 5
    %p166 = por %p164, %p165
    %p167 = scmp.ne.s32.totalorder %s159, %s162
    %p168 = scmp.eq.s32.totalorder %s11, 0
    %p169 = por %p167, %p168
    %p170 = scmp.ne.s32.totalorder %s159, %s162
    %p171 = scmp.eq.s32.totalorder %s16, 5
    %p172 = por %p170, %p171
    %p173 = scmp.ne.s32.totalorder %s162, %s163
    %p174 = scmp.eq.s32.totalorder %s16, 0
    %p175 = por %p173, %p174
    %p176 = scmp.ne.s32.totalorder %s162, %s163
    %p177 = scmp.eq.s32.totalorder %s17, 5
    %p178 = por %p176, %p177
    %p180 = scmp.ne.s32.totalorder %s163, %s179
    %p181 = scmp.eq.s32.totalorder %s17, 0
    %p182 = por %p180, %p181
    %s183 = ssub.s32 %s18, %s44
    %s184 = ssub.s32 %s19, %s40
    %s185 = sor.u32 %s183, %s184
    %s186 = ssub.s32 %s20, %s36
    %s187 = sor.u32 %s185, %s186
    %p188 = scmp.eq.s32.totalorder %s187, 0
    %s190 = sadd.s32 %s189, 1
    %s191 = scalar_select %p188, %s189, %s190
    %p194 = pneg %p188
    %p195 = scmp.eq.s32.totalorder %s11, 5
    %p196 = por %p194, %p195
    %p197 = scmp.ne.s32.totalorder %s189, %s192
    %p198 = scmp.eq.s32.totalorder %s11, 0
    %p199 = por %p197, %p198
    %p200 = scmp.ne.s32.totalorder %s189, %s192
    %p201 = scmp.eq.s32.totalorder %s16, 5
    %p202 = por %p200, %p201
    %p203 = scmp.ne.s32.totalorder %s192, %s193
    %p204 = scmp.eq.s32.totalorder %s16, 0
    %p205 = por %p203, %p204
    %p206 = scmp.ne.s32.totalorder %s192, %s193
    %p207 = scmp.eq.s32.totalorder %s17, 5
    %p208 = por %p206, %p207
    %p210 = scmp.ne.s32.totalorder %s193, %s209
    %p211 = scmp.eq.s32.totalorder %s17, 0
    %p212 = por %p210, %p211
    %p213 = scmp.le.s32.totalorder 1, %s11
    %p214 = scmp.lt.s32.totalorder %s11, 7
    %p215 = pnand %p213, %p214
    %p216 = pneg %p215
    // Predicated region
    $region9: #{fwd.22} parent=5 // pred_check
      _
    $region10: #{fwd.22} parent=5 // pred_check_branch
      %218 = sbr.rel (%p215) target = $region12
    $region11: #{fwd.22} parent=5 // pred_region
      %s219 = ssub.s32 %s11, 1
      // Predicated region
      $region13: #{fwd.22} parent=11 // pred_check
        %p220 = pneg %p95
      $region14: #{fwd.22} parent=11 // pred_check_branch
        %222 = sbr.rel (%p220) target = $region16
      $region15: #{fwd.22} parent=11 // pred_region
        %s223 = smul.u32 16, %s25
        %p224 = scmp.lt.s32.totalorder %s223, 15
        %s225 = scalar_select %p224, %s223, 15
        %p226 = scmp.lt.s32.totalorder %s24, 0
        %s227 = scalar_select %p226, %s24, 0
        %s228 = sadd.s32 %s227, %s225
        %s229 = smul.addr %s228, 4
        %s230 = scalar_lea.vmem %s1, %s229
        %s231 = smul.u32 16, %s25
      $region16: #{fwd.22} parent=11 // pred_fallthru
        _
      // Predicated region
      $region17: #{fwd.22} parent=11 // pred_check
        %p232 = pneg %p121
      $region18: #{fwd.22} parent=11 // pred_check_branch
        %234 = sbr.rel (%p232) target = $region20
      $region19: #{fwd.22} parent=11 // pred_region
        %p235 = scmp.lt.s32.totalorder %s24, 0
        %s236 = scalar_select %p235, %s24, 0
        %s237 = scalar_lea.vmem %s2, %s236
      $region20: #{fwd.22} parent=11 // pred_fallthru
        _
      // Predicated region
      $region21: #{fwd.22} parent=11 // pred_check
        %p238 = pneg %p147
      $region22: #{fwd.22} parent=11 // pred_check_branch
        %240 = sbr.rel (%p238) target = $region24
      $region23: #{fwd.22} parent=11 // pred_region
        %p241 = scmp.lt.s32.totalorder %s24, 0
        %s242 = scalar_select %p241, %s24, 0
        %s243 = scalar_lea.vmem %s3, %s242
      $region24: #{fwd.22} parent=11 // pred_fallthru
        _
    $region12: #{fwd.22} parent=5 // pred_fallthru
      _
    %p244 = scmp.lt.s32.totalorder %s11, 6
    // Predicated region
    $region25: #{fwd.22} parent=5 // pred_check
      %p245 = pneg %p244
    $region26: #{fwd.22} parent=5 // pred_check_branch
      %247 = sbr.rel (%p245) target = $region28
    $region27: #{fwd.22} parent=5 // pred_region
      // Predicated region
      $region29: #{fwd.22} parent=27 // pred_check
        %p248 = pneg %p61
      $region30: #{fwd.22} parent=27 // pred_check_branch
        %250 = sbr.rel (%p248) target = $region32
      $region31: #{fwd.22} parent=27 // pred_region
        %s251 = smul.u32 2, %s19
        %p252 = scmp.lt.s32.totalorder %s18, 5
        %s253 = scalar_select %p252, %s18, 5
        %p254 = scmp.lt.s32.totalorder %s251, 1
        %s255 = scalar_select %p254, %s251, 1
        %p256 = scmp.lt.s32.totalorder %s21, 0
        %s257 = scalar_select %p256, %s21, 0
        %s258 = sadd.s32 %s257, %s255
        %s259 = smul.addr %s253, 2
        %s260 = sadd.s32 %s258, %s259
        %s261 = smul.addr %s260, 4
        %s262 = scalar_lea.vmem %s0, %s261
        %s263 = smul.u32 2, %s19
      $region32: #{fwd.22} parent=27 // pred_fallthru
        _
      // Predicated region
      $region33: #{fwd.22} parent=27 // pred_check
        %p264 = pneg %p169
      $region34: #{fwd.22} parent=27 // pred_check_branch
        %266 = sbr.rel (%p264) target = $region36
      $region35: #{fwd.22} parent=27 // pred_region
        %p267 = scmp.lt.s32.totalorder %s18, 5
        %s268 = scalar_select %p267, %s18, 5
        %p269 = scmp.lt.s32.totalorder %s21, 0
        %s270 = scalar_select %p269, %s21, 0
        %s271 = sadd.s32 %s270, %s268
        %s272 = scalar_lea.vmem %s4, %s271
      $region36: #{fwd.22} parent=27 // pred_fallthru
        _
    $region28: #{fwd.22} parent=5 // pred_fallthru
      _
    %p273 = scmp.le.s32.totalorder 1, %s11
    %p274 = scmp.lt.s32.totalorder %s11, 7
    %p275 = pnand %p273, %p274
    %p276 = pneg %p275
    // Predicated region
    $region37: #{fwd.22} parent=5 // pred_check
      _
    $region38: #{fwd.22} parent=5 // pred_check_branch
      %278 = sbr.rel (%p275) target = $region40
    $region39: #{fwd.22} parent=5 // pred_region
      %s279 = ssub.s32 %s11, 1
      %s280 = smul.u32 2, %s23
      %p281 = scmp.lt.s32.totalorder %s22, 5
      %s282 = scalar_select %p281, %s22, 5
      %p283 = scmp.lt.s32.totalorder %s280, 1
      %s284 = scalar_select %p283, %s280, 1
      %p285 = scmp.lt.s32.totalorder %s25, 0
      %s286 = scalar_select %p285, %s25, 0
      %s287 = sadd.s32 %s286, %s284
      %s288 = smul.addr %s282, 2
      %s289 = sadd.s32 %s287, %s288
      %s290 = smul.addr %s289, 4
      %s291 = scalar_lea.vmem %s0, %s290
      %p292 = pneg %p67
      %p293 = pneg %p64
      %s294 = smul.u32 16, %s25
      %p295 = scmp.lt.s32.totalorder %s294, 15
      %s296 = scalar_select %p295, %s294, 15
      %p297 = scmp.lt.s32.totalorder %s24, 0
      %s298 = scalar_select %p297, %s24, 0
      %s299 = sadd.s32 %s298, %s296
      %s300 = smul.addr %s299, 4
      %s301 = scalar_lea.vmem %s1, %s300
      %p302 = pneg %p95
      %p303 = pneg %p92
      %p304 = scmp.lt.s32.totalorder %s24, 0
      %s305 = scalar_select %p304, %s24, 0
      %s306 = scalar_lea.vmem %s2, %s305
      %p307 = pneg %p121
      %p308 = pneg %p118
      %p309 = scmp.lt.s32.totalorder %s24, 0
      %s310 = scalar_select %p309, %s24, 0
      %s311 = scalar_lea.vmem %s3, %s310
      %p312 = pneg %p147
      %p313 = pneg %p144
      %p314 = scmp.lt.s32.totalorder %s22, 5
      %s315 = scalar_select %p314, %s22, 5
      %p316 = scmp.lt.s32.totalorder %s25, 0
      %s317 = scalar_select %p316, %s25, 0
      %s318 = sadd.s32 %s317, %s315
      %s319 = scalar_lea.vmem %s4, %s318
      %p320 = pneg %p175
      %p321 = pneg %p172
      %p322 = pneg %p205
      %p323 = pneg %p202
      %s324 = smul.u32 2, %s23
      %p325 = scmp.lt.s32.totalorder %s22, 5
      %s326 = scalar_select %p325, %s22, 5
      %p327 = scmp.lt.s32.totalorder %s324, 1
      %s328 = scalar_select %p327, %s324, 1
      %p329 = scmp.lt.s32.totalorder %s24, 0
      %s330 = scalar_select %p329, %s24, 0
      %s331 = sadd.s32 %s330, %s328
      %s332 = smul.addr %s326, 2
      %s333 = sadd.s32 %s331, %s332
      %s334 = smul.addr %s333, 4
      %s335 = scalar_lea.vmem %s5, %s334
      %s336 = smul.u32 2, %s23
      %p337 = scmp.lt.s32.totalorder %s22, 5
      %s338 = scalar_select %p337, %s22, 5
      %p339 = scmp.lt.s32.totalorder %s336, 1
      %s340 = scalar_select %p339, %s336, 1
      %p341 = scmp.lt.s32.totalorder %s25, 0
      %s342 = scalar_select %p341, %s25, 0
      %s343 = sadd.s32 %s342, %s340
      %s344 = smul.addr %s338, 2
      %s345 = sadd.s32 %s343, %s344
      %s346 = smul.addr %s345, 4
      %s347 = scalar_lea.vmem %s0, %s346
      %s348 = smul.u32 2, %s23
      %s349 = smul.u32 16, %s25
      %p350 = scmp.lt.s32.totalorder %s349, 15
      %s351 = scalar_select %p350, %s349, 15
      %p352 = scmp.lt.s32.totalorder %s24, 0
      %s353 = scalar_select %p352, %s24, 0
      %s354 = sadd.s32 %s353, %s351
      %s355 = smul.addr %s354, 4
      %s356 = scalar_lea.vmem %s1, %s355
      %s357 = smul.u32 16, %s25
      %p358 = scmp.lt.s32.totalorder %s24, 0
      %s359 = scalar_select %p358, %s24, 0
      %s360 = scalar_lea.vmem %s2, %s359
      %p361 = scmp.lt.s32.totalorder %s24, 0
      %s362 = scalar_select %p361, %s24, 0
      %s363 = scalar_lea.vmem %s3, %s362
      %p364 = scmp.lt.s32.totalorder %s22, 5
      %s365 = scalar_select %p364, %s22, 5
      %p366 = scmp.lt.s32.totalorder %s25, 0
      %s367 = scalar_select %p366, %s25, 0
      %s368 = sadd.s32 %s367, %s365
      %s369 = scalar_lea.vmem %s4, %s368
      %s370 = smul.u32 2, %s23
      %p371 = scmp.lt.s32.totalorder %s22, 5
      %s372 = scalar_select %p371, %s22, 5
      %p373 = scmp.lt.s32.totalorder %s370, 1
      %s374 = scalar_select %p373, %s370, 1
      %p375 = scmp.lt.s32.totalorder %s24, 0
      %s376 = scalar_select %p375, %s24, 0
      %s377 = sadd.s32 %s376, %s374
      %s378 = smul.addr %s372, 2
      %s379 = sadd.s32 %s377, %s378
      %s380 = smul.addr %s379, 4
      %s381 = scalar_lea.vmem %s5, %s380
      %s382 = smul.u32 2, %s23
      %p384 = scmp.eq.s32.totalorder %s25, 0
      // Predicated region
      $region41: #{fwd.22} parent=39 // pred_check
        %p385 = pneg %p384
      $region42: #{fwd.22} parent=39 // pred_check_branch
        %387 = sbr.rel (%p385) target = $region44
      $region43: #{fwd.22} parent=39 // pred_region
        %388 = vst [vmem:[#allocation2] sm:$0xff] 0.0
        %389 = vst [vmem:[#allocation2 + $0x8] sm:$0xff] 0.0
      $region44: #{fwd.22} parent=39 // pred_fallthru
        _
      %v390 = vld [vmem:[%s347] sm:$0xf]
      %v391 = vld [vmem:[%s347 + $0x4] sm:$0xf]
      %v392 = vunpack.c.l.bf16 %v390
      %v393 = vunpack.c.l.bf16 %v391
      %v394 = vld [vmem:[%s369] sm:$0x1]
      %v396 = vlaneseq
      %v397 = vshrl.u32 %v396, 7
      %v398 = vsub.s32 0, %v397
      %v399 = vrot.slane %v394, %v398
      %v401 = vmul.f32 %v392, %v399
      %v402 = vmul.f32 %v393, %v399
      %v403 = vpack.c.bf16 %v402, %v401
      %v404 = vld [vmem:[#allocation2] sm:$0xff]
      %v405 = vld [vmem:[#allocation2 + $0x8] sm:$0xff]
      %v406 = vld [vmem:[%s356] sm:$0xf]
      %v407 = vld [vmem:[%s356 + $0x4] sm:$0xf]
      %v408 = vld [vmem:[%s356 + $0x8] sm:$0xf]
      %v409 = vld [vmem:[%s356 + $0xc] sm:$0xf]
      %v410 = vld [vmem:[%s356 + $0x10] sm:$0xf]
      %v411 = vld [vmem:[%s356 + $0x14] sm:$0xf]
      %v412 = vld [vmem:[%s356 + $0x18] sm:$0xf]
      %v413 = vld [vmem:[%s356 + $0x1c] sm:$0xf]
      %v414 = vld [vmem:[%s356 + $0x20] sm:$0xf]
      %v415 = vld [vmem:[%s356 + $0x24] sm:$0xf]
      %v416 = vld [vmem:[%s356 + $0x28] sm:$0xf]
      %v417 = vld [vmem:[%s356 + $0x2c] sm:$0xf]
      %v418 = vld [vmem:[%s356 + $0x30] sm:$0xf]
      %v419 = vld [vmem:[%s356 + $0x34] sm:$0xf]
      %v420 = vld [vmem:[%s356 + $0x38] sm:$0xf]
      %v421 = vld [vmem:[%s356 + $0x3c] sm:$0xf]
      %v438 = vunpack.c.l.b16 %v406
      %v439 = vunpack.c.l.b16 %v407
      %v440 = vunpack.c.l.b16 %v408
      %v441 = vunpack.c.l.b16 %v409
      %v442 = vunpack.c.l.b16 %v410
      %v443 = vunpack.c.l.b16 %v411
      %v444 = vunpack.c.l.b16 %v412
      %v445 = vunpack.c.l.b16 %v413
      %v446 = vunpack.c.l.b16 %v414
      %v447 = vunpack.c.l.b16 %v415
      %v448 = vunpack.c.l.b16 %v416
      %v449 = vunpack.c.l.b16 %v417
      %v450 = vunpack.c.l.b16 %v418
      %v451 = vunpack.c.l.b16 %v419
      %v452 = vunpack.c.l.b16 %v420
      %v453 = vunpack.c.l.b16 %v421
      %v454 = vpack.c.b16 %v439, %v438
      %v455 = vpack.c.b16 %v441, %v440
      %v456 = vpack.c.b16 %v443, %v442
      %v457 = vpack.c.b16 %v445, %v444
      %v458 = vpack.c.b16 %v447, %v446
      %v459 = vpack.c.b16 %v449, %v448
      %v460 = vpack.c.b16 %v451, %v450
      %v461 = vpack.c.b16 %v453, %v452
      %470 = vmatprep.subr.bf16.mxu0 0
      %471 = vmatpush1.bf16.msra.mxu0 %v461
      %472 = vmatprep.subr.bf16.mxu0 0
      %473 = vmatpush1.bf16.msra.mxu0 %v460
      %474 = vmatprep.subr.bf16.mxu0 0
      %475 = vmatpush1.bf16.msra.mxu0 %v459
      %476 = vmatprep.subr.bf16.mxu0 0
      %477 = vmatpush1.bf16.msra.mxu0 %v458
      %478 = vmatprep.subr.bf16.mxu0 0
      %479 = vmatpush1.bf16.msra.mxu0 %v457
      %480 = vmatprep.subr.bf16.mxu0 0
      %481 = vmatpush1.bf16.msra.mxu0 %v456
      %482 = vmatprep.subr.bf16.mxu0 0
      %483 = vmatpush1.bf16.msra.mxu0 %v455
      %484 = vmatprep.subr.bf16.mxu0 0
      %485 = vmatpush1.bf16.msra.mxu0 %v454
      %486 = vmatprep.subr.bf16.mxu0 0
      %487 = vmatpush2.bf16.msra.mxu0 0
      %488 = vmatprep.subr.bf16.mxu0 0
      %489 = vmatpush2.bf16.msra.mxu0 0
      %490 = vmatprep.subr.bf16.mxu0 0
      %491 = vmatpush2.bf16.msra.mxu0 0
      %492 = vmatprep.subr.bf16.mxu0 0
      %493 = vmatpush2.bf16.msra.mxu0 0
      %494 = vmatprep.subr.bf16.mxu0 0
      %495 = vmatpush2.bf16.msra.mxu0 0
      %496 = vmatprep.subr.bf16.mxu0 0
      %497 = vmatpush2.bf16.msra.mxu0 0
      %498 = vmatprep.subr.bf16.mxu0 0
      %499 = vmatpush2.bf16.msra.mxu0 0
      %500 = vmatprep.subr.bf16.mxu0 0
      %501 = vmatpush2.bf16.msra.mxu0 0
      %502 = vmatprep.mubr.bf16.mxu0 0
      %503 = vmatmul.mubr.bf16.gmra.mxu0 %v403
      %v504 = vpop.f32.mrf.mxu0
      %v505 = vadd.f32 0.0, %v504
      %v506 = vpop.f32.mrf.mxu0
      %v507 = vpop.f32.mrf.mxu0
      %v508 = vadd.f32 0.0, %v507
      %v509 = vpop.f32.mrf.mxu0
      %510 = vdwg.mxu0
      %v511 = vadd.f32 %v404, %v505
      %v512 = vadd.f32 %v405, %v508
      %513 = vst [vmem:[#allocation2] sm:$0xff] %v511
      %514 = vst [vmem:[#allocation2 + $0x8] sm:$0xff] %v512
      // Predicated region
      $region45: #{fwd.22} parent=39 // pred_check
        %p515 = pneg %p384
      $region46: #{fwd.22} parent=39 // pred_check_branch
        %517 = sbr.rel (%p515) target = $region48
      $region47: #{fwd.22} parent=39 // pred_region
        %v518 = vld [vmem:[#allocation2] sm:$0xff]
        %v519 = vld [vmem:[#allocation2 + $0x8] sm:$0xff]
        %v520 = vld [vmem:[%s360] sm:$0x1]
        %v522 = vlaneseq
        %v523 = vshrl.u32 %v522, 7
        %v524 = vsub.s32 0, %v523
        %v525 = vrot.slane %v520, %v524
        %v527 = vmul.f32 %v518, %v525
        %v528 = vmul.f32 %v519, %v525
        %v529 = vld [vmem:[%s363] sm:$0x1]
        %v531 = vlaneseq
        %v532 = vshrl.u32 %v531, 7
        %v533 = vsub.s32 0, %v532
        %v534 = vrot.slane %v529, %v533
        %v536 = vadd.f32 %v527, %v534
        %v537 = vadd.f32 %v528, %v534
        %v538 = vpack.c.bf16 %v537, %v536
        %v540 = vunpack.c.l.b16 %v538
        %v541 = vunpack.c.h.b16 %v538
        %v542 = vpack.c.b16 %v540, %v540
        %v543 = vpack.c.b16 %v541, %v541
        %546 = vst [vmem:[%s381] sm:$0xf] %v542
        %547 = vst [vmem:[%s381 + $0x4] sm:$0xf] %v543
      $region48: #{fwd.22} parent=39 // pred_fallthru
        _
      %s548 = smul.u32 2, %s23
      %p549 = scmp.lt.s32.totalorder %s22, 5
      %s550 = scalar_select %p549, %s22, 5
      %p551 = scmp.lt.s32.totalorder %s548, 1
      %s552 = scalar_select %p551, %s548, 1
      %p553 = scmp.lt.s32.totalorder %s24, 0
      %s554 = scalar_select %p553, %s24, 0
      %s555 = sadd.s32 %s554, %s552
      %s556 = smul.addr %s550, 2
      %s557 = sadd.s32 %s555, %s556
      %s558 = smul.addr %s557, 4
      %s559 = scalar_lea.vmem %s5, %s558
      // Predicated region
      $region49: #{fwd.22} parent=39 // pred_check
        %p560 = pneg %p202
      $region50: #{fwd.22} parent=39 // pred_check_branch
        %562 = sbr.rel (%p560) target = $region52
      $region51: #{fwd.22} parent=39 // pred_region
        %s563 = smul.u32 2, %s23
      $region52: #{fwd.22} parent=39 // pred_fallthru
        _
    $region40: #{fwd.22} parent=5 // pred_fallthru
      _
    %p564 = scmp.le.s32.totalorder 2, %s11
    // Predicated region
    $region53: #{fwd.22} parent=5 // pred_check
      %p565 = pneg %p564
    $region54: #{fwd.22} parent=5 // pred_check_branch
      %567 = sbr.rel (%p565) target = $region56
    $region55: #{fwd.22} parent=5 // pred_region
      %s568 = ssub.s32 %s11, 2
      // Predicated region
      $region57: #{fwd.22} parent=55 // pred_check
        %p569 = pneg %p208
      $region58: #{fwd.22} parent=55 // pred_check_branch
        %571 = sbr.rel (%p569) target = $region60
      $region59: #{fwd.22} parent=55 // pred_region
        %s572 = smul.u32 2, %s27
        %p573 = scmp.lt.s32.totalorder %s26, 5
        %s574 = scalar_select %p573, %s26, 5
        %p575 = scmp.lt.s32.totalorder %s572, 1
        %s576 = scalar_select %p575, %s572, 1
        %p577 = scmp.lt.s32.totalorder %s28, 0
        %s578 = scalar_select %p577, %s28, 0
        %s579 = sadd.s32 %s578, %s576
        %s580 = smul.addr %s574, 2
        %s581 = sadd.s32 %s579, %s580
        %s582 = smul.addr %s581, 4
        %s583 = scalar_lea.vmem %s5, %s582
      $region60: #{fwd.22} parent=55 // pred_fallthru
        _
    $region56: #{fwd.22} parent=5 // pred_fallthru
      _
  $region6: #{fwd.22} parent=0 // loop_footer
    %s15 = sadd.s32 1, %s11
  $region7: #{fwd.22} parent=0 // loop_footer_branch
    %10 = sbr.rel target = $region3
  $region8: #{fwd.22} parent=0 // loop_exit
    _

// kernel: fwd.25
$region0: #{fwd.25}
  #allocation0 [shape = 'u32[]', space=smem, size = 0x4, offset = 0x4, fixed_abs, tag = 'smem constant byte address 0x4 - core index']
  #allocation1 [shape = 'u32[144,128]{1,0:T(1,128)}', space=vmem, size = 0x12000, scoped, tag = 'internal scratch']
  %s0 = inlined_call_operand.vmem [shape: f32[6,256], index: 0, kind: input, shape index: {}]
  %s1 = inlined_call_operand.vmem [shape: f32[256,128], index: 1, kind: input, shape index: {}]
  %s2 = inlined_call_operand.vmem [shape: f32[1,128], index: 2, kind: input, shape index: {}]
  %s3 = inlined_call_operand.vmem [shape: f32[128,256], index: 3, kind: input, shape index: {}]
  %s4 = inlined_call_operand.vmem [shape: f32[1,256], index: 4, kind: input, shape index: {}]
  %s5 = inlined_call_operand.vmem [shape: f32[6,256], index: 5, kind: output, shape index: {}]
  %s6 = sld [smem:[#allocation0]]
  $region30: #{fwd.25} parent=0
    _
  %s8 = ssub.s32 1, %s6
  %s9 = scalar_select 0, %s8, %s6
  // Predicated region
  $region2: #{fwd.25} parent=0 // pred_check
    _
  $region3: #{fwd.25} parent=0 // pred_check_branch
    %11 = sbr.rel (0) target = $region5
  $region4: #{fwd.25} parent=0 // pred_region
    _
  $region5: #{fwd.25} parent=0 // pred_fallthru
    _
  // Predicated region
  $region6: #{fwd.25} parent=0 // pred_check
    _
  $region7: #{fwd.25} parent=0 // pred_check_branch
    %13 = sbr.rel (0) target = $region9
  $region8: #{fwd.25} parent=0 // pred_region
    _
  $region9: #{fwd.25} parent=0 // pred_fallthru
    _
  // Predicated region
  $region10: #{fwd.25} parent=0 // pred_check
    _
  $region11: #{fwd.25} parent=0 // pred_check_branch
    %15 = sbr.rel (0) target = $region13
  $region12: #{fwd.25} parent=0 // pred_region
    _
  $region13: #{fwd.25} parent=0 // pred_fallthru
    _
  // Predicated region
  $region14: #{fwd.25} parent=0 // pred_check
    _
  $region15: #{fwd.25} parent=0 // pred_check_branch
    %17 = sbr.rel (0) target = $region17
  $region16: #{fwd.25} parent=0 // pred_region
    _
  $region17: #{fwd.25} parent=0 // pred_fallthru
    _
  // Predicated region
  $region18: #{fwd.25} parent=0 // pred_check
    _
  $region19: #{fwd.25} parent=0 // pred_check_branch
    %19 = sbr.rel (0) target = $region21
  $region20: #{fwd.25} parent=0 // pred_region
    _
  $region21: #{fwd.25} parent=0 // pred_fallthru
    _
  %v20 = vld [vmem:[%s0] sm:$0x3f]
  %v21 = vld [vmem:[%s0 + $0x8] sm:$0x3f]
  %v22 = vld [vmem:[%s1] sm:$0xff]
  %v23 = vld [vmem:[%s1 + $0x8] sm:$0xff]
  %v24 = vld [vmem:[%s1 + $0x10] sm:$0xff]
  %v25 = vld [vmem:[%s1 + $0x18] sm:$0xff]
  %v26 = vld [vmem:[%s1 + $0x20] sm:$0xff]
  %v27 = vld [vmem:[%s1 + $0x28] sm:$0xff]
  %v28 = vld [vmem:[%s1 + $0x30] sm:$0xff]
  %v29 = vld [vmem:[%s1 + $0x38] sm:$0xff]
  %v30 = vld [vmem:[%s1 + $0x40] sm:$0xff]
  %v31 = vld [vmem:[%s1 + $0x48] sm:$0xff]
  %v32 = vld [vmem:[%s1 + $0x50] sm:$0xff]
  %v33 = vld [vmem:[%s1 + $0x58] sm:$0xff]
  %v34 = vld [vmem:[%s1 + $0x60] sm:$0xff]
  %v35 = vld [vmem:[%s1 + $0x68] sm:$0xff]
  %v36 = vld [vmem:[%s1 + $0x70] sm:$0xff]
  %v37 = vld [vmem:[%s1 + $0x78] sm:$0xff]
  %v38 = vld [vmem:[%s1 + $0x80] sm:$0xff]
  %v39 = vld [vmem:[%s1 + $0x88] sm:$0xff]
  %v40 = vld [vmem:[%s1 + $0x90] sm:$0xff]
  %v41 = vld [vmem:[%s1 + $0x98] sm:$0xff]
  %v42 = vld [vmem:[%s1 + $0xa0] sm:$0xff]
  %v43 = vld [vmem:[%s1 + $0xa8] sm:$0xff]
  %v44 = vld [vmem:[%s1 + $0xb0] sm:$0xff]
  %v45 = vld [vmem:[%s1 + $0xb8] sm:$0xff]
  %v46 = vld [vmem:[%s1 + $0xc0] sm:$0xff]
  %v47 = vld [vmem:[%s1 + $0xc8] sm:$0xff]
  %v48 = vld [vmem:[%s1 + $0xd0] sm:$0xff]
  %v49 = vld [vmem:[%s1 + $0xd8] sm:$0xff]
  %v50 = vld [vmem:[%s1 + $0xe0] sm:$0xff]
  %v51 = vld [vmem:[%s1 + $0xe8] sm:$0xff]
  %v52 = vld [vmem:[%s1 + $0xf0] sm:$0xff]
  %v53 = vld [vmem:[%s1 + $0xf8] sm:$0xff]
  %v54 = vld [vmem:[%s2] sm:$0x1]
  %v56 = vlaneseq
  %v57 = vshrl.u32 %v56, 7
  %v58 = vsub.s32 0, %v57
  %v59 = vrot.slane %v54, %v58
  %61 = vmatprep.subr.mxu0 0.0
  %62 = vmatpush1.msra.mxu0 %v37
  %63 = vmatprep.subr.mxu0 0.0
  %64 = vmatpush1.msra.mxu0 %v36
  %65 = vmatprep.subr.mxu0 0.0
  %66 = vmatpush1.msra.mxu0 %v35
  %67 = vmatprep.subr.mxu0 0.0
  %68 = vmatpush1.msra.mxu0 %v34
  %69 = vmatprep.subr.mxu0 0.0
  %70 = vmatpush1.msra.mxu0 %v33
  %71 = vmatprep.subr.mxu0 0.0
  %72 = vmatpush1.msra.mxu0 %v32
  %73 = vmatprep.subr.mxu0 0.0
  %74 = vmatpush1.msra.mxu0 %v31
  %75 = vmatprep.subr.mxu0 0.0
  %76 = vmatpush1.msra.mxu0 %v30
  %77 = vmatprep.subr.mxu0 0.0
  %78 = vmatpush1.msra.mxu0 %v29
  %79 = vmatprep.subr.mxu0 0.0
  %80 = vmatpush1.msra.mxu0 %v28
  %81 = vmatprep.subr.mxu0 0.0
  %82 = vmatpush1.msra.mxu0 %v27
  %83 = vmatprep.subr.mxu0 0.0
  %84 = vmatpush1.msra.mxu0 %v26
  %85 = vmatprep.subr.mxu0 0.0
  %86 = vmatpush1.msra.mxu0 %v25
  %87 = vmatprep.subr.mxu0 0.0
  %88 = vmatpush1.msra.mxu0 %v24
  %89 = vmatprep.subr.mxu0 0.0
  %90 = vmatpush1.msra.mxu0 %v23
  %91 = vmatprep.subr.mxu0 0.0
  %92 = vmatpush1.msra.mxu0 %v22
  %93 = vmatprep.subr.mxu0 0.0
  %94 = vmatpush2.msra.mxu0 %v53
  %95 = vmatprep.subr.mxu0 0.0
  %96 = vmatpush2.msra.mxu0 %v52
  %97 = vmatprep.subr.mxu0 0.0
  %98 = vmatpush2.msra.mxu0 %v51
  %99 = vmatprep.subr.mxu0 0.0
  %100 = vmatpush2.msra.mxu0 %v50
  %101 = vmatprep.subr.mxu0 0.0
  %102 = vmatpush2.msra.mxu0 %v49
  %103 = vmatprep.subr.mxu0 0.0
  %104 = vmatpush2.msra.mxu0 %v48
  %105 = vmatprep.subr.mxu0 0.0
  %106 = vmatpush2.msra.mxu0 %v47
  %107 = vmatprep.subr.mxu0 0.0
  %108 = vmatpush2.msra.mxu0 %v46
  %109 = vmatprep.subr.mxu0 0.0
  %110 = vmatpush2.msra.mxu0 %v45
  %111 = vmatprep.subr.mxu0 0.0
  %112 = vmatpush2.msra.mxu0 %v44
  %113 = vmatprep.subr.mxu0 0.0
  %114 = vmatpush2.msra.mxu0 %v43
  %115 = vmatprep.subr.mxu0 0.0
  %116 = vmatpush2.msra.mxu0 %v42
  %117 = vmatprep.subr.mxu0 0.0
  %118 = vmatpush2.msra.mxu0 %v41
  %119 = vmatprep.subr.mxu0 0.0
  %120 = vmatpush2.msra.mxu0 %v40
  %121 = vmatprep.subr.mxu0 0.0
  %122 = vmatpush2.msra.mxu0 %v39
  %123 = vmatprep.subr.mxu0 0.0
  %124 = vmatpush2.msra.mxu0 %v38
  %125 = vmatprep.mubr.f32.mxu0 %v21
  %126 = vmatmul.mubr.f32.gmra.mxu0 %v20
  %v127 = vpop.f32.mrf.mxu0
  %v128 = vadd.f32 %v59, %v127
  %v129 = vpop.f32.mrf.mxu0
  %130 = vdwg.mxu0
  %v131 = vxor.u32 %v128, 2147483648
  %v132 = vmul.f32 %v131, 1.442695
  %v133 = vpow.pop %v132
  %v134 = vadd.f32 %v133, 1.0
  %v135 = vrcp.pop %v134
  %v136 = vmul.f32 1.0, %v135
  %v137 = vmul.f32 %v128, %v136
  %v138 = vld [vmem:[%s3] sm:$0xff]
  %v139 = vld [vmem:[%s3 + $0x8] sm:$0xff]
  %v140 = vld [vmem:[%s3 + $0x10] sm:$0xff]
  %v141 = vld [vmem:[%s3 + $0x18] sm:$0xff]
  %v142 = vld [vmem:[%s3 + $0x20] sm:$0xff]
  %v143 = vld [vmem:[%s3 + $0x28] sm:$0xff]
  %v144 = vld [vmem:[%s3 + $0x30] sm:$0xff]
  %v145 = vld [vmem:[%s3 + $0x38] sm:$0xff]
  %v146 = vld [vmem:[%s3 + $0x40] sm:$0xff]
  %v147 = vld [vmem:[%s3 + $0x48] sm:$0xff]
  %v148 = vld [vmem:[%s3 + $0x50] sm:$0xff]
  %v149 = vld [vmem:[%s3 + $0x58] sm:$0xff]
  %v150 = vld [vmem:[%s3 + $0x60] sm:$0xff]
  %v151 = vld [vmem:[%s3 + $0x68] sm:$0xff]
  %v152 = vld [vmem:[%s3 + $0x70] sm:$0xff]
  %v153 = vld [vmem:[%s3 + $0x78] sm:$0xff]
  %v154 = vld [vmem:[%s3 + $0x80] sm:$0xff]
  %v155 = vld [vmem:[%s3 + $0x88] sm:$0xff]
  %v156 = vld [vmem:[%s3 + $0x90] sm:$0xff]
  %v157 = vld [vmem:[%s3 + $0x98] sm:$0xff]
  %v158 = vld [vmem:[%s3 + $0xa0] sm:$0xff]
  %v159 = vld [vmem:[%s3 + $0xa8] sm:$0xff]
  %v160 = vld [vmem:[%s3 + $0xb0] sm:$0xff]
  %v161 = vld [vmem:[%s3 + $0xb8] sm:$0xff]
  %v162 = vld [vmem:[%s3 + $0xc0] sm:$0xff]
  %v163 = vld [vmem:[%s3 + $0xc8] sm:$0xff]
  %v164 = vld [vmem:[%s3 + $0xd0] sm:$0xff]
  %v165 = vld [vmem:[%s3 + $0xd8] sm:$0xff]
  %v166 = vld [vmem:[%s3 + $0xe0] sm:$0xff]
  %v167 = vld [vmem:[%s3 + $0xe8] sm:$0xff]
  %v168 = vld [vmem:[%s3 + $0xf0] sm:$0xff]
  %v169 = vld [vmem:[%s3 + $0xf8] sm:$0xff]
  %v170 = vld [vmem:[%s4] sm:$0x3]
  %v172 = vlaneseq
  %v173 = vshrl.u32 %v172, 7
  %v174 = vsub.s32 0, %v173
  %v175 = vrot.slane %v170, %v174
  %v176 = vlaneseq
  %v177 = vshrl.u32 %v176, 7
  %v178 = vsub.s32 1, %v177
  %v179 = vrot.slane %v170, %v178
  %182 = vmatprep.subr.mxu0 %v169
  %183 = vmatpush1.msra.mxu0 %v168
  %184 = vmatprep.subr.mxu0 %v167
  %185 = vmatpush1.msra.mxu0 %v166
  %186 = vmatprep.subr.mxu0 %v165
  %187 = vmatpush1.msra.mxu0 %v164
  %188 = vmatprep.subr.mxu0 %v163
  %189 = vmatpush1.msra.mxu0 %v162
  %190 = vmatprep.subr.mxu0 %v161
  %191 = vmatpush1.msra.mxu0 %v160
  %192 = vmatprep.subr.mxu0 %v159
  %193 = vmatpush1.msra.mxu0 %v158
  %194 = vmatprep.subr.mxu0 %v157
  %195 = vmatpush1.msra.mxu0 %v156
  %196 = vmatprep.subr.mxu0 %v155
  %197 = vmatpush1.msra.mxu0 %v154
  %198 = vmatprep.subr.mxu0 %v153
  %199 = vmatpush1.msra.mxu0 %v152
  %200 = vmatprep.subr.mxu0 %v151
  %201 = vmatpush1.msra.mxu0 %v150
  %202 = vmatprep.subr.mxu0 %v149
  %203 = vmatpush1.msra.mxu0 %v148
  %204 = vmatprep.subr.mxu0 %v147
  %205 = vmatpush1.msra.mxu0 %v146
  %206 = vmatprep.subr.mxu0 %v145
  %207 = vmatpush1.msra.mxu0 %v144
  %208 = vmatprep.subr.mxu0 %v143
  %209 = vmatpush1.msra.mxu0 %v142
  %210 = vmatprep.subr.mxu0 %v141
  %211 = vmatpush1.msra.mxu0 %v140
  %212 = vmatprep.subr.mxu0 %v139
  %213 = vmatpush1.msra.mxu0 %v138
  %214 = vmatprep.subr.mxu0 0.0
  %215 = vmatpush2.msra.mxu0 0.0
  %216 = vmatprep.subr.mxu0 0.0
  %217 = vmatpush2.msra.mxu0 0.0
  %218 = vmatprep.subr.mxu0 0.0
  %219 = vmatpush2.msra.mxu0 0.0
  %220 = vmatprep.subr.mxu0 0.0
  %221 = vmatpush2.msra.mxu0 0.0
  %222 = vmatprep.subr.mxu0 0.0
  %223 = vmatpush2.msra.mxu0 0.0
  %224 = vmatprep.subr.mxu0 0.0
  %225 = vmatpush2.msra.mxu0 0.0
  %226 = vmatprep.subr.mxu0 0.0
  %227 = vmatpush2.msra.mxu0 0.0
  %228 = vmatprep.subr.mxu0 0.0
  %229 = vmatpush2.msra.mxu0 0.0
  %230 = vmatprep.subr.mxu0 0.0
  %231 = vmatpush2.msra.mxu0 0.0
  %232 = vmatprep.subr.mxu0 0.0
  %233 = vmatpush2.msra.mxu0 0.0
  %234 = vmatprep.subr.mxu0 0.0
  %235 = vmatpush2.msra.mxu0 0.0
  %236 = vmatprep.subr.mxu0 0.0
  %237 = vmatpush2.msra.mxu0 0.0
  %238 = vmatprep.subr.mxu0 0.0
  %239 = vmatpush2.msra.mxu0 0.0
  %240 = vmatprep.subr.mxu0 0.0
  %241 = vmatpush2.msra.mxu0 0.0
  %242 = vmatprep.subr.mxu0 0.0
  %243 = vmatpush2.msra.mxu0 0.0
  %244 = vmatprep.subr.mxu0 0.0
  %245 = vmatpush2.msra.mxu0 0.0
  %246 = vmatprep.mubr.f32.mxu0 0.0
  %247 = vmatmul.mubr.f32.gmra.mxu0 %v137
  %v248 = vpop.f32.mrf.mxu0
  %v249 = vadd.f32 %v175, %v248
  %v250 = vpop.f32.mrf.mxu0
  %v251 = vadd.f32 %v179, %v250
  %252 = vdwg.mxu0
  %v253 = vxor.u32 %v249, 2147483648
  %v254 = vxor.u32 %v251, 2147483648
  %v255 = vmul.f32 %v253, 1.442695
  %v256 = vpow.pop %v255
  %v257 = vmul.f32 %v254, 1.442695
  %v258 = vpow.pop %v257
  %v259 = vadd.f32 %v256, 1.0
  %v260 = vadd.f32 %v258, 1.0
  %v261 = vrcp.pop %v259
  %v262 = vmul.f32 1.0, %v261
  %v263 = vrcp.pop %v260
  %v264 = vmul.f32 1.0, %v263
  %265 = vst [vmem:[%s5] sm:$0x3f] %v262
  %266 = vst [vmem:[%s5 + $0x8] sm:$0x3f] %v264
  // Predicated region
  $region22: #{fwd.25} parent=0 // pred_check
    _
  $region23: #{fwd.25} parent=0 // pred_check_branch
    %268 = sbr.rel (0) target = $region25
  $region24: #{fwd.25} parent=0 // pred_region
    _
  $region25: #{fwd.25} parent=0 // pred_fallthru
    _
  // Predicated region
  $region26: #{fwd.25} parent=0 // pred_check
    _
  $region27: #{fwd.25} parent=0 // pred_check_branch
    %270 = sbr.rel (0) target = $region29
  $region28: #{fwd.25} parent=0 // pred_region
    _
  $region29: #{fwd.25} parent=0 // pred_fallthru
    _

// kernel: fwd.26
$region0: #{fwd.26}
  #allocation0 [shape = 'u32[]', space=smem, size = 0x4, offset = 0x4, fixed_abs, tag = 'smem constant byte address 0x4 - core index']
  #allocation1 [shape = 'u32[144,128]{1,0:T(1,128)}', space=vmem, size = 0x12000, scoped, tag = 'internal scratch']
  #allocation2 [shape = 'f32[16,128]{1,0:T(8,128)}', space=vmem, size = 0x2000, scoped, tag = 'scratch operand']
  %s0 = inlined_call_operand.vmem [shape: bf16[6,16,256], index: 0, kind: input, shape index: {}]
  %s1 = inlined_call_operand.vmem [shape: bf16[256,128], index: 1, kind: input, shape index: {}]
  %s2 = inlined_call_operand.vmem [shape: f32[1,128], index: 2, kind: input, shape index: {}]
  %s3 = inlined_call_operand.vmem [shape: f32[1,128], index: 3, kind: input, shape index: {}]
  %s4 = inlined_call_operand.vmem [shape: f32[6,1,256], index: 4, kind: input, shape index: {}]
  %s5 = inlined_call_operand.vmem [shape: bf16[6,16,128], index: 5, kind: input, shape index: {}]
  %s6 = inlined_call_operand.vmem [shape: bf16[6,16,128], index: 6, kind: output, shape index: {}]
  %s7 = sld [smem:[#allocation0]]
  $region65: #{fwd.26} parent=0
    _
  %s9 = ssub.s32 1, %s7
  %s10 = scalar_select 0, %s9, %s7
  loop: start=0, step=1, limit=8
  $region2: #{fwd.26} parent=0 // loop_pre_header
    _
  $region3: #{fwd.26} parent=0 // loop_header
    %s12 = sphi 0, %s16
    %p13 = scmp.ge.s32.totalorder %s12, 8
    %s19 = sphi 0, %s45
    %s20 = sphi 0, %s41
    %s21 = sphi 0, %s37
    %s22 = sphi 0, %s33
    %s23 = sphi 0, %s19
    %s24 = sphi 0, %s20
    %s25 = sphi 0, %s21
    %s26 = sphi 0, %s22
    %s27 = sphi 0, %s23
    %s28 = sphi 0, %s24
    %s29 = sphi 0, %s25
    %s30 = sphi 0, %s26
    %s52 = sphi 0, %s54
    %s55 = sphi 0, %s52
    %s56 = sphi 0, %s55
    %s72 = sphi 0, %s56
    %s80 = sphi 0, %s82
    %s83 = sphi 0, %s80
    %s84 = sphi 0, %s83
    %s100 = sphi 0, %s84
    %s106 = sphi 0, %s108
    %s109 = sphi 0, %s106
    %s110 = sphi 0, %s109
    %s126 = sphi 0, %s110
    %s132 = sphi 0, %s134
    %s135 = sphi 0, %s132
    %s136 = sphi 0, %s135
    %s152 = sphi 0, %s136
    %s160 = sphi 0, %s162
    %s163 = sphi 0, %s160
    %s164 = sphi 0, %s163
    %s180 = sphi 0, %s164
    %s190 = sphi 0, %s192
    %s193 = sphi 0, %s190
    %s194 = sphi 0, %s193
    %s210 = sphi 0, %s194
    %s220 = sphi 0, %s222
    %s223 = sphi 0, %s220
    %s224 = sphi 0, %s223
    %s240 = sphi 0, %s224
  $region4: #{fwd.26} parent=0 // loop_header_branch
    %15 = sbr.rel (%p13) target = $region8
  $region5: #{fwd.26} parent=0 // loop_body
    %s17 = ssub.s32 %s12, 1
    %s18 = ssub.s32 %s12, 2
    %s31 = sadd.s32 1, %s22
    %p32 = scmp.ge.s32.totalorder %s31, 1
    %s33 = scalar_select %p32, 0, %s31
    %s34 = sadd.s32 1, %s21
    %s35 = scalar_select %p32, %s34, %s21
    %p36 = scmp.ge.s32.totalorder %s35, 1
    %s37 = scalar_select %p36, 0, %s35
    %s38 = sadd.s32 1, %s20
    %s39 = scalar_select %p36, %s38, %s20
    %p40 = scmp.ge.s32.totalorder %s39, 1
    %s41 = scalar_select %p40, 0, %s39
    %s42 = sadd.s32 1, %s19
    %s43 = scalar_select %p40, %s42, %s19
    %p44 = scmp.ge.s32.totalorder %s43, 6
    %s45 = scalar_select %p44, 0, %s43
    %s46 = ssub.s32 %s19, %s45
    %s47 = ssub.s32 %s20, %s41
    %s48 = sor.u32 %s46, %s47
    %s49 = ssub.s32 %s22, %s33
    %s50 = sor.u32 %s48, %s49
    %p51 = scmp.eq.s32.totalorder %s50, 0
    %s53 = sadd.s32 %s52, 1
    %s54 = scalar_select %p51, %s52, %s53
    %p57 = pneg %p51
    %p58 = scmp.eq.s32.totalorder %s12, 5
    %p59 = por %p57, %p58
    %p60 = scmp.ne.s32.totalorder %s52, %s55
    %p61 = scmp.eq.s32.totalorder %s12, 0
    %p62 = por %p60, %p61
    %p63 = scmp.ne.s32.totalorder %s52, %s55
    %p64 = scmp.eq.s32.totalorder %s17, 5
    %p65 = por %p63, %p64
    %p66 = scmp.ne.s32.totalorder %s55, %s56
    %p67 = scmp.eq.s32.totalorder %s17, 0
    %p68 = por %p66, %p67
    %p69 = scmp.ne.s32.totalorder %s55, %s56
    %p70 = scmp.eq.s32.totalorder %s18, 5
    %p71 = por %p69, %p70
    %p73 = scmp.ne.s32.totalorder %s56, %s72
    %p74 = scmp.eq.s32.totalorder %s18, 0
    %p75 = por %p73, %p74
    %s76 = ssub.s32 %s22, %s33
    %s77 = ssub.s32 %s21, %s37
    %s78 = sor.u32 %s76, %s77
    %p79 = scmp.eq.s32.totalorder %s78, 0
    %s81 = sadd.s32 %s80, 1
    %s82 = scalar_select %p79, %s80, %s81
    %p85 = pneg %p79
    %p86 = scmp.eq.s32.totalorder %s12, 5
    %p87 = por %p85, %p86
    %p88 = scmp.ne.s32.totalorder %s80, %s83
    %p89 = scmp.eq.s32.totalorder %s12, 0
    %p90 = por %p88, %p89
    %p91 = scmp.ne.s32.totalorder %s80, %s83
    %p92 = scmp.eq.s32.totalorder %s17, 5
    %p93 = por %p91, %p92
    %p94 = scmp.ne.s32.totalorder %s83, %s84
    %p95 = scmp.eq.s32.totalorder %s17, 0
    %p96 = por %p94, %p95
    %p97 = scmp.ne.s32.totalorder %s83, %s84
    %p98 = scmp.eq.s32.totalorder %s18, 5
    %p99 = por %p97, %p98
    %p101 = scmp.ne.s32.totalorder %s84, %s100
    %p102 = scmp.eq.s32.totalorder %s18, 0
    %p103 = por %p101, %p102
    %s104 = ssub.s32 %s21, %s37
    %p105 = scmp.eq.s32.totalorder %s104, 0
    %s107 = sadd.s32 %s106, 1
    %s108 = scalar_select %p105, %s106, %s107
    %p111 = pneg %p105
    %p112 = scmp.eq.s32.totalorder %s12, 5
    %p113 = por %p111, %p112
    %p114 = scmp.ne.s32.totalorder %s106, %s109
    %p115 = scmp.eq.s32.totalorder %s12, 0
    %p116 = por %p114, %p115
    %p117 = scmp.ne.s32.totalorder %s106, %s109
    %p118 = scmp.eq.s32.totalorder %s17, 5
    %p119 = por %p117, %p118
    %p120 = scmp.ne.s32.totalorder %s109, %s110
    %p121 = scmp.eq.s32.totalorder %s17, 0
    %p122 = por %p120, %p121
    %p123 = scmp.ne.s32.totalorder %s109, %s110
    %p124 = scmp.eq.s32.totalorder %s18, 5
    %p125 = por %p123, %p124
    %p127 = scmp.ne.s32.totalorder %s110, %s126
    %p128 = scmp.eq.s32.totalorder %s18, 0
    %p129 = por %p127, %p128
    %s130 = ssub.s32 %s21, %s37
    %p131 = scmp.eq.s32.totalorder %s130, 0
    %s133 = sadd.s32 %s132, 1
    %s134 = scalar_select %p131, %s132, %s133
    %p137 = pneg %p131
    %p138 = scmp.eq.s32.totalorder %s12, 5
    %p139 = por %p137, %p138
    %p140 = scmp.ne.s32.totalorder %s132, %s135
    %p141 = scmp.eq.s32.totalorder %s12, 0
    %p142 = por %p140, %p141
    %p143 = scmp.ne.s32.totalorder %s132, %s135
    %p144 = scmp.eq.s32.totalorder %s17, 5
    %p145 = por %p143, %p144
    %p146 = scmp.ne.s32.totalorder %s135, %s136
    %p147 = scmp.eq.s32.totalorder %s17, 0
    %p148 = por %p146, %p147
    %p149 = scmp.ne.s32.totalorder %s135, %s136
    %p150 = scmp.eq.s32.totalorder %s18, 5
    %p151 = por %p149, %p150
    %p153 = scmp.ne.s32.totalorder %s136, %s152
    %p154 = scmp.eq.s32.totalorder %s18, 0
    %p155 = por %p153, %p154
    %s156 = ssub.s32 %s19, %s45
    %s157 = ssub.s32 %s22, %s33
    %s158 = sor.u32 %s156, %s157
    %p159 = scmp.eq.s32.totalorder %s158, 0
    %s161 = sadd.s32 %s160, 1
    %s162 = scalar_select %p159, %s160, %s161
    %p165 = pneg %p159
    %p166 = scmp.eq.s32.totalorder %s12, 5
    %p167 = por %p165, %p166
    %p168 = scmp.ne.s32.totalorder %s160, %s163
    %p169 = scmp.eq.s32.totalorder %s12, 0
    %p170 = por %p168, %p169
    %p171 = scmp.ne.s32.totalorder %s160, %s163
    %p172 = scmp.eq.s32.totalorder %s17, 5
    %p173 = por %p171, %p172
    %p174 = scmp.ne.s32.totalorder %s163, %s164
    %p175 = scmp.eq.s32.totalorder %s17, 0
    %p176 = por %p174, %p175
    %p177 = scmp.ne.s32.totalorder %s163, %s164
    %p178 = scmp.eq.s32.totalorder %s18, 5
    %p179 = por %p177, %p178
    %p181 = scmp.ne.s32.totalorder %s164, %s180
    %p182 = scmp.eq.s32.totalorder %s18, 0
    %p183 = por %p181, %p182
    %s184 = ssub.s32 %s19, %s45
    %s185 = ssub.s32 %s20, %s41
    %s186 = sor.u32 %s184, %s185
    %s187 = ssub.s32 %s21, %s37
    %s188 = sor.u32 %s186, %s187
    %p189 = scmp.eq.s32.totalorder %s188, 0
    %s191 = sadd.s32 %s190, 1
    %s192 = scalar_select %p189, %s190, %s191
    %p195 = pneg %p189
    %p196 = scmp.eq.s32.totalorder %s12, 5
    %p197 = por %p195, %p196
    %p198 = scmp.ne.s32.totalorder %s190, %s193
    %p199 = scmp.eq.s32.totalorder %s12, 0
    %p200 = por %p198, %p199
    %p201 = scmp.ne.s32.totalorder %s190, %s193
    %p202 = scmp.eq.s32.totalorder %s17, 5
    %p203 = por %p201, %p202
    %p204 = scmp.ne.s32.totalorder %s193, %s194
    %p205 = scmp.eq.s32.totalorder %s17, 0
    %p206 = por %p204, %p205
    %p207 = scmp.ne.s32.totalorder %s193, %s194
    %p208 = scmp.eq.s32.totalorder %s18, 5
    %p209 = por %p207, %p208
    %p211 = scmp.ne.s32.totalorder %s194, %s210
    %p212 = scmp.eq.s32.totalorder %s18, 0
    %p213 = por %p211, %p212
    %s214 = ssub.s32 %s19, %s45
    %s215 = ssub.s32 %s20, %s41
    %s216 = sor.u32 %s214, %s215
    %s217 = ssub.s32 %s21, %s37
    %s218 = sor.u32 %s216, %s217
    %p219 = scmp.eq.s32.totalorder %s218, 0
    %s221 = sadd.s32 %s220, 1
    %s222 = scalar_select %p219, %s220, %s221
    %p225 = pneg %p219
    %p226 = scmp.eq.s32.totalorder %s12, 5
    %p227 = por %p225, %p226
    %p228 = scmp.ne.s32.totalorder %s220, %s223
    %p229 = scmp.eq.s32.totalorder %s12, 0
    %p230 = por %p228, %p229
    %p231 = scmp.ne.s32.totalorder %s220, %s223
    %p232 = scmp.eq.s32.totalorder %s17, 5
    %p233 = por %p231, %p232
    %p234 = scmp.ne.s32.totalorder %s223, %s224
    %p235 = scmp.eq.s32.totalorder %s17, 0
    %p236 = por %p234, %p235
    %p237 = scmp.ne.s32.totalorder %s223, %s224
    %p238 = scmp.eq.s32.totalorder %s18, 5
    %p239 = por %p237, %p238
    %p241 = scmp.ne.s32.totalorder %s224, %s240
    %p242 = scmp.eq.s32.totalorder %s18, 0
    %p243 = por %p241, %p242
    %p244 = scmp.le.s32.totalorder 1, %s12
    %p245 = scmp.lt.s32.totalorder %s12, 7
    %p246 = pnand %p244, %p245
    %p247 = pneg %p246
    // Predicated region
    $region9: #{fwd.26} parent=5 // pred_check
      _
    $region10: #{fwd.26} parent=5 // pred_check_branch
      %249 = sbr.rel (%p246) target = $region12
    $region11: #{fwd.26} parent=5 // pred_region
      %s250 = ssub.s32 %s12, 1
      // Predicated region
      $region13: #{fwd.26} parent=11 // pred_check
        %p251 = pneg %p96
      $region14: #{fwd.26} parent=11 // pred_check_branch
        %253 = sbr.rel (%p251) target = $region16
      $region15: #{fwd.26} parent=11 // pred_region
        %s254 = smul.u32 32, %s26
        %p255 = scmp.lt.s32.totalorder %s254, 31
        %s256 = scalar_select %p255, %s254, 31
        %p257 = scmp.lt.s32.totalorder %s25, 0
        %s258 = scalar_select %p257, %s25, 0
        %s259 = sadd.s32 %s258, %s256
        %s260 = smul.addr %s259, 4
        %s261 = scalar_lea.vmem %s1, %s260
        %s262 = smul.u32 32, %s26
      $region16: #{fwd.26} parent=11 // pred_fallthru
        _
      // Predicated region
      $region17: #{fwd.26} parent=11 // pred_check
        %p263 = pneg %p122
      $region18: #{fwd.26} parent=11 // pred_check_branch
        %265 = sbr.rel (%p263) target = $region20
      $region19: #{fwd.26} parent=11 // pred_region
        %p266 = scmp.lt.s32.totalorder %s25, 0
        %s267 = scalar_select %p266, %s25, 0
        %s268 = scalar_lea.vmem %s2, %s267
      $region20: #{fwd.26} parent=11 // pred_fallthru
        _
      // Predicated region
      $region21: #{fwd.26} parent=11 // pred_check
        %p269 = pneg %p148
      $region22: #{fwd.26} parent=11 // pred_check_branch
        %271 = sbr.rel (%p269) target = $region24
      $region23: #{fwd.26} parent=11 // pred_region
        %p272 = scmp.lt.s32.totalorder %s25, 0
        %s273 = scalar_select %p272, %s25, 0
        %s274 = scalar_lea.vmem %s3, %s273
      $region24: #{fwd.26} parent=11 // pred_fallthru
        _
    $region12: #{fwd.26} parent=5 // pred_fallthru
      _
    %p275 = scmp.lt.s32.totalorder %s12, 6
    // Predicated region
    $region25: #{fwd.26} parent=5 // pred_check
      %p276 = pneg %p275
    $region26: #{fwd.26} parent=5 // pred_check_branch
      %278 = sbr.rel (%p276) target = $region28
    $region27: #{fwd.26} parent=5 // pred_region
      // Predicated region
      $region29: #{fwd.26} parent=27 // pred_check
        %p279 = pneg %p62
      $region30: #{fwd.26} parent=27 // pred_check_branch
        %281 = sbr.rel (%p279) target = $region32
      $region31: #{fwd.26} parent=27 // pred_region
        %s282 = smul.u32 2, %s20
        %s283 = smul.u32 2, %s22
        %p284 = scmp.lt.s32.totalorder %s19, 5
        %s285 = scalar_select %p284, %s19, 5
        %p286 = scmp.lt.s32.totalorder %s282, 1
        %s287 = scalar_select %p286, %s282, 1
        %p288 = scmp.lt.s32.totalorder %s283, 1
        %s289 = scalar_select %p288, %s283, 1
        %s290 = smul.addr %s287, 2
        %s291 = sadd.s32 %s289, %s290
        %s292 = smul.addr %s285, 4
        %s293 = sadd.s32 %s291, %s292
        %s294 = smul.addr %s293, 4
        %s295 = scalar_lea.vmem %s0, %s294
        %s296 = smul.u32 2, %s20
        %s297 = smul.u32 2, %s22
      $region32: #{fwd.26} parent=27 // pred_fallthru
        _
      // Predicated region
      $region33: #{fwd.26} parent=27 // pred_check
        %p298 = pneg %p170
      $region34: #{fwd.26} parent=27 // pred_check_branch
        %300 = sbr.rel (%p298) target = $region36
      $region35: #{fwd.26} parent=27 // pred_region
        %s301 = smul.u32 2, %s22
        %p302 = scmp.lt.s32.totalorder %s19, 5
        %s303 = scalar_select %p302, %s19, 5
        %p304 = scmp.lt.s32.totalorder %s301, 1
        %s305 = scalar_select %p304, %s301, 1
        %s306 = smul.addr %s303, 2
        %s307 = sadd.s32 %s305, %s306
        %s308 = scalar_lea.vmem %s4, %s307
        %s309 = smul.u32 2, %s22
      $region36: #{fwd.26} parent=27 // pred_fallthru
        _
      // Predicated region
      $region37: #{fwd.26} parent=27 // pred_check
        %p310 = pneg %p200
      $region38: #{fwd.26} parent=27 // pred_check_branch
        %312 = sbr.rel (%p310) target = $region40
      $region39: #{fwd.26} parent=27 // pred_region
        %s313 = smul.u32 2, %s20
        %p314 = scmp.lt.s32.totalorder %s19, 5
        %s315 = scalar_select %p314, %s19, 5
        %p316 = scmp.lt.s32.totalorder %s313, 1
        %s317 = scalar_select %p316, %s313, 1
        %p318 = scmp.lt.s32.totalorder %s21, 0
        %s319 = scalar_select %p318, %s21, 0
        %s320 = sadd.s32 %s319, %s317
        %s321 = smul.addr %s315, 2
        %s322 = sadd.s32 %s320, %s321
        %s323 = smul.addr %s322, 4
        %s324 = scalar_lea.vmem %s5, %s323
        %s325 = smul.u32 2, %s20
      $region40: #{fwd.26} parent=27 // pred_fallthru
        _
    $region28: #{fwd.26} parent=5 // pred_fallthru
      _
    %p326 = scmp.le.s32.totalorder 1, %s12
    %p327 = scmp.lt.s32.totalorder %s12, 7
    %p328 = pnand %p326, %p327
    %p329 = pneg %p328
    // Predicated region
    $region41: #{fwd.26} parent=5 // pred_check
      _
    $region42: #{fwd.26} parent=5 // pred_check_branch
      %331 = sbr.rel (%p328) target = $region44
    $region43: #{fwd.26} parent=5 // pred_region
      %s332 = ssub.s32 %s12, 1
      %s333 = smul.u32 2, %s24
      %s334 = smul.u32 2, %s26
      %p335 = scmp.lt.s32.totalorder %s23, 5
      %s336 = scalar_select %p335, %s23, 5
      %p337 = scmp.lt.s32.totalorder %s333, 1
      %s338 = scalar_select %p337, %s333, 1
      %p339 = scmp.lt.s32.totalorder %s334, 1
      %s340 = scalar_select %p339, %s334, 1
      %s341 = smul.addr %s338, 2
      %s342 = sadd.s32 %s340, %s341
      %s343 = smul.addr %s336, 4
      %s344 = sadd.s32 %s342, %s343
      %s345 = smul.addr %s344, 4
      %s346 = scalar_lea.vmem %s0, %s345
      %p347 = pneg %p68
      %p348 = pneg %p65
      %s349 = smul.u32 32, %s26
      %p350 = scmp.lt.s32.totalorder %s349, 31
      %s351 = scalar_select %p350, %s349, 31
      %p352 = scmp.lt.s32.totalorder %s25, 0
      %s353 = scalar_select %p352, %s25, 0
      %s354 = sadd.s32 %s353, %s351
      %s355 = smul.addr %s354, 4
      %s356 = scalar_lea.vmem %s1, %s355
      %p357 = pneg %p96
      %p358 = pneg %p93
      %p359 = scmp.lt.s32.totalorder %s25, 0
      %s360 = scalar_select %p359, %s25, 0
      %s361 = scalar_lea.vmem %s2, %s360
      %p362 = pneg %p122
      %p363 = pneg %p119
      %p364 = scmp.lt.s32.totalorder %s25, 0
      %s365 = scalar_select %p364, %s25, 0
      %s366 = scalar_lea.vmem %s3, %s365
      %p367 = pneg %p148
      %p368 = pneg %p145
      %s369 = smul.u32 2, %s26
      %p370 = scmp.lt.s32.totalorder %s23, 5
      %s371 = scalar_select %p370, %s23, 5
      %p372 = scmp.lt.s32.totalorder %s369, 1
      %s373 = scalar_select %p372, %s369, 1
      %s374 = smul.addr %s371, 2
      %s375 = sadd.s32 %s373, %s374
      %s376 = scalar_lea.vmem %s4, %s375
      %p377 = pneg %p176
      %p378 = pneg %p173
      %s379 = smul.u32 2, %s24
      %p380 = scmp.lt.s32.totalorder %s23, 5
      %s381 = scalar_select %p380, %s23, 5
      %p382 = scmp.lt.s32.totalorder %s379, 1
      %s383 = scalar_select %p382, %s379, 1
      %p384 = scmp.lt.s32.totalorder %s25, 0
      %s385 = scalar_select %p384, %s25, 0
      %s386 = sadd.s32 %s385, %s383
      %s387 = smul.addr %s381, 2
      %s388 = sadd.s32 %s386, %s387
      %s389 = smul.addr %s388, 4
      %s390 = scalar_lea.vmem %s5, %s389
      %p391 = pneg %p206
      %p392 = pneg %p203
      %p393 = pneg %p236
      %p394 = pneg %p233
      %s395 = smul.u32 2, %s24
      %p396 = scmp.lt.s32.totalorder %s23, 5
      %s397 = scalar_select %p396, %s23, 5
      %p398 = scmp.lt.s32.totalorder %s395, 1
      %s399 = scalar_select %p398, %s395, 1
      %p400 = scmp.lt.s32.totalorder %s25, 0
      %s401 = scalar_select %p400, %s25, 0
      %s402 = sadd.s32 %s401, %s399
      %s403 = smul.addr %s397, 2
      %s404 = sadd.s32 %s402, %s403
      %s405 = smul.addr %s404, 4
      %s406 = scalar_lea.vmem %s6, %s405
      %s407 = smul.u32 2, %s24
      %s408 = smul.u32 2, %s26
      %p409 = scmp.lt.s32.totalorder %s23, 5
      %s410 = scalar_select %p409, %s23, 5
      %p411 = scmp.lt.s32.totalorder %s407, 1
      %s412 = scalar_select %p411, %s407, 1
      %p413 = scmp.lt.s32.totalorder %s408, 1
      %s414 = scalar_select %p413, %s408, 1
      %s415 = smul.addr %s412, 2
      %s416 = sadd.s32 %s414, %s415
      %s417 = smul.addr %s410, 4
      %s418 = sadd.s32 %s416, %s417
      %s419 = smul.addr %s418, 4
      %s420 = scalar_lea.vmem %s0, %s419
      %s421 = smul.u32 2, %s24
      %s422 = smul.u32 2, %s26
      %s423 = smul.u32 32, %s26
      %p424 = scmp.lt.s32.totalorder %s423, 31
      %s425 = scalar_select %p424, %s423, 31
      %p426 = scmp.lt.s32.totalorder %s25, 0
      %s427 = scalar_select %p426, %s25, 0
      %s428 = sadd.s32 %s427, %s425
      %s429 = smul.addr %s428, 4
      %s430 = scalar_lea.vmem %s1, %s429
      %s431 = smul.u32 32, %s26
      %p432 = scmp.lt.s32.totalorder %s25, 0
      %s433 = scalar_select %p432, %s25, 0
      %s434 = scalar_lea.vmem %s2, %s433
      %p435 = scmp.lt.s32.totalorder %s25, 0
      %s436 = scalar_select %p435, %s25, 0
      %s437 = scalar_lea.vmem %s3, %s436
      %s438 = smul.u32 2, %s26
      %p439 = scmp.lt.s32.totalorder %s23, 5
      %s440 = scalar_select %p439, %s23, 5
      %p441 = scmp.lt.s32.totalorder %s438, 1
      %s442 = scalar_select %p441, %s438, 1
      %s443 = smul.addr %s440, 2
      %s444 = sadd.s32 %s442, %s443
      %s445 = scalar_lea.vmem %s4, %s444
      %s446 = smul.u32 2, %s26
      %s447 = smul.u32 2, %s24
      %p448 = scmp.lt.s32.totalorder %s23, 5
      %s449 = scalar_select %p448, %s23, 5
      %p450 = scmp.lt.s32.totalorder %s447, 1
      %s451 = scalar_select %p450, %s447, 1
      %p452 = scmp.lt.s32.totalorder %s25, 0
      %s453 = scalar_select %p452, %s25, 0
      %s454 = sadd.s32 %s453, %s451
      %s455 = smul.addr %s449, 2
      %s456 = sadd.s32 %s454, %s455
      %s457 = smul.addr %s456, 4
      %s458 = scalar_lea.vmem %s5, %s457
      %s459 = smul.u32 2, %s24
      %s460 = smul.u32 2, %s24
      %p461 = scmp.lt.s32.totalorder %s23, 5
      %s462 = scalar_select %p461, %s23, 5
      %p463 = scmp.lt.s32.totalorder %s460, 1
      %s464 = scalar_select %p463, %s460, 1
      %p465 = scmp.lt.s32.totalorder %s25, 0
      %s466 = scalar_select %p465, %s25, 0
      %s467 = sadd.s32 %s466, %s464
      %s468 = smul.addr %s462, 2
      %s469 = sadd.s32 %s467, %s468
      %s470 = smul.addr %s469, 4
      %s471 = scalar_lea.vmem %s6, %s470
      %s472 = smul.u32 2, %s24
      %p474 = scmp.eq.s32.totalorder %s26, 0
      // Predicated region
      $region45: #{fwd.26} parent=43 // pred_check
        %p475 = pneg %p474
      $region46: #{fwd.26} parent=43 // pred_check_branch
        %477 = sbr.rel (%p475) target = $region48
      $region47: #{fwd.26} parent=43 // pred_region
        %478 = vst [vmem:[#allocation2] sm:$0xff] 0.0
        %479 = vst [vmem:[#allocation2 + $0x8] sm:$0xff] 0.0
      $region48: #{fwd.26} parent=43 // pred_fallthru
        _
      %v480 = vld [vmem:[%s420] sm:$0xff]
      %v481 = vld [vmem:[%s420 + $0x8] sm:$0xff]
      %v482 = vunpack.c.l.bf16 %v480
      %v483 = vunpack.c.h.bf16 %v480
      %v484 = vunpack.c.l.bf16 %v481
      %v485 = vunpack.c.h.bf16 %v481
      %v486 = vld [vmem:[%s445] sm:$0x3]
      %v488 = vlaneseq
      %v489 = vshrl.u32 %v488, 7
      %v490 = vsub.s32 0, %v489
      %v491 = vrot.slane %v486, %v490
      %v492 = vlaneseq
      %v493 = vshrl.u32 %v492, 7
      %v494 = vsub.s32 1, %v493
      %v495 = vrot.slane %v486, %v494
      %v498 = vmul.f32 %v482, %v491
      %v499 = vmul.f32 %v483, %v495
      %v500 = vmul.f32 %v484, %v491
      %v501 = vmul.f32 %v485, %v495
      %v502 = vpack.c.bf16 %v500, %v498
      %v503 = vpack.c.bf16 %v501, %v499
      %v504 = vld [vmem:[#allocation2] sm:$0xff]
      %v505 = vld [vmem:[#allocation2 + $0x8] sm:$0xff]
      %v506 = vld [vmem:[%s430] sm:$0xf]
      %v507 = vld [vmem:[%s430 + $0x4] sm:$0xf]
      %v508 = vld [vmem:[%s430 + $0x8] sm:$0xf]
      %v509 = vld [vmem:[%s430 + $0xc] sm:$0xf]
      %v510 = vld [vmem:[%s430 + $0x10] sm:$0xf]
      %v511 = vld [vmem:[%s430 + $0x14] sm:$0xf]
      %v512 = vld [vmem:[%s430 + $0x18] sm:$0xf]
      %v513 = vld [vmem:[%s430 + $0x1c] sm:$0xf]
      %v514 = vld [vmem:[%s430 + $0x20] sm:$0xf]
      %v515 = vld [vmem:[%s430 + $0x24] sm:$0xf]
      %v516 = vld [vmem:[%s430 + $0x28] sm:$0xf]
      %v517 = vld [vmem:[%s430 + $0x2c] sm:$0xf]
      %v518 = vld [vmem:[%s430 + $0x30] sm:$0xf]
      %v519 = vld [vmem:[%s430 + $0x34] sm:$0xf]
      %v520 = vld [vmem:[%s430 + $0x38] sm:$0xf]
      %v521 = vld [vmem:[%s430 + $0x3c] sm:$0xf]
      %v522 = vld [vmem:[%s430 + $0x40] sm:$0xf]
      %v523 = vld [vmem:[%s430 + $0x44] sm:$0xf]
      %v524 = vld [vmem:[%s430 + $0x48] sm:$0xf]
      %v525 = vld [vmem:[%s430 + $0x4c] sm:$0xf]
      %v526 = vld [vmem:[%s430 + $0x50] sm:$0xf]
      %v527 = vld [vmem:[%s430 + $0x54] sm:$0xf]
      %v528 = vld [vmem:[%s430 + $0x58] sm:$0xf]
      %v529 = vld [vmem:[%s430 + $0x5c] sm:$0xf]
      %v530 = vld [vmem:[%s430 + $0x60] sm:$0xf]
      %v531 = vld [vmem:[%s430 + $0x64] sm:$0xf]
      %v532 = vld [vmem:[%s430 + $0x68] sm:$0xf]
      %v533 = vld [vmem:[%s430 + $0x6c] sm:$0xf]
      %v534 = vld [vmem:[%s430 + $0x70] sm:$0xf]
      %v535 = vld [vmem:[%s430 + $0x74] sm:$0xf]
      %v536 = vld [vmem:[%s430 + $0x78] sm:$0xf]
      %v537 = vld [vmem:[%s430 + $0x7c] sm:$0xf]
      %v570 = vunpack.c.l.b16 %v506
      %v571 = vunpack.c.l.b16 %v507
      %v572 = vunpack.c.l.b16 %v508
      %v573 = vunpack.c.l.b16 %v509
      %v574 = vunpack.c.l.b16 %v510
      %v575 = vunpack.c.l.b16 %v511
      %v576 = vunpack.c.l.b16 %v512
      %v577 = vunpack.c.l.b16 %v513
      %v578 = vunpack.c.l.b16 %v514
      %v579 = vunpack.c.l.b16 %v515
      %v580 = vunpack.c.l.b16 %v516
      %v581 = vunpack.c.l.b16 %v517
      %v582 = vunpack.c.l.b16 %v518
      %v583 = vunpack.c.l.b16 %v519
      %v584 = vunpack.c.l.b16 %v520
      %v585 = vunpack.c.l.b16 %v521
      %v586 = vunpack.c.l.b16 %v522
      %v587 = vunpack.c.l.b16 %v523
      %v588 = vunpack.c.l.b16 %v524
      %v589 = vunpack.c.l.b16 %v525
      %v590 = vunpack.c.l.b16 %v526
      %v591 = vunpack.c.l.b16 %v527
      %v592 = vunpack.c.l.b16 %v528
      %v593 = vunpack.c.l.b16 %v529
      %v594 = vunpack.c.l.b16 %v530
      %v595 = vunpack.c.l.b16 %v531
      %v596 = vunpack.c.l.b16 %v532
      %v597 = vunpack.c.l.b16 %v533
      %v598 = vunpack.c.l.b16 %v534
      %v599 = vunpack.c.l.b16 %v535
      %v600 = vunpack.c.l.b16 %v536
      %v601 = vunpack.c.l.b16 %v537
      %v602 = vpack.c.b16 %v571, %v570
      %v603 = vpack.c.b16 %v573, %v572
      %v604 = vpack.c.b16 %v575, %v574
      %v605 = vpack.c.b16 %v577, %v576
      %v606 = vpack.c.b16 %v579, %v578
      %v607 = vpack.c.b16 %v581, %v580
      %v608 = vpack.c.b16 %v583, %v582
      %v609 = vpack.c.b16 %v585, %v584
      %v610 = vpack.c.b16 %v587, %v586
      %v611 = vpack.c.b16 %v589, %v588
      %v612 = vpack.c.b16 %v591, %v590
      %v613 = vpack.c.b16 %v593, %v592
      %v614 = vpack.c.b16 %v595, %v594
      %v615 = vpack.c.b16 %v597, %v596
      %v616 = vpack.c.b16 %v599, %v598
      %v617 = vpack.c.b16 %v601, %v600
      %634 = vmatprep.subr.bf16.mxu0 0
      %635 = vmatpush1.bf16.msra.mxu0 %v609
      %636 = vmatprep.subr.bf16.mxu0 0
      %637 = vmatpush1.bf16.msra.mxu0 %v608
      %638 = vmatprep.subr.bf16.mxu0 0
      %639 = vmatpush1.bf16.msra.mxu0 %v607
      %640 = vmatprep.subr.bf16.mxu0 0
      %641 = vmatpush1.bf16.msra.mxu0 %v606
      %642 = vmatprep.subr.bf16.mxu0 0
      %643 = vmatpush1.bf16.msra.mxu0 %v605
      %644 = vmatprep.subr.bf16.mxu0 0
      %645 = vmatpush1.bf16.msra.mxu0 %v604
      %646 = vmatprep.subr.bf16.mxu0 0
      %647 = vmatpush1.bf16.msra.mxu0 %v603
      %648 = vmatprep.subr.bf16.mxu0 0
      %649 = vmatpush1.bf16.msra.mxu0 %v602
      %650 = vmatprep.subr.bf16.mxu0 0
      %651 = vmatpush2.bf16.msra.mxu0 %v617
      %652 = vmatprep.subr.bf16.mxu0 0
      %653 = vmatpush2.bf16.msra.mxu0 %v616
      %654 = vmatprep.subr.bf16.mxu0 0
      %655 = vmatpush2.bf16.msra.mxu0 %v615
      %656 = vmatprep.subr.bf16.mxu0 0
      %657 = vmatpush2.bf16.msra.mxu0 %v614
      %658 = vmatprep.subr.bf16.mxu0 0
      %659 = vmatpush2.bf16.msra.mxu0 %v613
      %660 = vmatprep.subr.bf16.mxu0 0
      %661 = vmatpush2.bf16.msra.mxu0 %v612
      %662 = vmatprep.subr.bf16.mxu0 0
      %663 = vmatpush2.bf16.msra.mxu0 %v611
      %664 = vmatprep.subr.bf16.mxu0 0
      %665 = vmatpush2.bf16.msra.mxu0 %v610
      %666 = vmatprep.mubr.bf16.mxu0 %v503
      %667 = vmatmul.mubr.bf16.gmra.mxu0 %v502
      %v668 = vpop.f32.mrf.mxu0
      %v669 = vadd.f32 0.0, %v668
      %v670 = vpop.f32.mrf.mxu0
      %v671 = vpop.f32.mrf.mxu0
      %v672 = vadd.f32 0.0, %v671
      %v673 = vpop.f32.mrf.mxu0
      %674 = vdwg.mxu0
      %v675 = vadd.f32 %v504, %v669
      %v676 = vadd.f32 %v505, %v672
      %677 = vst [vmem:[#allocation2] sm:$0xff] %v675
      %678 = vst [vmem:[#allocation2 + $0x8] sm:$0xff] %v676
      // Predicated region
      $region49: #{fwd.26} parent=43 // pred_check
        %p679 = pneg %p474
      $region50: #{fwd.26} parent=43 // pred_check_branch
        %681 = sbr.rel (%p679) target = $region52
      $region51: #{fwd.26} parent=43 // pred_region
        %v682 = vld [vmem:[#allocation2] sm:$0xff]
        %v683 = vld [vmem:[#allocation2 + $0x8] sm:$0xff]
        %v684 = vld [vmem:[%s434] sm:$0x1]
        %v686 = vlaneseq
        %v687 = vshrl.u32 %v686, 7
        %v688 = vsub.s32 0, %v687
        %v689 = vrot.slane %v684, %v688
        %v691 = vmul.f32 %v682, %v689
        %v692 = vmul.f32 %v683, %v689
        %v693 = vld [vmem:[%s437] sm:$0x1]
        %v695 = vlaneseq
        %v696 = vshrl.u32 %v695, 7
        %v697 = vsub.s32 0, %v696
        %v698 = vrot.slane %v693, %v697
        %v700 = vadd.f32 %v691, %v698
        %v701 = vadd.f32 %v692, %v698
        %v702 = vld [vmem:[%s458] sm:$0xf]
        %v703 = vld [vmem:[%s458 + $0x4] sm:$0xf]
        %v704 = vunpack.c.l.bf16 %v702
        %v705 = vunpack.c.l.bf16 %v703
        %v706 = vadd.f32 %v700, %v704
        %v707 = vadd.f32 %v701, %v705
        %v708 = vpack.c.bf16 %v707, %v706
        %v710 = vunpack.c.l.b16 %v708
        %v711 = vunpack.c.h.b16 %v708
        %v712 = vpack.c.b16 %v710, %v710
        %v713 = vpack.c.b16 %v711, %v711
        %716 = vst [vmem:[%s471] sm:$0xf] %v712
        %717 = vst [vmem:[%s471 + $0x4] sm:$0xf] %v713
      $region52: #{fwd.26} parent=43 // pred_fallthru
        _
      %s718 = smul.u32 2, %s24
      %p719 = scmp.lt.s32.totalorder %s23, 5
      %s720 = scalar_select %p719, %s23, 5
      %p721 = scmp.lt.s32.totalorder %s718, 1
      %s722 = scalar_select %p721, %s718, 1
      %p723 = scmp.lt.s32.totalorder %s25, 0
      %s724 = scalar_select %p723, %s25, 0
      %s725 = sadd.s32 %s724, %s722
      %s726 = smul.addr %s720, 2
      %s727 = sadd.s32 %s725, %s726
      %s728 = smul.addr %s727, 4
      %s729 = scalar_lea.vmem %s6, %s728
      // Predicated region
      $region53: #{fwd.26} parent=43 // pred_check
        %p730 = pneg %p233
      $region54: #{fwd.26} parent=43 // pred_check_branch
        %732 = sbr.rel (%p730) target = $region56
      $region55: #{fwd.26} parent=43 // pred_region
        %s733 = smul.u32 2, %s24
      $region56: #{fwd.26} parent=43 // pred_fallthru
        _
    $region44: #{fwd.26} parent=5 // pred_fallthru
      _
    %p734 = scmp.le.s32.totalorder 2, %s12
    // Predicated region
    $region57: #{fwd.26} parent=5 // pred_check
      %p735 = pneg %p734
    $region58: #{fwd.26} parent=5 // pred_check_branch
      %737 = sbr.rel (%p735) target = $region60
    $region59: #{fwd.26} parent=5 // pred_region
      %s738 = ssub.s32 %s12, 2
      // Predicated region
      $region61: #{fwd.26} parent=59 // pred_check
        %p739 = pneg %p239
      $region62: #{fwd.26} parent=59 // pred_check_branch
        %741 = sbr.rel (%p739) target = $region64
      $region63: #{fwd.26} parent=59 // pred_region
        %s742 = smul.u32 2, %s28
        %p743 = scmp.lt.s32.totalorder %s27, 5
        %s744 = scalar_select %p743, %s27, 5
        %p745 = scmp.lt.s32.totalorder %s742, 1
        %s746 = scalar_select %p745, %s742, 1
        %p747 = scmp.lt.s32.totalorder %s29, 0
        %s748 = scalar_select %p747, %s29, 0
        %s749 = sadd.s32 %s748, %s746
        %s750 = smul.addr %s744, 2
        %s751 = sadd.s32 %s749, %s750
        %s752 = smul.addr %s751, 4
        %s753 = scalar_lea.vmem %s6, %s752
      $region64: #{fwd.26} parent=59 // pred_fallthru
        _
    $region60: #{fwd.26} parent=5 // pred_fallthru
      _
  $region6: #{fwd.26} parent=0 // loop_footer
    %s16 = sadd.s32 1, %s12
  $region7: #{fwd.26} parent=0 // loop_footer_branch
    %11 = sbr.rel target = $region3
  $region8: #{fwd.26} parent=0 // loop_exit
    _

// kernel: fwd.24
$region0: #{fwd.24}
  #allocation0 [shape = 'u32[]', space=smem, size = 0x4, offset = 0x4, fixed_abs, tag = 'smem constant byte address 0x4 - core index']
  #allocation1 [shape = 'u32[144,128]{1,0:T(1,128)}', space=vmem, size = 0x12000, scoped, tag = 'internal scratch']
  %s0 = inlined_call_operand.vmem [shape: bf16[6,9,16,256], index: 0, kind: input, shape index: {}]
  %s1 = inlined_call_operand.vmem [shape: f32[9,1,256], index: 1, kind: input, shape index: {}]
  %s2 = inlined_call_operand.vmem [shape: f32[1,256], index: 2, kind: input, shape index: {}]
  %s3 = inlined_call_operand.vmem [shape: f32[1,256], index: 3, kind: input, shape index: {}]
  %s4 = inlined_call_operand.vmem [shape: bf16[6,16,256], index: 4, kind: output, shape index: {0}]
  %s5 = inlined_call_operand.vmem [shape: f32[6,1,256], index: 5, kind: output, shape index: {1}]
  %6 = xla_tuple %s4, %s5
  %s7 = sld [smem:[#allocation0]]
  $region61: #{fwd.24} parent=0
    _
  %s9 = ssub.s32 1, %s7
  %s10 = scalar_select 0, %s9, %s7
  loop: start=0, step=1, limit=8
  $region2: #{fwd.24} parent=0 // loop_pre_header
    _
  $region3: #{fwd.24} parent=0 // loop_header
    %s12 = sphi 0, %s16
    %p13 = scmp.ge.s32.totalorder %s12, 8
    %s19 = sphi 0, %s31
    %s20 = sphi 0, %s27
    %s21 = sphi 0, %s19
    %s22 = sphi 0, %s20
    %s23 = sphi 0, %s21
    %s24 = sphi 0, %s22
    %s36 = sphi 0, %s38
    %s39 = sphi 0, %s36
    %s40 = sphi 0, %s39
    %s56 = sphi 0, %s40
    %s60 = sphi 0, %s60
    %s62 = sphi 0, %s60
    %s63 = sphi 0, %s62
    %s77 = sphi 0, %s63
    %s81 = sphi 0, %s81
    %s83 = sphi 0, %s81
    %s84 = sphi 0, %s83
    %s98 = sphi 0, %s84
    %s102 = sphi 0, %s102
    %s104 = sphi 0, %s102
    %s105 = sphi 0, %s104
    %s119 = sphi 0, %s105
    %s127 = sphi 0, %s129
    %s130 = sphi 0, %s127
    %s131 = sphi 0, %s130
    %s147 = sphi 0, %s131
    %s153 = sphi 0, %s155
    %s156 = sphi 0, %s153
    %s157 = sphi 0, %s156
    %s173 = sphi 0, %s157
  $region4: #{fwd.24} parent=0 // loop_header_branch
    %15 = sbr.rel (%p13) target = $region8
  $region5: #{fwd.24} parent=0 // loop_body
    %s17 = ssub.s32 %s12, 1
    %s18 = ssub.s32 %s12, 2
    %s25 = sadd.s32 1, %s20
    %p26 = scmp.ge.s32.totalorder %s25, 1
    %s27 = scalar_select %p26, 0, %s25
    %s28 = sadd.s32 1, %s19
    %s29 = scalar_select %p26, %s28, %s19
    %p30 = scmp.ge.s32.totalorder %s29, 6
    %s31 = scalar_select %p30, 0, %s29
    %s32 = ssub.s32 %s19, %s31
    %s33 = ssub.s32 %s20, %s27
    %s34 = sor.u32 %s32, %s33
    %p35 = scmp.eq.s32.totalorder %s34, 0
    %s37 = sadd.s32 %s36, 1
    %s38 = scalar_select %p35, %s36, %s37
    %p41 = pneg %p35
    %p42 = scmp.eq.s32.totalorder %s12, 5
    %p43 = por %p41, %p42
    %p44 = scmp.ne.s32.totalorder %s36, %s39
    %p45 = scmp.eq.s32.totalorder %s12, 0
    %p46 = por %p44, %p45
    %p47 = scmp.ne.s32.totalorder %s36, %s39
    %p48 = scmp.eq.s32.totalorder %s17, 5
    %p49 = por %p47, %p48
    %p50 = scmp.ne.s32.totalorder %s39, %s40
    %p51 = scmp.eq.s32.totalorder %s17, 0
    %p52 = por %p50, %p51
    %p53 = scmp.ne.s32.totalorder %s39, %s40
    %p54 = scmp.eq.s32.totalorder %s18, 5
    %p55 = por %p53, %p54
    %p57 = scmp.ne.s32.totalorder %s40, %s56
    %p58 = scmp.eq.s32.totalorder %s18, 0
    %p59 = por %p57, %p58
    %s61 = sadd.s32 %s60, 1
    %p64 = scmp.eq.s32.totalorder %s12, 5
    %p65 = scmp.ne.s32.totalorder %s60, %s62
    %p66 = scmp.eq.s32.totalorder %s12, 0
    %p67 = por %p65, %p66
    %p68 = scmp.ne.s32.totalorder %s60, %s62
    %p69 = scmp.eq.s32.totalorder %s17, 5
    %p70 = por %p68, %p69
    %p71 = scmp.ne.s32.totalorder %s62, %s63
    %p72 = scmp.eq.s32.totalorder %s17, 0
    %p73 = por %p71, %p72
    %p74 = scmp.ne.s32.totalorder %s62, %s63
    %p75 = scmp.eq.s32.totalorder %s18, 5
    %p76 = por %p74, %p75
    %p78 = scmp.ne.s32.totalorder %s63, %s77
    %p79 = scmp.eq.s32.totalorder %s18, 0
    %p80 = por %p78, %p79
    %s82 = sadd.s32 %s81, 1
    %p85 = scmp.eq.s32.totalorder %s12, 5
    %p86 = scmp.ne.s32.totalorder %s81, %s83
    %p87 = scmp.eq.s32.totalorder %s12, 0
    %p88 = por %p86, %p87
    %p89 = scmp.ne.s32.totalorder %s81, %s83
    %p90 = scmp.eq.s32.totalorder %s17, 5
    %p91 = por %p89, %p90
    %p92 = scmp.ne.s32.totalorder %s83, %s84
    %p93 = scmp.eq.s32.totalorder %s17, 0
    %p94 = por %p92, %p93
    %p95 = scmp.ne.s32.totalorder %s83, %s84
    %p96 = scmp.eq.s32.totalorder %s18, 5
    %p97 = por %p95, %p96
    %p99 = scmp.ne.s32.totalorder %s84, %s98
    %p100 = scmp.eq.s32.totalorder %s18, 0
    %p101 = por %p99, %p100
    %s103 = sadd.s32 %s102, 1
    %p106 = scmp.eq.s32.totalorder %s12, 5
    %p107 = scmp.ne.s32.totalorder %s102, %s104
    %p108 = scmp.eq.s32.totalorder %s12, 0
    %p109 = por %p107, %p108
    %p110 = scmp.ne.s32.totalorder %s102, %s104
    %p111 = scmp.eq.s32.totalorder %s17, 5
    %p112 = por %p110, %p111
    %p113 = scmp.ne.s32.totalorder %s104, %s105
    %p114 = scmp.eq.s32.totalorder %s17, 0
    %p115 = por %p113, %p114
    %p116 = scmp.ne.s32.totalorder %s104, %s105
    %p117 = scmp.eq.s32.totalorder %s18, 5
    %p118 = por %p116, %p117
    %p120 = scmp.ne.s32.totalorder %s105, %s119
    %p121 = scmp.eq.s32.totalorder %s18, 0
    %p122 = por %p120, %p121
    %s123 = ssub.s32 %s19, %s31
    %s124 = ssub.s32 %s20, %s27
    %s125 = sor.u32 %s123, %s124
    %p126 = scmp.eq.s32.totalorder %s125, 0
    %s128 = sadd.s32 %s127, 1
    %s129 = scalar_select %p126, %s127, %s128
    %p132 = pneg %p126
    %p133 = scmp.eq.s32.totalorder %s12, 5
    %p134 = por %p132, %p133
    %p135 = scmp.ne.s32.totalorder %s127, %s130
    %p136 = scmp.eq.s32.totalorder %s12, 0
    %p137 = por %p135, %p136
    %p138 = scmp.ne.s32.totalorder %s127, %s130
    %p139 = scmp.eq.s32.totalorder %s17, 5
    %p140 = por %p138, %p139
    %p141 = scmp.ne.s32.totalorder %s130, %s131
    %p142 = scmp.eq.s32.totalorder %s17, 0
    %p143 = por %p141, %p142
    %p144 = scmp.ne.s32.totalorder %s130, %s131
    %p145 = scmp.eq.s32.totalorder %s18, 5
    %p146 = por %p144, %p145
    %p148 = scmp.ne.s32.totalorder %s131, %s147
    %p149 = scmp.eq.s32.totalorder %s18, 0
    %p150 = por %p148, %p149
    %s151 = ssub.s32 %s19, %s31
    %p152 = scmp.eq.s32.totalorder %s151, 0
    %s154 = sadd.s32 %s153, 1
    %s155 = scalar_select %p152, %s153, %s154
    %p158 = pneg %p152
    %p159 = scmp.eq.s32.totalorder %s12, 5
    %p160 = por %p158, %p159
    %p161 = scmp.ne.s32.totalorder %s153, %s156
    %p162 = scmp.eq.s32.totalorder %s12, 0
    %p163 = por %p161, %p162
    %p164 = scmp.ne.s32.totalorder %s153, %s156
    %p165 = scmp.eq.s32.totalorder %s17, 5
    %p166 = por %p164, %p165
    %p167 = scmp.ne.s32.totalorder %s156, %s157
    %p168 = scmp.eq.s32.totalorder %s17, 0
    %p169 = por %p167, %p168
    %p170 = scmp.ne.s32.totalorder %s156, %s157
    %p171 = scmp.eq.s32.totalorder %s18, 5
    %p172 = por %p170, %p171
    %p174 = scmp.ne.s32.totalorder %s157, %s173
    %p175 = scmp.eq.s32.totalorder %s18, 0
    %p176 = por %p174, %p175
    %p177 = scmp.le.s32.totalorder 1, %s12
    %p178 = scmp.lt.s32.totalorder %s12, 7
    %p179 = pnand %p177, %p178
    %p180 = pneg %p179
    // Predicated region
    $region9: #{fwd.24} parent=5 // pred_check
      _
    $region10: #{fwd.24} parent=5 // pred_check_branch
      %182 = sbr.rel (%p179) target = $region12
    $region11: #{fwd.24} parent=5 // pred_region
      %s183 = ssub.s32 %s12, 1
      // Predicated region
      $region13: #{fwd.24} parent=11 // pred_check
        %p184 = pneg %p73
      $region14: #{fwd.24} parent=11 // pred_check_branch
        %186 = sbr.rel (%p184) target = $region16
      $region15: #{fwd.24} parent=11 // pred_region
        _
      $region16: #{fwd.24} parent=11 // pred_fallthru
        _
      // Predicated region
      $region17: #{fwd.24} parent=11 // pred_check
        %p187 = pneg %p94
      $region18: #{fwd.24} parent=11 // pred_check_branch
        %189 = sbr.rel (%p187) target = $region20
      $region19: #{fwd.24} parent=11 // pred_region
        _
      $region20: #{fwd.24} parent=11 // pred_fallthru
        _
      // Predicated region
      $region21: #{fwd.24} parent=11 // pred_check
        %p190 = pneg %p115
      $region22: #{fwd.24} parent=11 // pred_check_branch
        %192 = sbr.rel (%p190) target = $region24
      $region23: #{fwd.24} parent=11 // pred_region
        _
      $region24: #{fwd.24} parent=11 // pred_fallthru
        _
    $region12: #{fwd.24} parent=5 // pred_fallthru
      _
    %p193 = scmp.lt.s32.totalorder %s12, 6
    // Predicated region
    $region25: #{fwd.24} parent=5 // pred_check
      %p194 = pneg %p193
    $region26: #{fwd.24} parent=5 // pred_check_branch
      %196 = sbr.rel (%p194) target = $region28
    $region27: #{fwd.24} parent=5 // pred_region
      // Predicated region
      $region29: #{fwd.24} parent=27 // pred_check
        %p197 = pneg %p46
      $region30: #{fwd.24} parent=27 // pred_check_branch
        %199 = sbr.rel (%p197) target = $region32
      $region31: #{fwd.24} parent=27 // pred_region
        %s200 = smul.u32 2, %s20
        %p201 = scmp.lt.s32.totalorder %s19, 5
        %s202 = scalar_select %p201, %s19, 5
        %p203 = scmp.lt.s32.totalorder %s200, 1
        %s204 = scalar_select %p203, %s200, 1
        %s205 = smul.addr %s204, 2
        %s206 = smul.addr %s202, 36
        %s207 = sadd.s32 %s205, %s206
        %s208 = smul.addr %s207, 4
        %s209 = scalar_lea.vmem %s0, %s208
        %s210 = smul.u32 2, %s20
      $region32: #{fwd.24} parent=27 // pred_fallthru
        _
    $region28: #{fwd.24} parent=5 // pred_fallthru
      _
    %p211 = scmp.le.s32.totalorder 1, %s12
    %p212 = scmp.lt.s32.totalorder %s12, 7
    %p213 = pnand %p211, %p212
    %p214 = pneg %p213
    // Predicated region
    $region33: #{fwd.24} parent=5 // pred_check
      _
    $region34: #{fwd.24} parent=5 // pred_check_branch
      %216 = sbr.rel (%p213) target = $region36
    $region35: #{fwd.24} parent=5 // pred_region
      %s217 = ssub.s32 %s12, 1
      %s218 = smul.u32 2, %s22
      %p219 = scmp.lt.s32.totalorder %s21, 5
      %s220 = scalar_select %p219, %s21, 5
      %p221 = scmp.lt.s32.totalorder %s218, 1
      %s222 = scalar_select %p221, %s218, 1
      %s223 = smul.addr %s222, 2
      %s224 = smul.addr %s220, 36
      %s225 = sadd.s32 %s223, %s224
      %s226 = smul.addr %s225, 4
      %s227 = scalar_lea.vmem %s0, %s226
      %p228 = pneg %p52
      %p229 = pneg %p49
      %p230 = pneg %p73
      %p231 = pneg %p70
      %p232 = pneg %p94
      %p233 = pneg %p91
      %p234 = pneg %p115
      %p235 = pneg %p112
      %p236 = pneg %p143
      %p237 = pneg %p140
      %s238 = smul.u32 2, %s22
      %p239 = scmp.lt.s32.totalorder %s21, 5
      %s240 = scalar_select %p239, %s21, 5
      %p241 = scmp.lt.s32.totalorder %s238, 1
      %s242 = scalar_select %p241, %s238, 1
      %s243 = smul.addr %s242, 2
      %s244 = smul.addr %s240, 4
      %s245 = sadd.s32 %s243, %s244
      %s246 = smul.addr %s245, 4
      %s247 = scalar_lea.vmem %s4, %s246
      %p248 = pneg %p169
      %p249 = pneg %p166
      %p250 = scmp.lt.s32.totalorder %s21, 5
      %s251 = scalar_select %p250, %s21, 5
      %s252 = smul.addr %s251, 2
      %s253 = scalar_lea.vmem %s5, %s252
      %s254 = smul.u32 2, %s22
      %p255 = scmp.lt.s32.totalorder %s21, 5
      %s256 = scalar_select %p255, %s21, 5
      %p257 = scmp.lt.s32.totalorder %s254, 1
      %s258 = scalar_select %p257, %s254, 1
      %s259 = smul.addr %s258, 2
      %s260 = smul.addr %s256, 36
      %s261 = sadd.s32 %s259, %s260
      %s262 = smul.addr %s261, 4
      %s263 = scalar_lea.vmem %s0, %s262
      %s264 = smul.u32 2, %s22
      %s265 = smul.u32 2, %s22
      %p266 = scmp.lt.s32.totalorder %s21, 5
      %s267 = scalar_select %p266, %s21, 5
      %p268 = scmp.lt.s32.totalorder %s265, 1
      %s269 = scalar_select %p268, %s265, 1
      %s270 = smul.addr %s269, 2
      %s271 = smul.addr %s267, 4
      %s272 = sadd.s32 %s270, %s271
      %s273 = smul.addr %s272, 4
      %s274 = scalar_lea.vmem %s4, %s273
      %s275 = smul.u32 2, %s22
      %p276 = scmp.lt.s32.totalorder %s21, 5
      %s277 = scalar_select %p276, %s21, 5
      %s278 = smul.addr %s277, 2
      %s279 = scalar_lea.vmem %s5, %s278
      %v280 = vld [vmem:[%s263] sm:$0xff]
      %v281 = vld [vmem:[%s263 + $0x8] sm:$0xff]
      %v282 = vunpack.c.l.bf16 %v280
      %v283 = vunpack.c.h.bf16 %v280
      %v284 = vunpack.c.l.bf16 %v281
      %v285 = vunpack.c.h.bf16 %v281
      %v286 = vld [vmem:[%s1] sm:$0x3]
      %v288 = vlaneseq
      %v289 = vshrl.u32 %v288, 7
      %v290 = vsub.s32 0, %v289
      %v291 = vrot.slane %v286, %v290
      %v292 = vlaneseq
      %v293 = vshrl.u32 %v292, 7
      %v294 = vsub.s32 1, %v293
      %v295 = vrot.slane %v286, %v294
      %v298 = vmul.f32 %v282, %v291
      %v299 = vmul.f32 %v283, %v295
      %v300 = vmul.f32 %v284, %v291
      %v301 = vmul.f32 %v285, %v295
      %v302 = vadd.f32 %v298, 0.0
      %v303 = vadd.f32 %v299, 0.0
      %v304 = vadd.f32 %v300, 0.0
      %v305 = vadd.f32 %v301, 0.0
      %s306 = scalar_lea.vmem %s263, 16
      %v307 = vld [vmem:[%s306] sm:$0xff]
      %v308 = vld [vmem:[%s306 + $0x8] sm:$0xff]
      %v309 = vunpack.c.l.bf16 %v307
      %v310 = vunpack.c.h.bf16 %v307
      %v311 = vunpack.c.l.bf16 %v308
      %v312 = vunpack.c.h.bf16 %v308
      %s313 = scalar_lea.vmem %s1, 2
      %v314 = vld [vmem:[%s313] sm:$0x3]
      %v316 = vlaneseq
      %v317 = vshrl.u32 %v316, 7
      %v318 = vsub.s32 0, %v317
      %v319 = vrot.slane %v314, %v318
      %v320 = vlaneseq
      %v321 = vshrl.u32 %v320, 7
      %v322 = vsub.s32 1, %v321
      %v323 = vrot.slane %v314, %v322
      %v326 = vmul.f32 %v309, %v319
      %v327 = vmul.f32 %v310, %v323
      %v328 = vmul.f32 %v311, %v319
      %v329 = vmul.f32 %v312, %v323
      %v330 = vadd.f32 %v302, %v326
      %v331 = vadd.f32 %v303, %v327
      %v332 = vadd.f32 %v304, %v328
      %v333 = vadd.f32 %v305, %v329
      %s334 = scalar_lea.vmem %s263, 32
      %v335 = vld [vmem:[%s334] sm:$0xff]
      %v336 = vld [vmem:[%s334 + $0x8] sm:$0xff]
      %v337 = vunpack.c.l.bf16 %v335
      %v338 = vunpack.c.h.bf16 %v335
      %v339 = vunpack.c.l.bf16 %v336
      %v340 = vunpack.c.h.bf16 %v336
      %s341 = scalar_lea.vmem %s1, 4
      %v342 = vld [vmem:[%s341] sm:$0x3]
      %v344 = vlaneseq
      %v345 = vshrl.u32 %v344, 7
      %v346 = vsub.s32 0, %v345
      %v347 = vrot.slane %v342, %v346
      %v348 = vlaneseq
      %v349 = vshrl.u32 %v348, 7
      %v350 = vsub.s32 1, %v349
      %v351 = vrot.slane %v342, %v350
      %v354 = vmul.f32 %v337, %v347
      %v355 = vmul.f32 %v338, %v351
      %v356 = vmul.f32 %v339, %v347
      %v357 = vmul.f32 %v340, %v351
      %v358 = vadd.f32 %v330, %v354
      %v359 = vadd.f32 %v331, %v355
      %v360 = vadd.f32 %v332, %v356
      %v361 = vadd.f32 %v333, %v357
      %s362 = scalar_lea.vmem %s263, 48
      %v363 = vld [vmem:[%s362] sm:$0xff]
      %v364 = vld [vmem:[%s362 + $0x8] sm:$0xff]
      %v365 = vunpack.c.l.bf16 %v363
      %v366 = vunpack.c.h.bf16 %v363
      %v367 = vunpack.c.l.bf16 %v364
      %v368 = vunpack.c.h.bf16 %v364
      %s369 = scalar_lea.vmem %s1, 6
      %v370 = vld [vmem:[%s369] sm:$0x3]
      %v372 = vlaneseq
      %v373 = vshrl.u32 %v372, 7
      %v374 = vsub.s32 0, %v373
      %v375 = vrot.slane %v370, %v374
      %v376 = vlaneseq
      %v377 = vshrl.u32 %v376, 7
      %v378 = vsub.s32 1, %v377
      %v379 = vrot.slane %v370, %v378
      %v382 = vmul.f32 %v365, %v375
      %v383 = vmul.f32 %v366, %v379
      %v384 = vmul.f32 %v367, %v375
      %v385 = vmul.f32 %v368, %v379
      %v386 = vadd.f32 %v358, %v382
      %v387 = vadd.f32 %v359, %v383
      %v388 = vadd.f32 %v360, %v384
      %v389 = vadd.f32 %v361, %v385
      %s390 = scalar_lea.vmem %s263, 64
      %v391 = vld [vmem:[%s390] sm:$0xff]
      %v392 = vld [vmem:[%s390 + $0x8] sm:$0xff]
      %v393 = vunpack.c.l.bf16 %v391
      %v394 = vunpack.c.h.bf16 %v391
      %v395 = vunpack.c.l.bf16 %v392
      %v396 = vunpack.c.h.bf16 %v392
      %s397 = scalar_lea.vmem %s1, 8
      %v398 = vld [vmem:[%s397] sm:$0x3]
      %v400 = vlaneseq
      %v401 = vshrl.u32 %v400, 7
      %v402 = vsub.s32 0, %v401
      %v403 = vrot.slane %v398, %v402
      %v404 = vlaneseq
      %v405 = vshrl.u32 %v404, 7
      %v406 = vsub.s32 1, %v405
      %v407 = vrot.slane %v398, %v406
      %v410 = vmul.f32 %v393, %v403
      %v411 = vmul.f32 %v394, %v407
      %v412 = vmul.f32 %v395, %v403
      %v413 = vmul.f32 %v396, %v407
      %v414 = vadd.f32 %v386, %v410
      %v415 = vadd.f32 %v387, %v411
      %v416 = vadd.f32 %v388, %v412
      %v417 = vadd.f32 %v389, %v413
      %s418 = scalar_lea.vmem %s263, 80
      %v419 = vld [vmem:[%s418] sm:$0xff]
      %v420 = vld [vmem:[%s418 + $0x8] sm:$0xff]
      %v421 = vunpack.c.l.bf16 %v419
      %v422 = vunpack.c.h.bf16 %v419
      %v423 = vunpack.c.l.bf16 %v420
      %v424 = vunpack.c.h.bf16 %v420
      %s425 = scalar_lea.vmem %s1, 10
      %v426 = vld [vmem:[%s425] sm:$0x3]
      %v428 = vlaneseq
      %v429 = vshrl.u32 %v428, 7
      %v430 = vsub.s32 0, %v429
      %v431 = vrot.slane %v426, %v430
      %v432 = vlaneseq
      %v433 = vshrl.u32 %v432, 7
      %v434 = vsub.s32 1, %v433
      %v435 = vrot.slane %v426, %v434
      %v438 = vmul.f32 %v421, %v431
      %v439 = vmul.f32 %v422, %v435
      %v440 = vmul.f32 %v423, %v431
      %v441 = vmul.f32 %v424, %v435
      %v442 = vadd.f32 %v414, %v438
      %v443 = vadd.f32 %v415, %v439
      %v444 = vadd.f32 %v416, %v440
      %v445 = vadd.f32 %v417, %v441
      %s446 = scalar_lea.vmem %s263, 96
      %v447 = vld [vmem:[%s446] sm:$0xff]
      %v448 = vld [vmem:[%s446 + $0x8] sm:$0xff]
      %v449 = vunpack.c.l.bf16 %v447
      %v450 = vunpack.c.h.bf16 %v447
      %v451 = vunpack.c.l.bf16 %v448
      %v452 = vunpack.c.h.bf16 %v448
      %s453 = scalar_lea.vmem %s1, 12
      %v454 = vld [vmem:[%s453] sm:$0x3]
      %v456 = vlaneseq
      %v457 = vshrl.u32 %v456, 7
      %v458 = vsub.s32 0, %v457
      %v459 = vrot.slane %v454, %v458
      %v460 = vlaneseq
      %v461 = vshrl.u32 %v460, 7
      %v462 = vsub.s32 1, %v461
      %v463 = vrot.slane %v454, %v462
      %v466 = vmul.f32 %v449, %v459
      %v467 = vmul.f32 %v450, %v463
      %v468 = vmul.f32 %v451, %v459
      %v469 = vmul.f32 %v452, %v463
      %v470 = vadd.f32 %v442, %v466
      %v471 = vadd.f32 %v443, %v467
      %v472 = vadd.f32 %v444, %v468
      %v473 = vadd.f32 %v445, %v469
      %s474 = scalar_lea.vmem %s263, 112
      %v475 = vld [vmem:[%s474] sm:$0xff]
      %v476 = vld [vmem:[%s474 + $0x8] sm:$0xff]
      %v477 = vunpack.c.l.bf16 %v475
      %v478 = vunpack.c.h.bf16 %v475
      %v479 = vunpack.c.l.bf16 %v476
      %v480 = vunpack.c.h.bf16 %v476
      %s481 = scalar_lea.vmem %s1, 14
      %v482 = vld [vmem:[%s481] sm:$0x3]
      %v484 = vlaneseq
      %v485 = vshrl.u32 %v484, 7
      %v486 = vsub.s32 0, %v485
      %v487 = vrot.slane %v482, %v486
      %v488 = vlaneseq
      %v489 = vshrl.u32 %v488, 7
      %v490 = vsub.s32 1, %v489
      %v491 = vrot.slane %v482, %v490
      %v494 = vmul.f32 %v477, %v487
      %v495 = vmul.f32 %v478, %v491
      %v496 = vmul.f32 %v479, %v487
      %v497 = vmul.f32 %v480, %v491
      %v498 = vadd.f32 %v470, %v494
      %v499 = vadd.f32 %v471, %v495
      %v500 = vadd.f32 %v472, %v496
      %v501 = vadd.f32 %v473, %v497
      %s502 = scalar_lea.vmem %s263, 128
      %v503 = vld [vmem:[%s502] sm:$0xff]
      %v504 = vld [vmem:[%s502 + $0x8] sm:$0xff]
      %v505 = vunpack.c.l.bf16 %v503
      %v506 = vunpack.c.h.bf16 %v503
      %v507 = vunpack.c.l.bf16 %v504
      %v508 = vunpack.c.h.bf16 %v504
      %s509 = scalar_lea.vmem %s1, 16
      %v510 = vld [vmem:[%s509] sm:$0x3]
      %v512 = vlaneseq
      %v513 = vshrl.u32 %v512, 7
      %v514 = vsub.s32 0, %v513
      %v515 = vrot.slane %v510, %v514
      %v516 = vlaneseq
      %v517 = vshrl.u32 %v516, 7
      %v518 = vsub.s32 1, %v517
      %v519 = vrot.slane %v510, %v518
      %v522 = vmul.f32 %v505, %v515
      %v523 = vmul.f32 %v506, %v519
      %v524 = vmul.f32 %v507, %v515
      %v525 = vmul.f32 %v508, %v519
      %v526 = vadd.f32 %v498, %v522
      %v527 = vadd.f32 %v499, %v523
      %v528 = vadd.f32 %v500, %v524
      %v529 = vadd.f32 %v501, %v525
      %v530 = vld [vmem:[%s2] sm:$0x3]
      %v532 = vlaneseq
      %v533 = vshrl.u32 %v532, 7
      %v534 = vsub.s32 0, %v533
      %v535 = vrot.slane %v530, %v534
      %v536 = vlaneseq
      %v537 = vshrl.u32 %v536, 7
      %v538 = vsub.s32 1, %v537
      %v539 = vrot.slane %v530, %v538
      %v542 = vmul.f32 %v526, %v535
      %v543 = vmul.f32 %v527, %v539
      %v544 = vmul.f32 %v528, %v535
      %v545 = vmul.f32 %v529, %v539
      %v546 = vld [vmem:[%s3] sm:$0x3]
      %v548 = vlaneseq
      %v549 = vshrl.u32 %v548, 7
      %v550 = vsub.s32 0, %v549
      %v551 = vrot.slane %v546, %v550
      %v552 = vlaneseq
      %v553 = vshrl.u32 %v552, 7
      %v554 = vsub.s32 1, %v553
      %v555 = vrot.slane %v546, %v554
      %v558 = vadd.f32 %v542, %v551
      %v559 = vadd.f32 %v543, %v555
      %v560 = vadd.f32 %v544, %v551
      %v561 = vadd.f32 %v545, %v555
      %v562 = vxor.u32 %v558, 2147483648
      %v563 = vxor.u32 %v559, 2147483648
      %v564 = vxor.u32 %v560, 2147483648
      %v565 = vxor.u32 %v561, 2147483648
      %v566 = vmul.f32 %v562, 1.442695
      %v567 = vpow.pop %v566
      %v568 = vmul.f32 %v563, 1.442695
      %v569 = vpow.pop %v568
      %v570 = vmul.f32 %v564, 1.442695
      %v571 = vpow.pop %v570
      %v572 = vmul.f32 %v565, 1.442695
      %v573 = vpow.pop %v572
      %v574 = vadd.f32 %v567, 1.0
      %v575 = vadd.f32 %v569, 1.0
      %v576 = vadd.f32 %v571, 1.0
      %v577 = vadd.f32 %v573, 1.0
      %v578 = vrcp.pop %v574
      %v579 = vmul.f32 1.0, %v578
      %v580 = vrcp.pop %v575
      %v581 = vmul.f32 1.0, %v580
      %v582 = vrcp.pop %v576
      %v583 = vmul.f32 1.0, %v582
      %v584 = vrcp.pop %v577
      %v585 = vmul.f32 1.0, %v584
      %v586 = vmul.f32 %v558, %v579
      %v587 = vmul.f32 %v559, %v581
      %v588 = vmul.f32 %v560, %v583
      %v589 = vmul.f32 %v561, %v585
      %v590 = vpack.c.bf16 %v588, %v586
      %v591 = vpack.c.bf16 %v589, %v587
      %v594 = vunpack.c.l.b16 %v590
      %v595 = vunpack.c.l.b16 %v591
      %v596 = vunpack.c.h.b16 %v590
      %v597 = vunpack.c.h.b16 %v591
      %v598 = vpack.c.b16 %v595, %v594
      %v599 = vpack.c.b16 %v597, %v596
      %602 = vst [vmem:[%s274] sm:$0xff] %v598
      %603 = vst [vmem:[%s274 + $0x8] sm:$0xff] %v599
      %p604 = scmp.eq.s32.totalorder %s22, 0
      // Predicated region
      $region37: #{fwd.24} parent=35 // pred_check
        %p605 = pneg %p604
      $region38: #{fwd.24} parent=35 // pred_check_branch
        %607 = sbr.rel (%p605) target = $region40
      $region39: #{fwd.24} parent=35 // pred_region
        %v608 = vlaneseq
        %vm609 = vcmp.ge.s32.totalorder %v608, 0
        %vm610 = vcmp.lt.s32.totalorder %v608, 256
        %vm611 = vmand %vm609, %vm610
        %612 = vst.msk [vmem:[%s279] sm:$0x3] %vm611, 0.0
      $region40: #{fwd.24} parent=35 // pred_fallthru
        _
      %s613 = smul.u32 %s22, 16
      %v614 = vlaneseq
      %v615 = vshrl.u32 %v614, 7
      %v616 = vadd.s32 %v615, 8
      %v617 = vstv %s613
      %v618 = vadd.s32 %v617, %v615
      %v619 = vadd.s32 %v617, %v616
      %vm620 = vcmp.lt.s32.totalorder %v618, 16
      %vm621 = vcmp.lt.s32.totalorder %v619, 16
      %v622 = vsel %vm620, %v586, 0.0
      %v623 = vsel %vm620, %v587, 0.0
      %v624 = vsel %vm621, %v588, 0.0
      %v625 = vsel %vm621, %v589, 0.0
      %v626 = vld [vmem:[%s279] sm:$0x3]
      %v627 = vadd.f32 %v622, %v624
      %v628 = vrot.slane %v627, 4
      %v629 = vadd.f32 %v627, %v628
      %v630 = vrot.slane %v629, 2
      %v631 = vadd.f32 %v629, %v630
      %v632 = vrot.slane %v631, 1
      %v633 = vadd.f32 %v631, %v632
      %v634 = vadd.f32 %v623, %v625
      %v635 = vrot.slane %v634, 4
      %v636 = vadd.f32 %v634, %v635
      %v637 = vrot.slane %v636, 2
      %v638 = vadd.f32 %v636, %v637
      %v639 = vrot.slane %v638, 1
      %v640 = vadd.f32 %v638, %v639
      %v643 = vcombine.low %v633, %v640
      %v645 = vunpack.c.l.s4 1966171168
      %v646 = vunpack.c.0.s8 %v645
      %v647 = vlaneseq
      %v648 = vshrl.u32 %v647, 7
      %v649 = vsub.s32 %v646, %v648
      %v650 = vrot.slane %v643, %v649
      %v652 = vunpack.c.l.s4 1966171168
      %v653 = vunpack.c.0.s8 %v652
      %v654 = vlaneseq
      %v655 = vshrl.u32 %v654, 7
      %v656 = vsub.s32 %v653, %v655
      %v657 = vrot.slane %v650, %v656
      %v659 = vadd.f32 %v626, %v657
      %v660 = vlaneseq
      %vm661 = vcmp.ge.s32.totalorder %v660, 0
      %vm662 = vcmp.lt.s32.totalorder %v660, 256
      %vm663 = vmand %vm661, %vm662
      %664 = vst.msk [vmem:[%s279] sm:$0x3] %vm663, %v659
      %s665 = smul.u32 2, %s22
      %p666 = scmp.lt.s32.totalorder %s21, 5
      %s667 = scalar_select %p666, %s21, 5
      %p668 = scmp.lt.s32.totalorder %s665, 1
      %s669 = scalar_select %p668, %s665, 1
      %s670 = smul.addr %s669, 2
      %s671 = smul.addr %s667, 4
      %s672 = sadd.s32 %s670, %s671
      %s673 = smul.addr %s672, 4
      %s674 = scalar_lea.vmem %s4, %s673
      %p675 = scmp.lt.s32.totalorder %s21, 5
      %s676 = scalar_select %p675, %s21, 5
      %s677 = smul.addr %s676, 2
      %s678 = scalar_lea.vmem %s5, %s677
      // Predicated region
      $region41: #{fwd.24} parent=35 // pred_check
        %p679 = pneg %p140
      $region42: #{fwd.24} parent=35 // pred_check_branch
        %681 = sbr.rel (%p679) target = $region44
      $region43: #{fwd.24} parent=35 // pred_region
        %s682 = smul.u32 2, %s22
      $region44: #{fwd.24} parent=35 // pred_fallthru
        _
      // Predicated region
      $region45: #{fwd.24} parent=35 // pred_check
        %p683 = pneg %p166
      $region46: #{fwd.24} parent=35 // pred_check_branch
        %685 = sbr.rel (%p683) target = $region48
      $region47: #{fwd.24} parent=35 // pred_region
        _
      $region48: #{fwd.24} parent=35 // pred_fallthru
        _
    $region36: #{fwd.24} parent=5 // pred_fallthru
      _
    %p686 = scmp.le.s32.totalorder 2, %s12
    // Predicated region
    $region49: #{fwd.24} parent=5 // pred_check
      %p687 = pneg %p686
    $region50: #{fwd.24} parent=5 // pred_check_branch
      %689 = sbr.rel (%p687) target = $region52
    $region51: #{fwd.24} parent=5 // pred_region
      %s690 = ssub.s32 %s12, 2
      // Predicated region
      $region53: #{fwd.24} parent=51 // pred_check
        %p691 = pneg %p146
      $region54: #{fwd.24} parent=51 // pred_check_branch
        %693 = sbr.rel (%p691) target = $region56
      $region55: #{fwd.24} parent=51 // pred_region
        %s694 = smul.u32 2, %s24
        %p695 = scmp.lt.s32.totalorder %s23, 5
        %s696 = scalar_select %p695, %s23, 5
        %p697 = scmp.lt.s32.totalorder %s694, 1
        %s698 = scalar_select %p697, %s694, 1
        %s699 = smul.addr %s698, 2
        %s700 = smul.addr %s696, 4
        %s701 = sadd.s32 %s699, %s700
        %s702 = smul.addr %s701, 4
        %s703 = scalar_lea.vmem %s4, %s702
      $region56: #{fwd.24} parent=51 // pred_fallthru
        _
      // Predicated region
      $region57: #{fwd.24} parent=51 // pred_check
        %p704 = pneg %p172
      $region58: #{fwd.24} parent=51 // pred_check_branch
        %706 = sbr.rel (%p704) target = $region60
      $region59: #{fwd.24} parent=51 // pred_region
        %p707 = scmp.lt.s32.totalorder %s23, 5
        %s708 = scalar_select %p707, %s23, 5
        %s709 = smul.addr %s708, 2
        %s710 = scalar_lea.vmem %s5, %s709
      $region60: #{fwd.24} parent=51 // pred_fallthru
        _
    $region52: #{fwd.24} parent=5 // pred_fallthru
      _
  $region6: #{fwd.24} parent=0 // loop_footer
    %s16 = sadd.s32 1, %s12
  $region7: #{fwd.24} parent=0 // loop_footer_branch
    %11 = sbr.rel target = $region3
  $region8: #{fwd.24} parent=0 // loop_exit
    _

// kernel: fwd.27
$region0: #{fwd.27}
  #allocation0 [shape = 'u32[]', space=smem, size = 0x4, offset = 0x4, fixed_abs, tag = 'smem constant byte address 0x4 - core index']
  #allocation1 [shape = 'u32[144,128]{1,0:T(1,128)}', space=vmem, size = 0x12000, scoped, tag = 'internal scratch']
  #allocation2 [shape = 'f32[16,256]{1,0:T(8,128)}', space=vmem, size = 0x4000, scoped, tag = 'scratch operand']
  #allocation3 [shape = 'f32[1,256]{1,0:T(1,128)}', space=vmem, size = 0x400, scoped, tag = 'scratch operand']
  %s0 = inlined_call_operand.vmem [shape: bf16[6,16,128], index: 0, kind: input, shape index: {}]
  %s1 = inlined_call_operand.vmem [shape: bf16[128,1280], index: 1, kind: input, shape index: {}]
  %s2 = inlined_call_operand.vmem [shape: f32[1,1280], index: 2, kind: input, shape index: {}]
  %s3 = inlined_call_operand.vmem [shape: f32[1,1280], index: 3, kind: input, shape index: {}]
  %s4 = inlined_call_operand.vmem [shape: f32[6,1,1280], index: 4, kind: output, shape index: {}]
  %s5 = sld [smem:[#allocation0]]
  $region103: #{fwd.27} parent=0
    _
  %s7 = ssub.s32 1, %s5
  %s8 = scalar_select 0, %s7, %s5
  $region1: #{fwd.27} parent=0
    #allocation4 [shape = 'u8[131072]{0}', space=vmem, size = 0x20000, scoped, tag = 'input window, operand 1']
    loop: start=0, step=1, limit=32
    $region2: #{fwd.27} parent=1 // loop_pre_header
      _
    $region3: #{fwd.27} parent=1 // loop_header
      %s10 = sphi 0, %s14
      %p11 = scmp.ge.s32.totalorder %s10, 32
      %s17 = sphi 0, %s43
      %s18 = sphi 0, %s39
      %s19 = sphi 0, %s35
      %s20 = sphi 0, %s31
      %s21 = sphi 0, %s17
      %s22 = sphi 0, %s18
      %s23 = sphi 0, %s19
      %s24 = sphi 0, %s20
      %s25 = sphi 0, %s21
      %s26 = sphi 0, %s22
      %s27 = sphi 0, %s23
      %s28 = sphi 0, %s24
      %s50 = sphi 0, %s52
      %s53 = sphi 0, %s50
      %s54 = sphi 0, %s53
      %s70 = sphi 0, %s54
      %s78 = sphi 0, %s80
      %s81 = sphi 0, %s78
      %s82 = sphi 0, %s81
      %s98 = sphi 0, %s82
      %s104 = sphi 0, %s106
      %s107 = sphi 0, %s104
      %s108 = sphi 0, %s107
      %s124 = sphi 0, %s108
      %s130 = sphi 0, %s132
      %s133 = sphi 0, %s130
      %s134 = sphi 0, %s133
      %s150 = sphi 0, %s134
      %s158 = sphi 0, %s160
      %s161 = sphi 0, %s158
      %s162 = sphi 0, %s161
      %s178 = sphi 0, %s162
    $region4: #{fwd.27} parent=1 // loop_header_branch
      %13 = sbr.rel (%p11) target = $region8
    $region5: #{fwd.27} parent=1 // loop_body
      %s15 = ssub.s32 %s10, 1
      %s16 = ssub.s32 %s10, 2
      %s29 = sadd.s32 1, %s20
      %p30 = scmp.ge.s32.totalorder %s29, 1
      %s31 = scalar_select %p30, 0, %s29
      %s32 = sadd.s32 1, %s19
      %s33 = scalar_select %p30, %s32, %s19
      %p34 = scmp.ge.s32.totalorder %s33, 1
      %s35 = scalar_select %p34, 0, %s33
      %s36 = sadd.s32 1, %s18
      %s37 = scalar_select %p34, %s36, %s18
      %p38 = scmp.ge.s32.totalorder %s37, 5
      %s39 = scalar_select %p38, 0, %s37
      %s40 = sadd.s32 1, %s17
      %s41 = scalar_select %p38, %s40, %s17
      %p42 = scmp.ge.s32.totalorder %s41, 6
      %s43 = scalar_select %p42, 0, %s41
      %s44 = ssub.s32 %s17, %s43
      %s45 = ssub.s32 %s19, %s35
      %s46 = sor.u32 %s44, %s45
      %s47 = ssub.s32 %s20, %s31
      %s48 = sor.u32 %s46, %s47
      %p49 = scmp.eq.s32.totalorder %s48, 0
      %s51 = sadd.s32 %s50, 1
      %s52 = scalar_select %p49, %s50, %s51
      %p55 = pneg %p49
      %p56 = scmp.eq.s32.totalorder %s10, 29
      %p57 = por %p55, %p56
      %p58 = scmp.ne.s32.totalorder %s50, %s53
      %p59 = scmp.eq.s32.totalorder %s10, 0
      %p60 = por %p58, %p59
      %p61 = scmp.ne.s32.totalorder %s50, %s53
      %p62 = scmp.eq.s32.totalorder %s15, 29
      %p63 = por %p61, %p62
      %p64 = scmp.ne.s32.totalorder %s53, %s54
      %p65 = scmp.eq.s32.totalorder %s15, 0
      %p66 = por %p64, %p65
      %p67 = scmp.ne.s32.totalorder %s53, %s54
      %p68 = scmp.eq.s32.totalorder %s16, 29
      %p69 = por %p67, %p68
      %p71 = scmp.ne.s32.totalorder %s54, %s70
      %p72 = scmp.eq.s32.totalorder %s16, 0
      %p73 = por %p71, %p72
      %s74 = ssub.s32 %s20, %s31
      %s75 = ssub.s32 %s18, %s39
      %s76 = sor.u32 %s74, %s75
      %p77 = scmp.eq.s32.totalorder %s76, 0
      %s79 = sadd.s32 %s78, 1
      %s80 = scalar_select %p77, %s78, %s79
      %p83 = pneg %p77
      %p84 = scmp.eq.s32.totalorder %s10, 29
      %p85 = por %p83, %p84
      %p86 = scmp.ne.s32.totalorder %s78, %s81
      %p87 = scmp.eq.s32.totalorder %s10, 0
      %p88 = por %p86, %p87
      %p89 = scmp.ne.s32.totalorder %s78, %s81
      %p90 = scmp.eq.s32.totalorder %s15, 29
      %p91 = por %p89, %p90
      %p92 = scmp.ne.s32.totalorder %s81, %s82
      %p93 = scmp.eq.s32.totalorder %s15, 0
      %p94 = por %p92, %p93
      %p95 = scmp.ne.s32.totalorder %s81, %s82
      %p96 = scmp.eq.s32.totalorder %s16, 29
      %p97 = por %p95, %p96
      %p99 = scmp.ne.s32.totalorder %s82, %s98
      %p100 = scmp.eq.s32.totalorder %s16, 0
      %p101 = por %p99, %p100
      %s102 = ssub.s32 %s18, %s39
      %p103 = scmp.eq.s32.totalorder %s102, 0
      %s105 = sadd.s32 %s104, 1
      %s106 = scalar_select %p103, %s104, %s105
      %p109 = pneg %p103
      %p110 = scmp.eq.s32.totalorder %s10, 29
      %p111 = por %p109, %p110
      %p112 = scmp.ne.s32.totalorder %s104, %s107
      %p113 = scmp.eq.s32.totalorder %s10, 0
      %p114 = por %p112, %p113
      %p115 = scmp.ne.s32.totalorder %s104, %s107
      %p116 = scmp.eq.s32.totalorder %s15, 29
      %p117 = por %p115, %p116
      %p118 = scmp.ne.s32.totalorder %s107, %s108
      %p119 = scmp.eq.s32.totalorder %s15, 0
      %p120 = por %p118, %p119
      %p121 = scmp.ne.s32.totalorder %s107, %s108
      %p122 = scmp.eq.s32.totalorder %s16, 29
      %p123 = por %p121, %p122
      %p125 = scmp.ne.s32.totalorder %s108, %s124
      %p126 = scmp.eq.s32.totalorder %s16, 0
      %p127 = por %p125, %p126
      %s128 = ssub.s32 %s18, %s39
      %p129 = scmp.eq.s32.totalorder %s128, 0
      %s131 = sadd.s32 %s130, 1
      %s132 = scalar_select %p129, %s130, %s131
      %p135 = pneg %p129
      %p136 = scmp.eq.s32.totalorder %s10, 29
      %p137 = por %p135, %p136
      %p138 = scmp.ne.s32.totalorder %s130, %s133
      %p139 = scmp.eq.s32.totalorder %s10, 0
      %p140 = por %p138, %p139
      %p141 = scmp.ne.s32.totalorder %s130, %s133
      %p142 = scmp.eq.s32.totalorder %s15, 29
      %p143 = por %p141, %p142
      %p144 = scmp.ne.s32.totalorder %s133, %s134
      %p145 = scmp.eq.s32.totalorder %s15, 0
      %p146 = por %p144, %p145
      %p147 = scmp.ne.s32.totalorder %s133, %s134
      %p148 = scmp.eq.s32.totalorder %s16, 29
      %p149 = por %p147, %p148
      %p151 = scmp.ne.s32.totalorder %s134, %s150
      %p152 = scmp.eq.s32.totalorder %s16, 0
      %p153 = por %p151, %p152
      %s154 = ssub.s32 %s17, %s43
      %s155 = ssub.s32 %s18, %s39
      %s156 = sor.u32 %s154, %s155
      %p157 = scmp.eq.s32.totalorder %s156, 0
      %s159 = sadd.s32 %s158, 1
      %s160 = scalar_select %p157, %s158, %s159
      %p163 = pneg %p157
      %p164 = scmp.eq.s32.totalorder %s10, 29
      %p165 = por %p163, %p164
      %p166 = scmp.ne.s32.totalorder %s158, %s161
      %p167 = scmp.eq.s32.totalorder %s10, 0
      %p168 = por %p166, %p167
      %p169 = scmp.ne.s32.totalorder %s158, %s161
      %p170 = scmp.eq.s32.totalorder %s15, 29
      %p171 = por %p169, %p170
      %p172 = scmp.ne.s32.totalorder %s161, %s162
      %p173 = scmp.eq.s32.totalorder %s15, 0
      %p174 = por %p172, %p173
      %p175 = scmp.ne.s32.totalorder %s161, %s162
      %p176 = scmp.eq.s32.totalorder %s16, 29
      %p177 = por %p175, %p176
      %p179 = scmp.ne.s32.totalorder %s162, %s178
      %p180 = scmp.eq.s32.totalorder %s16, 0
      %p181 = por %p179, %p180
      %p182 = scmp.le.s32.totalorder 1, %s10
      %p183 = scmp.lt.s32.totalorder %s10, 31
      %p184 = pnand %p182, %p183
      %p185 = pneg %p184
      // Predicated region
      $region9: #{fwd.27} parent=5 // pred_check
        _
      $region10: #{fwd.27} parent=5 // pred_check_branch
        %187 = sbr.rel (%p184) target = $region12
      $region11: #{fwd.27} parent=5 // pred_region
        %s188 = ssub.s32 %s10, 1
      $region12: #{fwd.27} parent=5 // pred_fallthru
        _
      %p189 = scmp.lt.s32.totalorder %s10, 30
      // Predicated region
      $region13: #{fwd.27} parent=5 // pred_check
        %p190 = pneg %p189
      $region14: #{fwd.27} parent=5 // pred_check_branch
        %192 = sbr.rel (%p190) target = $region16
      $region15: #{fwd.27} parent=5 // pred_region
        // Predicated region
        $region17: #{fwd.27} parent=15 // pred_check
          %p193 = pneg %p60
        $region18: #{fwd.27} parent=15 // pred_check_branch
          %195 = sbr.rel (%p193) target = $region20
        $region19: #{fwd.27} parent=15 // pred_region
          %s196 = smul.u32 2, %s19
          %p197 = scmp.lt.s32.totalorder %s17, 5
          %s198 = scalar_select %p197, %s17, 5
          %p199 = scmp.lt.s32.totalorder %s196, 1
          %s200 = scalar_select %p199, %s196, 1
          %p201 = scmp.lt.s32.totalorder %s20, 0
          %s202 = scalar_select %p201, %s20, 0
          %s203 = sadd.s32 %s202, %s200
          %s204 = smul.addr %s198, 2
          %s205 = sadd.s32 %s203, %s204
          %s206 = smul.addr %s205, 4
          %s207 = scalar_lea.vmem %s0, %s206
          %s208 = smul.u32 2, %s19
        $region20: #{fwd.27} parent=15 // pred_fallthru
          _
        // Predicated region
        $region21: #{fwd.27} parent=15 // pred_check
          %p209 = pneg %p88
        $region22: #{fwd.27} parent=15 // pred_check_branch
          %211 = sbr.rel (%p209) target = $region24
        $region23: #{fwd.27} parent=15 // pred_region
          %s212 = sand.u32 %s78, 1
          %s213 = sand.u32 %s78, 1
          %s214 = smul.addr %s213, 128
          %s215 = scalar_lea.vmem [#allocation4], %s214
          %s216 = smul.u32 16, %s20
          %s217 = smul.u32 2, %s18
          %s218 = smul.addr %s216, 10
          %s219 = sadd.s32 %s217, %s218
          %s220 = smul.addr %s219, 4
          %s221 = scalar_lea.vmem %s1, %s220
          // Predicated region
          $region25: #{fwd.27} parent=23 // pred_check
            _
          $region26: #{fwd.27} parent=23 // pred_check_branch
            %223 = sbr.rel (0) target = $region28
          $region27: #{fwd.27} parent=23 // pred_region
            // Predicated region
            $region29: #{fwd.27} parent=27 // pred_check
              _
            $region30: #{fwd.27} parent=27 // pred_check_branch
              %225 = sbr.rel (0) target = $region32
            $region31: #{fwd.27} parent=27 // pred_region
              // Predicated region
              $region44: #{fwd.27} parent=31 // pred_check
                _
              $region45: #{fwd.27} parent=31 // pred_check_branch
                %271 = sbr.rel (0) target = $region47
              $region46: #{fwd.27} parent=31 // pred_region
                loop: start=0, step=1, limit=1
                $region48: #{fwd.27} parent=46 // loop_pre_header
                  _
                $region49: #{fwd.27} parent=46 // loop_header
                  %s273 = sphi 0, %s277
                  %p274 = scmp.ge.s32.totalorder %s273, 1
                  %s278 = sphi %s221, %s221
                  %s279 = sphi %s215, %s215
                $region50: #{fwd.27} parent=46 // loop_header_branch
                  %276 = sbr.rel (%p274) target = $region54
                $region51: #{fwd.27} parent=46 // loop_body
                  %v280 = vld [vmem:[%s278] sm:$0xff]
                  %281 = vst [vmem:[%s279] sm:$0xff] %v280
                  %v282 = vld [vmem:[%s278 + $0x28] sm:$0xff]
                  %283 = vst [vmem:[%s279 + $0x8] sm:$0xff] %v282
                  %v284 = vld [vmem:[%s278 + $0x50] sm:$0xff]
                  %285 = vst [vmem:[%s279 + $0x10] sm:$0xff] %v284
                  %v286 = vld [vmem:[%s278 + $0x78] sm:$0xff]
                  %287 = vst [vmem:[%s279 + $0x18] sm:$0xff] %v286
                  %v288 = vld [vmem:[%s278 + $0xa0] sm:$0xff]
                  %289 = vst [vmem:[%s279 + $0x20] sm:$0xff] %v288
                  %v290 = vld [vmem:[%s278 + $0xc8] sm:$0xff]
                  %291 = vst [vmem:[%s279 + $0x28] sm:$0xff] %v290
                  %v292 = vld [vmem:[%s278 + $0xf0] sm:$0xff]
                  %293 = vst [vmem:[%s279 + $0x30] sm:$0xff] %v292
                  %v294 = vld [vmem:[%s278 + $0x118] sm:$0xff]
                  %295 = vst [vmem:[%s279 + $0x38] sm:$0xff] %v294
                  %v296 = vld [vmem:[%s278 + $0x140] sm:$0xff]
                  %297 = vst [vmem:[%s279 + $0x40] sm:$0xff] %v296
                  %v298 = vld [vmem:[%s278 + $0x168] sm:$0xff]
                  %299 = vst [vmem:[%s279 + $0x48] sm:$0xff] %v298
                  %v300 = vld [vmem:[%s278 + $0x190] sm:$0xff]
                  %301 = vst [vmem:[%s279 + $0x50] sm:$0xff] %v300
                  %v302 = vld [vmem:[%s278 + $0x1b8] sm:$0xff]
                  %303 = vst [vmem:[%s279 + $0x58] sm:$0xff] %v302
                  %v304 = vld [vmem:[%s278 + $0x1e0] sm:$0xff]
                  %305 = vst [vmem:[%s279 + $0x60] sm:$0xff] %v304
                  %v306 = vld [vmem:[%s278 + $0x208] sm:$0xff]
                  %307 = vst [vmem:[%s279 + $0x68] sm:$0xff] %v306
                  %v308 = vld [vmem:[%s278 + $0x230] sm:$0xff]
                  %309 = vst [vmem:[%s279 + $0x70] sm:$0xff] %v308
                  %v310 = vld [vmem:[%s278 + $0x258] sm:$0xff]
                  %311 = vst [vmem:[%s279 + $0x78] sm:$0xff] %v310
                $region52: #{fwd.27} parent=46 // loop_footer
                  %s277 = sadd.s32 1, %s273
                $region53: #{fwd.27} parent=46 // loop_footer_branch
                  %272 = sbr.rel target = $region49
                $region54: #{fwd.27} parent=46 // loop_exit
                  _
              $region47: #{fwd.27} parent=31 // pred_fallthru
                _
              // Predicated region
              $region55: #{fwd.27} parent=31 // pred_check
                _
              $region56: #{fwd.27} parent=31 // pred_check_branch
                %313 = sbr.rel target = $region58
              $region57: #{fwd.27} parent=31 // pred_region
                _
              $region58: #{fwd.27} parent=31 // pred_fallthru
                _
            $region32: #{fwd.27} parent=27 // pred_fallthru
              _
            // Predicated region
            $region33: #{fwd.27} parent=27 // pred_check
              _
            $region34: #{fwd.27} parent=27 // pred_check_branch
              %227 = sbr.rel target = $region36
            $region35: #{fwd.27} parent=27 // pred_region
              %s229 = ssub.s32 256, 1
              loop: start=0, step=1, limit=1
              $region37: #{fwd.27} parent=35 // loop_pre_header
                _
              $region38: #{fwd.27} parent=35 // loop_header
                %s231 = sphi 0, %s235
                %p232 = scmp.ge.s32.totalorder %s231, 1
                %s236 = sphi %s221, %s221
                %s237 = sphi %s215, %s215
              $region39: #{fwd.27} parent=35 // loop_header_branch
                %234 = sbr.rel (%p232) target = $region43
              $region40: #{fwd.27} parent=35 // loop_body
                %v238 = vld [vmem:[%s236] sm:%s229]
                %239 = vst [vmem:[%s237] sm:%s229] %v238
                %v240 = vld [vmem:[%s236 + $0x28] sm:%s229]
                %241 = vst [vmem:[%s237 + $0x8] sm:%s229] %v240
                %v242 = vld [vmem:[%s236 + $0x50] sm:%s229]
                %243 = vst [vmem:[%s237 + $0x10] sm:%s229] %v242
                %v244 = vld [vmem:[%s236 + $0x78] sm:%s229]
                %245 = vst [vmem:[%s237 + $0x18] sm:%s229] %v244
                %v246 = vld [vmem:[%s236 + $0xa0] sm:%s229]
                %247 = vst [vmem:[%s237 + $0x20] sm:%s229] %v246
                %v248 = vld [vmem:[%s236 + $0xc8] sm:%s229]
                %249 = vst [vmem:[%s237 + $0x28] sm:%s229] %v248
                %v250 = vld [vmem:[%s236 + $0xf0] sm:%s229]
                %251 = vst [vmem:[%s237 + $0x30] sm:%s229] %v250
                %v252 = vld [vmem:[%s236 + $0x118] sm:%s229]
                %253 = vst [vmem:[%s237 + $0x38] sm:%s229] %v252
                %v254 = vld [vmem:[%s236 + $0x140] sm:%s229]
                %255 = vst [vmem:[%s237 + $0x40] sm:%s229] %v254
                %v256 = vld [vmem:[%s236 + $0x168] sm:%s229]
                %257 = vst [vmem:[%s237 + $0x48] sm:%s229] %v256
                %v258 = vld [vmem:[%s236 + $0x190] sm:%s229]
                %259 = vst [vmem:[%s237 + $0x50] sm:%s229] %v258
                %v260 = vld [vmem:[%s236 + $0x1b8] sm:%s229]
                %261 = vst [vmem:[%s237 + $0x58] sm:%s229] %v260
                %v262 = vld [vmem:[%s236 + $0x1e0] sm:%s229]
                %263 = vst [vmem:[%s237 + $0x60] sm:%s229] %v262
                %v264 = vld [vmem:[%s236 + $0x208] sm:%s229]
                %265 = vst [vmem:[%s237 + $0x68] sm:%s229] %v264
                %v266 = vld [vmem:[%s236 + $0x230] sm:%s229]
                %267 = vst [vmem:[%s237 + $0x70] sm:%s229] %v266
                %v268 = vld [vmem:[%s236 + $0x258] sm:%s229]
                %269 = vst [vmem:[%s237 + $0x78] sm:%s229] %v268
              $region41: #{fwd.27} parent=35 // loop_footer
                %s235 = sadd.s32 1, %s231
              $region42: #{fwd.27} parent=35 // loop_footer_branch
                %230 = sbr.rel target = $region38
              $region43: #{fwd.27} parent=35 // loop_exit
                _
            $region36: #{fwd.27} parent=27 // pred_fallthru
              _
          $region28: #{fwd.27} parent=23 // pred_fallthru
            _
          %314 = vnop
        $region24: #{fwd.27} parent=15 // pred_fallthru
          _
        // Predicated region
        $region59: #{fwd.27} parent=15 // pred_check
          %p315 = pneg %p114
        $region60: #{fwd.27} parent=15 // pred_check_branch
          %317 = sbr.rel (%p315) target = $region62
        $region61: #{fwd.27} parent=15 // pred_region
          %s318 = smul.u32 2, %s18
          %p319 = scmp.lt.s32.totalorder %s318, 9
          %s320 = scalar_select %p319, %s318, 9
          %s321 = scalar_lea.vmem %s2, %s320
          %s322 = smul.u32 2, %s18
        $region62: #{fwd.27} parent=15 // pred_fallthru
          _
        // Predicated region
        $region63: #{fwd.27} parent=15 // pred_check
          %p323 = pneg %p140
        $region64: #{fwd.27} parent=15 // pred_check_branch
          %325 = sbr.rel (%p323) target = $region66
        $region65: #{fwd.27} parent=15 // pred_region
          %s326 = smul.u32 2, %s18
          %p327 = scmp.lt.s32.totalorder %s326, 9
          %s328 = scalar_select %p327, %s326, 9
          %s329 = scalar_lea.vmem %s3, %s328
          %s330 = smul.u32 2, %s18
        $region66: #{fwd.27} parent=15 // pred_fallthru
          _
      $region16: #{fwd.27} parent=5 // pred_fallthru
        _
      %p331 = scmp.le.s32.totalorder 1, %s10
      %p332 = scmp.lt.s32.totalorder %s10, 31
      %p333 = pnand %p331, %p332
      %p334 = pneg %p333
      // Predicated region
      $region67: #{fwd.27} parent=5 // pred_check
        _
      $region68: #{fwd.27} parent=5 // pred_check_branch
        %336 = sbr.rel (%p333) target = $region70
      $region69: #{fwd.27} parent=5 // pred_region
        %s337 = ssub.s32 %s10, 1
        %s338 = sand.u32 %s81, 1
        %s339 = sand.u32 %s81, 1
        %s340 = smul.addr %s339, 128
        %s341 = scalar_lea.vmem [#allocation4], %s340
        // Predicated region
        $region71: #{fwd.27} parent=69 // pred_check
          %p342 = pneg %p94
        $region72: #{fwd.27} parent=69 // pred_check_branch
          %344 = sbr.rel (%p342) target = $region74
        $region73: #{fwd.27} parent=69 // pred_region
          _
        $region74: #{fwd.27} parent=69 // pred_fallthru
          _
        %s345 = smul.u32 2, %s23
        %p346 = scmp.lt.s32.totalorder %s21, 5
        %s347 = scalar_select %p346, %s21, 5
        %p348 = scmp.lt.s32.totalorder %s345, 1
        %s349 = scalar_select %p348, %s345, 1
        %p350 = scmp.lt.s32.totalorder %s24, 0
        %s351 = scalar_select %p350, %s24, 0
        %s352 = sadd.s32 %s351, %s349
        %s353 = smul.addr %s347, 2
        %s354 = sadd.s32 %s352, %s353
        %s355 = smul.addr %s354, 4
        %s356 = scalar_lea.vmem %s0, %s355
        %p357 = pneg %p66
        %p358 = pneg %p63
        %s359 = sand.u32 %s81, 1
        %s360 = sand.u32 %s81, 1
        %s361 = smul.addr %s360, 128
        %s362 = scalar_lea.vmem [#allocation4], %s361
        %p363 = pneg %p94
        %p364 = pneg %p91
        %s365 = smul.u32 2, %s22
        %p366 = scmp.lt.s32.totalorder %s365, 9
        %s367 = scalar_select %p366, %s365, 9
        %s368 = scalar_lea.vmem %s2, %s367
        %p369 = pneg %p120
        %p370 = pneg %p117
        %s371 = smul.u32 2, %s22
        %p372 = scmp.lt.s32.totalorder %s371, 9
        %s373 = scalar_select %p372, %s371, 9
        %s374 = scalar_lea.vmem %s3, %s373
        %p375 = pneg %p146
        %p376 = pneg %p143
        %p377 = pneg %p174
        %p378 = pneg %p171
        %s379 = smul.u32 2, %s22
        %p380 = scmp.lt.s32.totalorder %s21, 5
        %s381 = scalar_select %p380, %s21, 5
        %p382 = scmp.lt.s32.totalorder %s379, 9
        %s383 = scalar_select %p382, %s379, 9
        %s384 = smul.addr %s381, 10
        %s385 = sadd.s32 %s383, %s384
        %s386 = scalar_lea.vmem %s4, %s385
        %s387 = smul.u32 2, %s23
        %p388 = scmp.lt.s32.totalorder %s21, 5
        %s389 = scalar_select %p388, %s21, 5
        %p390 = scmp.lt.s32.totalorder %s387, 1
        %s391 = scalar_select %p390, %s387, 1
        %p392 = scmp.lt.s32.totalorder %s24, 0
        %s393 = scalar_select %p392, %s24, 0
        %s394 = sadd.s32 %s393, %s391
        %s395 = smul.addr %s389, 2
        %s396 = sadd.s32 %s394, %s395
        %s397 = smul.addr %s396, 4
        %s398 = scalar_lea.vmem %s0, %s397
        %s399 = smul.u32 2, %s23
        %s400 = smul.u32 16, %s24
        %s401 = smul.u32 2, %s22
        %s402 = smul.u32 2, %s22
        %p403 = scmp.lt.s32.totalorder %s402, 9
        %s404 = scalar_select %p403, %s402, 9
        %s405 = scalar_lea.vmem %s2, %s404
        %s406 = smul.u32 2, %s22
        %s407 = smul.u32 2, %s22
        %p408 = scmp.lt.s32.totalorder %s407, 9
        %s409 = scalar_select %p408, %s407, 9
        %s410 = scalar_lea.vmem %s3, %s409
        %s411 = smul.u32 2, %s22
        %s412 = smul.u32 2, %s22
        %p413 = scmp.lt.s32.totalorder %s21, 5
        %s414 = scalar_select %p413, %s21, 5
        %p415 = scmp.lt.s32.totalorder %s412, 9
        %s416 = scalar_select %p415, %s412, 9
        %s417 = smul.addr %s414, 10
        %s418 = sadd.s32 %s416, %s417
        %s419 = scalar_lea.vmem %s4, %s418
        %s420 = smul.u32 2, %s22
        %p422 = scmp.eq.s32.totalorder %s23, 0
        %p423 = scmp.eq.s32.totalorder %s24, 0
        %p424 = pnand %p422, %p423
        %p425 = pneg %p424
        // Predicated region
        $region75: #{fwd.27} parent=69 // pred_check
          _
        $region76: #{fwd.27} parent=69 // pred_check_branch
          %427 = sbr.rel (%p424) target = $region78
        $region77: #{fwd.27} parent=69 // pred_region
          %v428 = vlaneseq
          %vm429 = vcmp.ge.s32.totalorder %v428, 0
          %vm430 = vcmp.lt.s32.totalorder %v428, 256
          %vm431 = vmand %vm429, %vm430
          %432 = vst.msk [vmem:[#allocation3] sm:$0x3] %vm431, 0.0
        $region78: #{fwd.27} parent=69 // pred_fallthru
          _
        // Predicated region
        $region79: #{fwd.27} parent=69 // pred_check
          %p433 = pneg %p423
        $region80: #{fwd.27} parent=69 // pred_check_branch
          %435 = sbr.rel (%p433) target = $region82
        $region81: #{fwd.27} parent=69 // pred_region
          %436 = vst [vmem:[#allocation2] sm:$0xff] 0.0
          %437 = vst [vmem:[#allocation2 + $0x8] sm:$0xff] 0.0
          %438 = vst [vmem:[#allocation2 + $0x10] sm:$0xff] 0.0
          %439 = vst [vmem:[#allocation2 + $0x18] sm:$0xff] 0.0
        $region82: #{fwd.27} parent=69 // pred_fallthru
          _
        %v440 = vld [vmem:[#allocation2] sm:$0xff]
        %v441 = vld [vmem:[#allocation2 + $0x8] sm:$0xff]
        %v442 = vld [vmem:[#allocation2 + $0x10] sm:$0xff]
        %v443 = vld [vmem:[#allocation2 + $0x18] sm:$0xff]
        %v444 = vld [vmem:[%s398] sm:$0xf]
        %v445 = vld [vmem:[%s398 + $0x4] sm:$0xf]
        %v446 = vld [vmem:[%s341] sm:$0xff]
        %v447 = vld [vmem:[%s341 + $0x8] sm:$0xff]
        %v448 = vld [vmem:[%s341 + $0x10] sm:$0xff]
        %v449 = vld [vmem:[%s341 + $0x18] sm:$0xff]
        %v450 = vld [vmem:[%s341 + $0x20] sm:$0xff]
        %v451 = vld [vmem:[%s341 + $0x28] sm:$0xff]
        %v452 = vld [vmem:[%s341 + $0x30] sm:$0xff]
        %v453 = vld [vmem:[%s341 + $0x38] sm:$0xff]
        %v454 = vld [vmem:[%s341 + $0x40] sm:$0xff]
        %v455 = vld [vmem:[%s341 + $0x48] sm:$0xff]
        %v456 = vld [vmem:[%s341 + $0x50] sm:$0xff]
        %v457 = vld [vmem:[%s341 + $0x58] sm:$0xff]
        %v458 = vld [vmem:[%s341 + $0x60] sm:$0xff]
        %v459 = vld [vmem:[%s341 + $0x68] sm:$0xff]
        %v460 = vld [vmem:[%s341 + $0x70] sm:$0xff]
        %v461 = vld [vmem:[%s341 + $0x78] sm:$0xff]
        %v464 = vunpack.c.l.b16 %v444
        %v465 = vunpack.c.l.b16 %v445
        %v466 = vpack.c.b16 %v465, %v464
        %v484 = vunpack.c.l.b16 %v446
        %v485 = vunpack.c.h.b16 %v446
        %v486 = vunpack.c.l.b16 %v447
        %v487 = vunpack.c.h.b16 %v447
        %v488 = vunpack.c.l.b16 %v448
        %v489 = vunpack.c.h.b16 %v448
        %v490 = vunpack.c.l.b16 %v449
        %v491 = vunpack.c.h.b16 %v449
        %v492 = vunpack.c.l.b16 %v450
        %v493 = vunpack.c.h.b16 %v450
        %v494 = vunpack.c.l.b16 %v451
        %v495 = vunpack.c.h.b16 %v451
        %v496 = vunpack.c.l.b16 %v452
        %v497 = vunpack.c.h.b16 %v452
        %v498 = vunpack.c.l.b16 %v453
        %v499 = vunpack.c.h.b16 %v453
        %v500 = vunpack.c.l.b16 %v454
        %v501 = vunpack.c.h.b16 %v454
        %v502 = vunpack.c.l.b16 %v455
        %v503 = vunpack.c.h.b16 %v455
        %v504 = vunpack.c.l.b16 %v456
        %v505 = vunpack.c.h.b16 %v456
        %v506 = vunpack.c.l.b16 %v457
        %v507 = vunpack.c.h.b16 %v457
        %v508 = vunpack.c.l.b16 %v458
        %v509 = vunpack.c.h.b16 %v458
        %v510 = vunpack.c.l.b16 %v459
        %v511 = vunpack.c.h.b16 %v459
        %v512 = vunpack.c.l.b16 %v460
        %v513 = vunpack.c.h.b16 %v460
        %v514 = vunpack.c.l.b16 %v461
        %v515 = vunpack.c.h.b16 %v461
        %v516 = vpack.c.b16 %v486, %v484
        %v517 = vpack.c.b16 %v487, %v485
        %v518 = vpack.c.b16 %v490, %v488
        %v519 = vpack.c.b16 %v491, %v489
        %v520 = vpack.c.b16 %v494, %v492
        %v521 = vpack.c.b16 %v495, %v493
        %v522 = vpack.c.b16 %v498, %v496
        %v523 = vpack.c.b16 %v499, %v497
        %v524 = vpack.c.b16 %v502, %v500
        %v525 = vpack.c.b16 %v503, %v501
        %v526 = vpack.c.b16 %v506, %v504
        %v527 = vpack.c.b16 %v507, %v505
        %v528 = vpack.c.b16 %v510, %v508
        %v529 = vpack.c.b16 %v511, %v509
        %v530 = vpack.c.b16 %v514, %v512
        %v531 = vpack.c.b16 %v515, %v513
        %548 = vmatprep.subr.bf16.mxu0 %v531
        %549 = vmatpush1.bf16.msra.mxu0 %v530
        %550 = vmatprep.subr.bf16.mxu0 %v529
        %551 = vmatpush1.bf16.msra.mxu0 %v528
        %552 = vmatprep.subr.bf16.mxu0 %v527
        %553 = vmatpush1.bf16.msra.mxu0 %v526
        %554 = vmatprep.subr.bf16.mxu0 %v525
        %555 = vmatpush1.bf16.msra.mxu0 %v524
        %556 = vmatprep.subr.bf16.mxu0 %v523
        %557 = vmatpush1.bf16.msra.mxu0 %v522
        %558 = vmatprep.subr.bf16.mxu0 %v521
        %559 = vmatpush1.bf16.msra.mxu0 %v520
        %560 = vmatprep.subr.bf16.mxu0 %v519
        %561 = vmatpush1.bf16.msra.mxu0 %v518
        %562 = vmatprep.subr.bf16.mxu0 %v517
        %563 = vmatpush1.bf16.msra.mxu0 %v516
        %564 = vmatprep.subr.bf16.mxu0 0
        %565 = vmatpush2.bf16.msra.mxu0 0
        %566 = vmatprep.subr.bf16.mxu0 0
        %567 = vmatpush2.bf16.msra.mxu0 0
        %568 = vmatprep.subr.bf16.mxu0 0
        %569 = vmatpush2.bf16.msra.mxu0 0
        %570 = vmatprep.subr.bf16.mxu0 0
        %571 = vmatpush2.bf16.msra.mxu0 0
        %572 = vmatprep.subr.bf16.mxu0 0
        %573 = vmatpush2.bf16.msra.mxu0 0
        %574 = vmatprep.subr.bf16.mxu0 0
        %575 = vmatpush2.bf16.msra.mxu0 0
        %576 = vmatprep.subr.bf16.mxu0 0
        %577 = vmatpush2.bf16.msra.mxu0 0
        %578 = vmatprep.subr.bf16.mxu0 0
        %579 = vmatpush2.bf16.msra.mxu0 0
        %580 = vmatprep.mubr.bf16.mxu0 0
        %581 = vmatmul.mubr.bf16.gmra.mxu0 %v466
        %v582 = vpop.f32.mrf.mxu0
        %v583 = vadd.f32 0.0, %v582
        %v584 = vpop.f32.mrf.mxu0
        %v585 = vadd.f32 0.0, %v584
        %v586 = vpop.f32.mrf.mxu0
        %v587 = vadd.f32 0.0, %v586
        %v588 = vpop.f32.mrf.mxu0
        %v589 = vadd.f32 0.0, %v588
        %590 = vdwg.mxu0
        %v591 = vadd.f32 %v440, %v583
        %v592 = vadd.f32 %v441, %v585
        %v593 = vadd.f32 %v442, %v587
        %v594 = vadd.f32 %v443, %v589
        %595 = vst [vmem:[#allocation2] sm:$0xff] %v591
        %596 = vst [vmem:[#allocation2 + $0x8] sm:$0xff] %v592
        %597 = vst [vmem:[#allocation2 + $0x10] sm:$0xff] %v593
        %598 = vst [vmem:[#allocation2 + $0x18] sm:$0xff] %v594
        // Predicated region
        $region83: #{fwd.27} parent=69 // pred_check
          %p599 = pneg %p423
        $region84: #{fwd.27} parent=69 // pred_check_branch
          %601 = sbr.rel (%p599) target = $region86
        $region85: #{fwd.27} parent=69 // pred_region
          %v602 = vld [vmem:[#allocation2] sm:$0xff]
          %v603 = vld [vmem:[#allocation2 + $0x8] sm:$0xff]
          %v604 = vld [vmem:[#allocation2 + $0x10] sm:$0xff]
          %v605 = vld [vmem:[#allocation2 + $0x18] sm:$0xff]
          %v606 = vld [vmem:[%s405] sm:$0x3]
          %v608 = vlaneseq
          %v609 = vshrl.u32 %v608, 7
          %v610 = vsub.s32 0, %v609
          %v611 = vrot.slane %v606, %v610
          %v612 = vlaneseq
          %v613 = vshrl.u32 %v612, 7
          %v614 = vsub.s32 1, %v613
          %v615 = vrot.slane %v606, %v614
          %v618 = vmul.f32 %v602, %v611
          %v619 = vmul.f32 %v603, %v615
          %v620 = vmul.f32 %v604, %v611
          %v621 = vmul.f32 %v605, %v615
          %v622 = vld [vmem:[%s410] sm:$0x3]
          %v624 = vlaneseq
          %v625 = vshrl.u32 %v624, 7
          %v626 = vsub.s32 0, %v625
          %v627 = vrot.slane %v622, %v626
          %v628 = vlaneseq
          %v629 = vshrl.u32 %v628, 7
          %v630 = vsub.s32 1, %v629
          %v631 = vrot.slane %v622, %v630
          %v634 = vadd.f32 %v618, %v627
          %v635 = vadd.f32 %v619, %v631
          %v636 = vadd.f32 %v620, %v627
          %v637 = vadd.f32 %v621, %v631
          %v638 = vxor.u32 %v634, 2147483648
          %v639 = vxor.u32 %v635, 2147483648
          %v640 = vxor.u32 %v636, 2147483648
          %v641 = vxor.u32 %v637, 2147483648
          %v642 = vmul.f32 %v638, 1.442695
          %v643 = vpow.pop %v642
          %v644 = vmul.f32 %v639, 1.442695
          %v645 = vpow.pop %v644
          %v646 = vmul.f32 %v640, 1.442695
          %v647 = vpow.pop %v646
          %v648 = vmul.f32 %v641, 1.442695
          %v649 = vpow.pop %v648
          %v650 = vadd.f32 %v643, 1.0
          %v651 = vadd.f32 %v645, 1.0
          %v652 = vadd.f32 %v647, 1.0
          %v653 = vadd.f32 %v649, 1.0
          %v654 = vrcp.pop %v650
          %v655 = vmul.f32 1.0, %v654
          %v656 = vrcp.pop %v651
          %v657 = vmul.f32 1.0, %v656
          %v658 = vrcp.pop %v652
          %v659 = vmul.f32 1.0, %v658
          %v660 = vrcp.pop %v653
          %v661 = vmul.f32 1.0, %v660
          %v662 = vmul.f32 %v634, %v655
          %v663 = vmul.f32 %v635, %v657
          %v664 = vmul.f32 %v636, %v659
          %v665 = vmul.f32 %v637, %v661
          %s666 = smul.u32 %s23, 16
          %v667 = vlaneseq
          %v668 = vshrl.u32 %v667, 7
          %v669 = vadd.s32 %v668, 8
          %v670 = vstv %s666
          %v671 = vadd.s32 %v670, %v668
          %v672 = vadd.s32 %v670, %v669
          %vm673 = vcmp.lt.s32.totalorder %v671, 16
          %vm674 = vcmp.lt.s32.totalorder %v672, 16
          %v675 = vsel %vm673, %v662, 0.0
          %v676 = vsel %vm673, %v663, 0.0
          %v677 = vsel %vm674, %v664, 0.0
          %v678 = vsel %vm674, %v665, 0.0
          %v679 = vld [vmem:[#allocation3] sm:$0x3]
          %v680 = vadd.f32 %v675, %v677
          %v681 = vrot.slane %v680, 4
          %v682 = vadd.f32 %v680, %v681
          %v683 = vrot.slane %v682, 2
          %v684 = vadd.f32 %v682, %v683
          %v685 = vrot.slane %v684, 1
          %v686 = vadd.f32 %v684, %v685
          %v687 = vadd.f32 %v676, %v678
          %v688 = vrot.slane %v687, 4
          %v689 = vadd.f32 %v687, %v688
          %v690 = vrot.slane %v689, 2
          %v691 = vadd.f32 %v689, %v690
          %v692 = vrot.slane %v691, 1
          %v693 = vadd.f32 %v691, %v692
          %v696 = vcombine.low %v686, %v693
          %v698 = vunpack.c.l.s4 1966171168
          %v699 = vunpack.c.0.s8 %v698
          %v700 = vlaneseq
          %v701 = vshrl.u32 %v700, 7
          %v702 = vsub.s32 %v699, %v701
          %v703 = vrot.slane %v696, %v702
          %v705 = vunpack.c.l.s4 1966171168
          %v706 = vunpack.c.0.s8 %v705
          %v707 = vlaneseq
          %v708 = vshrl.u32 %v707, 7
          %v709 = vsub.s32 %v706, %v708
          %v710 = vrot.slane %v703, %v709
          %v712 = vadd.f32 %v679, %v710
          %v713 = vlaneseq
          %vm714 = vcmp.ge.s32.totalorder %v713, 0
          %vm715 = vcmp.lt.s32.totalorder %v713, 256
          %vm716 = vmand %vm714, %vm715
          %717 = vst.msk [vmem:[#allocation3] sm:$0x3] %vm716, %v712
        $region86: #{fwd.27} parent=69 // pred_fallthru
          _
        // Predicated region
        $region87: #{fwd.27} parent=69 // pred_check
          _
        $region88: #{fwd.27} parent=69 // pred_check_branch
          %719 = sbr.rel (%p424) target = $region90
        $region89: #{fwd.27} parent=69 // pred_region
          %v720 = vld [vmem:[#allocation3] sm:$0x3]
          %v721 = vmul.f32 %v720, 0.0625
          %v722 = vlaneseq
          %vm723 = vcmp.ge.s32.totalorder %v722, 0
          %vm724 = vcmp.lt.s32.totalorder %v722, 256
          %vm725 = vmand %vm723, %vm724
          %726 = vst.msk [vmem:[%s419] sm:$0x3] %vm725, %v721
        $region90: #{fwd.27} parent=69 // pred_fallthru
          _
        %s727 = smul.u32 2, %s22
        %p728 = scmp.lt.s32.totalorder %s21, 5
        %s729 = scalar_select %p728, %s21, 5
        %p730 = scmp.lt.s32.totalorder %s727, 9
        %s731 = scalar_select %p730, %s727, 9
        %s732 = smul.addr %s729, 10
        %s733 = sadd.s32 %s731, %s732
        %s734 = scalar_lea.vmem %s4, %s733
        // Predicated region
        $region91: #{fwd.27} parent=69 // pred_check
          %p735 = pneg %p171
        $region92: #{fwd.27} parent=69 // pred_check_branch
          %737 = sbr.rel (%p735) target = $region94
        $region93: #{fwd.27} parent=69 // pred_region
          %s738 = smul.u32 2, %s22
        $region94: #{fwd.27} parent=69 // pred_fallthru
          _
      $region70: #{fwd.27} parent=5 // pred_fallthru
        _
      %p739 = scmp.le.s32.totalorder 2, %s10
      // Predicated region
      $region95: #{fwd.27} parent=5 // pred_check
        %p740 = pneg %p739
      $region96: #{fwd.27} parent=5 // pred_check_branch
        %742 = sbr.rel (%p740) target = $region98
      $region97: #{fwd.27} parent=5 // pred_region
        %s743 = ssub.s32 %s10, 2
        // Predicated region
        $region99: #{fwd.27} parent=97 // pred_check
          %p744 = pneg %p177
        $region100: #{fwd.27} parent=97 // pred_check_branch
          %746 = sbr.rel (%p744) target = $region102
        $region101: #{fwd.27} parent=97 // pred_region
          %s747 = smul.u32 2, %s26
          %p748 = scmp.lt.s32.totalorder %s25, 5
          %s749 = scalar_select %p748, %s25, 5
          %p750 = scmp.lt.s32.totalorder %s747, 9
          %s751 = scalar_select %p750, %s747, 9
          %s752 = smul.addr %s749, 10
          %s753 = sadd.s32 %s751, %s752
          %s754 = scalar_lea.vmem %s4, %s753
        $region102: #{fwd.27} parent=97 // pred_fallthru
          _
      $region98: #{fwd.27} parent=5 // pred_fallthru
        _
    $region6: #{fwd.27} parent=1 // loop_footer
      %s14 = sadd.s32 1, %s10
    $region7: #{fwd.27} parent=1 // loop_footer_branch
      %9 = sbr.rel target = $region3
    $region8: #{fwd.27} parent=1 // loop_exit
      _

</llo_original>
